<compile_context>
chip_gen: v6e
topology: v6e:2x2x1
jax: 0.10.0
libtpu: 0.0.40
codegen_flags: <defaults>
</compile_context>

<pallas_src>
import functools

import jax
import jax.numpy as jnp
from jax import lax
from jax.experimental import pallas as pl
from jax.experimental.pallas import tpu as pltpu

EPS = 1e-5                        # nn.BatchNorm2d default
LANE = 128                        # keep stores lane-dense
DEFAULT_TM = 512                  # rows per tile (v7x 64MiB VMEM friendly)
FUSED_MAX_ROWS = 2048             # fully-fused BN path only for small deep layers
VMEM_LIMIT_BYTES = 48 * 1024 * 1024


def _round_up(v, m):
    return (v + m - 1) // m * m


def _pad_cols(mat, n_to):
    n = mat.shape[-1]
    if n == n_to:
        return mat
    return jnp.pad(mat, [(0, 0)] * (mat.ndim - 1) + [(0, n_to - n)])


# ------------------------------ Pallas kernels ------------------------------ #
def _layer_kernel(a_ref, w_ref, b_ref, g_ref, be_ref, *out_refs,
                  mode, post_act, inv_rows):
    """pre-built bf16 patch tile @ bf16 weights -> f32, + bias, then:
       mode == "plain"    : (optional tanh) store
       mode == "bn_fused" : single-pass BatchNorm over the whole (single) block
       mode == "bn_stats" : also emit per-tile (sum, sumsq) partial stats
    Padded rows are exact zeros with zero bias, so they contribute 0 to stats.
    """
    y = jnp.dot(a_ref[...], w_ref[...], preferred_element_type=jnp.float32)
    y = y + b_ref[...]
    if mode == "bn_stats":
        s = jnp.sum(y, axis=0, keepdims=True)
        ss = jnp.sum(y * y, axis=0, keepdims=True)
        out_refs[1][...] = jnp.concatenate(
            [s, ss, jnp.zeros((6, y.shape[1]), jnp.float32)], axis=0)
    elif mode == "bn_fused":
        mean = jnp.sum(y, axis=0, keepdims=True) * inv_rows
        msq = jnp.sum(y * y, axis=0, keepdims=True) * inv_rows
        var = msq - mean * mean
        y = (y - mean) * lax.rsqrt(var + EPS) * g_ref[...] + be_ref[...]
    if post_act == "tanh":
        y = jnp.tanh(y)
    out_refs[0][...] = y


def _affine_kernel(y_ref, sc_ref, sh_ref, o_ref, *, post_act):
    y = y_ref[...] * sc_ref[...] + sh_ref[...]
    if post_act == "tanh":
        y = jnp.tanh(y)
    o_ref[...] = y


def _run_layer(a, w_mat, bias_row, g_row, be_row, *, mode, post_act, nvalid, tm):
    """a: (Mpad, K) bf16, w_mat: (K, Npad) bf16, rows: (1, Npad) f32."""
    Mpad, K = a.shape
    Npad = w_mat.shape[1]
    ntiles = Mpad // tm
    if mode == "bn_fused":
        assert ntiles == 1, "fused BN path requires a single M tile"

    kernel = functools.partial(_layer_kernel, mode=mode, post_act=post_act,
                               inv_rows=1.0 / float(nvalid))
    in_specs = [
        pl.BlockSpec((tm, K), lambda i: (i, 0)),       # patch tile (pipelined)
        pl.BlockSpec((K, Npad), lambda i: (0, 0)),     # weights: grid-resident
        pl.BlockSpec((1, Npad), lambda i: (0, 0)),     # bias
        pl.BlockSpec((1, Npad), lambda i: (0, 0)),     # gamma
        pl.BlockSpec((1, Npad), lambda i: (0, 0)),     # beta
    ]
    if mode == "bn_stats":
        out_shape = (jax.ShapeDtypeStruct((Mpad, Npad), jnp.float32),
                     jax.ShapeDtypeStruct((ntiles * 8, Npad), jnp.float32))
        out_specs = (pl.BlockSpec((tm, Npad), lambda i: (i, 0)),
                     pl.BlockSpec((8, Npad), lambda i: (i, 0)))
    else:
        out_shape = jax.ShapeDtypeStruct((Mpad, Npad), jnp.float32)
        out_specs = pl.BlockSpec((tm, Npad), lambda i: (i, 0))

    return pl.pallas_call(
        kernel,
        grid=(ntiles,),
        in_specs=in_specs,
        out_specs=out_specs,
        out_shape=out_shape,
        compiler_params=pltpu.CompilerParams(
            dimension_semantics=("parallel",),
            vmem_limit_bytes=VMEM_LIMIT_BYTES),
    )(a, w_mat, bias_row, g_row, be_row)


def _run_affine(y, scale_row, shift_row, *, post_act, tm):
    Mpad, Npad = y.shape
    ntiles = Mpad // tm
    return pl.pallas_call(
        functools.partial(_affine_kernel, post_act=post_act),
        grid=(ntiles,),
        in_specs=[pl.BlockSpec((tm, Npad), lambda i: (i, 0)),
                  pl.BlockSpec((1, Npad), lambda i: (0, 0)),
                  pl.BlockSpec((1, Npad), lambda i: (0, 0))],
        out_specs=pl.BlockSpec((tm, Npad), lambda i: (i, 0)),
        out_shape=jax.ShapeDtypeStruct((Mpad, Npad), jnp.float32),
        compiler_params=pltpu.CompilerParams(
            dimension_semantics=("parallel",),
            vmem_limit_bytes=VMEM_LIMIT_BYTES),
    )(y, scale_row, shift_row)


# ------------------------------ patch builders ------------------------------ #
def _im2col_down(x):  # Conv2d k=4, s=2, p=1 on NHWC -> (B*Ho*Wo, 16*C)
    B, H, W, C = x.shape
    Ho, Wo = H // 2, W // 2
    xp = jnp.pad(x, ((0, 0), (1, 1), (1, 1), (0, 0)))
    cols = []
    for kh in range(4):
        for kw in range(4):
            cols.append(xp[:, kh:kh + 2 * Ho:2, kw:kw + 2 * Wo:2, :])
    a = jnp.stack(cols, axis=3)                       # [B,Ho,Wo,16,C]
    return a.reshape(B * Ho * Wo, 16 * C)


def _im2col_up_patches(x):
    """2x2 patches of zero-padded x, stride 1 -> (B*(H+1)*(W+1), 4*C).
    Each ConvTranspose output phase consumes one of these patches."""
    B, H, W, C = x.shape
    xp = jnp.pad(x, ((0, 0), (1, 1), (1, 1), (0, 0)))
    cols = []
    for da in range(2):
        for db in range(2):
            cols.append(xp[:, da:da + H + 1, db:db + W + 1, :])
    a = jnp.stack(cols, axis=3)                       # [B,H+1,W+1,4,C]
    return a.reshape(B * (H + 1) * (W + 1), 4 * C)


# --------------------------------- layers ----------------------------------- #
def _fits_fused(mpad, k, npad):
    need = 2 * mpad * k * 2 + k * npad * 2 + 2 * mpad * npad * 4
    return need < 24 * 1024 * 1024


def down_layer(x, w, gamma=None, beta=None, *, pre_act="leaky", use_bn=True,
               tm=DEFAULT_TM, fused_max_rows=FUSED_MAX_ROWS):
    B, H, W, Cin = x.shape
    cout = w.shape[0]
    Ho, Wo = H // 2, W // 2
    M = B * Ho * Wo
    K = 16 * Cin
    Npad = _round_up(cout, LANE)

    # pre-activation on the (16x smaller) activation, then cast to bf16
    if pre_act == "leaky":
        x = jnp.where(x > 0, x, 0.2 * x)
    elif pre_act == "relu":
        x = jnp.maximum(x, 0.0)
    a = _im2col_down(x.astype(jnp.bfloat16))

    w_mat = jnp.transpose(w, (2, 3, 1, 0)).reshape(K, cout).astype(jnp.bfloat16)
    w_mat = _pad_cols(w_mat, Npad)
    bias_row = jnp.zeros((1, Npad), jnp.float32)      # downconv has bias=False
    g = jnp.ones((cout,), jnp.float32) if gamma is None else gamma
    be = jnp.zeros((cout,), jnp.float32) if beta is None else beta
    g_row = _pad_cols(g.reshape(1, -1), Npad)
    be_row = _pad_cols(be.reshape(1, -1), Npad)

    m16 = _round_up(M, 16)
    if use_bn and M <= fused_max_rows and _fits_fused(m16, K, Npad):
        mode, tm_eff, Mpad = "bn_fused", m16, m16
    else:
        mode = "bn_stats" if use_bn else "plain"
        tm_eff = min(tm, m16)
        Mpad = _round_up(M, tm_eff)
    a = jnp.pad(a, ((0, Mpad - M), (0, 0)))

    res = _run_layer(a, w_mat, bias_row, g_row, be_row,
                     mode=mode, post_act="none", nvalid=M, tm=tm_eff)
    if mode == "bn_stats":
        y, stats = res
        st = stats.reshape(-1, 8, Npad)
        s = jnp.sum(st[:, 0, :], axis=0)
        ss = jnp.sum(st[:, 1, :], axis=0)
        mean = s / M
        var = ss / M - mean * mean
        scale = g_row * lax.rsqrt(var + EPS).reshape(1, Npad)
        shift = be_row - mean.reshape(1, Npad) * scale
        y = _run_affine(y, scale, shift, post_act="none", tm=tm_eff)
    else:
        y = res
    return y[:M, :cout].reshape(B, Ho, Wo, cout)


def up_layer(x, wt, bias=None, gamma=None, beta=None, *, use_bn=True,
             post_act="none", tm=DEFAULT_TM, fused_max_rows=FUSED_MAX_ROWS):
    B, H, W, Cin = x.shape
    cout = wt.shape[1]
    M = B * (H + 1) * (W + 1)
    N = 4 * cout
    Npad = _round_up(N, LANE)

    x = jnp.maximum(x, 0.0)                           # ReLU before ConvT
    a = _im2col_up_patches(x.astype(jnp.bfloat16))    # (M, 4*Cin)

    # sub-pixel weights: column block p = 2*py+px, row block q = 2*da+db,
    # tap (ky,kx) = (3-py-2*da, 3-px-2*db)  [derived from oy = 2*iy - 1 + ky]
    blocks = []
    for da in range(2):
        for db in range(2):
            row = [wt[:, :, 3 - py - 2 * da, 3 - px - 2 * db]
                   for py in range(2) for px in range(2)]
            blocks.append(jnp.concatenate(row, axis=1))        # (Cin, 4*cout)
    w_mat = _pad_cols(jnp.concatenate(blocks, axis=0).astype(jnp.bfloat16), Npad)

    b = jnp.zeros((cout,), jnp.float32) if bias is None else bias
    bias_row = _pad_cols(jnp.tile(b, 4).reshape(1, N), Npad)
    zrow = jnp.zeros((1, Npad), jnp.float32)

    tm_eff = min(tm, _round_up(M, 16))
    Mpad = _round_up(M, tm_eff)
    a = jnp.pad(a, ((0, Mpad - M), (0, 0)))

    fuse_tanh = (not use_bn) and post_act == "tanh"
    y = _run_layer(a, w_mat, bias_row, zrow, zrow,
                   mode="plain", post_act="tanh" if fuse_tanh else "none",
                   nvalid=M, tm=tm_eff)

    if use_bn:
        g = jnp.ones((cout,), jnp.float32) if gamma is None else gamma
        be = jnp.zeros((cout,), jnp.float32) if beta is None else beta
        y4 = y[:M, :N].reshape(B, H + 1, W + 1, 4, cout)
        ph = [y4[:, :H, :W, 0], y4[:, :H, 1:, 1],
              y4[:, 1:, :W, 2], y4[:, 1:, 1:, 3]]
        cnt = 4.0 * B * H * W
        s = sum(p.sum(axis=(0, 1, 2)) for p in ph)
        ss = sum(jnp.square(p).sum(axis=(0, 1, 2)) for p in ph)
        mean = s / cnt
        var = ss / cnt - mean * mean
        scale_c = g * lax.rsqrt(var + EPS)
        shift_c = be - mean * scale_c
        scale = _pad_cols(jnp.tile(scale_c, 4).reshape(1, N), Npad)
        shift = _pad_cols(jnp.tile(shift_c, 4).reshape(1, N), Npad)
        y = _run_affine(y, scale, shift, post_act="none", tm=tm_eff)

    # depth-to-space interleave of the 4 phases
    y4 = y[:M, :N].reshape(B, H + 1, W + 1, 4, cout)
    p00, p01 = y4[:, :H, :W, 0], y4[:, :H, 1:, 1]
    p10, p11 = y4[:, 1:, :W, 2], y4[:, 1:, 1:, 3]
    row0 = jnp.stack([p00, p01], axis=3)              # (B,H,W,2,C)  px
    row1 = jnp.stack([p10, p11], axis=3)
    t = jnp.stack([row0, row1], axis=2)               # (B,H,2,W,2,C)
    return t.reshape(B, 2 * H, 2 * W, cout)


# --------------------- UnetGenerator parameters / forward ------------------ #
def _make_block(key_pool, outer_nc, inner_nc, input_nc=None, sub=None,
                outermost=False, innermost=False):
    if input_nc is None:
        input_nc = outer_nc
    nk = lambda: key_pool.pop()
    cw = lambda k, co, ci: 0.02 * jax.random.normal(k, (co, ci, 4, 4), jnp.float32)
    ctw = lambda k, ci, co: 0.02 * jax.random.normal(k, (ci, co, 4, 4), jnp.float32)
    blk = {"down_w": cw(nk(), inner_nc, input_nc)}
    if outermost:
        blk["type"] = "outermost"
        blk["up_w"] = ctw(nk(), inner_nc * 2, outer_nc)
        blk["up_b"] = 0.02 * jax.random.normal(nk(), (outer_nc,), jnp.float32)
        blk["sub"] = sub
    elif innermost:
        blk["type"] = "innermost"
        blk["up_w"] = ctw(nk(), inner_nc, outer_nc)
        blk["up_bn_g"] = jnp.ones((outer_nc,), jnp.float32)
        blk["up_bn_b"] = jnp.zeros((outer_nc,), jnp.float32)
    else:
        blk["type"] = "middle"
        blk["down_bn_g"] = jnp.ones((inner_nc,), jnp.float32)
        blk["down_bn_b"] = jnp.zeros((inner_nc,), jnp.float32)
        blk["up_w"] = ctw(nk(), inner_nc * 2, outer_nc)
        blk["up_bn_g"] = jnp.ones((outer_nc,), jnp.float32)
        blk["up_bn_b"] = jnp.zeros((outer_nc,), jnp.float32)
        blk["sub"] = sub
    return blk


def build_unet_params(key, input_nc, output_nc, num_downs, ngf):
    key_pool = list(jax.random.split(key, 4 * num_downs + 8))
    blk = _make_block(key_pool, ngf * 8, ngf * 8, innermost=True)
    for _ in range(num_downs - 5):
        blk = _make_block(key_pool, ngf * 8, ngf * 8, sub=blk)
    blk = _make_block(key_pool, ngf * 4, ngf * 8, sub=blk)
    blk = _make_block(key_pool, ngf * 2, ngf * 4, sub=blk)
    blk = _make_block(key_pool, ngf, ngf * 2, sub=blk)
    blk = _make_block(key_pool, output_nc, ngf, input_nc=input_nc, sub=blk,
                      outermost=True)
    return blk


def _block_forward(x, blk, *, tm, fused_max_rows):  # NHWC, Pallas-backed
    kw = dict(tm=tm, fused_max_rows=fused_max_rows)
    t = blk["type"]
    if t == "outermost":
        d = down_layer(x, blk["down_w"], pre_act="none", use_bn=False, **kw)
        m = _block_forward(d, blk["sub"], **kw)
        return up_layer(m, blk["up_w"], bias=blk["up_b"], use_bn=False,
                        post_act="tanh", **kw)
    if t == "innermost":
        d = down_layer(x, blk["down_w"], pre_act="leaky", use_bn=False, **kw)
        u = up_layer(d, blk["up_w"], gamma=blk["up_bn_g"], beta=blk["up_bn_b"], **kw)
        return jnp.concatenate([x, u], axis=-1)
    d = down_layer(x, blk["down_w"], blk["down_bn_g"], blk["down_bn_b"], **kw)
    m = _block_forward(d, blk["sub"], **kw)
    u = up_layer(m, blk["up_w"], gamma=blk["up_bn_g"], beta=blk["up_bn_b"], **kw)
    return jnp.concatenate([x, u], axis=-1)
    # TODO(synk): skip-concat still costs one HBM copy per level; could be
    # removed by splitting the next layer's K dimension into (x, u) halves.


def unet_forward(x_nchw, blk, *, tm=DEFAULT_TM, fused_max_rows=FUSED_MAX_ROWS):
    x = jnp.transpose(x_nchw, (0, 2, 3, 1)).astype(jnp.float32)
    y = _block_forward(x, blk, tm=tm, fused_max_rows=fused_max_rows)
    return jnp.transpose(y, (0, 3, 1, 2))


# --------------------------- plain-JAX reference --------------------------- #
# Reference mirrors the kernel's mixed precision (bf16 conv operands, f32
# accumulation, f32 BN/tanh) so the comparison isolates layout/algorithm bugs.
def _ref_down(x, w):
    return lax.conv_general_dilated(
        x.astype(jnp.bfloat16), w.astype(jnp.bfloat16), (2, 2), ((1, 1), (1, 1)),
        dimension_numbers=("NCHW", "OIHW", "NCHW"),
        preferred_element_type=jnp.float32)


def _ref_up(x, wt):
    w_eff = jnp.transpose(wt, (1, 0, 2, 3))[:, :, ::-1, ::-1]
    return lax.conv_general_dilated(
        x.astype(jnp.bfloat16), w_eff.astype(jnp.bfloat16), (1, 1),
        ((2, 2), (2, 2)), lhs_dilation=(2, 2),
        dimension_numbers=("NCHW", "OIHW", "NCHW"),
        preferred_element_type=jnp.float32)


def _ref_bn(x, g, b):
    mean = jnp.mean(x, axis=(0, 2, 3), keepdims=True)
    var = jnp.mean(jnp.square(x - mean), axis=(0, 2, 3), keepdims=True)
    return (x - mean) * lax.rsqrt(var + EPS) * g[None, :, None, None] \
        + b[None, :, None, None]


def ref_block(x, blk):  # NCHW
    lrelu = lambda t: jnp.where(t > 0, t, 0.2 * t)
    relu = lambda t: jnp.maximum(t, 0.0)
    t = blk["type"]
    if t == "outermost":
        d = _ref_down(x, blk["down_w"])
        m = ref_block(d, blk["sub"])
        return jnp.tanh(_ref_up(relu(m), blk["up_w"])
                        + blk["up_b"][None, :, None, None])
    if t == "innermost":
        d = _ref_down(lrelu(x), blk["down_w"])
        u = _ref_bn(_ref_up(relu(d), blk["up_w"]), blk["up_bn_g"], blk["up_bn_b"])
        return jnp.concatenate([x, u], axis=1)
    d = _ref_bn(_ref_down(lrelu(x), blk["down_w"]),
                blk["down_bn_g"], blk["down_bn_b"])
    m = ref_block(d, blk["sub"])
    u = _ref_bn(_ref_up(relu(m), blk["up_w"]), blk["up_bn_g"], blk["up_bn_b"])
    return jnp.concatenate([x, u], axis=1)


# ---------------------------------- main ----------------------------------- #
if __name__ == "__main__":
    input_nc, output_nc, num_downs, ngf = 3, 3, 5, 8
    B, H, W = 2, 64, 64  # 64x64 -> 2x2 at the bottleneck with num_downs=5

    key = jax.random.PRNGKey(0)
    pkey, xkey = jax.random.split(key)
    params = build_unet_params(pkey, input_nc, output_nc, num_downs, ngf)
    x = jax.random.normal(xkey, (B, input_nc, H, W), jnp.float32)  # NCHW

    ref = jax.block_until_ready(ref_block(x, params))

    # default path: fused single-block BN for small deep layers, tiled
    # (tm=512, pipelined, "parallel") pass for the large outer layers
    fwd = jax.jit(lambda inp: unet_forward(inp, params))
    out = jax.block_until_ready(fwd(x))
    assert out.shape == (B, output_nc, H, W), out.shape
    err = float(jnp.max(jnp.abs(out - ref)))
    assert err < 2e-2, f"default path mismatch vs reference: max abs err {err}"

    # force the fully-tiled multi-block path everywhere (exercises the M grid,
    # per-tile BN partial-stats reduction and the affine finalize kernel)
    fwd_tiled = jax.jit(
        lambda inp: unet_forward(inp, params, tm=64, fused_max_rows=0))
    out_t = jax.block_until_ready(fwd_tiled(x))
    err_t = float(jnp.max(jnp.abs(out_t - ref)))
    assert err_t < 2e-2, f"tiled path mismatch vs reference: max abs err {err_t}"

    print("KERNEL_OK")
</pallas_src>

<mosaic_0001>
module attributes {stable_mosaic.version = 11 : i64} {
  func.func @_layer_kernel(%arg0: i32, %arg1: memref<512x48xbf16, #tpu.memory_space<vmem>>, %arg2: memref<48x128xbf16, #tpu.memory_space<vmem>>, %arg3: memref<1x128xf32, #tpu.memory_space<vmem>>, %arg4: memref<1x128xf32, #tpu.memory_space<vmem>>, %arg5: memref<1x128xf32, #tpu.memory_space<vmem>>, %arg6: memref<512x128xf32, #tpu.memory_space<vmem>>) attributes {dimension_semantics = [#tpu.dimension_semantics<parallel>], iteration_bounds = array<i64: 4>, scalar_prefetch = 0 : i64, scratch_operands = 0 : i64, tpu.core_type = #tpu.core_type<tc>, window_params = [{transform_indices = @transform_0, window_bounds = array<i64: 512, 48>}, {pipeline_mode = #tpu.pipeline_mode<synchronous>, transform_indices = @transform_1, window_bounds = array<i64: 48, 128>}, {pipeline_mode = #tpu.pipeline_mode<synchronous>, transform_indices = @transform_2, window_bounds = array<i64: 1, 128>}, {pipeline_mode = #tpu.pipeline_mode<synchronous>, transform_indices = @transform_3, window_bounds = array<i64: 1, 128>}, {pipeline_mode = #tpu.pipeline_mode<synchronous>, transform_indices = @transform_4, window_bounds = array<i64: 1, 128>}, {transform_indices = @transform_5, window_bounds = array<i64: 512, 128>}]} {
    %c0 = arith.constant 0 : index
    %c0_0 = arith.constant 0 : index
    %0 = vector.load %arg1[%c0, %c0_0] : memref<512x48xbf16, #tpu.memory_space<vmem>>, vector<512x48xbf16>
    %c0_1 = arith.constant 0 : index
    %c0_2 = arith.constant 0 : index
    %1 = vector.load %arg2[%c0_1, %c0_2] : memref<48x128xbf16, #tpu.memory_space<vmem>>, vector<48x128xbf16>
    %cst = arith.constant dense<0.000000e+00> : vector<512x128xf32>
    %2 = tpu.matmul %0, %1, %cst {dimension_numbers = #tpu.dot_dimension_numbers<[1], [0], [0], [1], [0, 0, 1, 1], [], []>} : vector<512x48xbf16>, vector<48x128xbf16>, vector<512x128xf32> -> vector<512x128xf32>
    %c0_3 = arith.constant 0 : index
    %c0_4 = arith.constant 0 : index
    %3 = vector.load %arg3[%c0_3, %c0_4] : memref<1x128xf32, #tpu.memory_space<vmem>>, vector<1x128xf32>
    %4 = vector.broadcast %3 : vector<1x128xf32> to vector<512x128xf32>
    %5 = arith.addf %2, %4 : vector<512x128xf32>
    %c0_5 = arith.constant 0 : index
    %c0_6 = arith.constant 0 : index
    %6 = vector.load %arg6[%c0_5, %c0_6] : memref<512x128xf32, #tpu.memory_space<vmem>>, vector<512x128xf32>
    tpu.vector_store %arg6[%c0_5, %c0_6], %5 {strides = array<i32>} : memref<512x128xf32, #tpu.memory_space<vmem>>, vector<512x128xf32>,
    return
  }
  func.func @transform_0(%arg0: i32) -> (i32, i32) {
    %c0_i32 = arith.constant 0 : i32
    %c0_i32_0 = arith.constant 0 : i32
    return %arg0, %c0_i32 : i32, i32
  }
  func.func @transform_1(%arg0: i32) -> (i32, i32) {
    %c0_i32 = arith.constant 0 : i32
    %c0_i32_0 = arith.constant 0 : i32
    %c0_i32_1 = arith.constant 0 : i32
    return %c0_i32, %c0_i32_0 : i32, i32
  }
  func.func @transform_2(%arg0: i32) -> (i32, i32) {
    %c0_i32 = arith.constant 0 : i32
    %c0_i32_0 = arith.constant 0 : i32
    %c0_i32_1 = arith.constant 0 : i32
    return %c0_i32, %c0_i32_0 : i32, i32
  }
  func.func @transform_3(%arg0: i32) -> (i32, i32) {
    %c0_i32 = arith.constant 0 : i32
    %c0_i32_0 = arith.constant 0 : i32
    %c0_i32_1 = arith.constant 0 : i32
    return %c0_i32, %c0_i32_0 : i32, i32
  }
  func.func @transform_4(%arg0: i32) -> (i32, i32) {
    %c0_i32 = arith.constant 0 : i32
    %c0_i32_0 = arith.constant 0 : i32
    %c0_i32_1 = arith.constant 0 : i32
    return %c0_i32, %c0_i32_0 : i32, i32
  }
  func.func @transform_5(%arg0: i32) -> (i32, i32) {
    %c0_i32 = arith.constant 0 : i32
    %c0_i32_0 = arith.constant 0 : i32
    return %arg0, %c0_i32 : i32, i32
  }
}

module attributes {stable_mosaic.version = 11 : i64} {
  func.func @_layer_kernel(%arg0: i32, %arg1: memref<512x128xbf16, #tpu.memory_space<vmem>>, %arg2: memref<128x128xbf16, #tpu.memory_space<vmem>>, %arg3: memref<1x128xf32, #tpu.memory_space<vmem>>, %arg4: memref<1x128xf32, #tpu.memory_space<vmem>>, %arg5: memref<1x128xf32, #tpu.memory_space<vmem>>, %arg6: memref<512x128xf32, #tpu.memory_space<vmem>>) attributes {dimension_semantics = [#tpu.dimension_semantics<parallel>], iteration_bounds = array<i64: 1>, scalar_prefetch = 0 : i64, scratch_operands = 0 : i64, tpu.core_type = #tpu.core_type<tc>, window_params = [{transform_indices = @transform_0, window_bounds = array<i64: 512, 128>}, {pipeline_mode = #tpu.pipeline_mode<synchronous>, transform_indices = @transform_1, window_bounds = array<i64: 128, 128>}, {pipeline_mode = #tpu.pipeline_mode<synchronous>, transform_indices = @transform_2, window_bounds = array<i64: 1, 128>}, {pipeline_mode = #tpu.pipeline_mode<synchronous>, transform_indices = @transform_3, window_bounds = array<i64: 1, 128>}, {pipeline_mode = #tpu.pipeline_mode<synchronous>, transform_indices = @transform_4, window_bounds = array<i64: 1, 128>}, {transform_indices = @transform_5, window_bounds = array<i64: 512, 128>}]} {
    %c0 = arith.constant 0 : index
    %c0_0 = arith.constant 0 : index
    %0 = vector.load %arg1[%c0, %c0_0] : memref<512x128xbf16, #tpu.memory_space<vmem>>, vector<512x128xbf16>
    %c0_1 = arith.constant 0 : index
    %c0_2 = arith.constant 0 : index
    %1 = vector.load %arg2[%c0_1, %c0_2] : memref<128x128xbf16, #tpu.memory_space<vmem>>, vector<128x128xbf16>
    %cst = arith.constant dense<0.000000e+00> : vector<512x128xf32>
    %2 = tpu.matmul %0, %1, %cst {dimension_numbers = #tpu.dot_dimension_numbers<[1], [0], [0], [1], [0, 0, 1, 1], [], []>} : vector<512x128xbf16>, vector<128x128xbf16>, vector<512x128xf32> -> vector<512x128xf32>
    %c0_3 = arith.constant 0 : index
    %c0_4 = arith.constant 0 : index
    %3 = vector.load %arg3[%c0_3, %c0_4] : memref<1x128xf32, #tpu.memory_space<vmem>>, vector<1x128xf32>
    %4 = vector.broadcast %3 : vector<1x128xf32> to vector<512x128xf32>
    %5 = arith.addf %2, %4 : vector<512x128xf32>
    %cst_5 = arith.constant dense<0.000000e+00> : vector<128xf32>
    %6 = vector.multi_reduction <add>, %5, %cst_5 [0] : vector<512x128xf32> to vector<128xf32>
    %7 = vector.shape_cast %6 : vector<128xf32> to vector<1x128xf32>
    %cst_6 = arith.constant 0.001953125 : f32
    %8 = vector.broadcast %cst_6 : f32 to vector<1x128xf32>
    %9 = arith.mulf %7, %8 : vector<1x128xf32>
    %10 = arith.mulf %5, %5 : vector<512x128xf32>
    %cst_7 = arith.constant dense<0.000000e+00> : vector<128xf32>
    %11 = vector.multi_reduction <add>, %10, %cst_7 [0] : vector<512x128xf32> to vector<128xf32>
    %12 = vector.shape_cast %11 : vector<128xf32> to vector<1x128xf32>
    %cst_8 = arith.constant 0.001953125 : f32
    %13 = vector.broadcast %cst_8 : f32 to vector<1x128xf32>
    %14 = arith.mulf %12, %13 : vector<1x128xf32>
    %15 = arith.mulf %9, %9 : vector<1x128xf32>
    %16 = arith.subf %14, %15 : vector<1x128xf32>
    %17 = vector.broadcast %9 : vector<1x128xf32> to vector<512x128xf32>
    %18 = arith.subf %5, %17 : vector<512x128xf32>
    %cst_9 = arith.constant 9.99999974E-6 : f32
    %19 = vector.broadcast %cst_9 : f32 to vector<1x128xf32>
    %20 = arith.addf %16, %19 : vector<1x128xf32>
    %21 = math.rsqrt %20 : vector<1x128xf32>
    %22 = vector.broadcast %21 : vector<1x128xf32> to vector<512x128xf32>
    %23 = arith.mulf %18, %22 : vector<512x128xf32>
    %c0_10 = arith.constant 0 : index
    %c0_11 = arith.constant 0 : index
    %24 = vector.load %arg4[%c0_10, %c0_11] : memref<1x128xf32, #tpu.memory_space<vmem>>, vector<1x128xf32>
    %25 = vector.broadcast %24 : vector<1x128xf32> to vector<512x128xf32>
    %26 = arith.mulf %23, %25 : vector<512x128xf32>
    %c0_12 = arith.constant 0 : index
    %c0_13 = arith.constant 0 : index
    %27 = vector.load %arg5[%c0_12, %c0_13] : memref<1x128xf32, #tpu.memory_space<vmem>>, vector<1x128xf32>
    %28 = vector.broadcast %27 : vector<1x128xf32> to vector<512x128xf32>
    %29 = arith.addf %26, %28 : vector<512x128xf32>
    %c0_14 = arith.constant 0 : index
    %c0_15 = arith.constant 0 : index
    %30 = vector.load %arg6[%c0_14, %c0_15] : memref<512x128xf32, #tpu.memory_space<vmem>>, vector<512x128xf32>
    tpu.vector_store %arg6[%c0_14, %c0_15], %29 {strides = array<i32>} : memref<512x128xf32, #tpu.memory_space<vmem>>, vector<512x128xf32>,
    return
  }
  func.func @transform_0(%arg0: i32) -> (i32, i32) {
    %c0_i32 = arith.constant 0 : i32
    %c0_i32_0 = arith.constant 0 : i32
    return %arg0, %c0_i32 : i32, i32
  }
  func.func @transform_1(%arg0: i32) -> (i32, i32) {
    %c0_i32 = arith.constant 0 : i32
    %c0_i32_0 = arith.constant 0 : i32
    %c0_i32_1 = arith.constant 0 : i32
    return %c0_i32, %c0_i32_0 : i32, i32
  }
  func.func @transform_2(%arg0: i32) -> (i32, i32) {
    %c0_i32 = arith.constant 0 : i32
    %c0_i32_0 = arith.constant 0 : i32
    %c0_i32_1 = arith.constant 0 : i32
    return %c0_i32, %c0_i32_0 : i32, i32
  }
  func.func @transform_3(%arg0: i32) -> (i32, i32) {
    %c0_i32 = arith.constant 0 : i32
    %c0_i32_0 = arith.constant 0 : i32
    %c0_i32_1 = arith.constant 0 : i32
    return %c0_i32, %c0_i32_0 : i32, i32
  }
  func.func @transform_4(%arg0: i32) -> (i32, i32) {
    %c0_i32 = arith.constant 0 : i32
    %c0_i32_0 = arith.constant 0 : i32
    %c0_i32_1 = arith.constant 0 : i32
    return %c0_i32, %c0_i32_0 : i32, i32
  }
  func.func @transform_5(%arg0: i32) -> (i32, i32) {
    %c0_i32 = arith.constant 0 : i32
    %c0_i32_0 = arith.constant 0 : i32
    return %arg0, %c0_i32 : i32, i32
  }
}

module attributes {stable_mosaic.version = 11 : i64} {
  func.func @_layer_kernel(%arg0: i32, %arg1: memref<128x256xbf16, #tpu.memory_space<vmem>>, %arg2: memref<256x128xbf16, #tpu.memory_space<vmem>>, %arg3: memref<1x128xf32, #tpu.memory_space<vmem>>, %arg4: memref<1x128xf32, #tpu.memory_space<vmem>>, %arg5: memref<1x128xf32, #tpu.memory_space<vmem>>, %arg6: memref<128x128xf32, #tpu.memory_space<vmem>>) attributes {dimension_semantics = [#tpu.dimension_semantics<parallel>], iteration_bounds = array<i64: 1>, scalar_prefetch = 0 : i64, scratch_operands = 0 : i64, tpu.core_type = #tpu.core_type<tc>, window_params = [{transform_indices = @transform_0, window_bounds = array<i64: 128, 256>}, {pipeline_mode = #tpu.pipeline_mode<synchronous>, transform_indices = @transform_1, window_bounds = array<i64: 256, 128>}, {pipeline_mode = #tpu.pipeline_mode<synchronous>, transform_indices = @transform_2, window_bounds = array<i64: 1, 128>}, {pipeline_mode = #tpu.pipeline_mode<synchronous>, transform_indices = @transform_3, window_bounds = array<i64: 1, 128>}, {pipeline_mode = #tpu.pipeline_mode<synchronous>, transform_indices = @transform_4, window_bounds = array<i64: 1, 128>}, {transform_indices = @transform_5, window_bounds = array<i64: 128, 128>}]} {
    %c0 = arith.constant 0 : index
    %c0_0 = arith.constant 0 : index
    %0 = vector.load %arg1[%c0, %c0_0] : memref<128x256xbf16, #tpu.memory_space<vmem>>, vector<128x256xbf16>
    %c0_1 = arith.constant 0 : index
    %c0_2 = arith.constant 0 : index
    %1 = vector.load %arg2[%c0_1, %c0_2] : memref<256x128xbf16, #tpu.memory_space<vmem>>, vector<256x128xbf16>
    %cst = arith.constant dense<0.000000e+00> : vector<128x128xf32>
    %2 = tpu.matmul %0, %1, %cst {dimension_numbers = #tpu.dot_dimension_numbers<[1], [0], [0], [1], [0, 0, 1, 1], [], []>} : vector<128x256xbf16>, vector<256x128xbf16>, vector<128x128xf32> -> vector<128x128xf32>
    %c0_3 = arith.constant 0 : index
    %c0_4 = arith.constant 0 : index
    %3 = vector.load %arg3[%c0_3, %c0_4] : memref<1x128xf32, #tpu.memory_space<vmem>>, vector<1x128xf32>
    %4 = vector.broadcast %3 : vector<1x128xf32> to vector<128x128xf32>
    %5 = arith.addf %2, %4 : vector<128x128xf32>
    %cst_5 = arith.constant dense<0.000000e+00> : vector<128xf32>
    %6 = vector.multi_reduction <add>, %5, %cst_5 [0] : vector<128x128xf32> to vector<128xf32>
    %7 = vector.shape_cast %6 : vector<128xf32> to vector<1x128xf32>
    %cst_6 = arith.constant 7.812500e-03 : f32
    %8 = vector.broadcast %cst_6 : f32 to vector<1x128xf32>
    %9 = arith.mulf %7, %8 : vector<1x128xf32>
    %10 = arith.mulf %5, %5 : vector<128x128xf32>
    %cst_7 = arith.constant dense<0.000000e+00> : vector<128xf32>
    %11 = vector.multi_reduction <add>, %10, %cst_7 [0] : vector<128x128xf32> to vector<128xf32>
    %12 = vector.shape_cast %11 : vector<128xf32> to vector<1x128xf32>
    %cst_8 = arith.constant 7.812500e-03 : f32
    %13 = vector.broadcast %cst_8 : f32 to vector<1x128xf32>
    %14 = arith.mulf %12, %13 : vector<1x128xf32>
    %15 = arith.mulf %9, %9 : vector<1x128xf32>
    %16 = arith.subf %14, %15 : vector<1x128xf32>
    %17 = vector.broadcast %9 : vector<1x128xf32> to vector<128x128xf32>
    %18 = arith.subf %5, %17 : vector<128x128xf32>
    %cst_9 = arith.constant 9.99999974E-6 : f32
    %19 = vector.broadcast %cst_9 : f32 to vector<1x128xf32>
    %20 = arith.addf %16, %19 : vector<1x128xf32>
    %21 = math.rsqrt %20 : vector<1x128xf32>
    %22 = vector.broadcast %21 : vector<1x128xf32> to vector<128x128xf32>
    %23 = arith.mulf %18, %22 : vector<128x128xf32>
    %c0_10 = arith.constant 0 : index
    %c0_11 = arith.constant 0 : index
    %24 = vector.load %arg4[%c0_10, %c0_11] : memref<1x128xf32, #tpu.memory_space<vmem>>, vector<1x128xf32>
    %25 = vector.broadcast %24 : vector<1x128xf32> to vector<128x128xf32>
    %26 = arith.mulf %23, %25 : vector<128x128xf32>
    %c0_12 = arith.constant 0 : index
    %c0_13 = arith.constant 0 : index
    %27 = vector.load %arg5[%c0_12, %c0_13] : memref<1x128xf32, #tpu.memory_space<vmem>>, vector<1x128xf32>
    %28 = vector.broadcast %27 : vector<1x128xf32> to vector<128x128xf32>
    %29 = arith.addf %26, %28 : vector<128x128xf32>
    %c0_14 = arith.constant 0 : index
    %c0_15 = arith.constant 0 : index
    %30 = vector.load %arg6[%c0_14, %c0_15] : memref<128x128xf32, #tpu.memory_space<vmem>>, vector<128x128xf32>
    tpu.vector_store %arg6[%c0_14, %c0_15], %29 {strides = array<i32>} : memref<128x128xf32, #tpu.memory_space<vmem>>, vector<128x128xf32>,
    return
  }
  func.func @transform_0(%arg0: i32) -> (i32, i32) {
    %c0_i32 = arith.constant 0 : i32
    %c0_i32_0 = arith.constant 0 : i32
    return %arg0, %c0_i32 : i32, i32
  }
  func.func @transform_1(%arg0: i32) -> (i32, i32) {
    %c0_i32 = arith.constant 0 : i32
    %c0_i32_0 = arith.constant 0 : i32
    %c0_i32_1 = arith.constant 0 : i32
    return %c0_i32, %c0_i32_0 : i32, i32
  }
  func.func @transform_2(%arg0: i32) -> (i32, i32) {
    %c0_i32 = arith.constant 0 : i32
    %c0_i32_0 = arith.constant 0 : i32
    %c0_i32_1 = arith.constant 0 : i32
    return %c0_i32, %c0_i32_0 : i32, i32
  }
  func.func @transform_3(%arg0: i32) -> (i32, i32) {
    %c0_i32 = arith.constant 0 : i32
    %c0_i32_0 = arith.constant 0 : i32
    %c0_i32_1 = arith.constant 0 : i32
    return %c0_i32, %c0_i32_0 : i32, i32
  }
  func.func @transform_4(%arg0: i32) -> (i32, i32) {
    %c0_i32 = arith.constant 0 : i32
    %c0_i32_0 = arith.constant 0 : i32
    %c0_i32_1 = arith.constant 0 : i32
    return %c0_i32, %c0_i32_0 : i32, i32
  }
  func.func @transform_5(%arg0: i32) -> (i32, i32) {
    %c0_i32 = arith.constant 0 : i32
    %c0_i32_0 = arith.constant 0 : i32
    return %arg0, %c0_i32 : i32, i32
  }
}

module attributes {stable_mosaic.version = 11 : i64} {
  func.func @_layer_kernel(%arg0: i32, %arg1: memref<32x512xbf16, #tpu.memory_space<vmem>>, %arg2: memref<512x128xbf16, #tpu.memory_space<vmem>>, %arg3: memref<1x128xf32, #tpu.memory_space<vmem>>, %arg4: memref<1x128xf32, #tpu.memory_space<vmem>>, %arg5: memref<1x128xf32, #tpu.memory_space<vmem>>, %arg6: memref<32x128xf32, #tpu.memory_space<vmem>>) attributes {dimension_semantics = [#tpu.dimension_semantics<parallel>], iteration_bounds = array<i64: 1>, scalar_prefetch = 0 : i64, scratch_operands = 0 : i64, tpu.core_type = #tpu.core_type<tc>, window_params = [{transform_indices = @transform_0, window_bounds = array<i64: 32, 512>}, {pipeline_mode = #tpu.pipeline_mode<synchronous>, transform_indices = @transform_1, window_bounds = array<i64: 512, 128>}, {pipeline_mode = #tpu.pipeline_mode<synchronous>, transform_indices = @transform_2, window_bounds = array<i64: 1, 128>}, {pipeline_mode = #tpu.pipeline_mode<synchronous>, transform_indices = @transform_3, window_bounds = array<i64: 1, 128>}, {pipeline_mode = #tpu.pipeline_mode<synchronous>, transform_indices = @transform_4, window_bounds = array<i64: 1, 128>}, {transform_indices = @transform_5, window_bounds = array<i64: 32, 128>}]} {
    %c0 = arith.constant 0 : index
    %c0_0 = arith.constant 0 : index
    %0 = vector.load %arg1[%c0, %c0_0] : memref<32x512xbf16, #tpu.memory_space<vmem>>, vector<32x512xbf16>
    %c0_1 = arith.constant 0 : index
    %c0_2 = arith.constant 0 : index
    %1 = vector.load %arg2[%c0_1, %c0_2] : memref<512x128xbf16, #tpu.memory_space<vmem>>, vector<512x128xbf16>
    %cst = arith.constant dense<0.000000e+00> : vector<32x128xf32>
    %2 = tpu.matmul %0, %1, %cst {dimension_numbers = #tpu.dot_dimension_numbers<[1], [0], [0], [1], [0, 0, 1, 1], [], []>} : vector<32x512xbf16>, vector<512x128xbf16>, vector<32x128xf32> -> vector<32x128xf32>
    %c0_3 = arith.constant 0 : index
    %c0_4 = arith.constant 0 : index
    %3 = vector.load %arg3[%c0_3, %c0_4] : memref<1x128xf32, #tpu.memory_space<vmem>>, vector<1x128xf32>
    %4 = vector.broadcast %3 : vector<1x128xf32> to vector<32x128xf32>
    %5 = arith.addf %2, %4 : vector<32x128xf32>
    %cst_5 = arith.constant dense<0.000000e+00> : vector<128xf32>
    %6 = vector.multi_reduction <add>, %5, %cst_5 [0] : vector<32x128xf32> to vector<128xf32>
    %7 = vector.shape_cast %6 : vector<128xf32> to vector<1x128xf32>
    %cst_6 = arith.constant 3.125000e-02 : f32
    %8 = vector.broadcast %cst_6 : f32 to vector<1x128xf32>
    %9 = arith.mulf %7, %8 : vector<1x128xf32>
    %10 = arith.mulf %5, %5 : vector<32x128xf32>
    %cst_7 = arith.constant dense<0.000000e+00> : vector<128xf32>
    %11 = vector.multi_reduction <add>, %10, %cst_7 [0] : vector<32x128xf32> to vector<128xf32>
    %12 = vector.shape_cast %11 : vector<128xf32> to vector<1x128xf32>
    %cst_8 = arith.constant 3.125000e-02 : f32
    %13 = vector.broadcast %cst_8 : f32 to vector<1x128xf32>
    %14 = arith.mulf %12, %13 : vector<1x128xf32>
    %15 = arith.mulf %9, %9 : vector<1x128xf32>
    %16 = arith.subf %14, %15 : vector<1x128xf32>
    %17 = vector.broadcast %9 : vector<1x128xf32> to vector<32x128xf32>
    %18 = arith.subf %5, %17 : vector<32x128xf32>
    %cst_9 = arith.constant 9.99999974E-6 : f32
    %19 = vector.broadcast %cst_9 : f32 to vector<1x128xf32>
    %20 = arith.addf %16, %19 : vector<1x128xf32>
    %21 = math.rsqrt %20 : vector<1x128xf32>
    %22 = vector.broadcast %21 : vector<1x128xf32> to vector<32x128xf32>
    %23 = arith.mulf %18, %22 : vector<32x128xf32>
    %c0_10 = arith.constant 0 : index
    %c0_11 = arith.constant 0 : index
    %24 = vector.load %arg4[%c0_10, %c0_11] : memref<1x128xf32, #tpu.memory_space<vmem>>, vector<1x128xf32>
    %25 = vector.broadcast %24 : vector<1x128xf32> to vector<32x128xf32>
    %26 = arith.mulf %23, %25 : vector<32x128xf32>
    %c0_12 = arith.constant 0 : index
    %c0_13 = arith.constant 0 : index
    %27 = vector.load %arg5[%c0_12, %c0_13] : memref<1x128xf32, #tpu.memory_space<vmem>>, vector<1x128xf32>
    %28 = vector.broadcast %27 : vector<1x128xf32> to vector<32x128xf32>
    %29 = arith.addf %26, %28 : vector<32x128xf32>
    %c0_14 = arith.constant 0 : index
    %c0_15 = arith.constant 0 : index
    %30 = vector.load %arg6[%c0_14, %c0_15] : memref<32x128xf32, #tpu.memory_space<vmem>>, vector<32x128xf32>
    tpu.vector_store %arg6[%c0_14, %c0_15], %29 {strides = array<i32>} : memref<32x128xf32, #tpu.memory_space<vmem>>, vector<32x128xf32>,
    return
  }
  func.func @transform_0(%arg0: i32) -> (i32, i32) {
    %c0_i32 = arith.constant 0 : i32
    %c0_i32_0 = arith.constant 0 : i32
    return %arg0, %c0_i32 : i32, i32
  }
  func.func @transform_1(%arg0: i32) -> (i32, i32) {
    %c0_i32 = arith.constant 0 : i32
    %c0_i32_0 = arith.constant 0 : i32
    %c0_i32_1 = arith.constant 0 : i32
    return %c0_i32, %c0_i32_0 : i32, i32
  }
  func.func @transform_2(%arg0: i32) -> (i32, i32) {
    %c0_i32 = arith.constant 0 : i32
    %c0_i32_0 = arith.constant 0 : i32
    %c0_i32_1 = arith.constant 0 : i32
    return %c0_i32, %c0_i32_0 : i32, i32
  }
  func.func @transform_3(%arg0: i32) -> (i32, i32) {
    %c0_i32 = arith.constant 0 : i32
    %c0_i32_0 = arith.constant 0 : i32
    %c0_i32_1 = arith.constant 0 : i32
    return %c0_i32, %c0_i32_0 : i32, i32
  }
  func.func @transform_4(%arg0: i32) -> (i32, i32) {
    %c0_i32 = arith.constant 0 : i32
    %c0_i32_0 = arith.constant 0 : i32
    %c0_i32_1 = arith.constant 0 : i32
    return %c0_i32, %c0_i32_0 : i32, i32
  }
  func.func @transform_5(%arg0: i32) -> (i32, i32) {
    %c0_i32 = arith.constant 0 : i32
    %c0_i32_0 = arith.constant 0 : i32
    return %arg0, %c0_i32 : i32, i32
  }
}

module attributes {stable_mosaic.version = 11 : i64} {
  func.func @_layer_kernel(%arg0: i32, %arg1: memref<16x1024xbf16, #tpu.memory_space<vmem>>, %arg2: memref<1024x128xbf16, #tpu.memory_space<vmem>>, %arg3: memref<1x128xf32, #tpu.memory_space<vmem>>, %arg4: memref<1x128xf32, #tpu.memory_space<vmem>>, %arg5: memref<1x128xf32, #tpu.memory_space<vmem>>, %arg6: memref<16x128xf32, #tpu.memory_space<vmem>>) attributes {dimension_semantics = [#tpu.dimension_semantics<parallel>], iteration_bounds = array<i64: 1>, scalar_prefetch = 0 : i64, scratch_operands = 0 : i64, tpu.core_type = #tpu.core_type<tc>, window_params = [{transform_indices = @transform_0, window_bounds = array<i64: 16, 1024>}, {pipeline_mode = #tpu.pipeline_mode<synchronous>, transform_indices = @transform_1, window_bounds = array<i64: 1024, 128>}, {pipeline_mode = #tpu.pipeline_mode<synchronous>, transform_indices = @transform_2, window_bounds = array<i64: 1, 128>}, {pipeline_mode = #tpu.pipeline_mode<synchronous>, transform_indices = @transform_3, window_bounds = array<i64: 1, 128>}, {pipeline_mode = #tpu.pipeline_mode<synchronous>, transform_indices = @transform_4, window_bounds = array<i64: 1, 128>}, {transform_indices = @transform_5, window_bounds = array<i64: 16, 128>}]} {
    %c0 = arith.constant 0 : index
    %c0_0 = arith.constant 0 : index
    %0 = vector.load %arg1[%c0, %c0_0] : memref<16x1024xbf16, #tpu.memory_space<vmem>>, vector<16x1024xbf16>
    %c0_1 = arith.constant 0 : index
    %c0_2 = arith.constant 0 : index
    %1 = vector.load %arg2[%c0_1, %c0_2] : memref<1024x128xbf16, #tpu.memory_space<vmem>>, vector<1024x128xbf16>
    %cst = arith.constant dense<0.000000e+00> : vector<16x128xf32>
    %2 = tpu.matmul %0, %1, %cst {dimension_numbers = #tpu.dot_dimension_numbers<[1], [0], [0], [1], [0, 0, 1, 1], [], []>} : vector<16x1024xbf16>, vector<1024x128xbf16>, vector<16x128xf32> -> vector<16x128xf32>
    %c0_3 = arith.constant 0 : index
    %c0_4 = arith.constant 0 : index
    %3 = vector.load %arg3[%c0_3, %c0_4] : memref<1x128xf32, #tpu.memory_space<vmem>>, vector<1x128xf32>
    %4 = vector.broadcast %3 : vector<1x128xf32> to vector<16x128xf32>
    %5 = arith.addf %2, %4 : vector<16x128xf32>
    %c0_5 = arith.constant 0 : index
    %c0_6 = arith.constant 0 : index
    %6 = vector.load %arg6[%c0_5, %c0_6] : memref<16x128xf32, #tpu.memory_space<vmem>>, vector<16x128xf32>
    tpu.vector_store %arg6[%c0_5, %c0_6], %5 {strides = array<i32>} : memref<16x128xf32, #tpu.memory_space<vmem>>, vector<16x128xf32>,
    return
  }
  func.func @transform_0(%arg0: i32) -> (i32, i32) {
    %c0_i32 = arith.constant 0 : i32
    %c0_i32_0 = arith.constant 0 : i32
    return %arg0, %c0_i32 : i32, i32
  }
  func.func @transform_1(%arg0: i32) -> (i32, i32) {
    %c0_i32 = arith.constant 0 : i32
    %c0_i32_0 = arith.constant 0 : i32
    %c0_i32_1 = arith.constant 0 : i32
    return %c0_i32, %c0_i32_0 : i32, i32
  }
  func.func @transform_2(%arg0: i32) -> (i32, i32) {
    %c0_i32 = arith.constant 0 : i32
    %c0_i32_0 = arith.constant 0 : i32
    %c0_i32_1 = arith.constant 0 : i32
    return %c0_i32, %c0_i32_0 : i32, i32
  }
  func.func @transform_3(%arg0: i32) -> (i32, i32) {
    %c0_i32 = arith.constant 0 : i32
    %c0_i32_0 = arith.constant 0 : i32
    %c0_i32_1 = arith.constant 0 : i32
    return %c0_i32, %c0_i32_0 : i32, i32
  }
  func.func @transform_4(%arg0: i32) -> (i32, i32) {
    %c0_i32 = arith.constant 0 : i32
    %c0_i32_0 = arith.constant 0 : i32
    %c0_i32_1 = arith.constant 0 : i32
    return %c0_i32, %c0_i32_0 : i32, i32
  }
  func.func @transform_5(%arg0: i32) -> (i32, i32) {
    %c0_i32 = arith.constant 0 : i32
    %c0_i32_0 = arith.constant 0 : i32
    return %arg0, %c0_i32 : i32, i32
  }
}

module attributes {stable_mosaic.version = 11 : i64} {
  func.func @_layer_kernel(%arg0: i32, %arg1: memref<32x256xbf16, #tpu.memory_space<vmem>>, %arg2: memref<256x256xbf16, #tpu.memory_space<vmem>>, %arg3: memref<1x256xf32, #tpu.memory_space<vmem>>, %arg4: memref<1x256xf32, #tpu.memory_space<vmem>>, %arg5: memref<1x256xf32, #tpu.memory_space<vmem>>, %arg6: memref<32x256xf32, #tpu.memory_space<vmem>>) attributes {dimension_semantics = [#tpu.dimension_semantics<parallel>], iteration_bounds = array<i64: 1>, scalar_prefetch = 0 : i64, scratch_operands = 0 : i64, tpu.core_type = #tpu.core_type<tc>, window_params = [{transform_indices = @transform_0, window_bounds = array<i64: 32, 256>}, {pipeline_mode = #tpu.pipeline_mode<synchronous>, transform_indices = @transform_1, window_bounds = array<i64: 256, 256>}, {pipeline_mode = #tpu.pipeline_mode<synchronous>, transform_indices = @transform_2, window_bounds = array<i64: 1, 256>}, {pipeline_mode = #tpu.pipeline_mode<synchronous>, transform_indices = @transform_3, window_bounds = array<i64: 1, 256>}, {pipeline_mode = #tpu.pipeline_mode<synchronous>, transform_indices = @transform_4, window_bounds = array<i64: 1, 256>}, {transform_indices = @transform_5, window_bounds = array<i64: 32, 256>}]} {
    %c0 = arith.constant 0 : index
    %c0_0 = arith.constant 0 : index
    %0 = vector.load %arg1[%c0, %c0_0] : memref<32x256xbf16, #tpu.memory_space<vmem>>, vector<32x256xbf16>
    %c0_1 = arith.constant 0 : index
    %c0_2 = arith.constant 0 : index
    %1 = vector.load %arg2[%c0_1, %c0_2] : memref<256x256xbf16, #tpu.memory_space<vmem>>, vector<256x256xbf16>
    %cst = arith.constant dense<0.000000e+00> : vector<32x256xf32>
    %2 = tpu.matmul %0, %1, %cst {dimension_numbers = #tpu.dot_dimension_numbers<[1], [0], [0], [1], [0, 0, 1, 1], [], []>} : vector<32x256xbf16>, vector<256x256xbf16>, vector<32x256xf32> -> vector<32x256xf32>
    %c0_3 = arith.constant 0 : index
    %c0_4 = arith.constant 0 : index
    %3 = vector.load %arg3[%c0_3, %c0_4] : memref<1x256xf32, #tpu.memory_space<vmem>>, vector<1x256xf32>
    %4 = vector.broadcast %3 : vector<1x256xf32> to vector<32x256xf32>
    %5 = arith.addf %2, %4 : vector<32x256xf32>
    %c0_5 = arith.constant 0 : index
    %c0_6 = arith.constant 0 : index
    %6 = vector.load %arg6[%c0_5, %c0_6] : memref<32x256xf32, #tpu.memory_space<vmem>>, vector<32x256xf32>
    tpu.vector_store %arg6[%c0_5, %c0_6], %5 {strides = array<i32>} : memref<32x256xf32, #tpu.memory_space<vmem>>, vector<32x256xf32>,
    return
  }
  func.func @transform_0(%arg0: i32) -> (i32, i32) {
    %c0_i32 = arith.constant 0 : i32
    %c0_i32_0 = arith.constant 0 : i32
    return %arg0, %c0_i32 : i32, i32
  }
  func.func @transform_1(%arg0: i32) -> (i32, i32) {
    %c0_i32 = arith.constant 0 : i32
    %c0_i32_0 = arith.constant 0 : i32
    %c0_i32_1 = arith.constant 0 : i32
    return %c0_i32, %c0_i32_0 : i32, i32
  }
  func.func @transform_2(%arg0: i32) -> (i32, i32) {
    %c0_i32 = arith.constant 0 : i32
    %c0_i32_0 = arith.constant 0 : i32
    %c0_i32_1 = arith.constant 0 : i32
    return %c0_i32, %c0_i32_0 : i32, i32
  }
  func.func @transform_3(%arg0: i32) -> (i32, i32) {
    %c0_i32 = arith.constant 0 : i32
    %c0_i32_0 = arith.constant 0 : i32
    %c0_i32_1 = arith.constant 0 : i32
    return %c0_i32, %c0_i32_0 : i32, i32
  }
  func.func @transform_4(%arg0: i32) -> (i32, i32) {
    %c0_i32 = arith.constant 0 : i32
    %c0_i32_0 = arith.constant 0 : i32
    %c0_i32_1 = arith.constant 0 : i32
    return %c0_i32, %c0_i32_0 : i32, i32
  }
  func.func @transform_5(%arg0: i32) -> (i32, i32) {
    %c0_i32 = arith.constant 0 : i32
    %c0_i32_0 = arith.constant 0 : i32
    return %arg0, %c0_i32 : i32, i32
  }
}

module attributes {stable_mosaic.version = 11 : i64} {
  func.func @_affine_kernel(%arg0: i32, %arg1: memref<32x256xf32, #tpu.memory_space<vmem>>, %arg2: memref<1x256xf32, #tpu.memory_space<vmem>>, %arg3: memref<1x256xf32, #tpu.memory_space<vmem>>, %arg4: memref<32x256xf32, #tpu.memory_space<vmem>>) attributes {dimension_semantics = [#tpu.dimension_semantics<parallel>], iteration_bounds = array<i64: 1>, scalar_prefetch = 0 : i64, scratch_operands = 0 : i64, tpu.core_type = #tpu.core_type<tc>, window_params = [{transform_indices = @transform_0, window_bounds = array<i64: 32, 256>}, {pipeline_mode = #tpu.pipeline_mode<synchronous>, transform_indices = @transform_1, window_bounds = array<i64: 1, 256>}, {pipeline_mode = #tpu.pipeline_mode<synchronous>, transform_indices = @transform_2, window_bounds = array<i64: 1, 256>}, {transform_indices = @transform_3, window_bounds = array<i64: 32, 256>}]} {
    %c0 = arith.constant 0 : index
    %c0_0 = arith.constant 0 : index
    %0 = vector.load %arg1[%c0, %c0_0] : memref<32x256xf32, #tpu.memory_space<vmem>>, vector<32x256xf32>
    %c0_1 = arith.constant 0 : index
    %c0_2 = arith.constant 0 : index
    %1 = vector.load %arg2[%c0_1, %c0_2] : memref<1x256xf32, #tpu.memory_space<vmem>>, vector<1x256xf32>
    %2 = vector.broadcast %1 : vector<1x256xf32> to vector<32x256xf32>
    %3 = arith.mulf %0, %2 : vector<32x256xf32>
    %c0_3 = arith.constant 0 : index
    %c0_4 = arith.constant 0 : index
    %4 = vector.load %arg3[%c0_3, %c0_4] : memref<1x256xf32, #tpu.memory_space<vmem>>, vector<1x256xf32>
    %5 = vector.broadcast %4 : vector<1x256xf32> to vector<32x256xf32>
    %6 = arith.addf %3, %5 : vector<32x256xf32>
    %c0_5 = arith.constant 0 : index
    %c0_6 = arith.constant 0 : index
    %7 = vector.load %arg4[%c0_5, %c0_6] : memref<32x256xf32, #tpu.memory_space<vmem>>, vector<32x256xf32>
    tpu.vector_store %arg4[%c0_5, %c0_6], %6 {strides = array<i32>} : memref<32x256xf32, #tpu.memory_space<vmem>>, vector<32x256xf32>,
    return
  }
  func.func @transform_0(%arg0: i32) -> (i32, i32) {
    %c0_i32 = arith.constant 0 : i32
    %c0_i32_0 = arith.constant 0 : i32
    return %arg0, %c0_i32 : i32, i32
  }
  func.func @transform_1(%arg0: i32) -> (i32, i32) {
    %c0_i32 = arith.constant 0 : i32
    %c0_i32_0 = arith.constant 0 : i32
    %c0_i32_1 = arith.constant 0 : i32
    return %c0_i32, %c0_i32_0 : i32, i32
  }
  func.func @transform_2(%arg0: i32) -> (i32, i32) {
    %c0_i32 = arith.constant 0 : i32
    %c0_i32_0 = arith.constant 0 : i32
    %c0_i32_1 = arith.constant 0 : i32
    return %c0_i32, %c0_i32_0 : i32, i32
  }
  func.func @transform_3(%arg0: i32) -> (i32, i32) {
    %c0_i32 = arith.constant 0 : i32
    %c0_i32_0 = arith.constant 0 : i32
    return %arg0, %c0_i32 : i32, i32
  }
}

module attributes {stable_mosaic.version = 11 : i64} {
  func.func @_layer_kernel(%arg0: i32, %arg1: memref<64x512xbf16, #tpu.memory_space<vmem>>, %arg2: memref<512x128xbf16, #tpu.memory_space<vmem>>, %arg3: memref<1x128xf32, #tpu.memory_space<vmem>>, %arg4: memref<1x128xf32, #tpu.memory_space<vmem>>, %arg5: memref<1x128xf32, #tpu.memory_space<vmem>>, %arg6: memref<64x128xf32, #tpu.memory_space<vmem>>) attributes {dimension_semantics = [#tpu.dimension_semantics<parallel>], iteration_bounds = array<i64: 1>, scalar_prefetch = 0 : i64, scratch_operands = 0 : i64, tpu.core_type = #tpu.core_type<tc>, window_params = [{transform_indices = @transform_0, window_bounds = array<i64: 64, 512>}, {pipeline_mode = #tpu.pipeline_mode<synchronous>, transform_indices = @transform_1, window_bounds = array<i64: 512, 128>}, {pipeline_mode = #tpu.pipeline_mode<synchronous>, transform_indices = @transform_2, window_bounds = array<i64: 1, 128>}, {pipeline_mode = #tpu.pipeline_mode<synchronous>, transform_indices = @transform_3, window_bounds = array<i64: 1, 128>}, {pipeline_mode = #tpu.pipeline_mode<synchronous>, transform_indices = @transform_4, window_bounds = array<i64: 1, 128>}, {transform_indices = @transform_5, window_bounds = array<i64: 64, 128>}]} {
    %c0 = arith.constant 0 : index
    %c0_0 = arith.constant 0 : index
    %0 = vector.load %arg1[%c0, %c0_0] : memref<64x512xbf16, #tpu.memory_space<vmem>>, vector<64x512xbf16>
    %c0_1 = arith.constant 0 : index
    %c0_2 = arith.constant 0 : index
    %1 = vector.load %arg2[%c0_1, %c0_2] : memref<512x128xbf16, #tpu.memory_space<vmem>>, vector<512x128xbf16>
    %cst = arith.constant dense<0.000000e+00> : vector<64x128xf32>
    %2 = tpu.matmul %0, %1, %cst {dimension_numbers = #tpu.dot_dimension_numbers<[1], [0], [0], [1], [0, 0, 1, 1], [], []>} : vector<64x512xbf16>, vector<512x128xbf16>, vector<64x128xf32> -> vector<64x128xf32>
    %c0_3 = arith.constant 0 : index
    %c0_4 = arith.constant 0 : index
    %3 = vector.load %arg3[%c0_3, %c0_4] : memref<1x128xf32, #tpu.memory_space<vmem>>, vector<1x128xf32>
    %4 = vector.broadcast %3 : vector<1x128xf32> to vector<64x128xf32>
    %5 = arith.addf %2, %4 : vector<64x128xf32>
    %c0_5 = arith.constant 0 : index
    %c0_6 = arith.constant 0 : index
    %6 = vector.load %arg6[%c0_5, %c0_6] : memref<64x128xf32, #tpu.memory_space<vmem>>, vector<64x128xf32>
    tpu.vector_store %arg6[%c0_5, %c0_6], %5 {strides = array<i32>} : memref<64x128xf32, #tpu.memory_space<vmem>>, vector<64x128xf32>,
    return
  }
  func.func @transform_0(%arg0: i32) -> (i32, i32) {
    %c0_i32 = arith.constant 0 : i32
    %c0_i32_0 = arith.constant 0 : i32
    return %arg0, %c0_i32 : i32, i32
  }
  func.func @transform_1(%arg0: i32) -> (i32, i32) {
    %c0_i32 = arith.constant 0 : i32
    %c0_i32_0 = arith.constant 0 : i32
    %c0_i32_1 = arith.constant 0 : i32
    return %c0_i32, %c0_i32_0 : i32, i32
  }
  func.func @transform_2(%arg0: i32) -> (i32, i32) {
    %c0_i32 = arith.constant 0 : i32
    %c0_i32_0 = arith.constant 0 : i32
    %c0_i32_1 = arith.constant 0 : i32
    return %c0_i32, %c0_i32_0 : i32, i32
  }
  func.func @transform_3(%arg0: i32) -> (i32, i32) {
    %c0_i32 = arith.constant 0 : i32
    %c0_i32_0 = arith.constant 0 : i32
    %c0_i32_1 = arith.constant 0 : i32
    return %c0_i32, %c0_i32_0 : i32, i32
  }
  func.func @transform_4(%arg0: i32) -> (i32, i32) {
    %c0_i32 = arith.constant 0 : i32
    %c0_i32_0 = arith.constant 0 : i32
    %c0_i32_1 = arith.constant 0 : i32
    return %c0_i32, %c0_i32_0 : i32, i32
  }
  func.func @transform_5(%arg0: i32) -> (i32, i32) {
    %c0_i32 = arith.constant 0 : i32
    %c0_i32_0 = arith.constant 0 : i32
    return %arg0, %c0_i32 : i32, i32
  }
}

module attributes {stable_mosaic.version = 11 : i64} {
  func.func @_affine_kernel(%arg0: i32, %arg1: memref<64x128xf32, #tpu.memory_space<vmem>>, %arg2: memref<1x128xf32, #tpu.memory_space<vmem>>, %arg3: memref<1x128xf32, #tpu.memory_space<vmem>>, %arg4: memref<64x128xf32, #tpu.memory_space<vmem>>) attributes {dimension_semantics = [#tpu.dimension_semantics<parallel>], iteration_bounds = array<i64: 1>, scalar_prefetch = 0 : i64, scratch_operands = 0 : i64, tpu.core_type = #tpu.core_type<tc>, window_params = [{transform_indices = @transform_0, window_bounds = array<i64: 64, 128>}, {pipeline_mode = #tpu.pipeline_mode<synchronous>, transform_indices = @transform_1, window_bounds = array<i64: 1, 128>}, {pipeline_mode = #tpu.pipeline_mode<synchronous>, transform_indices = @transform_2, window_bounds = array<i64: 1, 128>}, {transform_indices = @transform_3, window_bounds = array<i64: 64, 128>}]} {
    %c0 = arith.constant 0 : index
    %c0_0 = arith.constant 0 : index
    %0 = vector.load %arg1[%c0, %c0_0] : memref<64x128xf32, #tpu.memory_space<vmem>>, vector<64x128xf32>
    %c0_1 = arith.constant 0 : index
    %c0_2 = arith.constant 0 : index
    %1 = vector.load %arg2[%c0_1, %c0_2] : memref<1x128xf32, #tpu.memory_space<vmem>>, vector<1x128xf32>
    %2 = vector.broadcast %1 : vector<1x128xf32> to vector<64x128xf32>
    %3 = arith.mulf %0, %2 : vector<64x128xf32>
    %c0_3 = arith.constant 0 : index
    %c0_4 = arith.constant 0 : index
    %4 = vector.load %arg3[%c0_3, %c0_4] : memref<1x128xf32, #tpu.memory_space<vmem>>, vector<1x128xf32>
    %5 = vector.broadcast %4 : vector<1x128xf32> to vector<64x128xf32>
    %6 = arith.addf %3, %5 : vector<64x128xf32>
    %c0_5 = arith.constant 0 : index
    %c0_6 = arith.constant 0 : index
    %7 = vector.load %arg4[%c0_5, %c0_6] : memref<64x128xf32, #tpu.memory_space<vmem>>, vector<64x128xf32>
    tpu.vector_store %arg4[%c0_5, %c0_6], %6 {strides = array<i32>} : memref<64x128xf32, #tpu.memory_space<vmem>>, vector<64x128xf32>,
    return
  }
  func.func @transform_0(%arg0: i32) -> (i32, i32) {
    %c0_i32 = arith.constant 0 : i32
    %c0_i32_0 = arith.constant 0 : i32
    return %arg0, %c0_i32 : i32, i32
  }
  func.func @transform_1(%arg0: i32) -> (i32, i32) {
    %c0_i32 = arith.constant 0 : i32
    %c0_i32_0 = arith.constant 0 : i32
    %c0_i32_1 = arith.constant 0 : i32
    return %c0_i32, %c0_i32_0 : i32, i32
  }
  func.func @transform_2(%arg0: i32) -> (i32, i32) {
    %c0_i32 = arith.constant 0 : i32
    %c0_i32_0 = arith.constant 0 : i32
    %c0_i32_1 = arith.constant 0 : i32
    return %c0_i32, %c0_i32_0 : i32, i32
  }
  func.func @transform_3(%arg0: i32) -> (i32, i32) {
    %c0_i32 = arith.constant 0 : i32
    %c0_i32_0 = arith.constant 0 : i32
    return %arg0, %c0_i32 : i32, i32
  }
}

module attributes {stable_mosaic.version = 11 : i64} {
  func.func @_layer_kernel(%arg0: i32, %arg1: memref<176x256xbf16, #tpu.memory_space<vmem>>, %arg2: memref<256x128xbf16, #tpu.memory_space<vmem>>, %arg3: memref<1x128xf32, #tpu.memory_space<vmem>>, %arg4: memref<1x128xf32, #tpu.memory_space<vmem>>, %arg5: memref<1x128xf32, #tpu.memory_space<vmem>>, %arg6: memref<176x128xf32, #tpu.memory_space<vmem>>) attributes {dimension_semantics = [#tpu.dimension_semantics<parallel>], iteration_bounds = array<i64: 1>, scalar_prefetch = 0 : i64, scratch_operands = 0 : i64, tpu.core_type = #tpu.core_type<tc>, window_params = [{transform_indices = @transform_0, window_bounds = array<i64: 176, 256>}, {pipeline_mode = #tpu.pipeline_mode<synchronous>, transform_indices = @transform_1, window_bounds = array<i64: 256, 128>}, {pipeline_mode = #tpu.pipeline_mode<synchronous>, transform_indices = @transform_2, window_bounds = array<i64: 1, 128>}, {pipeline_mode = #tpu.pipeline_mode<synchronous>, transform_indices = @transform_3, window_bounds = array<i64: 1, 128>}, {pipeline_mode = #tpu.pipeline_mode<synchronous>, transform_indices = @transform_4, window_bounds = array<i64: 1, 128>}, {transform_indices = @transform_5, window_bounds = array<i64: 176, 128>}]} {
    %c0 = arith.constant 0 : index
    %c0_0 = arith.constant 0 : index
    %0 = vector.load %arg1[%c0, %c0_0] : memref<176x256xbf16, #tpu.memory_space<vmem>>, vector<176x256xbf16>
    %c0_1 = arith.constant 0 : index
    %c0_2 = arith.constant 0 : index
    %1 = vector.load %arg2[%c0_1, %c0_2] : memref<256x128xbf16, #tpu.memory_space<vmem>>, vector<256x128xbf16>
    %cst = arith.constant dense<0.000000e+00> : vector<176x128xf32>
    %2 = tpu.matmul %0, %1, %cst {dimension_numbers = #tpu.dot_dimension_numbers<[1], [0], [0], [1], [0, 0, 1, 1], [], []>} : vector<176x256xbf16>, vector<256x128xbf16>, vector<176x128xf32> -> vector<176x128xf32>
    %c0_3 = arith.constant 0 : index
    %c0_4 = arith.constant 0 : index
    %3 = vector.load %arg3[%c0_3, %c0_4] : memref<1x128xf32, #tpu.memory_space<vmem>>, vector<1x128xf32>
    %4 = vector.broadcast %3 : vector<1x128xf32> to vector<176x128xf32>
    %5 = arith.addf %2, %4 : vector<176x128xf32>
    %c0_5 = arith.constant 0 : index
    %c0_6 = arith.constant 0 : index
    %6 = vector.load %arg6[%c0_5, %c0_6] : memref<176x128xf32, #tpu.memory_space<vmem>>, vector<176x128xf32>
    tpu.vector_store %arg6[%c0_5, %c0_6], %5 {strides = array<i32>} : memref<176x128xf32, #tpu.memory_space<vmem>>, vector<176x128xf32>,
    return
  }
  func.func @transform_0(%arg0: i32) -> (i32, i32) {
    %c0_i32 = arith.constant 0 : i32
    %c0_i32_0 = arith.constant 0 : i32
    return %arg0, %c0_i32 : i32, i32
  }
  func.func @transform_1(%arg0: i32) -> (i32, i32) {
    %c0_i32 = arith.constant 0 : i32
    %c0_i32_0 = arith.constant 0 : i32
    %c0_i32_1 = arith.constant 0 : i32
    return %c0_i32, %c0_i32_0 : i32, i32
  }
  func.func @transform_2(%arg0: i32) -> (i32, i32) {
    %c0_i32 = arith.constant 0 : i32
    %c0_i32_0 = arith.constant 0 : i32
    %c0_i32_1 = arith.constant 0 : i32
    return %c0_i32, %c0_i32_0 : i32, i32
  }
  func.func @transform_3(%arg0: i32) -> (i32, i32) {
    %c0_i32 = arith.constant 0 : i32
    %c0_i32_0 = arith.constant 0 : i32
    %c0_i32_1 = arith.constant 0 : i32
    return %c0_i32, %c0_i32_0 : i32, i32
  }
  func.func @transform_4(%arg0: i32) -> (i32, i32) {
    %c0_i32 = arith.constant 0 : i32
    %c0_i32_0 = arith.constant 0 : i32
    %c0_i32_1 = arith.constant 0 : i32
    return %c0_i32, %c0_i32_0 : i32, i32
  }
  func.func @transform_5(%arg0: i32) -> (i32, i32) {
    %c0_i32 = arith.constant 0 : i32
    %c0_i32_0 = arith.constant 0 : i32
    return %arg0, %c0_i32 : i32, i32
  }
}

module attributes {stable_mosaic.version = 11 : i64} {
  func.func @_affine_kernel(%arg0: i32, %arg1: memref<176x128xf32, #tpu.memory_space<vmem>>, %arg2: memref<1x128xf32, #tpu.memory_space<vmem>>, %arg3: memref<1x128xf32, #tpu.memory_space<vmem>>, %arg4: memref<176x128xf32, #tpu.memory_space<vmem>>) attributes {dimension_semantics = [#tpu.dimension_semantics<parallel>], iteration_bounds = array<i64: 1>, scalar_prefetch = 0 : i64, scratch_operands = 0 : i64, tpu.core_type = #tpu.core_type<tc>, window_params = [{transform_indices = @transform_0, window_bounds = array<i64: 176, 128>}, {pipeline_mode = #tpu.pipeline_mode<synchronous>, transform_indices = @transform_1, window_bounds = array<i64: 1, 128>}, {pipeline_mode = #tpu.pipeline_mode<synchronous>, transform_indices = @transform_2, window_bounds = array<i64: 1, 128>}, {transform_indices = @transform_3, window_bounds = array<i64: 176, 128>}]} {
    %c0 = arith.constant 0 : index
    %c0_0 = arith.constant 0 : index
    %0 = vector.load %arg1[%c0, %c0_0] : memref<176x128xf32, #tpu.memory_space<vmem>>, vector<176x128xf32>
    %c0_1 = arith.constant 0 : index
    %c0_2 = arith.constant 0 : index
    %1 = vector.load %arg2[%c0_1, %c0_2] : memref<1x128xf32, #tpu.memory_space<vmem>>, vector<1x128xf32>
    %2 = vector.broadcast %1 : vector<1x128xf32> to vector<176x128xf32>
    %3 = arith.mulf %0, %2 : vector<176x128xf32>
    %c0_3 = arith.constant 0 : index
    %c0_4 = arith.constant 0 : index
    %4 = vector.load %arg3[%c0_3, %c0_4] : memref<1x128xf32, #tpu.memory_space<vmem>>, vector<1x128xf32>
    %5 = vector.broadcast %4 : vector<1x128xf32> to vector<176x128xf32>
    %6 = arith.addf %3, %5 : vector<176x128xf32>
    %c0_5 = arith.constant 0 : index
    %c0_6 = arith.constant 0 : index
    %7 = vector.load %arg4[%c0_5, %c0_6] : memref<176x128xf32, #tpu.memory_space<vmem>>, vector<176x128xf32>
    tpu.vector_store %arg4[%c0_5, %c0_6], %6 {strides = array<i32>} : memref<176x128xf32, #tpu.memory_space<vmem>>, vector<176x128xf32>,
    return
  }
  func.func @transform_0(%arg0: i32) -> (i32, i32) {
    %c0_i32 = arith.constant 0 : i32
    %c0_i32_0 = arith.constant 0 : i32
    return %arg0, %c0_i32 : i32, i32
  }
  func.func @transform_1(%arg0: i32) -> (i32, i32) {
    %c0_i32 = arith.constant 0 : i32
    %c0_i32_0 = arith.constant 0 : i32
    %c0_i32_1 = arith.constant 0 : i32
    return %c0_i32, %c0_i32_0 : i32, i32
  }
  func.func @transform_2(%arg0: i32) -> (i32, i32) {
    %c0_i32 = arith.constant 0 : i32
    %c0_i32_0 = arith.constant 0 : i32
    %c0_i32_1 = arith.constant 0 : i32
    return %c0_i32, %c0_i32_0 : i32, i32
  }
  func.func @transform_3(%arg0: i32) -> (i32, i32) {
    %c0_i32 = arith.constant 0 : i32
    %c0_i32_0 = arith.constant 0 : i32
    return %arg0, %c0_i32 : i32, i32
  }
}

module attributes {stable_mosaic.version = 11 : i64} {
  func.func @_layer_kernel(%arg0: i32, %arg1: memref<512x128xbf16, #tpu.memory_space<vmem>>, %arg2: memref<128x128xbf16, #tpu.memory_space<vmem>>, %arg3: memref<1x128xf32, #tpu.memory_space<vmem>>, %arg4: memref<1x128xf32, #tpu.memory_space<vmem>>, %arg5: memref<1x128xf32, #tpu.memory_space<vmem>>, %arg6: memref<512x128xf32, #tpu.memory_space<vmem>>) attributes {dimension_semantics = [#tpu.dimension_semantics<parallel>], iteration_bounds = array<i64: 2>, scalar_prefetch = 0 : i64, scratch_operands = 0 : i64, tpu.core_type = #tpu.core_type<tc>, window_params = [{transform_indices = @transform_0, window_bounds = array<i64: 512, 128>}, {pipeline_mode = #tpu.pipeline_mode<synchronous>, transform_indices = @transform_1, window_bounds = array<i64: 128, 128>}, {pipeline_mode = #tpu.pipeline_mode<synchronous>, transform_indices = @transform_2, window_bounds = array<i64: 1, 128>}, {pipeline_mode = #tpu.pipeline_mode<synchronous>, transform_indices = @transform_3, window_bounds = array<i64: 1, 128>}, {pipeline_mode = #tpu.pipeline_mode<synchronous>, transform_indices = @transform_4, window_bounds = array<i64: 1, 128>}, {transform_indices = @transform_5, window_bounds = array<i64: 512, 128>}]} {
    %c0 = arith.constant 0 : index
    %c0_0 = arith.constant 0 : index
    %0 = vector.load %arg1[%c0, %c0_0] : memref<512x128xbf16, #tpu.memory_space<vmem>>, vector<512x128xbf16>
    %c0_1 = arith.constant 0 : index
    %c0_2 = arith.constant 0 : index
    %1 = vector.load %arg2[%c0_1, %c0_2] : memref<128x128xbf16, #tpu.memory_space<vmem>>, vector<128x128xbf16>
    %cst = arith.constant dense<0.000000e+00> : vector<512x128xf32>
    %2 = tpu.matmul %0, %1, %cst {dimension_numbers = #tpu.dot_dimension_numbers<[1], [0], [0], [1], [0, 0, 1, 1], [], []>} : vector<512x128xbf16>, vector<128x128xbf16>, vector<512x128xf32> -> vector<512x128xf32>
    %c0_3 = arith.constant 0 : index
    %c0_4 = arith.constant 0 : index
    %3 = vector.load %arg3[%c0_3, %c0_4] : memref<1x128xf32, #tpu.memory_space<vmem>>, vector<1x128xf32>
    %4 = vector.broadcast %3 : vector<1x128xf32> to vector<512x128xf32>
    %5 = arith.addf %2, %4 : vector<512x128xf32>
    %c0_5 = arith.constant 0 : index
    %c0_6 = arith.constant 0 : index
    %6 = vector.load %arg6[%c0_5, %c0_6] : memref<512x128xf32, #tpu.memory_space<vmem>>, vector<512x128xf32>
    tpu.vector_store %arg6[%c0_5, %c0_6], %5 {strides = array<i32>} : memref<512x128xf32, #tpu.memory_space<vmem>>, vector<512x128xf32>,
    return
  }
  func.func @transform_0(%arg0: i32) -> (i32, i32) {
    %c0_i32 = arith.constant 0 : i32
    %c0_i32_0 = arith.constant 0 : i32
    return %arg0, %c0_i32 : i32, i32
  }
  func.func @transform_1(%arg0: i32) -> (i32, i32) {
    %c0_i32 = arith.constant 0 : i32
    %c0_i32_0 = arith.constant 0 : i32
    %c0_i32_1 = arith.constant 0 : i32
    return %c0_i32, %c0_i32_0 : i32, i32
  }
  func.func @transform_2(%arg0: i32) -> (i32, i32) {
    %c0_i32 = arith.constant 0 : i32
    %c0_i32_0 = arith.constant 0 : i32
    %c0_i32_1 = arith.constant 0 : i32
    return %c0_i32, %c0_i32_0 : i32, i32
  }
  func.func @transform_3(%arg0: i32) -> (i32, i32) {
    %c0_i32 = arith.constant 0 : i32
    %c0_i32_0 = arith.constant 0 : i32
    %c0_i32_1 = arith.constant 0 : i32
    return %c0_i32, %c0_i32_0 : i32, i32
  }
  func.func @transform_4(%arg0: i32) -> (i32, i32) {
    %c0_i32 = arith.constant 0 : i32
    %c0_i32_0 = arith.constant 0 : i32
    %c0_i32_1 = arith.constant 0 : i32
    return %c0_i32, %c0_i32_0 : i32, i32
  }
  func.func @transform_5(%arg0: i32) -> (i32, i32) {
    %c0_i32 = arith.constant 0 : i32
    %c0_i32_0 = arith.constant 0 : i32
    return %arg0, %c0_i32 : i32, i32
  }
}

module attributes {stable_mosaic.version = 11 : i64} {
  func.func @_affine_kernel(%arg0: i32, %arg1: memref<512x128xf32, #tpu.memory_space<vmem>>, %arg2: memref<1x128xf32, #tpu.memory_space<vmem>>, %arg3: memref<1x128xf32, #tpu.memory_space<vmem>>, %arg4: memref<512x128xf32, #tpu.memory_space<vmem>>) attributes {dimension_semantics = [#tpu.dimension_semantics<parallel>], iteration_bounds = array<i64: 2>, scalar_prefetch = 0 : i64, scratch_operands = 0 : i64, tpu.core_type = #tpu.core_type<tc>, window_params = [{transform_indices = @transform_0, window_bounds = array<i64: 512, 128>}, {pipeline_mode = #tpu.pipeline_mode<synchronous>, transform_indices = @transform_1, window_bounds = array<i64: 1, 128>}, {pipeline_mode = #tpu.pipeline_mode<synchronous>, transform_indices = @transform_2, window_bounds = array<i64: 1, 128>}, {transform_indices = @transform_3, window_bounds = array<i64: 512, 128>}]} {
    %c0 = arith.constant 0 : index
    %c0_0 = arith.constant 0 : index
    %0 = vector.load %arg1[%c0, %c0_0] : memref<512x128xf32, #tpu.memory_space<vmem>>, vector<512x128xf32>
    %c0_1 = arith.constant 0 : index
    %c0_2 = arith.constant 0 : index
    %1 = vector.load %arg2[%c0_1, %c0_2] : memref<1x128xf32, #tpu.memory_space<vmem>>, vector<1x128xf32>
    %2 = vector.broadcast %1 : vector<1x128xf32> to vector<512x128xf32>
    %3 = arith.mulf %0, %2 : vector<512x128xf32>
    %c0_3 = arith.constant 0 : index
    %c0_4 = arith.constant 0 : index
    %4 = vector.load %arg3[%c0_3, %c0_4] : memref<1x128xf32, #tpu.memory_space<vmem>>, vector<1x128xf32>
    %5 = vector.broadcast %4 : vector<1x128xf32> to vector<512x128xf32>
    %6 = arith.addf %3, %5 : vector<512x128xf32>
    %c0_5 = arith.constant 0 : index
    %c0_6 = arith.constant 0 : index
    %7 = vector.load %arg4[%c0_5, %c0_6] : memref<512x128xf32, #tpu.memory_space<vmem>>, vector<512x128xf32>
    tpu.vector_store %arg4[%c0_5, %c0_6], %6 {strides = array<i32>} : memref<512x128xf32, #tpu.memory_space<vmem>>, vector<512x128xf32>,
    return
  }
  func.func @transform_0(%arg0: i32) -> (i32, i32) {
    %c0_i32 = arith.constant 0 : i32
    %c0_i32_0 = arith.constant 0 : i32
    return %arg0, %c0_i32 : i32, i32
  }
  func.func @transform_1(%arg0: i32) -> (i32, i32) {
    %c0_i32 = arith.constant 0 : i32
    %c0_i32_0 = arith.constant 0 : i32
    %c0_i32_1 = arith.constant 0 : i32
    return %c0_i32, %c0_i32_0 : i32, i32
  }
  func.func @transform_2(%arg0: i32) -> (i32, i32) {
    %c0_i32 = arith.constant 0 : i32
    %c0_i32_0 = arith.constant 0 : i32
    %c0_i32_1 = arith.constant 0 : i32
    return %c0_i32, %c0_i32_0 : i32, i32
  }
  func.func @transform_3(%arg0: i32) -> (i32, i32) {
    %c0_i32 = arith.constant 0 : i32
    %c0_i32_0 = arith.constant 0 : i32
    return %arg0, %c0_i32 : i32, i32
  }
}

module attributes {stable_mosaic.version = 11 : i64} {
  func.func @_layer_kernel(%arg0: i32, %arg1: memref<512x64xbf16, #tpu.memory_space<vmem>>, %arg2: memref<64x128xbf16, #tpu.memory_space<vmem>>, %arg3: memref<1x128xf32, #tpu.memory_space<vmem>>, %arg4: memref<1x128xf32, #tpu.memory_space<vmem>>, %arg5: memref<1x128xf32, #tpu.memory_space<vmem>>, %arg6: memref<512x128xf32, #tpu.memory_space<vmem>>) attributes {dimension_semantics = [#tpu.dimension_semantics<parallel>], iteration_bounds = array<i64: 5>, scalar_prefetch = 0 : i64, scratch_operands = 0 : i64, tpu.core_type = #tpu.core_type<tc>, window_params = [{transform_indices = @transform_0, window_bounds = array<i64: 512, 64>}, {pipeline_mode = #tpu.pipeline_mode<synchronous>, transform_indices = @transform_1, window_bounds = array<i64: 64, 128>}, {pipeline_mode = #tpu.pipeline_mode<synchronous>, transform_indices = @transform_2, window_bounds = array<i64: 1, 128>}, {pipeline_mode = #tpu.pipeline_mode<synchronous>, transform_indices = @transform_3, window_bounds = array<i64: 1, 128>}, {pipeline_mode = #tpu.pipeline_mode<synchronous>, transform_indices = @transform_4, window_bounds = array<i64: 1, 128>}, {transform_indices = @transform_5, window_bounds = array<i64: 512, 128>}]} {
    %c0 = arith.constant 0 : index
    %c0_0 = arith.constant 0 : index
    %0 = vector.load %arg1[%c0, %c0_0] : memref<512x64xbf16, #tpu.memory_space<vmem>>, vector<512x64xbf16>
    %c0_1 = arith.constant 0 : index
    %c0_2 = arith.constant 0 : index
    %1 = vector.load %arg2[%c0_1, %c0_2] : memref<64x128xbf16, #tpu.memory_space<vmem>>, vector<64x128xbf16>
    %cst = arith.constant dense<0.000000e+00> : vector<512x128xf32>
    %2 = tpu.matmul %0, %1, %cst {dimension_numbers = #tpu.dot_dimension_numbers<[1], [0], [0], [1], [0, 0, 1, 1], [], []>} : vector<512x64xbf16>, vector<64x128xbf16>, vector<512x128xf32> -> vector<512x128xf32>
    %c0_3 = arith.constant 0 : index
    %c0_4 = arith.constant 0 : index
    %3 = vector.load %arg3[%c0_3, %c0_4] : memref<1x128xf32, #tpu.memory_space<vmem>>, vector<1x128xf32>
    %4 = vector.broadcast %3 : vector<1x128xf32> to vector<512x128xf32>
    %5 = arith.addf %2, %4 : vector<512x128xf32>
    %6 = math.tanh %5 : vector<512x128xf32>
    %c0_5 = arith.constant 0 : index
    %c0_6 = arith.constant 0 : index
    %7 = vector.load %arg6[%c0_5, %c0_6] : memref<512x128xf32, #tpu.memory_space<vmem>>, vector<512x128xf32>
    tpu.vector_store %arg6[%c0_5, %c0_6], %6 {strides = array<i32>} : memref<512x128xf32, #tpu.memory_space<vmem>>, vector<512x128xf32>,
    return
  }
  func.func @transform_0(%arg0: i32) -> (i32, i32) {
    %c0_i32 = arith.constant 0 : i32
    %c0_i32_0 = arith.constant 0 : i32
    return %arg0, %c0_i32 : i32, i32
  }
  func.func @transform_1(%arg0: i32) -> (i32, i32) {
    %c0_i32 = arith.constant 0 : i32
    %c0_i32_0 = arith.constant 0 : i32
    %c0_i32_1 = arith.constant 0 : i32
    return %c0_i32, %c0_i32_0 : i32, i32
  }
  func.func @transform_2(%arg0: i32) -> (i32, i32) {
    %c0_i32 = arith.constant 0 : i32
    %c0_i32_0 = arith.constant 0 : i32
    %c0_i32_1 = arith.constant 0 : i32
    return %c0_i32, %c0_i32_0 : i32, i32
  }
  func.func @transform_3(%arg0: i32) -> (i32, i32) {
    %c0_i32 = arith.constant 0 : i32
    %c0_i32_0 = arith.constant 0 : i32
    %c0_i32_1 = arith.constant 0 : i32
    return %c0_i32, %c0_i32_0 : i32, i32
  }
  func.func @transform_4(%arg0: i32) -> (i32, i32) {
    %c0_i32 = arith.constant 0 : i32
    %c0_i32_0 = arith.constant 0 : i32
    %c0_i32_1 = arith.constant 0 : i32
    return %c0_i32, %c0_i32_0 : i32, i32
  }
  func.func @transform_5(%arg0: i32) -> (i32, i32) {
    %c0_i32 = arith.constant 0 : i32
    %c0_i32_0 = arith.constant 0 : i32
    return %arg0, %c0_i32 : i32, i32
  }
}

</mosaic_0001>

<llo_original>
// kernel: _lambda_.14
$region0: #{_lambda_.14}
  #allocation0 [shape = 'u32[]', space=smem, size = 0x4, offset = 0x4, fixed_abs, tag = 'smem constant byte address 0x4 - core index']
  #allocation1 [shape = 'u32[144,128]{1,0:T(1,128)}', space=vmem, size = 0x12000, scoped, tag = 'internal scratch']
  %s0 = inlined_call_operand.vmem [shape: bf16[2048,48], index: 0, kind: input, shape index: {}]
  %s1 = inlined_call_operand.vmem [shape: bf16[48,128], index: 1, kind: input, shape index: {}]
  %s2 = inlined_call_operand.vmem [shape: f32[1,128], index: 2, kind: input, shape index: {}]
  %s3 = inlined_call_operand.vmem [shape: f32[1,128], index: 3, kind: input, shape index: {}]
  %s4 = inlined_call_operand.vmem [shape: f32[1,128], index: 4, kind: input, shape index: {}]
  %s5 = inlined_call_operand.vmem [shape: f32[2048,128], index: 5, kind: output, shape index: {}]
  %s6 = sld [smem:[#allocation0]]
  $region53: #{_lambda_.14} parent=0
    _
  %s8 = ssub.s32 1, %s6
  %s9 = scalar_select 0, %s8, %s6
  loop: start=0, step=1, limit=6
  $region2: #{_lambda_.14} parent=0 // loop_pre_header
    _
  $region3: #{_lambda_.14} parent=0 // loop_header
    %s11 = sphi 0, %s15
    %p12 = scmp.ge.s32.totalorder %s11, 6
    %s21 = sphi 0, %s23
    %s24 = sphi 0, %s21
    %s25 = sphi 0, %s24
    %s41 = sphi 0, %s25
    %s45 = sphi 0, %s45
    %s47 = sphi 0, %s45
    %s48 = sphi 0, %s47
    %s62 = sphi 0, %s48
    %s66 = sphi 0, %s66
    %s68 = sphi 0, %s66
    %s69 = sphi 0, %s68
    %s83 = sphi 0, %s69
    %s87 = sphi 0, %s87
    %s89 = sphi 0, %s87
    %s90 = sphi 0, %s89
    %s104 = sphi 0, %s90
    %s108 = sphi 0, %s108
    %s110 = sphi 0, %s108
    %s111 = sphi 0, %s110
    %s125 = sphi 0, %s111
    %s131 = sphi 0, %s133
    %s134 = sphi 0, %s131
    %s135 = sphi 0, %s134
    %s151 = sphi 0, %s135
  $region4: #{_lambda_.14} parent=0 // loop_header_branch
    %14 = sbr.rel (%p12) target = $region8
  $region5: #{_lambda_.14} parent=0 // loop_body
    %s16 = ssub.s32 %s11, 1
    %s17 = ssub.s32 %s11, 2
    %s18 = sadd.s32 %s11, 1
    %s19 = ssub.s32 %s11, %s18
    %p20 = scmp.eq.s32.totalorder %s19, 0
    %s22 = sadd.s32 %s21, 1
    %s23 = scalar_select %p20, %s21, %s22
    %p26 = pneg %p20
    %p27 = scmp.eq.s32.totalorder %s11, 3
    %p28 = por %p26, %p27
    %p29 = scmp.ne.s32.totalorder %s21, %s24
    %p30 = scmp.eq.s32.totalorder %s11, 0
    %p31 = por %p29, %p30
    %p32 = scmp.ne.s32.totalorder %s21, %s24
    %p33 = scmp.eq.s32.totalorder %s16, 3
    %p34 = por %p32, %p33
    %p35 = scmp.ne.s32.totalorder %s24, %s25
    %p36 = scmp.eq.s32.totalorder %s16, 0
    %p37 = por %p35, %p36
    %p38 = scmp.ne.s32.totalorder %s24, %s25
    %p39 = scmp.eq.s32.totalorder %s17, 3
    %p40 = por %p38, %p39
    %p42 = scmp.ne.s32.totalorder %s25, %s41
    %p43 = scmp.eq.s32.totalorder %s17, 0
    %p44 = por %p42, %p43
    %s46 = sadd.s32 %s45, 1
    %p49 = scmp.eq.s32.totalorder %s11, 3
    %p50 = scmp.ne.s32.totalorder %s45, %s47
    %p51 = scmp.eq.s32.totalorder %s11, 0
    %p52 = por %p50, %p51
    %p53 = scmp.ne.s32.totalorder %s45, %s47
    %p54 = scmp.eq.s32.totalorder %s16, 3
    %p55 = por %p53, %p54
    %p56 = scmp.ne.s32.totalorder %s47, %s48
    %p57 = scmp.eq.s32.totalorder %s16, 0
    %p58 = por %p56, %p57
    %p59 = scmp.ne.s32.totalorder %s47, %s48
    %p60 = scmp.eq.s32.totalorder %s17, 3
    %p61 = por %p59, %p60
    %p63 = scmp.ne.s32.totalorder %s48, %s62
    %p64 = scmp.eq.s32.totalorder %s17, 0
    %p65 = por %p63, %p64
    %s67 = sadd.s32 %s66, 1
    %p70 = scmp.eq.s32.totalorder %s11, 3
    %p71 = scmp.ne.s32.totalorder %s66, %s68
    %p72 = scmp.eq.s32.totalorder %s11, 0
    %p73 = por %p71, %p72
    %p74 = scmp.ne.s32.totalorder %s66, %s68
    %p75 = scmp.eq.s32.totalorder %s16, 3
    %p76 = por %p74, %p75
    %p77 = scmp.ne.s32.totalorder %s68, %s69
    %p78 = scmp.eq.s32.totalorder %s16, 0
    %p79 = por %p77, %p78
    %p80 = scmp.ne.s32.totalorder %s68, %s69
    %p81 = scmp.eq.s32.totalorder %s17, 3
    %p82 = por %p80, %p81
    %p84 = scmp.ne.s32.totalorder %s69, %s83
    %p85 = scmp.eq.s32.totalorder %s17, 0
    %p86 = por %p84, %p85
    %s88 = sadd.s32 %s87, 1
    %p91 = scmp.eq.s32.totalorder %s11, 3
    %p92 = scmp.ne.s32.totalorder %s87, %s89
    %p93 = scmp.eq.s32.totalorder %s11, 0
    %p94 = por %p92, %p93
    %p95 = scmp.ne.s32.totalorder %s87, %s89
    %p96 = scmp.eq.s32.totalorder %s16, 3
    %p97 = por %p95, %p96
    %p98 = scmp.ne.s32.totalorder %s89, %s90
    %p99 = scmp.eq.s32.totalorder %s16, 0
    %p100 = por %p98, %p99
    %p101 = scmp.ne.s32.totalorder %s89, %s90
    %p102 = scmp.eq.s32.totalorder %s17, 3
    %p103 = por %p101, %p102
    %p105 = scmp.ne.s32.totalorder %s90, %s104
    %p106 = scmp.eq.s32.totalorder %s17, 0
    %p107 = por %p105, %p106
    %s109 = sadd.s32 %s108, 1
    %p112 = scmp.eq.s32.totalorder %s11, 3
    %p113 = scmp.ne.s32.totalorder %s108, %s110
    %p114 = scmp.eq.s32.totalorder %s11, 0
    %p115 = por %p113, %p114
    %p116 = scmp.ne.s32.totalorder %s108, %s110
    %p117 = scmp.eq.s32.totalorder %s16, 3
    %p118 = por %p116, %p117
    %p119 = scmp.ne.s32.totalorder %s110, %s111
    %p120 = scmp.eq.s32.totalorder %s16, 0
    %p121 = por %p119, %p120
    %p122 = scmp.ne.s32.totalorder %s110, %s111
    %p123 = scmp.eq.s32.totalorder %s17, 3
    %p124 = por %p122, %p123
    %p126 = scmp.ne.s32.totalorder %s111, %s125
    %p127 = scmp.eq.s32.totalorder %s17, 0
    %p128 = por %p126, %p127
    %s129 = ssub.s32 %s11, %s18
    %p130 = scmp.eq.s32.totalorder %s129, 0
    %s132 = sadd.s32 %s131, 1
    %s133 = scalar_select %p130, %s131, %s132
    %p136 = pneg %p130
    %p137 = scmp.eq.s32.totalorder %s11, 3
    %p138 = por %p136, %p137
    %p139 = scmp.ne.s32.totalorder %s131, %s134
    %p140 = scmp.eq.s32.totalorder %s11, 0
    %p141 = por %p139, %p140
    %p142 = scmp.ne.s32.totalorder %s131, %s134
    %p143 = scmp.eq.s32.totalorder %s16, 3
    %p144 = por %p142, %p143
    %p145 = scmp.ne.s32.totalorder %s134, %s135
    %p146 = scmp.eq.s32.totalorder %s16, 0
    %p147 = por %p145, %p146
    %p148 = scmp.ne.s32.totalorder %s134, %s135
    %p149 = scmp.eq.s32.totalorder %s17, 3
    %p150 = por %p148, %p149
    %p152 = scmp.ne.s32.totalorder %s135, %s151
    %p153 = scmp.eq.s32.totalorder %s17, 0
    %p154 = por %p152, %p153
    %p155 = scmp.le.s32.totalorder 1, %s11
    %p156 = scmp.lt.s32.totalorder %s11, 5
    %p157 = pnand %p155, %p156
    %p158 = pneg %p157
    // Predicated region
    $region9: #{_lambda_.14} parent=5 // pred_check
      _
    $region10: #{_lambda_.14} parent=5 // pred_check_branch
      %160 = sbr.rel (%p157) target = $region12
    $region11: #{_lambda_.14} parent=5 // pred_region
      %s161 = ssub.s32 %s11, 1
      // Predicated region
      $region13: #{_lambda_.14} parent=11 // pred_check
        %p162 = pneg %p58
      $region14: #{_lambda_.14} parent=11 // pred_check_branch
        %164 = sbr.rel (%p162) target = $region16
      $region15: #{_lambda_.14} parent=11 // pred_region
        _
      $region16: #{_lambda_.14} parent=11 // pred_fallthru
        _
      // Predicated region
      $region17: #{_lambda_.14} parent=11 // pred_check
        %p165 = pneg %p79
      $region18: #{_lambda_.14} parent=11 // pred_check_branch
        %167 = sbr.rel (%p165) target = $region20
      $region19: #{_lambda_.14} parent=11 // pred_region
        _
      $region20: #{_lambda_.14} parent=11 // pred_fallthru
        _
      // Predicated region
      $region21: #{_lambda_.14} parent=11 // pred_check
        %p168 = pneg %p100
      $region22: #{_lambda_.14} parent=11 // pred_check_branch
        %170 = sbr.rel (%p168) target = $region24
      $region23: #{_lambda_.14} parent=11 // pred_region
        _
      $region24: #{_lambda_.14} parent=11 // pred_fallthru
        _
      // Predicated region
      $region25: #{_lambda_.14} parent=11 // pred_check
        %p171 = pneg %p121
      $region26: #{_lambda_.14} parent=11 // pred_check_branch
        %173 = sbr.rel (%p171) target = $region28
      $region27: #{_lambda_.14} parent=11 // pred_region
        _
      $region28: #{_lambda_.14} parent=11 // pred_fallthru
        _
    $region12: #{_lambda_.14} parent=5 // pred_fallthru
      _
    %p174 = scmp.lt.s32.totalorder %s11, 4
    // Predicated region
    $region29: #{_lambda_.14} parent=5 // pred_check
      %p175 = pneg %p174
    $region30: #{_lambda_.14} parent=5 // pred_check_branch
      %177 = sbr.rel (%p175) target = $region32
    $region31: #{_lambda_.14} parent=5 // pred_region
      // Predicated region
      $region33: #{_lambda_.14} parent=31 // pred_check
        %p178 = pneg %p31
      $region34: #{_lambda_.14} parent=31 // pred_check_branch
        %180 = sbr.rel (%p178) target = $region36
      $region35: #{_lambda_.14} parent=31 // pred_region
        %s181 = smul.u32 64, %s11
        %p182 = scmp.lt.s32.totalorder %s181, 255
        %s183 = scalar_select %p182, %s181, 255
        %s184 = smul.addr %s183, 4
        %s185 = scalar_lea.vmem %s0, %s184
        %s186 = smul.u32 64, %s11
      $region36: #{_lambda_.14} parent=31 // pred_fallthru
        _
    $region32: #{_lambda_.14} parent=5 // pred_fallthru
      _
    %p187 = scmp.le.s32.totalorder 1, %s11
    %p188 = scmp.lt.s32.totalorder %s11, 5
    %p189 = pnand %p187, %p188
    %p190 = pneg %p189
    // Predicated region
    $region37: #{_lambda_.14} parent=5 // pred_check
      _
    $region38: #{_lambda_.14} parent=5 // pred_check_branch
      %192 = sbr.rel (%p189) target = $region40
    $region39: #{_lambda_.14} parent=5 // pred_region
      %s193 = ssub.s32 %s11, 1
      %s194 = smul.u32 64, %s16
      %p195 = scmp.lt.s32.totalorder %s194, 255
      %s196 = scalar_select %p195, %s194, 255
      %s197 = smul.addr %s196, 4
      %s198 = scalar_lea.vmem %s0, %s197
      %p199 = pneg %p37
      %p200 = pneg %p34
      %p201 = pneg %p58
      %p202 = pneg %p55
      %p203 = pneg %p79
      %p204 = pneg %p76
      %p205 = pneg %p100
      %p206 = pneg %p97
      %p207 = pneg %p121
      %p208 = pneg %p118
      %p209 = pneg %p147
      %p210 = pneg %p144
      %s211 = smul.u32 64, %s16
      %p212 = scmp.lt.s32.totalorder %s211, 255
      %s213 = scalar_select %p212, %s211, 255
      %s214 = smul.addr %s213, 8
      %s215 = scalar_lea.vmem %s5, %s214
      %s216 = smul.u32 64, %s16
      %p217 = scmp.lt.s32.totalorder %s216, 255
      %s218 = scalar_select %p217, %s216, 255
      %s219 = smul.addr %s218, 4
      %s220 = scalar_lea.vmem %s0, %s219
      %s221 = smul.u32 64, %s16
      %s222 = smul.u32 64, %s16
      %p223 = scmp.lt.s32.totalorder %s222, 255
      %s224 = scalar_select %p223, %s222, 255
      %s225 = smul.addr %s224, 8
      %s226 = scalar_lea.vmem %s5, %s225
      %s227 = smul.u32 64, %s16
      %v229 = vld [vmem:[%s220] sm:$0xf]
      %v230 = vld [vmem:[%s220 + $0x4] sm:$0xf]
      %v231 = vld [vmem:[%s220 + $0x8] sm:$0xf]
      %v232 = vld [vmem:[%s220 + $0xc] sm:$0xf]
      %v233 = vld [vmem:[%s220 + $0x10] sm:$0xf]
      %v234 = vld [vmem:[%s220 + $0x14] sm:$0xf]
      %v235 = vld [vmem:[%s220 + $0x18] sm:$0xf]
      %v236 = vld [vmem:[%s220 + $0x1c] sm:$0xf]
      %v237 = vld [vmem:[%s220 + $0x20] sm:$0xf]
      %v238 = vld [vmem:[%s220 + $0x24] sm:$0xf]
      %v239 = vld [vmem:[%s220 + $0x28] sm:$0xf]
      %v240 = vld [vmem:[%s220 + $0x2c] sm:$0xf]
      %v241 = vld [vmem:[%s220 + $0x30] sm:$0xf]
      %v242 = vld [vmem:[%s220 + $0x34] sm:$0xf]
      %v243 = vld [vmem:[%s220 + $0x38] sm:$0xf]
      %v244 = vld [vmem:[%s220 + $0x3c] sm:$0xf]
      %v245 = vld [vmem:[%s220 + $0x40] sm:$0xf]
      %v246 = vld [vmem:[%s220 + $0x44] sm:$0xf]
      %v247 = vld [vmem:[%s220 + $0x48] sm:$0xf]
      %v248 = vld [vmem:[%s220 + $0x4c] sm:$0xf]
      %v249 = vld [vmem:[%s220 + $0x50] sm:$0xf]
      %v250 = vld [vmem:[%s220 + $0x54] sm:$0xf]
      %v251 = vld [vmem:[%s220 + $0x58] sm:$0xf]
      %v252 = vld [vmem:[%s220 + $0x5c] sm:$0xf]
      %v253 = vld [vmem:[%s220 + $0x60] sm:$0xf]
      %v254 = vld [vmem:[%s220 + $0x64] sm:$0xf]
      %v255 = vld [vmem:[%s220 + $0x68] sm:$0xf]
      %v256 = vld [vmem:[%s220 + $0x6c] sm:$0xf]
      %v257 = vld [vmem:[%s220 + $0x70] sm:$0xf]
      %v258 = vld [vmem:[%s220 + $0x74] sm:$0xf]
      %v259 = vld [vmem:[%s220 + $0x78] sm:$0xf]
      %v260 = vld [vmem:[%s220 + $0x7c] sm:$0xf]
      %v261 = vld [vmem:[%s220 + $0x80] sm:$0xf]
      %v262 = vld [vmem:[%s220 + $0x84] sm:$0xf]
      %v263 = vld [vmem:[%s220 + $0x88] sm:$0xf]
      %v264 = vld [vmem:[%s220 + $0x8c] sm:$0xf]
      %v265 = vld [vmem:[%s220 + $0x90] sm:$0xf]
      %v266 = vld [vmem:[%s220 + $0x94] sm:$0xf]
      %v267 = vld [vmem:[%s220 + $0x98] sm:$0xf]
      %v268 = vld [vmem:[%s220 + $0x9c] sm:$0xf]
      %v269 = vld [vmem:[%s220 + $0xa0] sm:$0xf]
      %v270 = vld [vmem:[%s220 + $0xa4] sm:$0xf]
      %v271 = vld [vmem:[%s220 + $0xa8] sm:$0xf]
      %v272 = vld [vmem:[%s220 + $0xac] sm:$0xf]
      %v273 = vld [vmem:[%s220 + $0xb0] sm:$0xf]
      %v274 = vld [vmem:[%s220 + $0xb4] sm:$0xf]
      %v275 = vld [vmem:[%s220 + $0xb8] sm:$0xf]
      %v276 = vld [vmem:[%s220 + $0xbc] sm:$0xf]
      %v277 = vld [vmem:[%s220 + $0xc0] sm:$0xf]
      %v278 = vld [vmem:[%s220 + $0xc4] sm:$0xf]
      %v279 = vld [vmem:[%s220 + $0xc8] sm:$0xf]
      %v280 = vld [vmem:[%s220 + $0xcc] sm:$0xf]
      %v281 = vld [vmem:[%s220 + $0xd0] sm:$0xf]
      %v282 = vld [vmem:[%s220 + $0xd4] sm:$0xf]
      %v283 = vld [vmem:[%s220 + $0xd8] sm:$0xf]
      %v284 = vld [vmem:[%s220 + $0xdc] sm:$0xf]
      %v285 = vld [vmem:[%s220 + $0xe0] sm:$0xf]
      %v286 = vld [vmem:[%s220 + $0xe4] sm:$0xf]
      %v287 = vld [vmem:[%s220 + $0xe8] sm:$0xf]
      %v288 = vld [vmem:[%s220 + $0xec] sm:$0xf]
      %v289 = vld [vmem:[%s220 + $0xf0] sm:$0xf]
      %v290 = vld [vmem:[%s220 + $0xf4] sm:$0xf]
      %v291 = vld [vmem:[%s220 + $0xf8] sm:$0xf]
      %v292 = vld [vmem:[%s220 + $0xfc] sm:$0xf]
      %v293 = vld [vmem:[%s1] sm:$0xf]
      %v294 = vld [vmem:[%s1 + $0x4] sm:$0xf]
      %v295 = vld [vmem:[%s1 + $0x8] sm:$0xf]
      %v296 = vld [vmem:[%s1 + $0xc] sm:$0xf]
      %v297 = vld [vmem:[%s1 + $0x10] sm:$0xf]
      %v298 = vld [vmem:[%s1 + $0x14] sm:$0xf]
      %v299 = vld [vmem:[%s2] sm:$0x1]
      %v301 = vlaneseq
      %v302 = vshrl.u32 %v301, 7
      %v303 = vsub.s32 0, %v302
      %v304 = vrot.slane %v299, %v303
      %v370 = vunpack.c.l.b16 %v229
      %v371 = vunpack.c.l.b16 %v230
      %v372 = vunpack.c.l.b16 %v231
      %v373 = vunpack.c.l.b16 %v232
      %v374 = vunpack.c.l.b16 %v233
      %v375 = vunpack.c.l.b16 %v234
      %v376 = vunpack.c.l.b16 %v235
      %v377 = vunpack.c.l.b16 %v236
      %v378 = vunpack.c.l.b16 %v237
      %v379 = vunpack.c.l.b16 %v238
      %v380 = vunpack.c.l.b16 %v239
      %v381 = vunpack.c.l.b16 %v240
      %v382 = vunpack.c.l.b16 %v241
      %v383 = vunpack.c.l.b16 %v242
      %v384 = vunpack.c.l.b16 %v243
      %v385 = vunpack.c.l.b16 %v244
      %v386 = vunpack.c.l.b16 %v245
      %v387 = vunpack.c.l.b16 %v246
      %v388 = vunpack.c.l.b16 %v247
      %v389 = vunpack.c.l.b16 %v248
      %v390 = vunpack.c.l.b16 %v249
      %v391 = vunpack.c.l.b16 %v250
      %v392 = vunpack.c.l.b16 %v251
      %v393 = vunpack.c.l.b16 %v252
      %v394 = vunpack.c.l.b16 %v253
      %v395 = vunpack.c.l.b16 %v254
      %v396 = vunpack.c.l.b16 %v255
      %v397 = vunpack.c.l.b16 %v256
      %v398 = vunpack.c.l.b16 %v257
      %v399 = vunpack.c.l.b16 %v258
      %v400 = vunpack.c.l.b16 %v259
      %v401 = vunpack.c.l.b16 %v260
      %v402 = vunpack.c.l.b16 %v261
      %v403 = vunpack.c.l.b16 %v262
      %v404 = vunpack.c.l.b16 %v263
      %v405 = vunpack.c.l.b16 %v264
      %v406 = vunpack.c.l.b16 %v265
      %v407 = vunpack.c.l.b16 %v266
      %v408 = vunpack.c.l.b16 %v267
      %v409 = vunpack.c.l.b16 %v268
      %v410 = vunpack.c.l.b16 %v269
      %v411 = vunpack.c.l.b16 %v270
      %v412 = vunpack.c.l.b16 %v271
      %v413 = vunpack.c.l.b16 %v272
      %v414 = vunpack.c.l.b16 %v273
      %v415 = vunpack.c.l.b16 %v274
      %v416 = vunpack.c.l.b16 %v275
      %v417 = vunpack.c.l.b16 %v276
      %v418 = vunpack.c.l.b16 %v277
      %v419 = vunpack.c.l.b16 %v278
      %v420 = vunpack.c.l.b16 %v279
      %v421 = vunpack.c.l.b16 %v280
      %v422 = vunpack.c.l.b16 %v281
      %v423 = vunpack.c.l.b16 %v282
      %v424 = vunpack.c.l.b16 %v283
      %v425 = vunpack.c.l.b16 %v284
      %v426 = vunpack.c.l.b16 %v285
      %v427 = vunpack.c.l.b16 %v286
      %v428 = vunpack.c.l.b16 %v287
      %v429 = vunpack.c.l.b16 %v288
      %v430 = vunpack.c.l.b16 %v289
      %v431 = vunpack.c.l.b16 %v290
      %v432 = vunpack.c.l.b16 %v291
      %v433 = vunpack.c.l.b16 %v292
      %v434 = vpack.c.b16 %v371, %v370
      %v435 = vpack.c.b16 %v373, %v372
      %v436 = vpack.c.b16 %v375, %v374
      %v437 = vpack.c.b16 %v377, %v376
      %v438 = vpack.c.b16 %v379, %v378
      %v439 = vpack.c.b16 %v381, %v380
      %v440 = vpack.c.b16 %v383, %v382
      %v441 = vpack.c.b16 %v385, %v384
      %v442 = vpack.c.b16 %v387, %v386
      %v443 = vpack.c.b16 %v389, %v388
      %v444 = vpack.c.b16 %v391, %v390
      %v445 = vpack.c.b16 %v393, %v392
      %v446 = vpack.c.b16 %v395, %v394
      %v447 = vpack.c.b16 %v397, %v396
      %v448 = vpack.c.b16 %v399, %v398
      %v449 = vpack.c.b16 %v401, %v400
      %v450 = vpack.c.b16 %v403, %v402
      %v451 = vpack.c.b16 %v405, %v404
      %v452 = vpack.c.b16 %v407, %v406
      %v453 = vpack.c.b16 %v409, %v408
      %v454 = vpack.c.b16 %v411, %v410
      %v455 = vpack.c.b16 %v413, %v412
      %v456 = vpack.c.b16 %v415, %v414
      %v457 = vpack.c.b16 %v417, %v416
      %v458 = vpack.c.b16 %v419, %v418
      %v459 = vpack.c.b16 %v421, %v420
      %v460 = vpack.c.b16 %v423, %v422
      %v461 = vpack.c.b16 %v425, %v424
      %v462 = vpack.c.b16 %v427, %v426
      %v463 = vpack.c.b16 %v429, %v428
      %v464 = vpack.c.b16 %v431, %v430
      %v465 = vpack.c.b16 %v433, %v432
      %v472 = vunpack.c.l.b16 %v293
      %v473 = vunpack.c.l.b16 %v294
      %v474 = vunpack.c.l.b16 %v295
      %v475 = vunpack.c.l.b16 %v296
      %v476 = vunpack.c.l.b16 %v297
      %v477 = vunpack.c.l.b16 %v298
      %v478 = vpack.c.b16 %v473, %v472
      %v479 = vpack.c.b16 %v475, %v474
      %v480 = vpack.c.b16 %v477, %v476
      %vm484 = vcmask 392192
      %v486 = vsel %vm484, %v434, 0
      %v489 = vsel %vm484, %v435, 0
      %v492 = vsel %vm484, %v436, 0
      %v495 = vsel %vm484, %v437, 0
      %v498 = vsel %vm484, %v438, 0
      %v501 = vsel %vm484, %v439, 0
      %v504 = vsel %vm484, %v440, 0
      %v507 = vsel %vm484, %v441, 0
      %v510 = vsel %vm484, %v442, 0
      %v513 = vsel %vm484, %v443, 0
      %v516 = vsel %vm484, %v444, 0
      %v519 = vsel %vm484, %v445, 0
      %v522 = vsel %vm484, %v446, 0
      %v525 = vsel %vm484, %v447, 0
      %v528 = vsel %vm484, %v448, 0
      %v531 = vsel %vm484, %v449, 0
      %v534 = vsel %vm484, %v450, 0
      %v537 = vsel %vm484, %v451, 0
      %v540 = vsel %vm484, %v452, 0
      %v543 = vsel %vm484, %v453, 0
      %v546 = vsel %vm484, %v454, 0
      %v549 = vsel %vm484, %v455, 0
      %v552 = vsel %vm484, %v456, 0
      %v555 = vsel %vm484, %v457, 0
      %v558 = vsel %vm484, %v458, 0
      %v561 = vsel %vm484, %v459, 0
      %v564 = vsel %vm484, %v460, 0
      %v567 = vsel %vm484, %v461, 0
      %v570 = vsel %vm484, %v462, 0
      %v573 = vsel %vm484, %v463, 0
      %v576 = vsel %vm484, %v464, 0
      %v579 = vsel %vm484, %v465, 0
      %581 = vmatprep.subr.bf16.mxu0 0
      %582 = vmatpush1.bf16.msra.mxu0 0
      %583 = vmatprep.subr.bf16.mxu0 0
      %584 = vmatpush1.bf16.msra.mxu0 0
      %585 = vmatprep.subr.bf16.mxu0 0
      %586 = vmatpush1.bf16.msra.mxu0 0
      %587 = vmatprep.subr.bf16.mxu0 0
      %588 = vmatpush1.bf16.msra.mxu0 0
      %589 = vmatprep.subr.bf16.mxu0 0
      %590 = vmatpush1.bf16.msra.mxu0 0
      %591 = vmatprep.subr.bf16.mxu0 0
      %592 = vmatpush1.bf16.msra.mxu0 %v480
      %593 = vmatprep.subr.bf16.mxu0 0
      %594 = vmatpush1.bf16.msra.mxu0 %v479
      %595 = vmatprep.subr.bf16.mxu0 0
      %596 = vmatpush1.bf16.msra.mxu0 %v478
      %597 = vmatprep.subr.bf16.mxu0 0
      %598 = vmatpush2.bf16.msra.mxu0 0
      %599 = vmatprep.subr.bf16.mxu0 0
      %600 = vmatpush2.bf16.msra.mxu0 0
      %601 = vmatprep.subr.bf16.mxu0 0
      %602 = vmatpush2.bf16.msra.mxu0 0
      %603 = vmatprep.subr.bf16.mxu0 0
      %604 = vmatpush2.bf16.msra.mxu0 0
      %605 = vmatprep.subr.bf16.mxu0 0
      %606 = vmatpush2.bf16.msra.mxu0 0
      %607 = vmatprep.subr.bf16.mxu0 0
      %608 = vmatpush2.bf16.msra.mxu0 0
      %609 = vmatprep.subr.bf16.mxu0 0
      %610 = vmatpush2.bf16.msra.mxu0 0
      %611 = vmatprep.subr.bf16.mxu0 0
      %612 = vmatpush2.bf16.msra.mxu0 0
      %613 = vmatprep.mubr.bf16.mxu0 0
      %614 = vmatmul.mubr.bf16.gmra.mxu0 %v486
      %v615 = vpop.f32.mrf.mxu0
      %v616 = vadd.f32 %v304, %v615
      %v617 = vpop.f32.mrf.mxu0
      %v618 = vpop.f32.mrf.mxu0
      %v619 = vadd.f32 %v304, %v618
      %v620 = vpop.f32.mrf.mxu0
      %621 = vmatprep.mubr.bf16.mxu0 0
      %622 = vmatmul.mubr.bf16.gmra.mxu0 %v489
      %v623 = vpop.f32.mrf.mxu0
      %v624 = vadd.f32 %v304, %v623
      %v625 = vpop.f32.mrf.mxu0
      %v626 = vpop.f32.mrf.mxu0
      %v627 = vadd.f32 %v304, %v626
      %v628 = vpop.f32.mrf.mxu0
      %629 = vmatprep.mubr.bf16.mxu0 0
      %630 = vmatmul.mubr.bf16.gmra.mxu0 %v492
      %v631 = vpop.f32.mrf.mxu0
      %v632 = vadd.f32 %v304, %v631
      %v633 = vpop.f32.mrf.mxu0
      %v634 = vpop.f32.mrf.mxu0
      %v635 = vadd.f32 %v304, %v634
      %v636 = vpop.f32.mrf.mxu0
      %637 = vmatprep.mubr.bf16.mxu0 0
      %638 = vmatmul.mubr.bf16.gmra.mxu0 %v495
      %v639 = vpop.f32.mrf.mxu0
      %v640 = vadd.f32 %v304, %v639
      %v641 = vpop.f32.mrf.mxu0
      %v642 = vpop.f32.mrf.mxu0
      %v643 = vadd.f32 %v304, %v642
      %v644 = vpop.f32.mrf.mxu0
      %645 = vmatprep.mubr.bf16.mxu0 0
      %646 = vmatmul.mubr.bf16.gmra.mxu0 %v498
      %v647 = vpop.f32.mrf.mxu0
      %v648 = vadd.f32 %v304, %v647
      %v649 = vpop.f32.mrf.mxu0
      %v650 = vpop.f32.mrf.mxu0
      %v651 = vadd.f32 %v304, %v650
      %v652 = vpop.f32.mrf.mxu0
      %653 = vmatprep.mubr.bf16.mxu0 0
      %654 = vmatmul.mubr.bf16.gmra.mxu0 %v501
      %v655 = vpop.f32.mrf.mxu0
      %v656 = vadd.f32 %v304, %v655
      %v657 = vpop.f32.mrf.mxu0
      %v658 = vpop.f32.mrf.mxu0
      %v659 = vadd.f32 %v304, %v658
      %v660 = vpop.f32.mrf.mxu0
      %661 = vmatprep.mubr.bf16.mxu0 0
      %662 = vmatmul.mubr.bf16.gmra.mxu0 %v504
      %v663 = vpop.f32.mrf.mxu0
      %v664 = vadd.f32 %v304, %v663
      %v665 = vpop.f32.mrf.mxu0
      %v666 = vpop.f32.mrf.mxu0
      %v667 = vadd.f32 %v304, %v666
      %v668 = vpop.f32.mrf.mxu0
      %669 = vmatprep.mubr.bf16.mxu0 0
      %670 = vmatmul.mubr.bf16.gmra.mxu0 %v507
      %v671 = vpop.f32.mrf.mxu0
      %v672 = vadd.f32 %v304, %v671
      %v673 = vpop.f32.mrf.mxu0
      %v674 = vpop.f32.mrf.mxu0
      %v675 = vadd.f32 %v304, %v674
      %v676 = vpop.f32.mrf.mxu0
      %677 = vmatprep.mubr.bf16.mxu0 0
      %678 = vmatmul.mubr.bf16.gmra.mxu0 %v510
      %v679 = vpop.f32.mrf.mxu0
      %v680 = vadd.f32 %v304, %v679
      %v681 = vpop.f32.mrf.mxu0
      %v682 = vpop.f32.mrf.mxu0
      %v683 = vadd.f32 %v304, %v682
      %v684 = vpop.f32.mrf.mxu0
      %685 = vmatprep.mubr.bf16.mxu0 0
      %686 = vmatmul.mubr.bf16.gmra.mxu0 %v513
      %v687 = vpop.f32.mrf.mxu0
      %v688 = vadd.f32 %v304, %v687
      %v689 = vpop.f32.mrf.mxu0
      %v690 = vpop.f32.mrf.mxu0
      %v691 = vadd.f32 %v304, %v690
      %v692 = vpop.f32.mrf.mxu0
      %693 = vmatprep.mubr.bf16.mxu0 0
      %694 = vmatmul.mubr.bf16.gmra.mxu0 %v516
      %v695 = vpop.f32.mrf.mxu0
      %v696 = vadd.f32 %v304, %v695
      %v697 = vpop.f32.mrf.mxu0
      %v698 = vpop.f32.mrf.mxu0
      %v699 = vadd.f32 %v304, %v698
      %v700 = vpop.f32.mrf.mxu0
      %701 = vmatprep.mubr.bf16.mxu0 0
      %702 = vmatmul.mubr.bf16.gmra.mxu0 %v519
      %v703 = vpop.f32.mrf.mxu0
      %v704 = vadd.f32 %v304, %v703
      %v705 = vpop.f32.mrf.mxu0
      %v706 = vpop.f32.mrf.mxu0
      %v707 = vadd.f32 %v304, %v706
      %v708 = vpop.f32.mrf.mxu0
      %709 = vmatprep.mubr.bf16.mxu0 0
      %710 = vmatmul.mubr.bf16.gmra.mxu0 %v522
      %v711 = vpop.f32.mrf.mxu0
      %v712 = vadd.f32 %v304, %v711
      %v713 = vpop.f32.mrf.mxu0
      %v714 = vpop.f32.mrf.mxu0
      %v715 = vadd.f32 %v304, %v714
      %v716 = vpop.f32.mrf.mxu0
      %717 = vmatprep.mubr.bf16.mxu0 0
      %718 = vmatmul.mubr.bf16.gmra.mxu0 %v525
      %v719 = vpop.f32.mrf.mxu0
      %v720 = vadd.f32 %v304, %v719
      %v721 = vpop.f32.mrf.mxu0
      %v722 = vpop.f32.mrf.mxu0
      %v723 = vadd.f32 %v304, %v722
      %v724 = vpop.f32.mrf.mxu0
      %725 = vmatprep.mubr.bf16.mxu0 0
      %726 = vmatmul.mubr.bf16.gmra.mxu0 %v528
      %v727 = vpop.f32.mrf.mxu0
      %v728 = vadd.f32 %v304, %v727
      %v729 = vpop.f32.mrf.mxu0
      %v730 = vpop.f32.mrf.mxu0
      %v731 = vadd.f32 %v304, %v730
      %v732 = vpop.f32.mrf.mxu0
      %733 = vmatprep.mubr.bf16.mxu0 0
      %734 = vmatmul.mubr.bf16.gmra.mxu0 %v531
      %v735 = vpop.f32.mrf.mxu0
      %v736 = vadd.f32 %v304, %v735
      %v737 = vpop.f32.mrf.mxu0
      %v738 = vpop.f32.mrf.mxu0
      %v739 = vadd.f32 %v304, %v738
      %v740 = vpop.f32.mrf.mxu0
      %741 = vmatprep.mubr.bf16.mxu0 0
      %742 = vmatmul.mubr.bf16.gmra.mxu0 %v534
      %v743 = vpop.f32.mrf.mxu0
      %v744 = vadd.f32 %v304, %v743
      %v745 = vpop.f32.mrf.mxu0
      %v746 = vpop.f32.mrf.mxu0
      %v747 = vadd.f32 %v304, %v746
      %v748 = vpop.f32.mrf.mxu0
      %749 = vmatprep.mubr.bf16.mxu0 0
      %750 = vmatmul.mubr.bf16.gmra.mxu0 %v537
      %v751 = vpop.f32.mrf.mxu0
      %v752 = vadd.f32 %v304, %v751
      %v753 = vpop.f32.mrf.mxu0
      %v754 = vpop.f32.mrf.mxu0
      %v755 = vadd.f32 %v304, %v754
      %v756 = vpop.f32.mrf.mxu0
      %757 = vmatprep.mubr.bf16.mxu0 0
      %758 = vmatmul.mubr.bf16.gmra.mxu0 %v540
      %v759 = vpop.f32.mrf.mxu0
      %v760 = vadd.f32 %v304, %v759
      %v761 = vpop.f32.mrf.mxu0
      %v762 = vpop.f32.mrf.mxu0
      %v763 = vadd.f32 %v304, %v762
      %v764 = vpop.f32.mrf.mxu0
      %765 = vmatprep.mubr.bf16.mxu0 0
      %766 = vmatmul.mubr.bf16.gmra.mxu0 %v543
      %v767 = vpop.f32.mrf.mxu0
      %v768 = vadd.f32 %v304, %v767
      %v769 = vpop.f32.mrf.mxu0
      %v770 = vpop.f32.mrf.mxu0
      %v771 = vadd.f32 %v304, %v770
      %v772 = vpop.f32.mrf.mxu0
      %773 = vmatprep.mubr.bf16.mxu0 0
      %774 = vmatmul.mubr.bf16.gmra.mxu0 %v546
      %v775 = vpop.f32.mrf.mxu0
      %v776 = vadd.f32 %v304, %v775
      %v777 = vpop.f32.mrf.mxu0
      %v778 = vpop.f32.mrf.mxu0
      %v779 = vadd.f32 %v304, %v778
      %v780 = vpop.f32.mrf.mxu0
      %781 = vmatprep.mubr.bf16.mxu0 0
      %782 = vmatmul.mubr.bf16.gmra.mxu0 %v549
      %v783 = vpop.f32.mrf.mxu0
      %v784 = vadd.f32 %v304, %v783
      %v785 = vpop.f32.mrf.mxu0
      %v786 = vpop.f32.mrf.mxu0
      %v787 = vadd.f32 %v304, %v786
      %v788 = vpop.f32.mrf.mxu0
      %789 = vmatprep.mubr.bf16.mxu0 0
      %790 = vmatmul.mubr.bf16.gmra.mxu0 %v552
      %v791 = vpop.f32.mrf.mxu0
      %v792 = vadd.f32 %v304, %v791
      %v793 = vpop.f32.mrf.mxu0
      %v794 = vpop.f32.mrf.mxu0
      %v795 = vadd.f32 %v304, %v794
      %v796 = vpop.f32.mrf.mxu0
      %797 = vmatprep.mubr.bf16.mxu0 0
      %798 = vmatmul.mubr.bf16.gmra.mxu0 %v555
      %v799 = vpop.f32.mrf.mxu0
      %v800 = vadd.f32 %v304, %v799
      %v801 = vpop.f32.mrf.mxu0
      %v802 = vpop.f32.mrf.mxu0
      %v803 = vadd.f32 %v304, %v802
      %v804 = vpop.f32.mrf.mxu0
      %805 = vmatprep.mubr.bf16.mxu0 0
      %806 = vmatmul.mubr.bf16.gmra.mxu0 %v558
      %v807 = vpop.f32.mrf.mxu0
      %v808 = vadd.f32 %v304, %v807
      %v809 = vpop.f32.mrf.mxu0
      %v810 = vpop.f32.mrf.mxu0
      %v811 = vadd.f32 %v304, %v810
      %v812 = vpop.f32.mrf.mxu0
      %813 = vmatprep.mubr.bf16.mxu0 0
      %814 = vmatmul.mubr.bf16.gmra.mxu0 %v561
      %v815 = vpop.f32.mrf.mxu0
      %v816 = vadd.f32 %v304, %v815
      %v817 = vpop.f32.mrf.mxu0
      %v818 = vpop.f32.mrf.mxu0
      %v819 = vadd.f32 %v304, %v818
      %v820 = vpop.f32.mrf.mxu0
      %821 = vmatprep.mubr.bf16.mxu0 0
      %822 = vmatmul.mubr.bf16.gmra.mxu0 %v564
      %v823 = vpop.f32.mrf.mxu0
      %v824 = vadd.f32 %v304, %v823
      %v825 = vpop.f32.mrf.mxu0
      %v826 = vpop.f32.mrf.mxu0
      %v827 = vadd.f32 %v304, %v826
      %v828 = vpop.f32.mrf.mxu0
      %829 = vmatprep.mubr.bf16.mxu0 0
      %830 = vmatmul.mubr.bf16.gmra.mxu0 %v567
      %v831 = vpop.f32.mrf.mxu0
      %v832 = vadd.f32 %v304, %v831
      %v833 = vpop.f32.mrf.mxu0
      %v834 = vpop.f32.mrf.mxu0
      %v835 = vadd.f32 %v304, %v834
      %v836 = vpop.f32.mrf.mxu0
      %837 = vmatprep.mubr.bf16.mxu0 0
      %838 = vmatmul.mubr.bf16.gmra.mxu0 %v570
      %v839 = vpop.f32.mrf.mxu0
      %v840 = vadd.f32 %v304, %v839
      %v841 = vpop.f32.mrf.mxu0
      %v842 = vpop.f32.mrf.mxu0
      %v843 = vadd.f32 %v304, %v842
      %v844 = vpop.f32.mrf.mxu0
      %845 = vmatprep.mubr.bf16.mxu0 0
      %846 = vmatmul.mubr.bf16.gmra.mxu0 %v573
      %v847 = vpop.f32.mrf.mxu0
      %v848 = vadd.f32 %v304, %v847
      %v849 = vpop.f32.mrf.mxu0
      %v850 = vpop.f32.mrf.mxu0
      %v851 = vadd.f32 %v304, %v850
      %v852 = vpop.f32.mrf.mxu0
      %853 = vmatprep.mubr.bf16.mxu0 0
      %854 = vmatmul.mubr.bf16.gmra.mxu0 %v576
      %v855 = vpop.f32.mrf.mxu0
      %v856 = vadd.f32 %v304, %v855
      %v857 = vpop.f32.mrf.mxu0
      %v858 = vpop.f32.mrf.mxu0
      %v859 = vadd.f32 %v304, %v858
      %v860 = vpop.f32.mrf.mxu0
      %861 = vmatprep.mubr.bf16.mxu0 0
      %862 = vmatmul.mubr.bf16.gmra.mxu0 %v579
      %v863 = vpop.f32.mrf.mxu0
      %v864 = vadd.f32 %v304, %v863
      %v865 = vpop.f32.mrf.mxu0
      %v866 = vpop.f32.mrf.mxu0
      %v867 = vadd.f32 %v304, %v866
      %v868 = vpop.f32.mrf.mxu0
      %869 = vdwg.mxu0
      %870 = vst [vmem:[%s226] sm:$0xff] %v616
      %871 = vst [vmem:[%s226 + $0x8] sm:$0xff] %v619
      %872 = vst [vmem:[%s226 + $0x10] sm:$0xff] %v624
      %873 = vst [vmem:[%s226 + $0x18] sm:$0xff] %v627
      %874 = vst [vmem:[%s226 + $0x20] sm:$0xff] %v632
      %875 = vst [vmem:[%s226 + $0x28] sm:$0xff] %v635
      %876 = vst [vmem:[%s226 + $0x30] sm:$0xff] %v640
      %877 = vst [vmem:[%s226 + $0x38] sm:$0xff] %v643
      %878 = vst [vmem:[%s226 + $0x40] sm:$0xff] %v648
      %879 = vst [vmem:[%s226 + $0x48] sm:$0xff] %v651
      %880 = vst [vmem:[%s226 + $0x50] sm:$0xff] %v656
      %881 = vst [vmem:[%s226 + $0x58] sm:$0xff] %v659
      %882 = vst [vmem:[%s226 + $0x60] sm:$0xff] %v664
      %883 = vst [vmem:[%s226 + $0x68] sm:$0xff] %v667
      %884 = vst [vmem:[%s226 + $0x70] sm:$0xff] %v672
      %885 = vst [vmem:[%s226 + $0x78] sm:$0xff] %v675
      %886 = vst [vmem:[%s226 + $0x80] sm:$0xff] %v680
      %887 = vst [vmem:[%s226 + $0x88] sm:$0xff] %v683
      %888 = vst [vmem:[%s226 + $0x90] sm:$0xff] %v688
      %889 = vst [vmem:[%s226 + $0x98] sm:$0xff] %v691
      %890 = vst [vmem:[%s226 + $0xa0] sm:$0xff] %v696
      %891 = vst [vmem:[%s226 + $0xa8] sm:$0xff] %v699
      %892 = vst [vmem:[%s226 + $0xb0] sm:$0xff] %v704
      %893 = vst [vmem:[%s226 + $0xb8] sm:$0xff] %v707
      %894 = vst [vmem:[%s226 + $0xc0] sm:$0xff] %v712
      %895 = vst [vmem:[%s226 + $0xc8] sm:$0xff] %v715
      %896 = vst [vmem:[%s226 + $0xd0] sm:$0xff] %v720
      %897 = vst [vmem:[%s226 + $0xd8] sm:$0xff] %v723
      %898 = vst [vmem:[%s226 + $0xe0] sm:$0xff] %v728
      %899 = vst [vmem:[%s226 + $0xe8] sm:$0xff] %v731
      %900 = vst [vmem:[%s226 + $0xf0] sm:$0xff] %v736
      %901 = vst [vmem:[%s226 + $0xf8] sm:$0xff] %v739
      %902 = vst [vmem:[%s226 + $0x100] sm:$0xff] %v744
      %903 = vst [vmem:[%s226 + $0x108] sm:$0xff] %v747
      %904 = vst [vmem:[%s226 + $0x110] sm:$0xff] %v752
      %905 = vst [vmem:[%s226 + $0x118] sm:$0xff] %v755
      %906 = vst [vmem:[%s226 + $0x120] sm:$0xff] %v760
      %907 = vst [vmem:[%s226 + $0x128] sm:$0xff] %v763
      %908 = vst [vmem:[%s226 + $0x130] sm:$0xff] %v768
      %909 = vst [vmem:[%s226 + $0x138] sm:$0xff] %v771
      %910 = vst [vmem:[%s226 + $0x140] sm:$0xff] %v776
      %911 = vst [vmem:[%s226 + $0x148] sm:$0xff] %v779
      %912 = vst [vmem:[%s226 + $0x150] sm:$0xff] %v784
      %913 = vst [vmem:[%s226 + $0x158] sm:$0xff] %v787
      %914 = vst [vmem:[%s226 + $0x160] sm:$0xff] %v792
      %915 = vst [vmem:[%s226 + $0x168] sm:$0xff] %v795
      %916 = vst [vmem:[%s226 + $0x170] sm:$0xff] %v800
      %917 = vst [vmem:[%s226 + $0x178] sm:$0xff] %v803
      %918 = vst [vmem:[%s226 + $0x180] sm:$0xff] %v808
      %919 = vst [vmem:[%s226 + $0x188] sm:$0xff] %v811
      %920 = vst [vmem:[%s226 + $0x190] sm:$0xff] %v816
      %921 = vst [vmem:[%s226 + $0x198] sm:$0xff] %v819
      %922 = vst [vmem:[%s226 + $0x1a0] sm:$0xff] %v824
      %923 = vst [vmem:[%s226 + $0x1a8] sm:$0xff] %v827
      %924 = vst [vmem:[%s226 + $0x1b0] sm:$0xff] %v832
      %925 = vst [vmem:[%s226 + $0x1b8] sm:$0xff] %v835
      %926 = vst [vmem:[%s226 + $0x1c0] sm:$0xff] %v840
      %927 = vst [vmem:[%s226 + $0x1c8] sm:$0xff] %v843
      %928 = vst [vmem:[%s226 + $0x1d0] sm:$0xff] %v848
      %929 = vst [vmem:[%s226 + $0x1d8] sm:$0xff] %v851
      %930 = vst [vmem:[%s226 + $0x1e0] sm:$0xff] %v856
      %931 = vst [vmem:[%s226 + $0x1e8] sm:$0xff] %v859
      %932 = vst [vmem:[%s226 + $0x1f0] sm:$0xff] %v864
      %933 = vst [vmem:[%s226 + $0x1f8] sm:$0xff] %v867
      %s934 = smul.u32 64, %s16
      %p935 = scmp.lt.s32.totalorder %s934, 255
      %s936 = scalar_select %p935, %s934, 255
      %s937 = smul.addr %s936, 8
      %s938 = scalar_lea.vmem %s5, %s937
      // Predicated region
      $region41: #{_lambda_.14} parent=39 // pred_check
        %p939 = pneg %p144
      $region42: #{_lambda_.14} parent=39 // pred_check_branch
        %941 = sbr.rel (%p939) target = $region44
      $region43: #{_lambda_.14} parent=39 // pred_region
        %s942 = smul.u32 64, %s16
      $region44: #{_lambda_.14} parent=39 // pred_fallthru
        _
    $region40: #{_lambda_.14} parent=5 // pred_fallthru
      _
    %p943 = scmp.le.s32.totalorder 2, %s11
    // Predicated region
    $region45: #{_lambda_.14} parent=5 // pred_check
      %p944 = pneg %p943
    $region46: #{_lambda_.14} parent=5 // pred_check_branch
      %946 = sbr.rel (%p944) target = $region48
    $region47: #{_lambda_.14} parent=5 // pred_region
      %s947 = ssub.s32 %s11, 2
      // Predicated region
      $region49: #{_lambda_.14} parent=47 // pred_check
        %p948 = pneg %p150
      $region50: #{_lambda_.14} parent=47 // pred_check_branch
        %950 = sbr.rel (%p948) target = $region52
      $region51: #{_lambda_.14} parent=47 // pred_region
        %s951 = smul.u32 64, %s17
        %p952 = scmp.lt.s32.totalorder %s951, 255
        %s953 = scalar_select %p952, %s951, 255
        %s954 = smul.addr %s953, 8
        %s955 = scalar_lea.vmem %s5, %s954
      $region52: #{_lambda_.14} parent=47 // pred_fallthru
        _
    $region48: #{_lambda_.14} parent=5 // pred_fallthru
      _
  $region6: #{_lambda_.14} parent=0 // loop_footer
    %s15 = sadd.s32 1, %s11
  $region7: #{_lambda_.14} parent=0 // loop_footer_branch
    %10 = sbr.rel target = $region3
  $region8: #{_lambda_.14} parent=0 // loop_exit
    _

// kernel: _lambda_.15
$region0: #{_lambda_.15}
  #allocation0 [shape = 'u32[]', space=smem, size = 0x4, offset = 0x4, fixed_abs, tag = 'smem constant byte address 0x4 - core index']
  #allocation1 [shape = 'u32[144,128]{1,0:T(1,128)}', space=vmem, size = 0x12000, scoped, tag = 'internal scratch']
  %s0 = inlined_call_operand.vmem [shape: bf16[512,128], index: 0, kind: input, shape index: {}]
  %s1 = inlined_call_operand.vmem [shape: bf16[128,128], index: 1, kind: input, shape index: {}]
  %s2 = inlined_call_operand.vmem [shape: f32[1,128], index: 2, kind: input, shape index: {}]
  %s3 = inlined_call_operand.vmem [shape: f32[1,128], index: 3, kind: input, shape index: {}]
  %s4 = inlined_call_operand.vmem [shape: f32[1,128], index: 4, kind: input, shape index: {}]
  %s5 = inlined_call_operand.vmem [shape: f32[512,128], index: 5, kind: output, shape index: {}]
  %s6 = sld [smem:[#allocation0]]
  $region30: #{_lambda_.15} parent=0
    _
  %s8 = ssub.s32 1, %s6
  %s9 = scalar_select 0, %s8, %s6
  // Predicated region
  $region2: #{_lambda_.15} parent=0 // pred_check
    _
  $region3: #{_lambda_.15} parent=0 // pred_check_branch
    %11 = sbr.rel (0) target = $region5
  $region4: #{_lambda_.15} parent=0 // pred_region
    _
  $region5: #{_lambda_.15} parent=0 // pred_fallthru
    _
  // Predicated region
  $region6: #{_lambda_.15} parent=0 // pred_check
    _
  $region7: #{_lambda_.15} parent=0 // pred_check_branch
    %13 = sbr.rel (0) target = $region9
  $region8: #{_lambda_.15} parent=0 // pred_region
    _
  $region9: #{_lambda_.15} parent=0 // pred_fallthru
    _
  // Predicated region
  $region10: #{_lambda_.15} parent=0 // pred_check
    _
  $region11: #{_lambda_.15} parent=0 // pred_check_branch
    %15 = sbr.rel (0) target = $region13
  $region12: #{_lambda_.15} parent=0 // pred_region
    _
  $region13: #{_lambda_.15} parent=0 // pred_fallthru
    _
  // Predicated region
  $region14: #{_lambda_.15} parent=0 // pred_check
    _
  $region15: #{_lambda_.15} parent=0 // pred_check_branch
    %17 = sbr.rel (0) target = $region17
  $region16: #{_lambda_.15} parent=0 // pred_region
    _
  $region17: #{_lambda_.15} parent=0 // pred_fallthru
    _
  // Predicated region
  $region18: #{_lambda_.15} parent=0 // pred_check
    _
  $region19: #{_lambda_.15} parent=0 // pred_check_branch
    %19 = sbr.rel (0) target = $region21
  $region20: #{_lambda_.15} parent=0 // pred_region
    _
  $region21: #{_lambda_.15} parent=0 // pred_fallthru
    _
  %v21 = vld [vmem:[%s0] sm:$0xf]
  %v22 = vld [vmem:[%s0 + $0x4] sm:$0xf]
  %v23 = vld [vmem:[%s0 + $0x8] sm:$0xf]
  %v24 = vld [vmem:[%s0 + $0xc] sm:$0xf]
  %v25 = vld [vmem:[%s0 + $0x10] sm:$0xf]
  %v26 = vld [vmem:[%s0 + $0x14] sm:$0xf]
  %v27 = vld [vmem:[%s0 + $0x18] sm:$0xf]
  %v28 = vld [vmem:[%s0 + $0x1c] sm:$0xf]
  %v29 = vld [vmem:[%s0 + $0x20] sm:$0xf]
  %v30 = vld [vmem:[%s0 + $0x24] sm:$0xf]
  %v31 = vld [vmem:[%s0 + $0x28] sm:$0xf]
  %v32 = vld [vmem:[%s0 + $0x2c] sm:$0xf]
  %v33 = vld [vmem:[%s0 + $0x30] sm:$0xf]
  %v34 = vld [vmem:[%s0 + $0x34] sm:$0xf]
  %v35 = vld [vmem:[%s0 + $0x38] sm:$0xf]
  %v36 = vld [vmem:[%s0 + $0x3c] sm:$0xf]
  %v37 = vld [vmem:[%s0 + $0x40] sm:$0xf]
  %v38 = vld [vmem:[%s0 + $0x44] sm:$0xf]
  %v39 = vld [vmem:[%s0 + $0x48] sm:$0xf]
  %v40 = vld [vmem:[%s0 + $0x4c] sm:$0xf]
  %v41 = vld [vmem:[%s0 + $0x50] sm:$0xf]
  %v42 = vld [vmem:[%s0 + $0x54] sm:$0xf]
  %v43 = vld [vmem:[%s0 + $0x58] sm:$0xf]
  %v44 = vld [vmem:[%s0 + $0x5c] sm:$0xf]
  %v45 = vld [vmem:[%s0 + $0x60] sm:$0xf]
  %v46 = vld [vmem:[%s0 + $0x64] sm:$0xf]
  %v47 = vld [vmem:[%s0 + $0x68] sm:$0xf]
  %v48 = vld [vmem:[%s0 + $0x6c] sm:$0xf]
  %v49 = vld [vmem:[%s0 + $0x70] sm:$0xf]
  %v50 = vld [vmem:[%s0 + $0x74] sm:$0xf]
  %v51 = vld [vmem:[%s0 + $0x78] sm:$0xf]
  %v52 = vld [vmem:[%s0 + $0x7c] sm:$0xf]
  %v53 = vld [vmem:[%s0 + $0x80] sm:$0xf]
  %v54 = vld [vmem:[%s0 + $0x84] sm:$0xf]
  %v55 = vld [vmem:[%s0 + $0x88] sm:$0xf]
  %v56 = vld [vmem:[%s0 + $0x8c] sm:$0xf]
  %v57 = vld [vmem:[%s0 + $0x90] sm:$0xf]
  %v58 = vld [vmem:[%s0 + $0x94] sm:$0xf]
  %v59 = vld [vmem:[%s0 + $0x98] sm:$0xf]
  %v60 = vld [vmem:[%s0 + $0x9c] sm:$0xf]
  %v61 = vld [vmem:[%s0 + $0xa0] sm:$0xf]
  %v62 = vld [vmem:[%s0 + $0xa4] sm:$0xf]
  %v63 = vld [vmem:[%s0 + $0xa8] sm:$0xf]
  %v64 = vld [vmem:[%s0 + $0xac] sm:$0xf]
  %v65 = vld [vmem:[%s0 + $0xb0] sm:$0xf]
  %v66 = vld [vmem:[%s0 + $0xb4] sm:$0xf]
  %v67 = vld [vmem:[%s0 + $0xb8] sm:$0xf]
  %v68 = vld [vmem:[%s0 + $0xbc] sm:$0xf]
  %v69 = vld [vmem:[%s0 + $0xc0] sm:$0xf]
  %v70 = vld [vmem:[%s0 + $0xc4] sm:$0xf]
  %v71 = vld [vmem:[%s0 + $0xc8] sm:$0xf]
  %v72 = vld [vmem:[%s0 + $0xcc] sm:$0xf]
  %v73 = vld [vmem:[%s0 + $0xd0] sm:$0xf]
  %v74 = vld [vmem:[%s0 + $0xd4] sm:$0xf]
  %v75 = vld [vmem:[%s0 + $0xd8] sm:$0xf]
  %v76 = vld [vmem:[%s0 + $0xdc] sm:$0xf]
  %v77 = vld [vmem:[%s0 + $0xe0] sm:$0xf]
  %v78 = vld [vmem:[%s0 + $0xe4] sm:$0xf]
  %v79 = vld [vmem:[%s0 + $0xe8] sm:$0xf]
  %v80 = vld [vmem:[%s0 + $0xec] sm:$0xf]
  %v81 = vld [vmem:[%s0 + $0xf0] sm:$0xf]
  %v82 = vld [vmem:[%s0 + $0xf4] sm:$0xf]
  %v83 = vld [vmem:[%s0 + $0xf8] sm:$0xf]
  %v84 = vld [vmem:[%s0 + $0xfc] sm:$0xf]
  %v85 = vld [vmem:[%s1] sm:$0xf]
  %v86 = vld [vmem:[%s1 + $0x4] sm:$0xf]
  %v87 = vld [vmem:[%s1 + $0x8] sm:$0xf]
  %v88 = vld [vmem:[%s1 + $0xc] sm:$0xf]
  %v89 = vld [vmem:[%s1 + $0x10] sm:$0xf]
  %v90 = vld [vmem:[%s1 + $0x14] sm:$0xf]
  %v91 = vld [vmem:[%s1 + $0x18] sm:$0xf]
  %v92 = vld [vmem:[%s1 + $0x1c] sm:$0xf]
  %v93 = vld [vmem:[%s1 + $0x20] sm:$0xf]
  %v94 = vld [vmem:[%s1 + $0x24] sm:$0xf]
  %v95 = vld [vmem:[%s1 + $0x28] sm:$0xf]
  %v96 = vld [vmem:[%s1 + $0x2c] sm:$0xf]
  %v97 = vld [vmem:[%s1 + $0x30] sm:$0xf]
  %v98 = vld [vmem:[%s1 + $0x34] sm:$0xf]
  %v99 = vld [vmem:[%s1 + $0x38] sm:$0xf]
  %v100 = vld [vmem:[%s1 + $0x3c] sm:$0xf]
  %v101 = vld [vmem:[%s2] sm:$0x1]
  %v103 = vlaneseq
  %v104 = vshrl.u32 %v103, 7
  %v105 = vsub.s32 0, %v104
  %v106 = vrot.slane %v101, %v105
  %v172 = vunpack.c.l.b16 %v21
  %v173 = vunpack.c.l.b16 %v22
  %v174 = vunpack.c.l.b16 %v23
  %v175 = vunpack.c.l.b16 %v24
  %v176 = vunpack.c.l.b16 %v25
  %v177 = vunpack.c.l.b16 %v26
  %v178 = vunpack.c.l.b16 %v27
  %v179 = vunpack.c.l.b16 %v28
  %v180 = vunpack.c.l.b16 %v29
  %v181 = vunpack.c.l.b16 %v30
  %v182 = vunpack.c.l.b16 %v31
  %v183 = vunpack.c.l.b16 %v32
  %v184 = vunpack.c.l.b16 %v33
  %v185 = vunpack.c.l.b16 %v34
  %v186 = vunpack.c.l.b16 %v35
  %v187 = vunpack.c.l.b16 %v36
  %v188 = vunpack.c.l.b16 %v37
  %v189 = vunpack.c.l.b16 %v38
  %v190 = vunpack.c.l.b16 %v39
  %v191 = vunpack.c.l.b16 %v40
  %v192 = vunpack.c.l.b16 %v41
  %v193 = vunpack.c.l.b16 %v42
  %v194 = vunpack.c.l.b16 %v43
  %v195 = vunpack.c.l.b16 %v44
  %v196 = vunpack.c.l.b16 %v45
  %v197 = vunpack.c.l.b16 %v46
  %v198 = vunpack.c.l.b16 %v47
  %v199 = vunpack.c.l.b16 %v48
  %v200 = vunpack.c.l.b16 %v49
  %v201 = vunpack.c.l.b16 %v50
  %v202 = vunpack.c.l.b16 %v51
  %v203 = vunpack.c.l.b16 %v52
  %v204 = vunpack.c.l.b16 %v53
  %v205 = vunpack.c.l.b16 %v54
  %v206 = vunpack.c.l.b16 %v55
  %v207 = vunpack.c.l.b16 %v56
  %v208 = vunpack.c.l.b16 %v57
  %v209 = vunpack.c.l.b16 %v58
  %v210 = vunpack.c.l.b16 %v59
  %v211 = vunpack.c.l.b16 %v60
  %v212 = vunpack.c.l.b16 %v61
  %v213 = vunpack.c.l.b16 %v62
  %v214 = vunpack.c.l.b16 %v63
  %v215 = vunpack.c.l.b16 %v64
  %v216 = vunpack.c.l.b16 %v65
  %v217 = vunpack.c.l.b16 %v66
  %v218 = vunpack.c.l.b16 %v67
  %v219 = vunpack.c.l.b16 %v68
  %v220 = vunpack.c.l.b16 %v69
  %v221 = vunpack.c.l.b16 %v70
  %v222 = vunpack.c.l.b16 %v71
  %v223 = vunpack.c.l.b16 %v72
  %v224 = vunpack.c.l.b16 %v73
  %v225 = vunpack.c.l.b16 %v74
  %v226 = vunpack.c.l.b16 %v75
  %v227 = vunpack.c.l.b16 %v76
  %v228 = vunpack.c.l.b16 %v77
  %v229 = vunpack.c.l.b16 %v78
  %v230 = vunpack.c.l.b16 %v79
  %v231 = vunpack.c.l.b16 %v80
  %v232 = vunpack.c.l.b16 %v81
  %v233 = vunpack.c.l.b16 %v82
  %v234 = vunpack.c.l.b16 %v83
  %v235 = vunpack.c.l.b16 %v84
  %v236 = vpack.c.b16 %v173, %v172
  %v237 = vpack.c.b16 %v175, %v174
  %v238 = vpack.c.b16 %v177, %v176
  %v239 = vpack.c.b16 %v179, %v178
  %v240 = vpack.c.b16 %v181, %v180
  %v241 = vpack.c.b16 %v183, %v182
  %v242 = vpack.c.b16 %v185, %v184
  %v243 = vpack.c.b16 %v187, %v186
  %v244 = vpack.c.b16 %v189, %v188
  %v245 = vpack.c.b16 %v191, %v190
  %v246 = vpack.c.b16 %v193, %v192
  %v247 = vpack.c.b16 %v195, %v194
  %v248 = vpack.c.b16 %v197, %v196
  %v249 = vpack.c.b16 %v199, %v198
  %v250 = vpack.c.b16 %v201, %v200
  %v251 = vpack.c.b16 %v203, %v202
  %v252 = vpack.c.b16 %v205, %v204
  %v253 = vpack.c.b16 %v207, %v206
  %v254 = vpack.c.b16 %v209, %v208
  %v255 = vpack.c.b16 %v211, %v210
  %v256 = vpack.c.b16 %v213, %v212
  %v257 = vpack.c.b16 %v215, %v214
  %v258 = vpack.c.b16 %v217, %v216
  %v259 = vpack.c.b16 %v219, %v218
  %v260 = vpack.c.b16 %v221, %v220
  %v261 = vpack.c.b16 %v223, %v222
  %v262 = vpack.c.b16 %v225, %v224
  %v263 = vpack.c.b16 %v227, %v226
  %v264 = vpack.c.b16 %v229, %v228
  %v265 = vpack.c.b16 %v231, %v230
  %v266 = vpack.c.b16 %v233, %v232
  %v267 = vpack.c.b16 %v235, %v234
  %v316 = vunpack.c.l.b16 %v85
  %v317 = vunpack.c.l.b16 %v86
  %v318 = vunpack.c.l.b16 %v87
  %v319 = vunpack.c.l.b16 %v88
  %v320 = vunpack.c.l.b16 %v89
  %v321 = vunpack.c.l.b16 %v90
  %v322 = vunpack.c.l.b16 %v91
  %v323 = vunpack.c.l.b16 %v92
  %v324 = vunpack.c.l.b16 %v93
  %v325 = vunpack.c.l.b16 %v94
  %v326 = vunpack.c.l.b16 %v95
  %v327 = vunpack.c.l.b16 %v96
  %v328 = vunpack.c.l.b16 %v97
  %v329 = vunpack.c.l.b16 %v98
  %v330 = vunpack.c.l.b16 %v99
  %v331 = vunpack.c.l.b16 %v100
  %v332 = vpack.c.b16 %v317, %v316
  %v333 = vpack.c.b16 %v319, %v318
  %v334 = vpack.c.b16 %v321, %v320
  %v335 = vpack.c.b16 %v323, %v322
  %v336 = vpack.c.b16 %v325, %v324
  %v337 = vpack.c.b16 %v327, %v326
  %v338 = vpack.c.b16 %v329, %v328
  %v339 = vpack.c.b16 %v331, %v330
  %348 = vmatprep.subr.bf16.mxu0 0
  %349 = vmatpush1.bf16.msra.mxu0 %v339
  %350 = vmatprep.subr.bf16.mxu0 0
  %351 = vmatpush1.bf16.msra.mxu0 %v338
  %352 = vmatprep.subr.bf16.mxu0 0
  %353 = vmatpush1.bf16.msra.mxu0 %v337
  %354 = vmatprep.subr.bf16.mxu0 0
  %355 = vmatpush1.bf16.msra.mxu0 %v336
  %356 = vmatprep.subr.bf16.mxu0 0
  %357 = vmatpush1.bf16.msra.mxu0 %v335
  %358 = vmatprep.subr.bf16.mxu0 0
  %359 = vmatpush1.bf16.msra.mxu0 %v334
  %360 = vmatprep.subr.bf16.mxu0 0
  %361 = vmatpush1.bf16.msra.mxu0 %v333
  %362 = vmatprep.subr.bf16.mxu0 0
  %363 = vmatpush1.bf16.msra.mxu0 %v332
  %364 = vmatprep.subr.bf16.mxu0 0
  %365 = vmatpush2.bf16.msra.mxu0 0
  %366 = vmatprep.subr.bf16.mxu0 0
  %367 = vmatpush2.bf16.msra.mxu0 0
  %368 = vmatprep.subr.bf16.mxu0 0
  %369 = vmatpush2.bf16.msra.mxu0 0
  %370 = vmatprep.subr.bf16.mxu0 0
  %371 = vmatpush2.bf16.msra.mxu0 0
  %372 = vmatprep.subr.bf16.mxu0 0
  %373 = vmatpush2.bf16.msra.mxu0 0
  %374 = vmatprep.subr.bf16.mxu0 0
  %375 = vmatpush2.bf16.msra.mxu0 0
  %376 = vmatprep.subr.bf16.mxu0 0
  %377 = vmatpush2.bf16.msra.mxu0 0
  %378 = vmatprep.subr.bf16.mxu0 0
  %379 = vmatpush2.bf16.msra.mxu0 0
  %380 = vmatprep.mubr.bf16.mxu0 0
  %381 = vmatmul.mubr.bf16.gmra.mxu0 %v236
  %v382 = vpop.f32.mrf.mxu0
  %v383 = vadd.f32 %v106, %v382
  %v384 = vpop.f32.mrf.mxu0
  %v385 = vpop.f32.mrf.mxu0
  %v386 = vadd.f32 %v106, %v385
  %v387 = vpop.f32.mrf.mxu0
  %388 = vmatprep.mubr.bf16.mxu0 0
  %389 = vmatmul.mubr.bf16.gmra.mxu0 %v237
  %v390 = vpop.f32.mrf.mxu0
  %v391 = vadd.f32 %v106, %v390
  %v392 = vpop.f32.mrf.mxu0
  %v393 = vpop.f32.mrf.mxu0
  %v394 = vadd.f32 %v106, %v393
  %v395 = vpop.f32.mrf.mxu0
  %396 = vmatprep.mubr.bf16.mxu0 0
  %397 = vmatmul.mubr.bf16.gmra.mxu0 %v238
  %v398 = vpop.f32.mrf.mxu0
  %v399 = vadd.f32 %v106, %v398
  %v400 = vpop.f32.mrf.mxu0
  %v401 = vpop.f32.mrf.mxu0
  %v402 = vadd.f32 %v106, %v401
  %v403 = vpop.f32.mrf.mxu0
  %404 = vmatprep.mubr.bf16.mxu0 0
  %405 = vmatmul.mubr.bf16.gmra.mxu0 %v239
  %v406 = vpop.f32.mrf.mxu0
  %v407 = vadd.f32 %v106, %v406
  %v408 = vpop.f32.mrf.mxu0
  %v409 = vpop.f32.mrf.mxu0
  %v410 = vadd.f32 %v106, %v409
  %v411 = vpop.f32.mrf.mxu0
  %412 = vmatprep.mubr.bf16.mxu0 0
  %413 = vmatmul.mubr.bf16.gmra.mxu0 %v240
  %v414 = vpop.f32.mrf.mxu0
  %v415 = vadd.f32 %v106, %v414
  %v416 = vpop.f32.mrf.mxu0
  %v417 = vpop.f32.mrf.mxu0
  %v418 = vadd.f32 %v106, %v417
  %v419 = vpop.f32.mrf.mxu0
  %420 = vmatprep.mubr.bf16.mxu0 0
  %421 = vmatmul.mubr.bf16.gmra.mxu0 %v241
  %v422 = vpop.f32.mrf.mxu0
  %v423 = vadd.f32 %v106, %v422
  %v424 = vpop.f32.mrf.mxu0
  %v425 = vpop.f32.mrf.mxu0
  %v426 = vadd.f32 %v106, %v425
  %v427 = vpop.f32.mrf.mxu0
  %428 = vmatprep.mubr.bf16.mxu0 0
  %429 = vmatmul.mubr.bf16.gmra.mxu0 %v242
  %v430 = vpop.f32.mrf.mxu0
  %v431 = vadd.f32 %v106, %v430
  %v432 = vpop.f32.mrf.mxu0
  %v433 = vpop.f32.mrf.mxu0
  %v434 = vadd.f32 %v106, %v433
  %v435 = vpop.f32.mrf.mxu0
  %436 = vmatprep.mubr.bf16.mxu0 0
  %437 = vmatmul.mubr.bf16.gmra.mxu0 %v243
  %v438 = vpop.f32.mrf.mxu0
  %v439 = vadd.f32 %v106, %v438
  %v440 = vpop.f32.mrf.mxu0
  %v441 = vpop.f32.mrf.mxu0
  %v442 = vadd.f32 %v106, %v441
  %v443 = vpop.f32.mrf.mxu0
  %444 = vmatprep.mubr.bf16.mxu0 0
  %445 = vmatmul.mubr.bf16.gmra.mxu0 %v244
  %v446 = vpop.f32.mrf.mxu0
  %v447 = vadd.f32 %v106, %v446
  %v448 = vpop.f32.mrf.mxu0
  %v449 = vpop.f32.mrf.mxu0
  %v450 = vadd.f32 %v106, %v449
  %v451 = vpop.f32.mrf.mxu0
  %452 = vmatprep.mubr.bf16.mxu0 0
  %453 = vmatmul.mubr.bf16.gmra.mxu0 %v245
  %v454 = vpop.f32.mrf.mxu0
  %v455 = vadd.f32 %v106, %v454
  %v456 = vpop.f32.mrf.mxu0
  %v457 = vpop.f32.mrf.mxu0
  %v458 = vadd.f32 %v106, %v457
  %v459 = vpop.f32.mrf.mxu0
  %460 = vmatprep.mubr.bf16.mxu0 0
  %461 = vmatmul.mubr.bf16.gmra.mxu0 %v246
  %v462 = vpop.f32.mrf.mxu0
  %v463 = vadd.f32 %v106, %v462
  %v464 = vpop.f32.mrf.mxu0
  %v465 = vpop.f32.mrf.mxu0
  %v466 = vadd.f32 %v106, %v465
  %v467 = vpop.f32.mrf.mxu0
  %468 = vmatprep.mubr.bf16.mxu0 0
  %469 = vmatmul.mubr.bf16.gmra.mxu0 %v247
  %v470 = vpop.f32.mrf.mxu0
  %v471 = vadd.f32 %v106, %v470
  %v472 = vpop.f32.mrf.mxu0
  %v473 = vpop.f32.mrf.mxu0
  %v474 = vadd.f32 %v106, %v473
  %v475 = vpop.f32.mrf.mxu0
  %476 = vmatprep.mubr.bf16.mxu0 0
  %477 = vmatmul.mubr.bf16.gmra.mxu0 %v248
  %v478 = vpop.f32.mrf.mxu0
  %v479 = vadd.f32 %v106, %v478
  %v480 = vpop.f32.mrf.mxu0
  %v481 = vpop.f32.mrf.mxu0
  %v482 = vadd.f32 %v106, %v481
  %v483 = vpop.f32.mrf.mxu0
  %484 = vmatprep.mubr.bf16.mxu0 0
  %485 = vmatmul.mubr.bf16.gmra.mxu0 %v249
  %v486 = vpop.f32.mrf.mxu0
  %v487 = vadd.f32 %v106, %v486
  %v488 = vpop.f32.mrf.mxu0
  %v489 = vpop.f32.mrf.mxu0
  %v490 = vadd.f32 %v106, %v489
  %v491 = vpop.f32.mrf.mxu0
  %492 = vmatprep.mubr.bf16.mxu0 0
  %493 = vmatmul.mubr.bf16.gmra.mxu0 %v250
  %v494 = vpop.f32.mrf.mxu0
  %v495 = vadd.f32 %v106, %v494
  %v496 = vpop.f32.mrf.mxu0
  %v497 = vpop.f32.mrf.mxu0
  %v498 = vadd.f32 %v106, %v497
  %v499 = vpop.f32.mrf.mxu0
  %500 = vmatprep.mubr.bf16.mxu0 0
  %501 = vmatmul.mubr.bf16.gmra.mxu0 %v251
  %v502 = vpop.f32.mrf.mxu0
  %v503 = vadd.f32 %v106, %v502
  %v504 = vpop.f32.mrf.mxu0
  %v505 = vpop.f32.mrf.mxu0
  %v506 = vadd.f32 %v106, %v505
  %v507 = vpop.f32.mrf.mxu0
  %508 = vmatprep.mubr.bf16.mxu0 0
  %509 = vmatmul.mubr.bf16.gmra.mxu0 %v252
  %v510 = vpop.f32.mrf.mxu0
  %v511 = vadd.f32 %v106, %v510
  %v512 = vpop.f32.mrf.mxu0
  %v513 = vpop.f32.mrf.mxu0
  %v514 = vadd.f32 %v106, %v513
  %v515 = vpop.f32.mrf.mxu0
  %516 = vmatprep.mubr.bf16.mxu0 0
  %517 = vmatmul.mubr.bf16.gmra.mxu0 %v253
  %v518 = vpop.f32.mrf.mxu0
  %v519 = vadd.f32 %v106, %v518
  %v520 = vpop.f32.mrf.mxu0
  %v521 = vpop.f32.mrf.mxu0
  %v522 = vadd.f32 %v106, %v521
  %v523 = vpop.f32.mrf.mxu0
  %524 = vmatprep.mubr.bf16.mxu0 0
  %525 = vmatmul.mubr.bf16.gmra.mxu0 %v254
  %v526 = vpop.f32.mrf.mxu0
  %v527 = vadd.f32 %v106, %v526
  %v528 = vpop.f32.mrf.mxu0
  %v529 = vpop.f32.mrf.mxu0
  %v530 = vadd.f32 %v106, %v529
  %v531 = vpop.f32.mrf.mxu0
  %532 = vmatprep.mubr.bf16.mxu0 0
  %533 = vmatmul.mubr.bf16.gmra.mxu0 %v255
  %v534 = vpop.f32.mrf.mxu0
  %v535 = vadd.f32 %v106, %v534
  %v536 = vpop.f32.mrf.mxu0
  %v537 = vpop.f32.mrf.mxu0
  %v538 = vadd.f32 %v106, %v537
  %v539 = vpop.f32.mrf.mxu0
  %540 = vmatprep.mubr.bf16.mxu0 0
  %541 = vmatmul.mubr.bf16.gmra.mxu0 %v256
  %v542 = vpop.f32.mrf.mxu0
  %v543 = vadd.f32 %v106, %v542
  %v544 = vpop.f32.mrf.mxu0
  %v545 = vpop.f32.mrf.mxu0
  %v546 = vadd.f32 %v106, %v545
  %v547 = vpop.f32.mrf.mxu0
  %548 = vmatprep.mubr.bf16.mxu0 0
  %549 = vmatmul.mubr.bf16.gmra.mxu0 %v257
  %v550 = vpop.f32.mrf.mxu0
  %v551 = vadd.f32 %v106, %v550
  %v552 = vpop.f32.mrf.mxu0
  %v553 = vpop.f32.mrf.mxu0
  %v554 = vadd.f32 %v106, %v553
  %v555 = vpop.f32.mrf.mxu0
  %556 = vmatprep.mubr.bf16.mxu0 0
  %557 = vmatmul.mubr.bf16.gmra.mxu0 %v258
  %v558 = vpop.f32.mrf.mxu0
  %v559 = vadd.f32 %v106, %v558
  %v560 = vpop.f32.mrf.mxu0
  %v561 = vpop.f32.mrf.mxu0
  %v562 = vadd.f32 %v106, %v561
  %v563 = vpop.f32.mrf.mxu0
  %564 = vmatprep.mubr.bf16.mxu0 0
  %565 = vmatmul.mubr.bf16.gmra.mxu0 %v259
  %v566 = vpop.f32.mrf.mxu0
  %v567 = vadd.f32 %v106, %v566
  %v568 = vpop.f32.mrf.mxu0
  %v569 = vpop.f32.mrf.mxu0
  %v570 = vadd.f32 %v106, %v569
  %v571 = vpop.f32.mrf.mxu0
  %572 = vmatprep.mubr.bf16.mxu0 0
  %573 = vmatmul.mubr.bf16.gmra.mxu0 %v260
  %v574 = vpop.f32.mrf.mxu0
  %v575 = vadd.f32 %v106, %v574
  %v576 = vpop.f32.mrf.mxu0
  %v577 = vpop.f32.mrf.mxu0
  %v578 = vadd.f32 %v106, %v577
  %v579 = vpop.f32.mrf.mxu0
  %580 = vmatprep.mubr.bf16.mxu0 0
  %581 = vmatmul.mubr.bf16.gmra.mxu0 %v261
  %v582 = vpop.f32.mrf.mxu0
  %v583 = vadd.f32 %v106, %v582
  %v584 = vpop.f32.mrf.mxu0
  %v585 = vpop.f32.mrf.mxu0
  %v586 = vadd.f32 %v106, %v585
  %v587 = vpop.f32.mrf.mxu0
  %588 = vmatprep.mubr.bf16.mxu0 0
  %589 = vmatmul.mubr.bf16.gmra.mxu0 %v262
  %v590 = vpop.f32.mrf.mxu0
  %v591 = vadd.f32 %v106, %v590
  %v592 = vpop.f32.mrf.mxu0
  %v593 = vpop.f32.mrf.mxu0
  %v594 = vadd.f32 %v106, %v593
  %v595 = vpop.f32.mrf.mxu0
  %596 = vmatprep.mubr.bf16.mxu0 0
  %597 = vmatmul.mubr.bf16.gmra.mxu0 %v263
  %v598 = vpop.f32.mrf.mxu0
  %v599 = vadd.f32 %v106, %v598
  %v600 = vpop.f32.mrf.mxu0
  %v601 = vpop.f32.mrf.mxu0
  %v602 = vadd.f32 %v106, %v601
  %v603 = vpop.f32.mrf.mxu0
  %604 = vmatprep.mubr.bf16.mxu0 0
  %605 = vmatmul.mubr.bf16.gmra.mxu0 %v264
  %v606 = vpop.f32.mrf.mxu0
  %v607 = vadd.f32 %v106, %v606
  %v608 = vpop.f32.mrf.mxu0
  %v609 = vpop.f32.mrf.mxu0
  %v610 = vadd.f32 %v106, %v609
  %v611 = vpop.f32.mrf.mxu0
  %612 = vmatprep.mubr.bf16.mxu0 0
  %613 = vmatmul.mubr.bf16.gmra.mxu0 %v265
  %v614 = vpop.f32.mrf.mxu0
  %v615 = vadd.f32 %v106, %v614
  %v616 = vpop.f32.mrf.mxu0
  %v617 = vpop.f32.mrf.mxu0
  %v618 = vadd.f32 %v106, %v617
  %v619 = vpop.f32.mrf.mxu0
  %620 = vmatprep.mubr.bf16.mxu0 0
  %621 = vmatmul.mubr.bf16.gmra.mxu0 %v266
  %v622 = vpop.f32.mrf.mxu0
  %v623 = vadd.f32 %v106, %v622
  %v624 = vpop.f32.mrf.mxu0
  %v625 = vpop.f32.mrf.mxu0
  %v626 = vadd.f32 %v106, %v625
  %v627 = vpop.f32.mrf.mxu0
  %628 = vmatprep.mubr.bf16.mxu0 0
  %629 = vmatmul.mubr.bf16.gmra.mxu0 %v267
  %v630 = vpop.f32.mrf.mxu0
  %v631 = vadd.f32 %v106, %v630
  %v632 = vpop.f32.mrf.mxu0
  %v633 = vpop.f32.mrf.mxu0
  %v634 = vadd.f32 %v106, %v633
  %v635 = vpop.f32.mrf.mxu0
  %636 = vdwg.mxu0
  %v637 = vadd.f32 %v383, %v386
  %v638 = vadd.f32 %v637, %v391
  %v639 = vadd.f32 %v638, %v394
  %v640 = vadd.f32 %v639, %v399
  %v641 = vadd.f32 %v640, %v402
  %v642 = vadd.f32 %v641, %v407
  %v643 = vadd.f32 %v642, %v410
  %v644 = vadd.f32 %v643, %v415
  %v645 = vadd.f32 %v644, %v418
  %v646 = vadd.f32 %v645, %v423
  %v647 = vadd.f32 %v646, %v426
  %v648 = vadd.f32 %v647, %v431
  %v649 = vadd.f32 %v648, %v434
  %v650 = vadd.f32 %v649, %v439
  %v651 = vadd.f32 %v650, %v442
  %v652 = vadd.f32 %v651, %v447
  %v653 = vadd.f32 %v652, %v450
  %v654 = vadd.f32 %v653, %v455
  %v655 = vadd.f32 %v654, %v458
  %v656 = vadd.f32 %v655, %v463
  %v657 = vadd.f32 %v656, %v466
  %v658 = vadd.f32 %v657, %v471
  %v659 = vadd.f32 %v658, %v474
  %v660 = vadd.f32 %v659, %v479
  %v661 = vadd.f32 %v660, %v482
  %v662 = vadd.f32 %v661, %v487
  %v663 = vadd.f32 %v662, %v490
  %v664 = vadd.f32 %v663, %v495
  %v665 = vadd.f32 %v664, %v498
  %v666 = vadd.f32 %v665, %v503
  %v667 = vadd.f32 %v666, %v506
  %v668 = vadd.f32 %v667, %v511
  %v669 = vadd.f32 %v668, %v514
  %v670 = vadd.f32 %v669, %v519
  %v671 = vadd.f32 %v670, %v522
  %v672 = vadd.f32 %v671, %v527
  %v673 = vadd.f32 %v672, %v530
  %v674 = vadd.f32 %v673, %v535
  %v675 = vadd.f32 %v674, %v538
  %v676 = vadd.f32 %v675, %v543
  %v677 = vadd.f32 %v676, %v546
  %v678 = vadd.f32 %v677, %v551
  %v679 = vadd.f32 %v678, %v554
  %v680 = vadd.f32 %v679, %v559
  %v681 = vadd.f32 %v680, %v562
  %v682 = vadd.f32 %v681, %v567
  %v683 = vadd.f32 %v682, %v570
  %v684 = vadd.f32 %v683, %v575
  %v685 = vadd.f32 %v684, %v578
  %v686 = vadd.f32 %v685, %v583
  %v687 = vadd.f32 %v686, %v586
  %v688 = vadd.f32 %v687, %v591
  %v689 = vadd.f32 %v688, %v594
  %v690 = vadd.f32 %v689, %v599
  %v691 = vadd.f32 %v690, %v602
  %v692 = vadd.f32 %v691, %v607
  %v693 = vadd.f32 %v692, %v610
  %v694 = vadd.f32 %v693, %v615
  %v695 = vadd.f32 %v694, %v618
  %v696 = vadd.f32 %v695, %v623
  %v697 = vadd.f32 %v696, %v626
  %v698 = vadd.f32 %v697, %v631
  %v699 = vadd.f32 %v698, %v634
  %v700 = vrot.slane %v699, 4
  %v701 = vadd.f32 %v699, %v700
  %v702 = vrot.slane %v701, 2
  %v703 = vadd.f32 %v701, %v702
  %v704 = vrot.slane %v703, 1
  %v705 = vadd.f32 %v703, %v704
  %v706 = vmul.f32 %v705, 0.001953125
  %v707 = vmul.f32 %v383, %v383
  %v708 = vmul.f32 %v386, %v386
  %v709 = vmul.f32 %v391, %v391
  %v710 = vmul.f32 %v394, %v394
  %v711 = vmul.f32 %v399, %v399
  %v712 = vmul.f32 %v402, %v402
  %v713 = vmul.f32 %v407, %v407
  %v714 = vmul.f32 %v410, %v410
  %v715 = vmul.f32 %v415, %v415
  %v716 = vmul.f32 %v418, %v418
  %v717 = vmul.f32 %v423, %v423
  %v718 = vmul.f32 %v426, %v426
  %v719 = vmul.f32 %v431, %v431
  %v720 = vmul.f32 %v434, %v434
  %v721 = vmul.f32 %v439, %v439
  %v722 = vmul.f32 %v442, %v442
  %v723 = vmul.f32 %v447, %v447
  %v724 = vmul.f32 %v450, %v450
  %v725 = vmul.f32 %v455, %v455
  %v726 = vmul.f32 %v458, %v458
  %v727 = vmul.f32 %v463, %v463
  %v728 = vmul.f32 %v466, %v466
  %v729 = vmul.f32 %v471, %v471
  %v730 = vmul.f32 %v474, %v474
  %v731 = vmul.f32 %v479, %v479
  %v732 = vmul.f32 %v482, %v482
  %v733 = vmul.f32 %v487, %v487
  %v734 = vmul.f32 %v490, %v490
  %v735 = vmul.f32 %v495, %v495
  %v736 = vmul.f32 %v498, %v498
  %v737 = vmul.f32 %v503, %v503
  %v738 = vmul.f32 %v506, %v506
  %v739 = vmul.f32 %v511, %v511
  %v740 = vmul.f32 %v514, %v514
  %v741 = vmul.f32 %v519, %v519
  %v742 = vmul.f32 %v522, %v522
  %v743 = vmul.f32 %v527, %v527
  %v744 = vmul.f32 %v530, %v530
  %v745 = vmul.f32 %v535, %v535
  %v746 = vmul.f32 %v538, %v538
  %v747 = vmul.f32 %v543, %v543
  %v748 = vmul.f32 %v546, %v546
  %v749 = vmul.f32 %v551, %v551
  %v750 = vmul.f32 %v554, %v554
  %v751 = vmul.f32 %v559, %v559
  %v752 = vmul.f32 %v562, %v562
  %v753 = vmul.f32 %v567, %v567
  %v754 = vmul.f32 %v570, %v570
  %v755 = vmul.f32 %v575, %v575
  %v756 = vmul.f32 %v578, %v578
  %v757 = vmul.f32 %v583, %v583
  %v758 = vmul.f32 %v586, %v586
  %v759 = vmul.f32 %v591, %v591
  %v760 = vmul.f32 %v594, %v594
  %v761 = vmul.f32 %v599, %v599
  %v762 = vmul.f32 %v602, %v602
  %v763 = vmul.f32 %v607, %v607
  %v764 = vmul.f32 %v610, %v610
  %v765 = vmul.f32 %v615, %v615
  %v766 = vmul.f32 %v618, %v618
  %v767 = vmul.f32 %v623, %v623
  %v768 = vmul.f32 %v626, %v626
  %v769 = vmul.f32 %v631, %v631
  %v770 = vmul.f32 %v634, %v634
  %v771 = vadd.f32 %v707, %v708
  %v772 = vadd.f32 %v771, %v709
  %v773 = vadd.f32 %v772, %v710
  %v774 = vadd.f32 %v773, %v711
  %v775 = vadd.f32 %v774, %v712
  %v776 = vadd.f32 %v775, %v713
  %v777 = vadd.f32 %v776, %v714
  %v778 = vadd.f32 %v777, %v715
  %v779 = vadd.f32 %v778, %v716
  %v780 = vadd.f32 %v779, %v717
  %v781 = vadd.f32 %v780, %v718
  %v782 = vadd.f32 %v781, %v719
  %v783 = vadd.f32 %v782, %v720
  %v784 = vadd.f32 %v783, %v721
  %v785 = vadd.f32 %v784, %v722
  %v786 = vadd.f32 %v785, %v723
  %v787 = vadd.f32 %v786, %v724
  %v788 = vadd.f32 %v787, %v725
  %v789 = vadd.f32 %v788, %v726
  %v790 = vadd.f32 %v789, %v727
  %v791 = vadd.f32 %v790, %v728
  %v792 = vadd.f32 %v791, %v729
  %v793 = vadd.f32 %v792, %v730
  %v794 = vadd.f32 %v793, %v731
  %v795 = vadd.f32 %v794, %v732
  %v796 = vadd.f32 %v795, %v733
  %v797 = vadd.f32 %v796, %v734
  %v798 = vadd.f32 %v797, %v735
  %v799 = vadd.f32 %v798, %v736
  %v800 = vadd.f32 %v799, %v737
  %v801 = vadd.f32 %v800, %v738
  %v802 = vadd.f32 %v801, %v739
  %v803 = vadd.f32 %v802, %v740
  %v804 = vadd.f32 %v803, %v741
  %v805 = vadd.f32 %v804, %v742
  %v806 = vadd.f32 %v805, %v743
  %v807 = vadd.f32 %v806, %v744
  %v808 = vadd.f32 %v807, %v745
  %v809 = vadd.f32 %v808, %v746
  %v810 = vadd.f32 %v809, %v747
  %v811 = vadd.f32 %v810, %v748
  %v812 = vadd.f32 %v811, %v749
  %v813 = vadd.f32 %v812, %v750
  %v814 = vadd.f32 %v813, %v751
  %v815 = vadd.f32 %v814, %v752
  %v816 = vadd.f32 %v815, %v753
  %v817 = vadd.f32 %v816, %v754
  %v818 = vadd.f32 %v817, %v755
  %v819 = vadd.f32 %v818, %v756
  %v820 = vadd.f32 %v819, %v757
  %v821 = vadd.f32 %v820, %v758
  %v822 = vadd.f32 %v821, %v759
  %v823 = vadd.f32 %v822, %v760
  %v824 = vadd.f32 %v823, %v761
  %v825 = vadd.f32 %v824, %v762
  %v826 = vadd.f32 %v825, %v763
  %v827 = vadd.f32 %v826, %v764
  %v828 = vadd.f32 %v827, %v765
  %v829 = vadd.f32 %v828, %v766
  %v830 = vadd.f32 %v829, %v767
  %v831 = vadd.f32 %v830, %v768
  %v832 = vadd.f32 %v831, %v769
  %v833 = vadd.f32 %v832, %v770
  %v834 = vrot.slane %v833, 4
  %v835 = vadd.f32 %v833, %v834
  %v836 = vrot.slane %v835, 2
  %v837 = vadd.f32 %v835, %v836
  %v838 = vrot.slane %v837, 1
  %v839 = vadd.f32 %v837, %v838
  %v840 = vmul.f32 %v839, 0.001953125
  %v841 = vmul.f32 %v706, %v706
  %v842 = vsub.f32 %v840, %v841
  %v843 = vsub.f32 %v383, %v706
  %v844 = vsub.f32 %v386, %v706
  %v845 = vsub.f32 %v391, %v706
  %v846 = vsub.f32 %v394, %v706
  %v847 = vsub.f32 %v399, %v706
  %v848 = vsub.f32 %v402, %v706
  %v849 = vsub.f32 %v407, %v706
  %v850 = vsub.f32 %v410, %v706
  %v851 = vsub.f32 %v415, %v706
  %v852 = vsub.f32 %v418, %v706
  %v853 = vsub.f32 %v423, %v706
  %v854 = vsub.f32 %v426, %v706
  %v855 = vsub.f32 %v431, %v706
  %v856 = vsub.f32 %v434, %v706
  %v857 = vsub.f32 %v439, %v706
  %v858 = vsub.f32 %v442, %v706
  %v859 = vsub.f32 %v447, %v706
  %v860 = vsub.f32 %v450, %v706
  %v861 = vsub.f32 %v455, %v706
  %v862 = vsub.f32 %v458, %v706
  %v863 = vsub.f32 %v463, %v706
  %v864 = vsub.f32 %v466, %v706
  %v865 = vsub.f32 %v471, %v706
  %v866 = vsub.f32 %v474, %v706
  %v867 = vsub.f32 %v479, %v706
  %v868 = vsub.f32 %v482, %v706
  %v869 = vsub.f32 %v487, %v706
  %v870 = vsub.f32 %v490, %v706
  %v871 = vsub.f32 %v495, %v706
  %v872 = vsub.f32 %v498, %v706
  %v873 = vsub.f32 %v503, %v706
  %v874 = vsub.f32 %v506, %v706
  %v875 = vsub.f32 %v511, %v706
  %v876 = vsub.f32 %v514, %v706
  %v877 = vsub.f32 %v519, %v706
  %v878 = vsub.f32 %v522, %v706
  %v879 = vsub.f32 %v527, %v706
  %v880 = vsub.f32 %v530, %v706
  %v881 = vsub.f32 %v535, %v706
  %v882 = vsub.f32 %v538, %v706
  %v883 = vsub.f32 %v543, %v706
  %v884 = vsub.f32 %v546, %v706
  %v885 = vsub.f32 %v551, %v706
  %v886 = vsub.f32 %v554, %v706
  %v887 = vsub.f32 %v559, %v706
  %v888 = vsub.f32 %v562, %v706
  %v889 = vsub.f32 %v567, %v706
  %v890 = vsub.f32 %v570, %v706
  %v891 = vsub.f32 %v575, %v706
  %v892 = vsub.f32 %v578, %v706
  %v893 = vsub.f32 %v583, %v706
  %v894 = vsub.f32 %v586, %v706
  %v895 = vsub.f32 %v591, %v706
  %v896 = vsub.f32 %v594, %v706
  %v897 = vsub.f32 %v599, %v706
  %v898 = vsub.f32 %v602, %v706
  %v899 = vsub.f32 %v607, %v706
  %v900 = vsub.f32 %v610, %v706
  %v901 = vsub.f32 %v615, %v706
  %v902 = vsub.f32 %v618, %v706
  %v903 = vsub.f32 %v623, %v706
  %v904 = vsub.f32 %v626, %v706
  %v905 = vsub.f32 %v631, %v706
  %v906 = vsub.f32 %v634, %v706
  %v907 = vadd.f32 %v842, 1e-05
  %v908 = vrsqrt.pop %v907
  %v909 = vmul.f32 %v843, %v908
  %v910 = vmul.f32 %v844, %v908
  %v911 = vmul.f32 %v845, %v908
  %v912 = vmul.f32 %v846, %v908
  %v913 = vmul.f32 %v847, %v908
  %v914 = vmul.f32 %v848, %v908
  %v915 = vmul.f32 %v849, %v908
  %v916 = vmul.f32 %v850, %v908
  %v917 = vmul.f32 %v851, %v908
  %v918 = vmul.f32 %v852, %v908
  %v919 = vmul.f32 %v853, %v908
  %v920 = vmul.f32 %v854, %v908
  %v921 = vmul.f32 %v855, %v908
  %v922 = vmul.f32 %v856, %v908
  %v923 = vmul.f32 %v857, %v908
  %v924 = vmul.f32 %v858, %v908
  %v925 = vmul.f32 %v859, %v908
  %v926 = vmul.f32 %v860, %v908
  %v927 = vmul.f32 %v861, %v908
  %v928 = vmul.f32 %v862, %v908
  %v929 = vmul.f32 %v863, %v908
  %v930 = vmul.f32 %v864, %v908
  %v931 = vmul.f32 %v865, %v908
  %v932 = vmul.f32 %v866, %v908
  %v933 = vmul.f32 %v867, %v908
  %v934 = vmul.f32 %v868, %v908
  %v935 = vmul.f32 %v869, %v908
  %v936 = vmul.f32 %v870, %v908
  %v937 = vmul.f32 %v871, %v908
  %v938 = vmul.f32 %v872, %v908
  %v939 = vmul.f32 %v873, %v908
  %v940 = vmul.f32 %v874, %v908
  %v941 = vmul.f32 %v875, %v908
  %v942 = vmul.f32 %v876, %v908
  %v943 = vmul.f32 %v877, %v908
  %v944 = vmul.f32 %v878, %v908
  %v945 = vmul.f32 %v879, %v908
  %v946 = vmul.f32 %v880, %v908
  %v947 = vmul.f32 %v881, %v908
  %v948 = vmul.f32 %v882, %v908
  %v949 = vmul.f32 %v883, %v908
  %v950 = vmul.f32 %v884, %v908
  %v951 = vmul.f32 %v885, %v908
  %v952 = vmul.f32 %v886, %v908
  %v953 = vmul.f32 %v887, %v908
  %v954 = vmul.f32 %v888, %v908
  %v955 = vmul.f32 %v889, %v908
  %v956 = vmul.f32 %v890, %v908
  %v957 = vmul.f32 %v891, %v908
  %v958 = vmul.f32 %v892, %v908
  %v959 = vmul.f32 %v893, %v908
  %v960 = vmul.f32 %v894, %v908
  %v961 = vmul.f32 %v895, %v908
  %v962 = vmul.f32 %v896, %v908
  %v963 = vmul.f32 %v897, %v908
  %v964 = vmul.f32 %v898, %v908
  %v965 = vmul.f32 %v899, %v908
  %v966 = vmul.f32 %v900, %v908
  %v967 = vmul.f32 %v901, %v908
  %v968 = vmul.f32 %v902, %v908
  %v969 = vmul.f32 %v903, %v908
  %v970 = vmul.f32 %v904, %v908
  %v971 = vmul.f32 %v905, %v908
  %v972 = vmul.f32 %v906, %v908
  %v973 = vld [vmem:[%s3] sm:$0x1]
  %v975 = vlaneseq
  %v976 = vshrl.u32 %v975, 7
  %v977 = vsub.s32 0, %v976
  %v978 = vrot.slane %v973, %v977
  %v980 = vmul.f32 %v909, %v978
  %v981 = vmul.f32 %v910, %v978
  %v982 = vmul.f32 %v911, %v978
  %v983 = vmul.f32 %v912, %v978
  %v984 = vmul.f32 %v913, %v978
  %v985 = vmul.f32 %v914, %v978
  %v986 = vmul.f32 %v915, %v978
  %v987 = vmul.f32 %v916, %v978
  %v988 = vmul.f32 %v917, %v978
  %v989 = vmul.f32 %v918, %v978
  %v990 = vmul.f32 %v919, %v978
  %v991 = vmul.f32 %v920, %v978
  %v992 = vmul.f32 %v921, %v978
  %v993 = vmul.f32 %v922, %v978
  %v994 = vmul.f32 %v923, %v978
  %v995 = vmul.f32 %v924, %v978
  %v996 = vmul.f32 %v925, %v978
  %v997 = vmul.f32 %v926, %v978
  %v998 = vmul.f32 %v927, %v978
  %v999 = vmul.f32 %v928, %v978
  %v1000 = vmul.f32 %v929, %v978
  %v1001 = vmul.f32 %v930, %v978
  %v1002 = vmul.f32 %v931, %v978
  %v1003 = vmul.f32 %v932, %v978
  %v1004 = vmul.f32 %v933, %v978
  %v1005 = vmul.f32 %v934, %v978
  %v1006 = vmul.f32 %v935, %v978
  %v1007 = vmul.f32 %v936, %v978
  %v1008 = vmul.f32 %v937, %v978
  %v1009 = vmul.f32 %v938, %v978
  %v1010 = vmul.f32 %v939, %v978
  %v1011 = vmul.f32 %v940, %v978
  %v1012 = vmul.f32 %v941, %v978
  %v1013 = vmul.f32 %v942, %v978
  %v1014 = vmul.f32 %v943, %v978
  %v1015 = vmul.f32 %v944, %v978
  %v1016 = vmul.f32 %v945, %v978
  %v1017 = vmul.f32 %v946, %v978
  %v1018 = vmul.f32 %v947, %v978
  %v1019 = vmul.f32 %v948, %v978
  %v1020 = vmul.f32 %v949, %v978
  %v1021 = vmul.f32 %v950, %v978
  %v1022 = vmul.f32 %v951, %v978
  %v1023 = vmul.f32 %v952, %v978
  %v1024 = vmul.f32 %v953, %v978
  %v1025 = vmul.f32 %v954, %v978
  %v1026 = vmul.f32 %v955, %v978
  %v1027 = vmul.f32 %v956, %v978
  %v1028 = vmul.f32 %v957, %v978
  %v1029 = vmul.f32 %v958, %v978
  %v1030 = vmul.f32 %v959, %v978
  %v1031 = vmul.f32 %v960, %v978
  %v1032 = vmul.f32 %v961, %v978
  %v1033 = vmul.f32 %v962, %v978
  %v1034 = vmul.f32 %v963, %v978
  %v1035 = vmul.f32 %v964, %v978
  %v1036 = vmul.f32 %v965, %v978
  %v1037 = vmul.f32 %v966, %v978
  %v1038 = vmul.f32 %v967, %v978
  %v1039 = vmul.f32 %v968, %v978
  %v1040 = vmul.f32 %v969, %v978
  %v1041 = vmul.f32 %v970, %v978
  %v1042 = vmul.f32 %v971, %v978
  %v1043 = vmul.f32 %v972, %v978
  %v1044 = vld [vmem:[%s4] sm:$0x1]
  %v1046 = vlaneseq
  %v1047 = vshrl.u32 %v1046, 7
  %v1048 = vsub.s32 0, %v1047
  %v1049 = vrot.slane %v1044, %v1048
  %v1051 = vadd.f32 %v980, %v1049
  %v1052 = vadd.f32 %v981, %v1049
  %v1053 = vadd.f32 %v982, %v1049
  %v1054 = vadd.f32 %v983, %v1049
  %v1055 = vadd.f32 %v984, %v1049
  %v1056 = vadd.f32 %v985, %v1049
  %v1057 = vadd.f32 %v986, %v1049
  %v1058 = vadd.f32 %v987, %v1049
  %v1059 = vadd.f32 %v988, %v1049
  %v1060 = vadd.f32 %v989, %v1049
  %v1061 = vadd.f32 %v990, %v1049
  %v1062 = vadd.f32 %v991, %v1049
  %v1063 = vadd.f32 %v992, %v1049
  %v1064 = vadd.f32 %v993, %v1049
  %v1065 = vadd.f32 %v994, %v1049
  %v1066 = vadd.f32 %v995, %v1049
  %v1067 = vadd.f32 %v996, %v1049
  %v1068 = vadd.f32 %v997, %v1049
  %v1069 = vadd.f32 %v998, %v1049
  %v1070 = vadd.f32 %v999, %v1049
  %v1071 = vadd.f32 %v1000, %v1049
  %v1072 = vadd.f32 %v1001, %v1049
  %v1073 = vadd.f32 %v1002, %v1049
  %v1074 = vadd.f32 %v1003, %v1049
  %v1075 = vadd.f32 %v1004, %v1049
  %v1076 = vadd.f32 %v1005, %v1049
  %v1077 = vadd.f32 %v1006, %v1049
  %v1078 = vadd.f32 %v1007, %v1049
  %v1079 = vadd.f32 %v1008, %v1049
  %v1080 = vadd.f32 %v1009, %v1049
  %v1081 = vadd.f32 %v1010, %v1049
  %v1082 = vadd.f32 %v1011, %v1049
  %v1083 = vadd.f32 %v1012, %v1049
  %v1084 = vadd.f32 %v1013, %v1049
  %v1085 = vadd.f32 %v1014, %v1049
  %v1086 = vadd.f32 %v1015, %v1049
  %v1087 = vadd.f32 %v1016, %v1049
  %v1088 = vadd.f32 %v1017, %v1049
  %v1089 = vadd.f32 %v1018, %v1049
  %v1090 = vadd.f32 %v1019, %v1049
  %v1091 = vadd.f32 %v1020, %v1049
  %v1092 = vadd.f32 %v1021, %v1049
  %v1093 = vadd.f32 %v1022, %v1049
  %v1094 = vadd.f32 %v1023, %v1049
  %v1095 = vadd.f32 %v1024, %v1049
  %v1096 = vadd.f32 %v1025, %v1049
  %v1097 = vadd.f32 %v1026, %v1049
  %v1098 = vadd.f32 %v1027, %v1049
  %v1099 = vadd.f32 %v1028, %v1049
  %v1100 = vadd.f32 %v1029, %v1049
  %v1101 = vadd.f32 %v1030, %v1049
  %v1102 = vadd.f32 %v1031, %v1049
  %v1103 = vadd.f32 %v1032, %v1049
  %v1104 = vadd.f32 %v1033, %v1049
  %v1105 = vadd.f32 %v1034, %v1049
  %v1106 = vadd.f32 %v1035, %v1049
  %v1107 = vadd.f32 %v1036, %v1049
  %v1108 = vadd.f32 %v1037, %v1049
  %v1109 = vadd.f32 %v1038, %v1049
  %v1110 = vadd.f32 %v1039, %v1049
  %v1111 = vadd.f32 %v1040, %v1049
  %v1112 = vadd.f32 %v1041, %v1049
  %v1113 = vadd.f32 %v1042, %v1049
  %v1114 = vadd.f32 %v1043, %v1049
  %1115 = vst [vmem:[%s5] sm:$0xff] %v1051
  %1116 = vst [vmem:[%s5 + $0x8] sm:$0xff] %v1052
  %1117 = vst [vmem:[%s5 + $0x10] sm:$0xff] %v1053
  %1118 = vst [vmem:[%s5 + $0x18] sm:$0xff] %v1054
  %1119 = vst [vmem:[%s5 + $0x20] sm:$0xff] %v1055
  %1120 = vst [vmem:[%s5 + $0x28] sm:$0xff] %v1056
  %1121 = vst [vmem:[%s5 + $0x30] sm:$0xff] %v1057
  %1122 = vst [vmem:[%s5 + $0x38] sm:$0xff] %v1058
  %1123 = vst [vmem:[%s5 + $0x40] sm:$0xff] %v1059
  %1124 = vst [vmem:[%s5 + $0x48] sm:$0xff] %v1060
  %1125 = vst [vmem:[%s5 + $0x50] sm:$0xff] %v1061
  %1126 = vst [vmem:[%s5 + $0x58] sm:$0xff] %v1062
  %1127 = vst [vmem:[%s5 + $0x60] sm:$0xff] %v1063
  %1128 = vst [vmem:[%s5 + $0x68] sm:$0xff] %v1064
  %1129 = vst [vmem:[%s5 + $0x70] sm:$0xff] %v1065
  %1130 = vst [vmem:[%s5 + $0x78] sm:$0xff] %v1066
  %1131 = vst [vmem:[%s5 + $0x80] sm:$0xff] %v1067
  %1132 = vst [vmem:[%s5 + $0x88] sm:$0xff] %v1068
  %1133 = vst [vmem:[%s5 + $0x90] sm:$0xff] %v1069
  %1134 = vst [vmem:[%s5 + $0x98] sm:$0xff] %v1070
  %1135 = vst [vmem:[%s5 + $0xa0] sm:$0xff] %v1071
  %1136 = vst [vmem:[%s5 + $0xa8] sm:$0xff] %v1072
  %1137 = vst [vmem:[%s5 + $0xb0] sm:$0xff] %v1073
  %1138 = vst [vmem:[%s5 + $0xb8] sm:$0xff] %v1074
  %1139 = vst [vmem:[%s5 + $0xc0] sm:$0xff] %v1075
  %1140 = vst [vmem:[%s5 + $0xc8] sm:$0xff] %v1076
  %1141 = vst [vmem:[%s5 + $0xd0] sm:$0xff] %v1077
  %1142 = vst [vmem:[%s5 + $0xd8] sm:$0xff] %v1078
  %1143 = vst [vmem:[%s5 + $0xe0] sm:$0xff] %v1079
  %1144 = vst [vmem:[%s5 + $0xe8] sm:$0xff] %v1080
  %1145 = vst [vmem:[%s5 + $0xf0] sm:$0xff] %v1081
  %1146 = vst [vmem:[%s5 + $0xf8] sm:$0xff] %v1082
  %1147 = vst [vmem:[%s5 + $0x100] sm:$0xff] %v1083
  %1148 = vst [vmem:[%s5 + $0x108] sm:$0xff] %v1084
  %1149 = vst [vmem:[%s5 + $0x110] sm:$0xff] %v1085
  %1150 = vst [vmem:[%s5 + $0x118] sm:$0xff] %v1086
  %1151 = vst [vmem:[%s5 + $0x120] sm:$0xff] %v1087
  %1152 = vst [vmem:[%s5 + $0x128] sm:$0xff] %v1088
  %1153 = vst [vmem:[%s5 + $0x130] sm:$0xff] %v1089
  %1154 = vst [vmem:[%s5 + $0x138] sm:$0xff] %v1090
  %1155 = vst [vmem:[%s5 + $0x140] sm:$0xff] %v1091
  %1156 = vst [vmem:[%s5 + $0x148] sm:$0xff] %v1092
  %1157 = vst [vmem:[%s5 + $0x150] sm:$0xff] %v1093
  %1158 = vst [vmem:[%s5 + $0x158] sm:$0xff] %v1094
  %1159 = vst [vmem:[%s5 + $0x160] sm:$0xff] %v1095
  %1160 = vst [vmem:[%s5 + $0x168] sm:$0xff] %v1096
  %1161 = vst [vmem:[%s5 + $0x170] sm:$0xff] %v1097
  %1162 = vst [vmem:[%s5 + $0x178] sm:$0xff] %v1098
  %1163 = vst [vmem:[%s5 + $0x180] sm:$0xff] %v1099
  %1164 = vst [vmem:[%s5 + $0x188] sm:$0xff] %v1100
  %1165 = vst [vmem:[%s5 + $0x190] sm:$0xff] %v1101
  %1166 = vst [vmem:[%s5 + $0x198] sm:$0xff] %v1102
  %1167 = vst [vmem:[%s5 + $0x1a0] sm:$0xff] %v1103
  %1168 = vst [vmem:[%s5 + $0x1a8] sm:$0xff] %v1104
  %1169 = vst [vmem:[%s5 + $0x1b0] sm:$0xff] %v1105
  %1170 = vst [vmem:[%s5 + $0x1b8] sm:$0xff] %v1106
  %1171 = vst [vmem:[%s5 + $0x1c0] sm:$0xff] %v1107
  %1172 = vst [vmem:[%s5 + $0x1c8] sm:$0xff] %v1108
  %1173 = vst [vmem:[%s5 + $0x1d0] sm:$0xff] %v1109
  %1174 = vst [vmem:[%s5 + $0x1d8] sm:$0xff] %v1110
  %1175 = vst [vmem:[%s5 + $0x1e0] sm:$0xff] %v1111
  %1176 = vst [vmem:[%s5 + $0x1e8] sm:$0xff] %v1112
  %1177 = vst [vmem:[%s5 + $0x1f0] sm:$0xff] %v1113
  %1178 = vst [vmem:[%s5 + $0x1f8] sm:$0xff] %v1114
  // Predicated region
  $region22: #{_lambda_.15} parent=0 // pred_check
    _
  $region23: #{_lambda_.15} parent=0 // pred_check_branch
    %1180 = sbr.rel (0) target = $region25
  $region24: #{_lambda_.15} parent=0 // pred_region
    _
  $region25: #{_lambda_.15} parent=0 // pred_fallthru
    _
  // Predicated region
  $region26: #{_lambda_.15} parent=0 // pred_check
    _
  $region27: #{_lambda_.15} parent=0 // pred_check_branch
    %1182 = sbr.rel (0) target = $region29
  $region28: #{_lambda_.15} parent=0 // pred_region
    _
  $region29: #{_lambda_.15} parent=0 // pred_fallthru
    _

// kernel: _lambda_.16
$region0: #{_lambda_.16}
  #allocation0 [shape = 'u32[]', space=smem, size = 0x4, offset = 0x4, fixed_abs, tag = 'smem constant byte address 0x4 - core index']
  #allocation1 [shape = 'u32[144,128]{1,0:T(1,128)}', space=vmem, size = 0x12000, scoped, tag = 'internal scratch']
  %s0 = inlined_call_operand.vmem [shape: bf16[128,256], index: 0, kind: input, shape index: {}]
  %s1 = inlined_call_operand.vmem [shape: bf16[256,128], index: 1, kind: input, shape index: {}]
  %s2 = inlined_call_operand.vmem [shape: f32[1,128], index: 2, kind: input, shape index: {}]
  %s3 = inlined_call_operand.vmem [shape: f32[1,128], index: 3, kind: input, shape index: {}]
  %s4 = inlined_call_operand.vmem [shape: f32[1,128], index: 4, kind: input, shape index: {}]
  %s5 = inlined_call_operand.vmem [shape: f32[128,128], index: 5, kind: output, shape index: {}]
  %s6 = sld [smem:[#allocation0]]
  $region30: #{_lambda_.16} parent=0
    _
  %s8 = ssub.s32 1, %s6
  %s9 = scalar_select 0, %s8, %s6
  // Predicated region
  $region2: #{_lambda_.16} parent=0 // pred_check
    _
  $region3: #{_lambda_.16} parent=0 // pred_check_branch
    %11 = sbr.rel (0) target = $region5
  $region4: #{_lambda_.16} parent=0 // pred_region
    _
  $region5: #{_lambda_.16} parent=0 // pred_fallthru
    _
  // Predicated region
  $region6: #{_lambda_.16} parent=0 // pred_check
    _
  $region7: #{_lambda_.16} parent=0 // pred_check_branch
    %13 = sbr.rel (0) target = $region9
  $region8: #{_lambda_.16} parent=0 // pred_region
    _
  $region9: #{_lambda_.16} parent=0 // pred_fallthru
    _
  // Predicated region
  $region10: #{_lambda_.16} parent=0 // pred_check
    _
  $region11: #{_lambda_.16} parent=0 // pred_check_branch
    %15 = sbr.rel (0) target = $region13
  $region12: #{_lambda_.16} parent=0 // pred_region
    _
  $region13: #{_lambda_.16} parent=0 // pred_fallthru
    _
  // Predicated region
  $region14: #{_lambda_.16} parent=0 // pred_check
    _
  $region15: #{_lambda_.16} parent=0 // pred_check_branch
    %17 = sbr.rel (0) target = $region17
  $region16: #{_lambda_.16} parent=0 // pred_region
    _
  $region17: #{_lambda_.16} parent=0 // pred_fallthru
    _
  // Predicated region
  $region18: #{_lambda_.16} parent=0 // pred_check
    _
  $region19: #{_lambda_.16} parent=0 // pred_check_branch
    %19 = sbr.rel (0) target = $region21
  $region20: #{_lambda_.16} parent=0 // pred_region
    _
  $region21: #{_lambda_.16} parent=0 // pred_fallthru
    _
  %v21 = vld [vmem:[%s0] sm:$0xff]
  %v22 = vld [vmem:[%s0 + $0x8] sm:$0xff]
  %v23 = vld [vmem:[%s0 + $0x10] sm:$0xff]
  %v24 = vld [vmem:[%s0 + $0x18] sm:$0xff]
  %v25 = vld [vmem:[%s0 + $0x20] sm:$0xff]
  %v26 = vld [vmem:[%s0 + $0x28] sm:$0xff]
  %v27 = vld [vmem:[%s0 + $0x30] sm:$0xff]
  %v28 = vld [vmem:[%s0 + $0x38] sm:$0xff]
  %v29 = vld [vmem:[%s0 + $0x40] sm:$0xff]
  %v30 = vld [vmem:[%s0 + $0x48] sm:$0xff]
  %v31 = vld [vmem:[%s0 + $0x50] sm:$0xff]
  %v32 = vld [vmem:[%s0 + $0x58] sm:$0xff]
  %v33 = vld [vmem:[%s0 + $0x60] sm:$0xff]
  %v34 = vld [vmem:[%s0 + $0x68] sm:$0xff]
  %v35 = vld [vmem:[%s0 + $0x70] sm:$0xff]
  %v36 = vld [vmem:[%s0 + $0x78] sm:$0xff]
  %v37 = vld [vmem:[%s1] sm:$0xf]
  %v38 = vld [vmem:[%s1 + $0x4] sm:$0xf]
  %v39 = vld [vmem:[%s1 + $0x8] sm:$0xf]
  %v40 = vld [vmem:[%s1 + $0xc] sm:$0xf]
  %v41 = vld [vmem:[%s1 + $0x10] sm:$0xf]
  %v42 = vld [vmem:[%s1 + $0x14] sm:$0xf]
  %v43 = vld [vmem:[%s1 + $0x18] sm:$0xf]
  %v44 = vld [vmem:[%s1 + $0x1c] sm:$0xf]
  %v45 = vld [vmem:[%s1 + $0x20] sm:$0xf]
  %v46 = vld [vmem:[%s1 + $0x24] sm:$0xf]
  %v47 = vld [vmem:[%s1 + $0x28] sm:$0xf]
  %v48 = vld [vmem:[%s1 + $0x2c] sm:$0xf]
  %v49 = vld [vmem:[%s1 + $0x30] sm:$0xf]
  %v50 = vld [vmem:[%s1 + $0x34] sm:$0xf]
  %v51 = vld [vmem:[%s1 + $0x38] sm:$0xf]
  %v52 = vld [vmem:[%s1 + $0x3c] sm:$0xf]
  %v53 = vld [vmem:[%s1 + $0x40] sm:$0xf]
  %v54 = vld [vmem:[%s1 + $0x44] sm:$0xf]
  %v55 = vld [vmem:[%s1 + $0x48] sm:$0xf]
  %v56 = vld [vmem:[%s1 + $0x4c] sm:$0xf]
  %v57 = vld [vmem:[%s1 + $0x50] sm:$0xf]
  %v58 = vld [vmem:[%s1 + $0x54] sm:$0xf]
  %v59 = vld [vmem:[%s1 + $0x58] sm:$0xf]
  %v60 = vld [vmem:[%s1 + $0x5c] sm:$0xf]
  %v61 = vld [vmem:[%s1 + $0x60] sm:$0xf]
  %v62 = vld [vmem:[%s1 + $0x64] sm:$0xf]
  %v63 = vld [vmem:[%s1 + $0x68] sm:$0xf]
  %v64 = vld [vmem:[%s1 + $0x6c] sm:$0xf]
  %v65 = vld [vmem:[%s1 + $0x70] sm:$0xf]
  %v66 = vld [vmem:[%s1 + $0x74] sm:$0xf]
  %v67 = vld [vmem:[%s1 + $0x78] sm:$0xf]
  %v68 = vld [vmem:[%s1 + $0x7c] sm:$0xf]
  %v69 = vld [vmem:[%s2] sm:$0x1]
  %v71 = vlaneseq
  %v72 = vshrl.u32 %v71, 7
  %v73 = vsub.s32 0, %v72
  %v74 = vrot.slane %v69, %v73
  %v92 = vunpack.c.l.b16 %v21
  %v93 = vunpack.c.h.b16 %v21
  %v94 = vunpack.c.l.b16 %v22
  %v95 = vunpack.c.h.b16 %v22
  %v96 = vunpack.c.l.b16 %v23
  %v97 = vunpack.c.h.b16 %v23
  %v98 = vunpack.c.l.b16 %v24
  %v99 = vunpack.c.h.b16 %v24
  %v100 = vunpack.c.l.b16 %v25
  %v101 = vunpack.c.h.b16 %v25
  %v102 = vunpack.c.l.b16 %v26
  %v103 = vunpack.c.h.b16 %v26
  %v104 = vunpack.c.l.b16 %v27
  %v105 = vunpack.c.h.b16 %v27
  %v106 = vunpack.c.l.b16 %v28
  %v107 = vunpack.c.h.b16 %v28
  %v108 = vunpack.c.l.b16 %v29
  %v109 = vunpack.c.h.b16 %v29
  %v110 = vunpack.c.l.b16 %v30
  %v111 = vunpack.c.h.b16 %v30
  %v112 = vunpack.c.l.b16 %v31
  %v113 = vunpack.c.h.b16 %v31
  %v114 = vunpack.c.l.b16 %v32
  %v115 = vunpack.c.h.b16 %v32
  %v116 = vunpack.c.l.b16 %v33
  %v117 = vunpack.c.h.b16 %v33
  %v118 = vunpack.c.l.b16 %v34
  %v119 = vunpack.c.h.b16 %v34
  %v120 = vunpack.c.l.b16 %v35
  %v121 = vunpack.c.h.b16 %v35
  %v122 = vunpack.c.l.b16 %v36
  %v123 = vunpack.c.h.b16 %v36
  %v124 = vpack.c.b16 %v94, %v92
  %v125 = vpack.c.b16 %v95, %v93
  %v126 = vpack.c.b16 %v98, %v96
  %v127 = vpack.c.b16 %v99, %v97
  %v128 = vpack.c.b16 %v102, %v100
  %v129 = vpack.c.b16 %v103, %v101
  %v130 = vpack.c.b16 %v106, %v104
  %v131 = vpack.c.b16 %v107, %v105
  %v132 = vpack.c.b16 %v110, %v108
  %v133 = vpack.c.b16 %v111, %v109
  %v134 = vpack.c.b16 %v114, %v112
  %v135 = vpack.c.b16 %v115, %v113
  %v136 = vpack.c.b16 %v118, %v116
  %v137 = vpack.c.b16 %v119, %v117
  %v138 = vpack.c.b16 %v122, %v120
  %v139 = vpack.c.b16 %v123, %v121
  %v188 = vunpack.c.l.b16 %v37
  %v189 = vunpack.c.l.b16 %v38
  %v190 = vunpack.c.l.b16 %v39
  %v191 = vunpack.c.l.b16 %v40
  %v192 = vunpack.c.l.b16 %v41
  %v193 = vunpack.c.l.b16 %v42
  %v194 = vunpack.c.l.b16 %v43
  %v195 = vunpack.c.l.b16 %v44
  %v196 = vunpack.c.l.b16 %v45
  %v197 = vunpack.c.l.b16 %v46
  %v198 = vunpack.c.l.b16 %v47
  %v199 = vunpack.c.l.b16 %v48
  %v200 = vunpack.c.l.b16 %v49
  %v201 = vunpack.c.l.b16 %v50
  %v202 = vunpack.c.l.b16 %v51
  %v203 = vunpack.c.l.b16 %v52
  %v204 = vunpack.c.l.b16 %v53
  %v205 = vunpack.c.l.b16 %v54
  %v206 = vunpack.c.l.b16 %v55
  %v207 = vunpack.c.l.b16 %v56
  %v208 = vunpack.c.l.b16 %v57
  %v209 = vunpack.c.l.b16 %v58
  %v210 = vunpack.c.l.b16 %v59
  %v211 = vunpack.c.l.b16 %v60
  %v212 = vunpack.c.l.b16 %v61
  %v213 = vunpack.c.l.b16 %v62
  %v214 = vunpack.c.l.b16 %v63
  %v215 = vunpack.c.l.b16 %v64
  %v216 = vunpack.c.l.b16 %v65
  %v217 = vunpack.c.l.b16 %v66
  %v218 = vunpack.c.l.b16 %v67
  %v219 = vunpack.c.l.b16 %v68
  %v220 = vpack.c.b16 %v189, %v188
  %v221 = vpack.c.b16 %v191, %v190
  %v222 = vpack.c.b16 %v193, %v192
  %v223 = vpack.c.b16 %v195, %v194
  %v224 = vpack.c.b16 %v197, %v196
  %v225 = vpack.c.b16 %v199, %v198
  %v226 = vpack.c.b16 %v201, %v200
  %v227 = vpack.c.b16 %v203, %v202
  %v228 = vpack.c.b16 %v205, %v204
  %v229 = vpack.c.b16 %v207, %v206
  %v230 = vpack.c.b16 %v209, %v208
  %v231 = vpack.c.b16 %v211, %v210
  %v232 = vpack.c.b16 %v213, %v212
  %v233 = vpack.c.b16 %v215, %v214
  %v234 = vpack.c.b16 %v217, %v216
  %v235 = vpack.c.b16 %v219, %v218
  %252 = vmatprep.subr.bf16.mxu0 0
  %253 = vmatpush1.bf16.msra.mxu0 %v227
  %254 = vmatprep.subr.bf16.mxu0 0
  %255 = vmatpush1.bf16.msra.mxu0 %v226
  %256 = vmatprep.subr.bf16.mxu0 0
  %257 = vmatpush1.bf16.msra.mxu0 %v225
  %258 = vmatprep.subr.bf16.mxu0 0
  %259 = vmatpush1.bf16.msra.mxu0 %v224
  %260 = vmatprep.subr.bf16.mxu0 0
  %261 = vmatpush1.bf16.msra.mxu0 %v223
  %262 = vmatprep.subr.bf16.mxu0 0
  %263 = vmatpush1.bf16.msra.mxu0 %v222
  %264 = vmatprep.subr.bf16.mxu0 0
  %265 = vmatpush1.bf16.msra.mxu0 %v221
  %266 = vmatprep.subr.bf16.mxu0 0
  %267 = vmatpush1.bf16.msra.mxu0 %v220
  %268 = vmatprep.subr.bf16.mxu0 0
  %269 = vmatpush2.bf16.msra.mxu0 %v235
  %270 = vmatprep.subr.bf16.mxu0 0
  %271 = vmatpush2.bf16.msra.mxu0 %v234
  %272 = vmatprep.subr.bf16.mxu0 0
  %273 = vmatpush2.bf16.msra.mxu0 %v233
  %274 = vmatprep.subr.bf16.mxu0 0
  %275 = vmatpush2.bf16.msra.mxu0 %v232
  %276 = vmatprep.subr.bf16.mxu0 0
  %277 = vmatpush2.bf16.msra.mxu0 %v231
  %278 = vmatprep.subr.bf16.mxu0 0
  %279 = vmatpush2.bf16.msra.mxu0 %v230
  %280 = vmatprep.subr.bf16.mxu0 0
  %281 = vmatpush2.bf16.msra.mxu0 %v229
  %282 = vmatprep.subr.bf16.mxu0 0
  %283 = vmatpush2.bf16.msra.mxu0 %v228
  %284 = vmatprep.mubr.bf16.mxu0 %v125
  %285 = vmatmul.mubr.bf16.gmra.mxu0 %v124
  %v286 = vpop.f32.mrf.mxu0
  %v287 = vadd.f32 %v74, %v286
  %v288 = vpop.f32.mrf.mxu0
  %v289 = vpop.f32.mrf.mxu0
  %v290 = vadd.f32 %v74, %v289
  %v291 = vpop.f32.mrf.mxu0
  %292 = vmatprep.mubr.bf16.mxu0 %v127
  %293 = vmatmul.mubr.bf16.gmra.mxu0 %v126
  %v294 = vpop.f32.mrf.mxu0
  %v295 = vadd.f32 %v74, %v294
  %v296 = vpop.f32.mrf.mxu0
  %v297 = vpop.f32.mrf.mxu0
  %v298 = vadd.f32 %v74, %v297
  %v299 = vpop.f32.mrf.mxu0
  %300 = vmatprep.mubr.bf16.mxu0 %v129
  %301 = vmatmul.mubr.bf16.gmra.mxu0 %v128
  %v302 = vpop.f32.mrf.mxu0
  %v303 = vadd.f32 %v74, %v302
  %v304 = vpop.f32.mrf.mxu0
  %v305 = vpop.f32.mrf.mxu0
  %v306 = vadd.f32 %v74, %v305
  %v307 = vpop.f32.mrf.mxu0
  %308 = vmatprep.mubr.bf16.mxu0 %v131
  %309 = vmatmul.mubr.bf16.gmra.mxu0 %v130
  %v310 = vpop.f32.mrf.mxu0
  %v311 = vadd.f32 %v74, %v310
  %v312 = vpop.f32.mrf.mxu0
  %v313 = vpop.f32.mrf.mxu0
  %v314 = vadd.f32 %v74, %v313
  %v315 = vpop.f32.mrf.mxu0
  %316 = vmatprep.mubr.bf16.mxu0 %v133
  %317 = vmatmul.mubr.bf16.gmra.mxu0 %v132
  %v318 = vpop.f32.mrf.mxu0
  %v319 = vadd.f32 %v74, %v318
  %v320 = vpop.f32.mrf.mxu0
  %v321 = vpop.f32.mrf.mxu0
  %v322 = vadd.f32 %v74, %v321
  %v323 = vpop.f32.mrf.mxu0
  %324 = vmatprep.mubr.bf16.mxu0 %v135
  %325 = vmatmul.mubr.bf16.gmra.mxu0 %v134
  %v326 = vpop.f32.mrf.mxu0
  %v327 = vadd.f32 %v74, %v326
  %v328 = vpop.f32.mrf.mxu0
  %v329 = vpop.f32.mrf.mxu0
  %v330 = vadd.f32 %v74, %v329
  %v331 = vpop.f32.mrf.mxu0
  %332 = vmatprep.mubr.bf16.mxu0 %v137
  %333 = vmatmul.mubr.bf16.gmra.mxu0 %v136
  %v334 = vpop.f32.mrf.mxu0
  %v335 = vadd.f32 %v74, %v334
  %v336 = vpop.f32.mrf.mxu0
  %v337 = vpop.f32.mrf.mxu0
  %v338 = vadd.f32 %v74, %v337
  %v339 = vpop.f32.mrf.mxu0
  %340 = vmatprep.mubr.bf16.mxu0 %v139
  %341 = vmatmul.mubr.bf16.gmra.mxu0 %v138
  %v342 = vpop.f32.mrf.mxu0
  %v343 = vadd.f32 %v74, %v342
  %v344 = vpop.f32.mrf.mxu0
  %v345 = vpop.f32.mrf.mxu0
  %v346 = vadd.f32 %v74, %v345
  %v347 = vpop.f32.mrf.mxu0
  %348 = vdwg.mxu0
  %v349 = vadd.f32 %v287, %v290
  %v350 = vadd.f32 %v349, %v295
  %v351 = vadd.f32 %v350, %v298
  %v352 = vadd.f32 %v351, %v303
  %v353 = vadd.f32 %v352, %v306
  %v354 = vadd.f32 %v353, %v311
  %v355 = vadd.f32 %v354, %v314
  %v356 = vadd.f32 %v355, %v319
  %v357 = vadd.f32 %v356, %v322
  %v358 = vadd.f32 %v357, %v327
  %v359 = vadd.f32 %v358, %v330
  %v360 = vadd.f32 %v359, %v335
  %v361 = vadd.f32 %v360, %v338
  %v362 = vadd.f32 %v361, %v343
  %v363 = vadd.f32 %v362, %v346
  %v364 = vrot.slane %v363, 4
  %v365 = vadd.f32 %v363, %v364
  %v366 = vrot.slane %v365, 2
  %v367 = vadd.f32 %v365, %v366
  %v368 = vrot.slane %v367, 1
  %v369 = vadd.f32 %v367, %v368
  %v370 = vmul.f32 %v369, 0.0078125
  %v371 = vmul.f32 %v287, %v287
  %v372 = vmul.f32 %v290, %v290
  %v373 = vmul.f32 %v295, %v295
  %v374 = vmul.f32 %v298, %v298
  %v375 = vmul.f32 %v303, %v303
  %v376 = vmul.f32 %v306, %v306
  %v377 = vmul.f32 %v311, %v311
  %v378 = vmul.f32 %v314, %v314
  %v379 = vmul.f32 %v319, %v319
  %v380 = vmul.f32 %v322, %v322
  %v381 = vmul.f32 %v327, %v327
  %v382 = vmul.f32 %v330, %v330
  %v383 = vmul.f32 %v335, %v335
  %v384 = vmul.f32 %v338, %v338
  %v385 = vmul.f32 %v343, %v343
  %v386 = vmul.f32 %v346, %v346
  %v387 = vadd.f32 %v371, %v372
  %v388 = vadd.f32 %v387, %v373
  %v389 = vadd.f32 %v388, %v374
  %v390 = vadd.f32 %v389, %v375
  %v391 = vadd.f32 %v390, %v376
  %v392 = vadd.f32 %v391, %v377
  %v393 = vadd.f32 %v392, %v378
  %v394 = vadd.f32 %v393, %v379
  %v395 = vadd.f32 %v394, %v380
  %v396 = vadd.f32 %v395, %v381
  %v397 = vadd.f32 %v396, %v382
  %v398 = vadd.f32 %v397, %v383
  %v399 = vadd.f32 %v398, %v384
  %v400 = vadd.f32 %v399, %v385
  %v401 = vadd.f32 %v400, %v386
  %v402 = vrot.slane %v401, 4
  %v403 = vadd.f32 %v401, %v402
  %v404 = vrot.slane %v403, 2
  %v405 = vadd.f32 %v403, %v404
  %v406 = vrot.slane %v405, 1
  %v407 = vadd.f32 %v405, %v406
  %v408 = vmul.f32 %v407, 0.0078125
  %v409 = vmul.f32 %v370, %v370
  %v410 = vsub.f32 %v408, %v409
  %v411 = vsub.f32 %v287, %v370
  %v412 = vsub.f32 %v290, %v370
  %v413 = vsub.f32 %v295, %v370
  %v414 = vsub.f32 %v298, %v370
  %v415 = vsub.f32 %v303, %v370
  %v416 = vsub.f32 %v306, %v370
  %v417 = vsub.f32 %v311, %v370
  %v418 = vsub.f32 %v314, %v370
  %v419 = vsub.f32 %v319, %v370
  %v420 = vsub.f32 %v322, %v370
  %v421 = vsub.f32 %v327, %v370
  %v422 = vsub.f32 %v330, %v370
  %v423 = vsub.f32 %v335, %v370
  %v424 = vsub.f32 %v338, %v370
  %v425 = vsub.f32 %v343, %v370
  %v426 = vsub.f32 %v346, %v370
  %v427 = vadd.f32 %v410, 1e-05
  %v428 = vrsqrt.pop %v427
  %v429 = vmul.f32 %v411, %v428
  %v430 = vmul.f32 %v412, %v428
  %v431 = vmul.f32 %v413, %v428
  %v432 = vmul.f32 %v414, %v428
  %v433 = vmul.f32 %v415, %v428
  %v434 = vmul.f32 %v416, %v428
  %v435 = vmul.f32 %v417, %v428
  %v436 = vmul.f32 %v418, %v428
  %v437 = vmul.f32 %v419, %v428
  %v438 = vmul.f32 %v420, %v428
  %v439 = vmul.f32 %v421, %v428
  %v440 = vmul.f32 %v422, %v428
  %v441 = vmul.f32 %v423, %v428
  %v442 = vmul.f32 %v424, %v428
  %v443 = vmul.f32 %v425, %v428
  %v444 = vmul.f32 %v426, %v428
  %v445 = vld [vmem:[%s3] sm:$0x1]
  %v447 = vlaneseq
  %v448 = vshrl.u32 %v447, 7
  %v449 = vsub.s32 0, %v448
  %v450 = vrot.slane %v445, %v449
  %v452 = vmul.f32 %v429, %v450
  %v453 = vmul.f32 %v430, %v450
  %v454 = vmul.f32 %v431, %v450
  %v455 = vmul.f32 %v432, %v450
  %v456 = vmul.f32 %v433, %v450
  %v457 = vmul.f32 %v434, %v450
  %v458 = vmul.f32 %v435, %v450
  %v459 = vmul.f32 %v436, %v450
  %v460 = vmul.f32 %v437, %v450
  %v461 = vmul.f32 %v438, %v450
  %v462 = vmul.f32 %v439, %v450
  %v463 = vmul.f32 %v440, %v450
  %v464 = vmul.f32 %v441, %v450
  %v465 = vmul.f32 %v442, %v450
  %v466 = vmul.f32 %v443, %v450
  %v467 = vmul.f32 %v444, %v450
  %v468 = vld [vmem:[%s4] sm:$0x1]
  %v470 = vlaneseq
  %v471 = vshrl.u32 %v470, 7
  %v472 = vsub.s32 0, %v471
  %v473 = vrot.slane %v468, %v472
  %v475 = vadd.f32 %v452, %v473
  %v476 = vadd.f32 %v453, %v473
  %v477 = vadd.f32 %v454, %v473
  %v478 = vadd.f32 %v455, %v473
  %v479 = vadd.f32 %v456, %v473
  %v480 = vadd.f32 %v457, %v473
  %v481 = vadd.f32 %v458, %v473
  %v482 = vadd.f32 %v459, %v473
  %v483 = vadd.f32 %v460, %v473
  %v484 = vadd.f32 %v461, %v473
  %v485 = vadd.f32 %v462, %v473
  %v486 = vadd.f32 %v463, %v473
  %v487 = vadd.f32 %v464, %v473
  %v488 = vadd.f32 %v465, %v473
  %v489 = vadd.f32 %v466, %v473
  %v490 = vadd.f32 %v467, %v473
  %491 = vst [vmem:[%s5] sm:$0xff] %v475
  %492 = vst [vmem:[%s5 + $0x8] sm:$0xff] %v476
  %493 = vst [vmem:[%s5 + $0x10] sm:$0xff] %v477
  %494 = vst [vmem:[%s5 + $0x18] sm:$0xff] %v478
  %495 = vst [vmem:[%s5 + $0x20] sm:$0xff] %v479
  %496 = vst [vmem:[%s5 + $0x28] sm:$0xff] %v480
  %497 = vst [vmem:[%s5 + $0x30] sm:$0xff] %v481
  %498 = vst [vmem:[%s5 + $0x38] sm:$0xff] %v482
  %499 = vst [vmem:[%s5 + $0x40] sm:$0xff] %v483
  %500 = vst [vmem:[%s5 + $0x48] sm:$0xff] %v484
  %501 = vst [vmem:[%s5 + $0x50] sm:$0xff] %v485
  %502 = vst [vmem:[%s5 + $0x58] sm:$0xff] %v486
  %503 = vst [vmem:[%s5 + $0x60] sm:$0xff] %v487
  %504 = vst [vmem:[%s5 + $0x68] sm:$0xff] %v488
  %505 = vst [vmem:[%s5 + $0x70] sm:$0xff] %v489
  %506 = vst [vmem:[%s5 + $0x78] sm:$0xff] %v490
  // Predicated region
  $region22: #{_lambda_.16} parent=0 // pred_check
    _
  $region23: #{_lambda_.16} parent=0 // pred_check_branch
    %508 = sbr.rel (0) target = $region25
  $region24: #{_lambda_.16} parent=0 // pred_region
    _
  $region25: #{_lambda_.16} parent=0 // pred_fallthru
    _
  // Predicated region
  $region26: #{_lambda_.16} parent=0 // pred_check
    _
  $region27: #{_lambda_.16} parent=0 // pred_check_branch
    %510 = sbr.rel (0) target = $region29
  $region28: #{_lambda_.16} parent=0 // pred_region
    _
  $region29: #{_lambda_.16} parent=0 // pred_fallthru
    _

// kernel: _lambda_.17
$region0: #{_lambda_.17}
  #allocation0 [shape = 'u32[]', space=smem, size = 0x4, offset = 0x4, fixed_abs, tag = 'smem constant byte address 0x4 - core index']
  #allocation1 [shape = 'u32[144,128]{1,0:T(1,128)}', space=vmem, size = 0x12000, scoped, tag = 'internal scratch']
  %s0 = inlined_call_operand.vmem [shape: bf16[32,512], index: 0, kind: input, shape index: {}]
  %s1 = inlined_call_operand.vmem [shape: bf16[512,128], index: 1, kind: input, shape index: {}]
  %s2 = inlined_call_operand.vmem [shape: f32[1,128], index: 2, kind: input, shape index: {}]
  %s3 = inlined_call_operand.vmem [shape: f32[1,128], index: 3, kind: input, shape index: {}]
  %s4 = inlined_call_operand.vmem [shape: f32[1,128], index: 4, kind: input, shape index: {}]
  %s5 = inlined_call_operand.vmem [shape: f32[32,128], index: 5, kind: output, shape index: {}]
  %s6 = sld [smem:[#allocation0]]
  $region30: #{_lambda_.17} parent=0
    _
  %s8 = ssub.s32 1, %s6
  %s9 = scalar_select 0, %s8, %s6
  // Predicated region
  $region2: #{_lambda_.17} parent=0 // pred_check
    _
  $region3: #{_lambda_.17} parent=0 // pred_check_branch
    %11 = sbr.rel (0) target = $region5
  $region4: #{_lambda_.17} parent=0 // pred_region
    _
  $region5: #{_lambda_.17} parent=0 // pred_fallthru
    _
  // Predicated region
  $region6: #{_lambda_.17} parent=0 // pred_check
    _
  $region7: #{_lambda_.17} parent=0 // pred_check_branch
    %13 = sbr.rel (0) target = $region9
  $region8: #{_lambda_.17} parent=0 // pred_region
    _
  $region9: #{_lambda_.17} parent=0 // pred_fallthru
    _
  // Predicated region
  $region10: #{_lambda_.17} parent=0 // pred_check
    _
  $region11: #{_lambda_.17} parent=0 // pred_check_branch
    %15 = sbr.rel (0) target = $region13
  $region12: #{_lambda_.17} parent=0 // pred_region
    _
  $region13: #{_lambda_.17} parent=0 // pred_fallthru
    _
  // Predicated region
  $region14: #{_lambda_.17} parent=0 // pred_check
    _
  $region15: #{_lambda_.17} parent=0 // pred_check_branch
    %17 = sbr.rel (0) target = $region17
  $region16: #{_lambda_.17} parent=0 // pred_region
    _
  $region17: #{_lambda_.17} parent=0 // pred_fallthru
    _
  // Predicated region
  $region18: #{_lambda_.17} parent=0 // pred_check
    _
  $region19: #{_lambda_.17} parent=0 // pred_check_branch
    %19 = sbr.rel (0) target = $region21
  $region20: #{_lambda_.17} parent=0 // pred_region
    _
  $region21: #{_lambda_.17} parent=0 // pred_fallthru
    _
  %v21 = vld [vmem:[%s0] sm:$0xff]
  %v22 = vld [vmem:[%s0 + $0x8] sm:$0xff]
  %v23 = vld [vmem:[%s0 + $0x10] sm:$0xff]
  %v24 = vld [vmem:[%s0 + $0x18] sm:$0xff]
  %v25 = vld [vmem:[%s0 + $0x20] sm:$0xff]
  %v26 = vld [vmem:[%s0 + $0x28] sm:$0xff]
  %v27 = vld [vmem:[%s0 + $0x30] sm:$0xff]
  %v28 = vld [vmem:[%s0 + $0x38] sm:$0xff]
  %v29 = vld [vmem:[%s1] sm:$0xf]
  %v30 = vld [vmem:[%s1 + $0x4] sm:$0xf]
  %v31 = vld [vmem:[%s1 + $0x8] sm:$0xf]
  %v32 = vld [vmem:[%s1 + $0xc] sm:$0xf]
  %v33 = vld [vmem:[%s1 + $0x10] sm:$0xf]
  %v34 = vld [vmem:[%s1 + $0x14] sm:$0xf]
  %v35 = vld [vmem:[%s1 + $0x18] sm:$0xf]
  %v36 = vld [vmem:[%s1 + $0x1c] sm:$0xf]
  %v37 = vld [vmem:[%s1 + $0x20] sm:$0xf]
  %v38 = vld [vmem:[%s1 + $0x24] sm:$0xf]
  %v39 = vld [vmem:[%s1 + $0x28] sm:$0xf]
  %v40 = vld [vmem:[%s1 + $0x2c] sm:$0xf]
  %v41 = vld [vmem:[%s1 + $0x30] sm:$0xf]
  %v42 = vld [vmem:[%s1 + $0x34] sm:$0xf]
  %v43 = vld [vmem:[%s1 + $0x38] sm:$0xf]
  %v44 = vld [vmem:[%s1 + $0x3c] sm:$0xf]
  %v45 = vld [vmem:[%s1 + $0x40] sm:$0xf]
  %v46 = vld [vmem:[%s1 + $0x44] sm:$0xf]
  %v47 = vld [vmem:[%s1 + $0x48] sm:$0xf]
  %v48 = vld [vmem:[%s1 + $0x4c] sm:$0xf]
  %v49 = vld [vmem:[%s1 + $0x50] sm:$0xf]
  %v50 = vld [vmem:[%s1 + $0x54] sm:$0xf]
  %v51 = vld [vmem:[%s1 + $0x58] sm:$0xf]
  %v52 = vld [vmem:[%s1 + $0x5c] sm:$0xf]
  %v53 = vld [vmem:[%s1 + $0x60] sm:$0xf]
  %v54 = vld [vmem:[%s1 + $0x64] sm:$0xf]
  %v55 = vld [vmem:[%s1 + $0x68] sm:$0xf]
  %v56 = vld [vmem:[%s1 + $0x6c] sm:$0xf]
  %v57 = vld [vmem:[%s1 + $0x70] sm:$0xf]
  %v58 = vld [vmem:[%s1 + $0x74] sm:$0xf]
  %v59 = vld [vmem:[%s1 + $0x78] sm:$0xf]
  %v60 = vld [vmem:[%s1 + $0x7c] sm:$0xf]
  %v61 = vld [vmem:[%s1 + $0x80] sm:$0xf]
  %v62 = vld [vmem:[%s1 + $0x84] sm:$0xf]
  %v63 = vld [vmem:[%s1 + $0x88] sm:$0xf]
  %v64 = vld [vmem:[%s1 + $0x8c] sm:$0xf]
  %v65 = vld [vmem:[%s1 + $0x90] sm:$0xf]
  %v66 = vld [vmem:[%s1 + $0x94] sm:$0xf]
  %v67 = vld [vmem:[%s1 + $0x98] sm:$0xf]
  %v68 = vld [vmem:[%s1 + $0x9c] sm:$0xf]
  %v69 = vld [vmem:[%s1 + $0xa0] sm:$0xf]
  %v70 = vld [vmem:[%s1 + $0xa4] sm:$0xf]
  %v71 = vld [vmem:[%s1 + $0xa8] sm:$0xf]
  %v72 = vld [vmem:[%s1 + $0xac] sm:$0xf]
  %v73 = vld [vmem:[%s1 + $0xb0] sm:$0xf]
  %v74 = vld [vmem:[%s1 + $0xb4] sm:$0xf]
  %v75 = vld [vmem:[%s1 + $0xb8] sm:$0xf]
  %v76 = vld [vmem:[%s1 + $0xbc] sm:$0xf]
  %v77 = vld [vmem:[%s1 + $0xc0] sm:$0xf]
  %v78 = vld [vmem:[%s1 + $0xc4] sm:$0xf]
  %v79 = vld [vmem:[%s1 + $0xc8] sm:$0xf]
  %v80 = vld [vmem:[%s1 + $0xcc] sm:$0xf]
  %v81 = vld [vmem:[%s1 + $0xd0] sm:$0xf]
  %v82 = vld [vmem:[%s1 + $0xd4] sm:$0xf]
  %v83 = vld [vmem:[%s1 + $0xd8] sm:$0xf]
  %v84 = vld [vmem:[%s1 + $0xdc] sm:$0xf]
  %v85 = vld [vmem:[%s1 + $0xe0] sm:$0xf]
  %v86 = vld [vmem:[%s1 + $0xe4] sm:$0xf]
  %v87 = vld [vmem:[%s1 + $0xe8] sm:$0xf]
  %v88 = vld [vmem:[%s1 + $0xec] sm:$0xf]
  %v89 = vld [vmem:[%s1 + $0xf0] sm:$0xf]
  %v90 = vld [vmem:[%s1 + $0xf4] sm:$0xf]
  %v91 = vld [vmem:[%s1 + $0xf8] sm:$0xf]
  %v92 = vld [vmem:[%s1 + $0xfc] sm:$0xf]
  %v93 = vld [vmem:[%s2] sm:$0x1]
  %v95 = vlaneseq
  %v96 = vshrl.u32 %v95, 7
  %v97 = vsub.s32 0, %v96
  %v98 = vrot.slane %v93, %v97
  %v108 = vunpack.c.l.b16 %v21
  %v109 = vunpack.c.h.b16 %v21
  %v110 = vunpack.c.l.b16 %v22
  %v111 = vunpack.c.h.b16 %v22
  %v112 = vunpack.c.l.b16 %v23
  %v113 = vunpack.c.h.b16 %v23
  %v114 = vunpack.c.l.b16 %v24
  %v115 = vunpack.c.h.b16 %v24
  %v116 = vunpack.c.l.b16 %v25
  %v117 = vunpack.c.h.b16 %v25
  %v118 = vunpack.c.l.b16 %v26
  %v119 = vunpack.c.h.b16 %v26
  %v120 = vunpack.c.l.b16 %v27
  %v121 = vunpack.c.h.b16 %v27
  %v122 = vunpack.c.l.b16 %v28
  %v123 = vunpack.c.h.b16 %v28
  %v124 = vpack.c.b16 %v112, %v108
  %v125 = vpack.c.b16 %v113, %v109
  %v126 = vpack.c.b16 %v114, %v110
  %v127 = vpack.c.b16 %v115, %v111
  %v128 = vpack.c.b16 %v120, %v116
  %v129 = vpack.c.b16 %v121, %v117
  %v130 = vpack.c.b16 %v122, %v118
  %v131 = vpack.c.b16 %v123, %v119
  %v204 = vunpack.c.l.b16 %v29
  %v205 = vunpack.c.l.b16 %v30
  %v206 = vunpack.c.l.b16 %v31
  %v207 = vunpack.c.l.b16 %v32
  %v208 = vunpack.c.l.b16 %v33
  %v209 = vunpack.c.l.b16 %v34
  %v210 = vunpack.c.l.b16 %v35
  %v211 = vunpack.c.l.b16 %v36
  %v212 = vunpack.c.l.b16 %v37
  %v213 = vunpack.c.l.b16 %v38
  %v214 = vunpack.c.l.b16 %v39
  %v215 = vunpack.c.l.b16 %v40
  %v216 = vunpack.c.l.b16 %v41
  %v217 = vunpack.c.l.b16 %v42
  %v218 = vunpack.c.l.b16 %v43
  %v219 = vunpack.c.l.b16 %v44
  %v220 = vunpack.c.l.b16 %v45
  %v221 = vunpack.c.l.b16 %v46
  %v222 = vunpack.c.l.b16 %v47
  %v223 = vunpack.c.l.b16 %v48
  %v224 = vunpack.c.l.b16 %v49
  %v225 = vunpack.c.l.b16 %v50
  %v226 = vunpack.c.l.b16 %v51
  %v227 = vunpack.c.l.b16 %v52
  %v228 = vunpack.c.l.b16 %v53
  %v229 = vunpack.c.l.b16 %v54
  %v230 = vunpack.c.l.b16 %v55
  %v231 = vunpack.c.l.b16 %v56
  %v232 = vunpack.c.l.b16 %v57
  %v233 = vunpack.c.l.b16 %v58
  %v234 = vunpack.c.l.b16 %v59
  %v235 = vunpack.c.l.b16 %v60
  %v236 = vunpack.c.l.b16 %v61
  %v237 = vunpack.c.l.b16 %v62
  %v238 = vunpack.c.l.b16 %v63
  %v239 = vunpack.c.l.b16 %v64
  %v240 = vunpack.c.l.b16 %v65
  %v241 = vunpack.c.l.b16 %v66
  %v242 = vunpack.c.l.b16 %v67
  %v243 = vunpack.c.l.b16 %v68
  %v244 = vunpack.c.l.b16 %v69
  %v245 = vunpack.c.l.b16 %v70
  %v246 = vunpack.c.l.b16 %v71
  %v247 = vunpack.c.l.b16 %v72
  %v248 = vunpack.c.l.b16 %v73
  %v249 = vunpack.c.l.b16 %v74
  %v250 = vunpack.c.l.b16 %v75
  %v251 = vunpack.c.l.b16 %v76
  %v252 = vunpack.c.l.b16 %v77
  %v253 = vunpack.c.l.b16 %v78
  %v254 = vunpack.c.l.b16 %v79
  %v255 = vunpack.c.l.b16 %v80
  %v256 = vunpack.c.l.b16 %v81
  %v257 = vunpack.c.l.b16 %v82
  %v258 = vunpack.c.l.b16 %v83
  %v259 = vunpack.c.l.b16 %v84
  %v260 = vunpack.c.l.b16 %v85
  %v261 = vunpack.c.l.b16 %v86
  %v262 = vunpack.c.l.b16 %v87
  %v263 = vunpack.c.l.b16 %v88
  %v264 = vunpack.c.l.b16 %v89
  %v265 = vunpack.c.l.b16 %v90
  %v266 = vunpack.c.l.b16 %v91
  %v267 = vunpack.c.l.b16 %v92
  %v268 = vpack.c.b16 %v205, %v204
  %v269 = vpack.c.b16 %v207, %v206
  %v270 = vpack.c.b16 %v209, %v208
  %v271 = vpack.c.b16 %v211, %v210
  %v272 = vpack.c.b16 %v213, %v212
  %v273 = vpack.c.b16 %v215, %v214
  %v274 = vpack.c.b16 %v217, %v216
  %v275 = vpack.c.b16 %v219, %v218
  %v276 = vpack.c.b16 %v221, %v220
  %v277 = vpack.c.b16 %v223, %v222
  %v278 = vpack.c.b16 %v225, %v224
  %v279 = vpack.c.b16 %v227, %v226
  %v280 = vpack.c.b16 %v229, %v228
  %v281 = vpack.c.b16 %v231, %v230
  %v282 = vpack.c.b16 %v233, %v232
  %v283 = vpack.c.b16 %v235, %v234
  %v284 = vpack.c.b16 %v237, %v236
  %v285 = vpack.c.b16 %v239, %v238
  %v286 = vpack.c.b16 %v241, %v240
  %v287 = vpack.c.b16 %v243, %v242
  %v288 = vpack.c.b16 %v245, %v244
  %v289 = vpack.c.b16 %v247, %v246
  %v290 = vpack.c.b16 %v249, %v248
  %v291 = vpack.c.b16 %v251, %v250
  %v292 = vpack.c.b16 %v253, %v252
  %v293 = vpack.c.b16 %v255, %v254
  %v294 = vpack.c.b16 %v257, %v256
  %v295 = vpack.c.b16 %v259, %v258
  %v296 = vpack.c.b16 %v261, %v260
  %v297 = vpack.c.b16 %v263, %v262
  %v298 = vpack.c.b16 %v265, %v264
  %v299 = vpack.c.b16 %v267, %v266
  %332 = vmatprep.subr.bf16.mxu0 0
  %333 = vmatpush1.bf16.msra.mxu0 %v275
  %334 = vmatprep.subr.bf16.mxu0 0
  %335 = vmatpush1.bf16.msra.mxu0 %v274
  %336 = vmatprep.subr.bf16.mxu0 0
  %337 = vmatpush1.bf16.msra.mxu0 %v273
  %338 = vmatprep.subr.bf16.mxu0 0
  %339 = vmatpush1.bf16.msra.mxu0 %v272
  %340 = vmatprep.subr.bf16.mxu0 0
  %341 = vmatpush1.bf16.msra.mxu0 %v271
  %342 = vmatprep.subr.bf16.mxu0 0
  %343 = vmatpush1.bf16.msra.mxu0 %v270
  %344 = vmatprep.subr.bf16.mxu0 0
  %345 = vmatpush1.bf16.msra.mxu0 %v269
  %346 = vmatprep.subr.bf16.mxu0 0
  %347 = vmatpush1.bf16.msra.mxu0 %v268
  %348 = vmatprep.subr.bf16.mxu0 0
  %349 = vmatpush2.bf16.msra.mxu0 %v283
  %350 = vmatprep.subr.bf16.mxu0 0
  %351 = vmatpush2.bf16.msra.mxu0 %v282
  %352 = vmatprep.subr.bf16.mxu0 0
  %353 = vmatpush2.bf16.msra.mxu0 %v281
  %354 = vmatprep.subr.bf16.mxu0 0
  %355 = vmatpush2.bf16.msra.mxu0 %v280
  %356 = vmatprep.subr.bf16.mxu0 0
  %357 = vmatpush2.bf16.msra.mxu0 %v279
  %358 = vmatprep.subr.bf16.mxu0 0
  %359 = vmatpush2.bf16.msra.mxu0 %v278
  %360 = vmatprep.subr.bf16.mxu0 0
  %361 = vmatpush2.bf16.msra.mxu0 %v277
  %362 = vmatprep.subr.bf16.mxu0 0
  %363 = vmatpush2.bf16.msra.mxu0 %v276
  %364 = vmatprep.mubr.bf16.mxu0 %v125
  %365 = vmatmul.mubr.bf16.gmra.mxu0 %v124
  %v366 = vpop.f32.mrf.mxu0
  %v367 = vadd.f32 %v98, %v366
  %v368 = vpop.f32.mrf.mxu0
  %v369 = vpop.f32.mrf.mxu0
  %v370 = vadd.f32 %v98, %v369
  %v371 = vpop.f32.mrf.mxu0
  %372 = vmatprep.mubr.bf16.mxu0 %v129
  %373 = vmatmul.mubr.bf16.gmra.mxu0 %v128
  %v374 = vpop.f32.mrf.mxu0
  %v375 = vadd.f32 %v98, %v374
  %v376 = vpop.f32.mrf.mxu0
  %v377 = vpop.f32.mrf.mxu0
  %v378 = vadd.f32 %v98, %v377
  %v379 = vpop.f32.mrf.mxu0
  %380 = vdwg.mxu0
  %381 = vmatprep.subr.bf16.mxu0 0
  %382 = vmatpush1.bf16.msra.mxu0 %v291
  %383 = vmatprep.subr.bf16.mxu0 0
  %384 = vmatpush1.bf16.msra.mxu0 %v290
  %385 = vmatprep.subr.bf16.mxu0 0
  %386 = vmatpush1.bf16.msra.mxu0 %v289
  %387 = vmatprep.subr.bf16.mxu0 0
  %388 = vmatpush1.bf16.msra.mxu0 %v288
  %389 = vmatprep.subr.bf16.mxu0 0
  %390 = vmatpush1.bf16.msra.mxu0 %v287
  %391 = vmatprep.subr.bf16.mxu0 0
  %392 = vmatpush1.bf16.msra.mxu0 %v286
  %393 = vmatprep.subr.bf16.mxu0 0
  %394 = vmatpush1.bf16.msra.mxu0 %v285
  %395 = vmatprep.subr.bf16.mxu0 0
  %396 = vmatpush1.bf16.msra.mxu0 %v284
  %397 = vmatprep.subr.bf16.mxu0 0
  %398 = vmatpush2.bf16.msra.mxu0 %v299
  %399 = vmatprep.subr.bf16.mxu0 0
  %400 = vmatpush2.bf16.msra.mxu0 %v298
  %401 = vmatprep.subr.bf16.mxu0 0
  %402 = vmatpush2.bf16.msra.mxu0 %v297
  %403 = vmatprep.subr.bf16.mxu0 0
  %404 = vmatpush2.bf16.msra.mxu0 %v296
  %405 = vmatprep.subr.bf16.mxu0 0
  %406 = vmatpush2.bf16.msra.mxu0 %v295
  %407 = vmatprep.subr.bf16.mxu0 0
  %408 = vmatpush2.bf16.msra.mxu0 %v294
  %409 = vmatprep.subr.bf16.mxu0 0
  %410 = vmatpush2.bf16.msra.mxu0 %v293
  %411 = vmatprep.subr.bf16.mxu0 0
  %412 = vmatpush2.bf16.msra.mxu0 %v292
  %413 = vmatprep.mubr.bf16.mxu0 %v127
  %414 = vmatmul.mubr.bf16.gmra.mxu0 %v126
  %v415 = vpop.f32.mrf.mxu0
  %v416 = vadd.f32 %v367, %v415
  %v417 = vpop.f32.mrf.mxu0
  %v418 = vpop.f32.mrf.mxu0
  %v419 = vadd.f32 %v370, %v418
  %v420 = vpop.f32.mrf.mxu0
  %421 = vmatprep.mubr.bf16.mxu0 %v131
  %422 = vmatmul.mubr.bf16.gmra.mxu0 %v130
  %v423 = vpop.f32.mrf.mxu0
  %v424 = vadd.f32 %v375, %v423
  %v425 = vpop.f32.mrf.mxu0
  %v426 = vpop.f32.mrf.mxu0
  %v427 = vadd.f32 %v378, %v426
  %v428 = vpop.f32.mrf.mxu0
  %429 = vdwg.mxu0
  %v430 = vadd.f32 %v416, %v419
  %v431 = vadd.f32 %v430, %v424
  %v432 = vadd.f32 %v431, %v427
  %v433 = vrot.slane %v432, 4
  %v434 = vadd.f32 %v432, %v433
  %v435 = vrot.slane %v434, 2
  %v436 = vadd.f32 %v434, %v435
  %v437 = vrot.slane %v436, 1
  %v438 = vadd.f32 %v436, %v437
  %v439 = vmul.f32 %v438, 0.03125
  %v440 = vmul.f32 %v416, %v416
  %v441 = vmul.f32 %v419, %v419
  %v442 = vmul.f32 %v424, %v424
  %v443 = vmul.f32 %v427, %v427
  %v444 = vadd.f32 %v440, %v441
  %v445 = vadd.f32 %v444, %v442
  %v446 = vadd.f32 %v445, %v443
  %v447 = vrot.slane %v446, 4
  %v448 = vadd.f32 %v446, %v447
  %v449 = vrot.slane %v448, 2
  %v450 = vadd.f32 %v448, %v449
  %v451 = vrot.slane %v450, 1
  %v452 = vadd.f32 %v450, %v451
  %v453 = vmul.f32 %v452, 0.03125
  %v454 = vmul.f32 %v439, %v439
  %v455 = vsub.f32 %v453, %v454
  %v456 = vsub.f32 %v416, %v439
  %v457 = vsub.f32 %v419, %v439
  %v458 = vsub.f32 %v424, %v439
  %v459 = vsub.f32 %v427, %v439
  %v460 = vadd.f32 %v455, 1e-05
  %v461 = vrsqrt.pop %v460
  %v462 = vmul.f32 %v456, %v461
  %v463 = vmul.f32 %v457, %v461
  %v464 = vmul.f32 %v458, %v461
  %v465 = vmul.f32 %v459, %v461
  %v466 = vld [vmem:[%s3] sm:$0x1]
  %v468 = vlaneseq
  %v469 = vshrl.u32 %v468, 7
  %v470 = vsub.s32 0, %v469
  %v471 = vrot.slane %v466, %v470
  %v473 = vmul.f32 %v462, %v471
  %v474 = vmul.f32 %v463, %v471
  %v475 = vmul.f32 %v464, %v471
  %v476 = vmul.f32 %v465, %v471
  %v477 = vld [vmem:[%s4] sm:$0x1]
  %v479 = vlaneseq
  %v480 = vshrl.u32 %v479, 7
  %v481 = vsub.s32 0, %v480
  %v482 = vrot.slane %v477, %v481
  %v484 = vadd.f32 %v473, %v482
  %v485 = vadd.f32 %v474, %v482
  %v486 = vadd.f32 %v475, %v482
  %v487 = vadd.f32 %v476, %v482
  %488 = vst [vmem:[%s5] sm:$0xff] %v484
  %489 = vst [vmem:[%s5 + $0x8] sm:$0xff] %v485
  %490 = vst [vmem:[%s5 + $0x10] sm:$0xff] %v486
  %491 = vst [vmem:[%s5 + $0x18] sm:$0xff] %v487
  // Predicated region
  $region22: #{_lambda_.17} parent=0 // pred_check
    _
  $region23: #{_lambda_.17} parent=0 // pred_check_branch
    %493 = sbr.rel (0) target = $region25
  $region24: #{_lambda_.17} parent=0 // pred_region
    _
  $region25: #{_lambda_.17} parent=0 // pred_fallthru
    _
  // Predicated region
  $region26: #{_lambda_.17} parent=0 // pred_check
    _
  $region27: #{_lambda_.17} parent=0 // pred_check_branch
    %495 = sbr.rel (0) target = $region29
  $region28: #{_lambda_.17} parent=0 // pred_region
    _
  $region29: #{_lambda_.17} parent=0 // pred_fallthru
    _

// kernel: _lambda_.19
$region0: #{_lambda_.19}
  #allocation0 [shape = 'u32[]', space=smem, size = 0x4, offset = 0x4, fixed_abs, tag = 'smem constant byte address 0x4 - core index']
  #allocation1 [shape = 'u32[144,128]{1,0:T(1,128)}', space=vmem, size = 0x12000, scoped, tag = 'internal scratch']
  %s0 = inlined_call_operand.vmem [shape: bf16[32,256], index: 0, kind: input, shape index: {}]
  %s1 = inlined_call_operand.vmem [shape: bf16[256,256], index: 1, kind: input, shape index: {}]
  %s2 = inlined_call_operand.vmem [shape: f32[1,256], index: 2, kind: input, shape index: {}, may-alias: {2,3,4}]
  %s3 = inlined_call_operand.vmem [shape: f32[1,256], index: 3, kind: input, shape index: {}, may-alias: {2,3,4}]
  %s4 = inlined_call_operand.vmem [shape: f32[1,256], index: 4, kind: input, shape index: {}, may-alias: {2,3,4}]
  %s5 = inlined_call_operand.vmem [shape: f32[32,256], index: 5, kind: output, shape index: {}]
  %s6 = sld [smem:[#allocation0]]
  $region30: #{_lambda_.19} parent=0
    _
  %s8 = ssub.s32 1, %s6
  %s9 = scalar_select 0, %s8, %s6
  // Predicated region
  $region2: #{_lambda_.19} parent=0 // pred_check
    _
  $region3: #{_lambda_.19} parent=0 // pred_check_branch
    %11 = sbr.rel (0) target = $region5
  $region4: #{_lambda_.19} parent=0 // pred_region
    _
  $region5: #{_lambda_.19} parent=0 // pred_fallthru
    _
  // Predicated region
  $region6: #{_lambda_.19} parent=0 // pred_check
    _
  $region7: #{_lambda_.19} parent=0 // pred_check_branch
    %13 = sbr.rel (0) target = $region9
  $region8: #{_lambda_.19} parent=0 // pred_region
    _
  $region9: #{_lambda_.19} parent=0 // pred_fallthru
    _
  // Predicated region
  $region10: #{_lambda_.19} parent=0 // pred_check
    _
  $region11: #{_lambda_.19} parent=0 // pred_check_branch
    %15 = sbr.rel (0) target = $region13
  $region12: #{_lambda_.19} parent=0 // pred_region
    _
  $region13: #{_lambda_.19} parent=0 // pred_fallthru
    _
  // Predicated region
  $region14: #{_lambda_.19} parent=0 // pred_check
    _
  $region15: #{_lambda_.19} parent=0 // pred_check_branch
    %17 = sbr.rel (0) target = $region17
  $region16: #{_lambda_.19} parent=0 // pred_region
    _
  $region17: #{_lambda_.19} parent=0 // pred_fallthru
    _
  // Predicated region
  $region18: #{_lambda_.19} parent=0 // pred_check
    _
  $region19: #{_lambda_.19} parent=0 // pred_check_branch
    %19 = sbr.rel (0) target = $region21
  $region20: #{_lambda_.19} parent=0 // pred_region
    _
  $region21: #{_lambda_.19} parent=0 // pred_fallthru
    _
  %v20 = vld [vmem:[%s0] sm:$0xff]
  %v21 = vld [vmem:[%s0 + $0x8] sm:$0xff]
  %v22 = vld [vmem:[%s0 + $0x10] sm:$0xff]
  %v23 = vld [vmem:[%s0 + $0x18] sm:$0xff]
  %v24 = vld [vmem:[%s1] sm:$0xff]
  %v25 = vld [vmem:[%s1 + $0x8] sm:$0xff]
  %v26 = vld [vmem:[%s1 + $0x10] sm:$0xff]
  %v27 = vld [vmem:[%s1 + $0x18] sm:$0xff]
  %v28 = vld [vmem:[%s1 + $0x20] sm:$0xff]
  %v29 = vld [vmem:[%s1 + $0x28] sm:$0xff]
  %v30 = vld [vmem:[%s1 + $0x30] sm:$0xff]
  %v31 = vld [vmem:[%s1 + $0x38] sm:$0xff]
  %v32 = vld [vmem:[%s1 + $0x40] sm:$0xff]
  %v33 = vld [vmem:[%s1 + $0x48] sm:$0xff]
  %v34 = vld [vmem:[%s1 + $0x50] sm:$0xff]
  %v35 = vld [vmem:[%s1 + $0x58] sm:$0xff]
  %v36 = vld [vmem:[%s1 + $0x60] sm:$0xff]
  %v37 = vld [vmem:[%s1 + $0x68] sm:$0xff]
  %v38 = vld [vmem:[%s1 + $0x70] sm:$0xff]
  %v39 = vld [vmem:[%s1 + $0x78] sm:$0xff]
  %v40 = vld [vmem:[%s1 + $0x80] sm:$0xff]
  %v41 = vld [vmem:[%s1 + $0x88] sm:$0xff]
  %v42 = vld [vmem:[%s1 + $0x90] sm:$0xff]
  %v43 = vld [vmem:[%s1 + $0x98] sm:$0xff]
  %v44 = vld [vmem:[%s1 + $0xa0] sm:$0xff]
  %v45 = vld [vmem:[%s1 + $0xa8] sm:$0xff]
  %v46 = vld [vmem:[%s1 + $0xb0] sm:$0xff]
  %v47 = vld [vmem:[%s1 + $0xb8] sm:$0xff]
  %v48 = vld [vmem:[%s1 + $0xc0] sm:$0xff]
  %v49 = vld [vmem:[%s1 + $0xc8] sm:$0xff]
  %v50 = vld [vmem:[%s1 + $0xd0] sm:$0xff]
  %v51 = vld [vmem:[%s1 + $0xd8] sm:$0xff]
  %v52 = vld [vmem:[%s1 + $0xe0] sm:$0xff]
  %v53 = vld [vmem:[%s1 + $0xe8] sm:$0xff]
  %v54 = vld [vmem:[%s1 + $0xf0] sm:$0xff]
  %v55 = vld [vmem:[%s1 + $0xf8] sm:$0xff]
  %v56 = vld [vmem:[%s2] sm:$0x3]
  %v58 = vlaneseq
  %v59 = vshrl.u32 %v58, 7
  %v60 = vsub.s32 0, %v59
  %v61 = vrot.slane %v56, %v60
  %v62 = vlaneseq
  %v63 = vshrl.u32 %v62, 7
  %v64 = vsub.s32 1, %v63
  %v65 = vrot.slane %v56, %v64
  %v72 = vunpack.c.l.b16 %v20
  %v73 = vunpack.c.h.b16 %v20
  %v74 = vunpack.c.l.b16 %v21
  %v75 = vunpack.c.h.b16 %v21
  %v76 = vunpack.c.l.b16 %v22
  %v77 = vunpack.c.h.b16 %v22
  %v78 = vunpack.c.l.b16 %v23
  %v79 = vunpack.c.h.b16 %v23
  %v80 = vpack.c.b16 %v74, %v72
  %v81 = vpack.c.b16 %v75, %v73
  %v82 = vpack.c.b16 %v78, %v76
  %v83 = vpack.c.b16 %v79, %v77
  %v120 = vunpack.c.l.b16 %v24
  %v121 = vunpack.c.h.b16 %v24
  %v122 = vunpack.c.l.b16 %v25
  %v123 = vunpack.c.h.b16 %v25
  %v124 = vunpack.c.l.b16 %v26
  %v125 = vunpack.c.h.b16 %v26
  %v126 = vunpack.c.l.b16 %v27
  %v127 = vunpack.c.h.b16 %v27
  %v128 = vunpack.c.l.b16 %v28
  %v129 = vunpack.c.h.b16 %v28
  %v130 = vunpack.c.l.b16 %v29
  %v131 = vunpack.c.h.b16 %v29
  %v132 = vunpack.c.l.b16 %v30
  %v133 = vunpack.c.h.b16 %v30
  %v134 = vunpack.c.l.b16 %v31
  %v135 = vunpack.c.h.b16 %v31
  %v136 = vunpack.c.l.b16 %v32
  %v137 = vunpack.c.h.b16 %v32
  %v138 = vunpack.c.l.b16 %v33
  %v139 = vunpack.c.h.b16 %v33
  %v140 = vunpack.c.l.b16 %v34
  %v141 = vunpack.c.h.b16 %v34
  %v142 = vunpack.c.l.b16 %v35
  %v143 = vunpack.c.h.b16 %v35
  %v144 = vunpack.c.l.b16 %v36
  %v145 = vunpack.c.h.b16 %v36
  %v146 = vunpack.c.l.b16 %v37
  %v147 = vunpack.c.h.b16 %v37
  %v148 = vunpack.c.l.b16 %v38
  %v149 = vunpack.c.h.b16 %v38
  %v150 = vunpack.c.l.b16 %v39
  %v151 = vunpack.c.h.b16 %v39
  %v152 = vunpack.c.l.b16 %v40
  %v153 = vunpack.c.h.b16 %v40
  %v154 = vunpack.c.l.b16 %v41
  %v155 = vunpack.c.h.b16 %v41
  %v156 = vunpack.c.l.b16 %v42
  %v157 = vunpack.c.h.b16 %v42
  %v158 = vunpack.c.l.b16 %v43
  %v159 = vunpack.c.h.b16 %v43
  %v160 = vunpack.c.l.b16 %v44
  %v161 = vunpack.c.h.b16 %v44
  %v162 = vunpack.c.l.b16 %v45
  %v163 = vunpack.c.h.b16 %v45
  %v164 = vunpack.c.l.b16 %v46
  %v165 = vunpack.c.h.b16 %v46
  %v166 = vunpack.c.l.b16 %v47
  %v167 = vunpack.c.h.b16 %v47
  %v168 = vunpack.c.l.b16 %v48
  %v169 = vunpack.c.h.b16 %v48
  %v170 = vunpack.c.l.b16 %v49
  %v171 = vunpack.c.h.b16 %v49
  %v172 = vunpack.c.l.b16 %v50
  %v173 = vunpack.c.h.b16 %v50
  %v174 = vunpack.c.l.b16 %v51
  %v175 = vunpack.c.h.b16 %v51
  %v176 = vunpack.c.l.b16 %v52
  %v177 = vunpack.c.h.b16 %v52
  %v178 = vunpack.c.l.b16 %v53
  %v179 = vunpack.c.h.b16 %v53
  %v180 = vunpack.c.l.b16 %v54
  %v181 = vunpack.c.h.b16 %v54
  %v182 = vunpack.c.l.b16 %v55
  %v183 = vunpack.c.h.b16 %v55
  %v184 = vpack.c.b16 %v122, %v120
  %v185 = vpack.c.b16 %v123, %v121
  %v186 = vpack.c.b16 %v126, %v124
  %v187 = vpack.c.b16 %v127, %v125
  %v188 = vpack.c.b16 %v130, %v128
  %v189 = vpack.c.b16 %v131, %v129
  %v190 = vpack.c.b16 %v134, %v132
  %v191 = vpack.c.b16 %v135, %v133
  %v192 = vpack.c.b16 %v138, %v136
  %v193 = vpack.c.b16 %v139, %v137
  %v194 = vpack.c.b16 %v142, %v140
  %v195 = vpack.c.b16 %v143, %v141
  %v196 = vpack.c.b16 %v146, %v144
  %v197 = vpack.c.b16 %v147, %v145
  %v198 = vpack.c.b16 %v150, %v148
  %v199 = vpack.c.b16 %v151, %v149
  %v200 = vpack.c.b16 %v154, %v152
  %v201 = vpack.c.b16 %v155, %v153
  %v202 = vpack.c.b16 %v158, %v156
  %v203 = vpack.c.b16 %v159, %v157
  %v204 = vpack.c.b16 %v162, %v160
  %v205 = vpack.c.b16 %v163, %v161
  %v206 = vpack.c.b16 %v166, %v164
  %v207 = vpack.c.b16 %v167, %v165
  %v208 = vpack.c.b16 %v170, %v168
  %v209 = vpack.c.b16 %v171, %v169
  %v210 = vpack.c.b16 %v174, %v172
  %v211 = vpack.c.b16 %v175, %v173
  %v212 = vpack.c.b16 %v178, %v176
  %v213 = vpack.c.b16 %v179, %v177
  %v214 = vpack.c.b16 %v182, %v180
  %v215 = vpack.c.b16 %v183, %v181
  %248 = vmatprep.subr.bf16.mxu0 %v199
  %249 = vmatpush1.bf16.msra.mxu0 %v198
  %250 = vmatprep.subr.bf16.mxu0 %v197
  %251 = vmatpush1.bf16.msra.mxu0 %v196
  %252 = vmatprep.subr.bf16.mxu0 %v195
  %253 = vmatpush1.bf16.msra.mxu0 %v194
  %254 = vmatprep.subr.bf16.mxu0 %v193
  %255 = vmatpush1.bf16.msra.mxu0 %v192
  %256 = vmatprep.subr.bf16.mxu0 %v191
  %257 = vmatpush1.bf16.msra.mxu0 %v190
  %258 = vmatprep.subr.bf16.mxu0 %v189
  %259 = vmatpush1.bf16.msra.mxu0 %v188
  %260 = vmatprep.subr.bf16.mxu0 %v187
  %261 = vmatpush1.bf16.msra.mxu0 %v186
  %262 = vmatprep.subr.bf16.mxu0 %v185
  %263 = vmatpush1.bf16.msra.mxu0 %v184
  %264 = vmatprep.subr.bf16.mxu0 %v215
  %265 = vmatpush2.bf16.msra.mxu0 %v214
  %266 = vmatprep.subr.bf16.mxu0 %v213
  %267 = vmatpush2.bf16.msra.mxu0 %v212
  %268 = vmatprep.subr.bf16.mxu0 %v211
  %269 = vmatpush2.bf16.msra.mxu0 %v210
  %270 = vmatprep.subr.bf16.mxu0 %v209
  %271 = vmatpush2.bf16.msra.mxu0 %v208
  %272 = vmatprep.subr.bf16.mxu0 %v207
  %273 = vmatpush2.bf16.msra.mxu0 %v206
  %274 = vmatprep.subr.bf16.mxu0 %v205
  %275 = vmatpush2.bf16.msra.mxu0 %v204
  %276 = vmatprep.subr.bf16.mxu0 %v203
  %277 = vmatpush2.bf16.msra.mxu0 %v202
  %278 = vmatprep.subr.bf16.mxu0 %v201
  %279 = vmatpush2.bf16.msra.mxu0 %v200
  %280 = vmatprep.mubr.bf16.mxu0 %v81
  %281 = vmatmul.mubr.bf16.gmra.mxu0 %v80
  %v282 = vpop.f32.mrf.mxu0
  %v283 = vadd.f32 %v61, %v282
  %v284 = vpop.f32.mrf.mxu0
  %v285 = vadd.f32 %v65, %v284
  %v286 = vpop.f32.mrf.mxu0
  %v287 = vadd.f32 %v61, %v286
  %v288 = vpop.f32.mrf.mxu0
  %v289 = vadd.f32 %v65, %v288
  %290 = vmatprep.mubr.bf16.mxu0 %v83
  %291 = vmatmul.mubr.bf16.gmra.mxu0 %v82
  %v292 = vpop.f32.mrf.mxu0
  %v293 = vadd.f32 %v61, %v292
  %v294 = vpop.f32.mrf.mxu0
  %v295 = vadd.f32 %v65, %v294
  %v296 = vpop.f32.mrf.mxu0
  %v297 = vadd.f32 %v61, %v296
  %v298 = vpop.f32.mrf.mxu0
  %v299 = vadd.f32 %v65, %v298
  %300 = vdwg.mxu0
  %301 = vst [vmem:[%s5] sm:$0xff] %v283
  %302 = vst [vmem:[%s5 + $0x8] sm:$0xff] %v285
  %303 = vst [vmem:[%s5 + $0x10] sm:$0xff] %v287
  %304 = vst [vmem:[%s5 + $0x18] sm:$0xff] %v289
  %305 = vst [vmem:[%s5 + $0x20] sm:$0xff] %v293
  %306 = vst [vmem:[%s5 + $0x28] sm:$0xff] %v295
  %307 = vst [vmem:[%s5 + $0x30] sm:$0xff] %v297
  %308 = vst [vmem:[%s5 + $0x38] sm:$0xff] %v299
  // Predicated region
  $region22: #{_lambda_.19} parent=0 // pred_check
    _
  $region23: #{_lambda_.19} parent=0 // pred_check_branch
    %310 = sbr.rel (0) target = $region25
  $region24: #{_lambda_.19} parent=0 // pred_region
    _
  $region25: #{_lambda_.19} parent=0 // pred_fallthru
    _
  // Predicated region
  $region26: #{_lambda_.19} parent=0 // pred_check
    _
  $region27: #{_lambda_.19} parent=0 // pred_check_branch
    %312 = sbr.rel (0) target = $region29
  $region28: #{_lambda_.19} parent=0 // pred_region
    _
  $region29: #{_lambda_.19} parent=0 // pred_fallthru
    _

// kernel: tile.47
$region0: #{tile.47}
  #allocation0 [shape = 's32[1]{0}', space=sflag, size = 0x4, scoped, tag = 'scoped memory for tile.47']
  %s0 = inlined_call_operand.vmem [shape: f32[64], index: 0, kind: input, shape index: {}]
  %s1 = inlined_call_operand.vmem [shape: f32[4,64], index: 1, kind: output, shape index: {}]
  // Predicated region
  $region2: #{tile.47} parent=0 // pred_check
    _
  $region3: #{tile.47} parent=0 // pred_check_branch
    %3 = sbr.rel (0) target = $region5
  $region4: #{tile.47} parent=0 // pred_region
    _
  $region5: #{tile.47} parent=0 // pred_fallthru
    _
  %v4 = vld [vmem:[%s0] ss:$0 sm:$0xff]
  %5 = vst [vmem:[%s1] sm:$0xf] %v4

// kernel: _lambda_.18
$region0: #{_lambda_.18}
  #allocation0 [shape = 'u32[]', space=smem, size = 0x4, offset = 0x4, fixed_abs, tag = 'smem constant byte address 0x4 - core index']
  #allocation1 [shape = 'u32[144,128]{1,0:T(1,128)}', space=vmem, size = 0x12000, scoped, tag = 'internal scratch']
  %s0 = inlined_call_operand.vmem [shape: bf16[16,1024], index: 0, kind: input, shape index: {}]
  %s1 = inlined_call_operand.vmem [shape: bf16[1024,128], index: 1, kind: input, shape index: {}]
  %s2 = inlined_call_operand.vmem [shape: f32[1,128], index: 2, kind: input, shape index: {}]
  %s3 = inlined_call_operand.vmem [shape: f32[1,128], index: 3, kind: input, shape index: {}]
  %s4 = inlined_call_operand.vmem [shape: f32[1,128], index: 4, kind: input, shape index: {}]
  %s5 = inlined_call_operand.vmem [shape: f32[16,128], index: 5, kind: output, shape index: {}]
  %s6 = sld [smem:[#allocation0]]
  $region30: #{_lambda_.18} parent=0
    _
  %s8 = ssub.s32 1, %s6
  %s9 = scalar_select 0, %s8, %s6
  // Predicated region
  $region2: #{_lambda_.18} parent=0 // pred_check
    _
  $region3: #{_lambda_.18} parent=0 // pred_check_branch
    %11 = sbr.rel (0) target = $region5
  $region4: #{_lambda_.18} parent=0 // pred_region
    _
  $region5: #{_lambda_.18} parent=0 // pred_fallthru
    _
  // Predicated region
  $region6: #{_lambda_.18} parent=0 // pred_check
    _
  $region7: #{_lambda_.18} parent=0 // pred_check_branch
    %13 = sbr.rel (0) target = $region9
  $region8: #{_lambda_.18} parent=0 // pred_region
    _
  $region9: #{_lambda_.18} parent=0 // pred_fallthru
    _
  // Predicated region
  $region10: #{_lambda_.18} parent=0 // pred_check
    _
  $region11: #{_lambda_.18} parent=0 // pred_check_branch
    %15 = sbr.rel (0) target = $region13
  $region12: #{_lambda_.18} parent=0 // pred_region
    _
  $region13: #{_lambda_.18} parent=0 // pred_fallthru
    _
  // Predicated region
  $region14: #{_lambda_.18} parent=0 // pred_check
    _
  $region15: #{_lambda_.18} parent=0 // pred_check_branch
    %17 = sbr.rel (0) target = $region17
  $region16: #{_lambda_.18} parent=0 // pred_region
    _
  $region17: #{_lambda_.18} parent=0 // pred_fallthru
    _
  // Predicated region
  $region18: #{_lambda_.18} parent=0 // pred_check
    _
  $region19: #{_lambda_.18} parent=0 // pred_check_branch
    %19 = sbr.rel (0) target = $region21
  $region20: #{_lambda_.18} parent=0 // pred_region
    _
  $region21: #{_lambda_.18} parent=0 // pred_fallthru
    _
  %v21 = vld [vmem:[%s0] sm:$0xff]
  %v22 = vld [vmem:[%s0 + $0x8] sm:$0xff]
  %v23 = vld [vmem:[%s0 + $0x10] sm:$0xff]
  %v24 = vld [vmem:[%s0 + $0x18] sm:$0xff]
  %v25 = vld [vmem:[%s0 + $0x20] sm:$0xff]
  %v26 = vld [vmem:[%s0 + $0x28] sm:$0xff]
  %v27 = vld [vmem:[%s0 + $0x30] sm:$0xff]
  %v28 = vld [vmem:[%s0 + $0x38] sm:$0xff]
  %v29 = vld [vmem:[%s1] sm:$0xf]
  %v30 = vld [vmem:[%s1 + $0x4] sm:$0xf]
  %v31 = vld [vmem:[%s1 + $0x8] sm:$0xf]
  %v32 = vld [vmem:[%s1 + $0xc] sm:$0xf]
  %v33 = vld [vmem:[%s1 + $0x10] sm:$0xf]
  %v34 = vld [vmem:[%s1 + $0x14] sm:$0xf]
  %v35 = vld [vmem:[%s1 + $0x18] sm:$0xf]
  %v36 = vld [vmem:[%s1 + $0x1c] sm:$0xf]
  %v37 = vld [vmem:[%s1 + $0x20] sm:$0xf]
  %v38 = vld [vmem:[%s1 + $0x24] sm:$0xf]
  %v39 = vld [vmem:[%s1 + $0x28] sm:$0xf]
  %v40 = vld [vmem:[%s1 + $0x2c] sm:$0xf]
  %v41 = vld [vmem:[%s1 + $0x30] sm:$0xf]
  %v42 = vld [vmem:[%s1 + $0x34] sm:$0xf]
  %v43 = vld [vmem:[%s1 + $0x38] sm:$0xf]
  %v44 = vld [vmem:[%s1 + $0x3c] sm:$0xf]
  %v45 = vld [vmem:[%s1 + $0x40] sm:$0xf]
  %v46 = vld [vmem:[%s1 + $0x44] sm:$0xf]
  %v47 = vld [vmem:[%s1 + $0x48] sm:$0xf]
  %v48 = vld [vmem:[%s1 + $0x4c] sm:$0xf]
  %v49 = vld [vmem:[%s1 + $0x50] sm:$0xf]
  %v50 = vld [vmem:[%s1 + $0x54] sm:$0xf]
  %v51 = vld [vmem:[%s1 + $0x58] sm:$0xf]
  %v52 = vld [vmem:[%s1 + $0x5c] sm:$0xf]
  %v53 = vld [vmem:[%s1 + $0x60] sm:$0xf]
  %v54 = vld [vmem:[%s1 + $0x64] sm:$0xf]
  %v55 = vld [vmem:[%s1 + $0x68] sm:$0xf]
  %v56 = vld [vmem:[%s1 + $0x6c] sm:$0xf]
  %v57 = vld [vmem:[%s1 + $0x70] sm:$0xf]
  %v58 = vld [vmem:[%s1 + $0x74] sm:$0xf]
  %v59 = vld [vmem:[%s1 + $0x78] sm:$0xf]
  %v60 = vld [vmem:[%s1 + $0x7c] sm:$0xf]
  %v61 = vld [vmem:[%s1 + $0x80] sm:$0xf]
  %v62 = vld [vmem:[%s1 + $0x84] sm:$0xf]
  %v63 = vld [vmem:[%s1 + $0x88] sm:$0xf]
  %v64 = vld [vmem:[%s1 + $0x8c] sm:$0xf]
  %v65 = vld [vmem:[%s1 + $0x90] sm:$0xf]
  %v66 = vld [vmem:[%s1 + $0x94] sm:$0xf]
  %v67 = vld [vmem:[%s1 + $0x98] sm:$0xf]
  %v68 = vld [vmem:[%s1 + $0x9c] sm:$0xf]
  %v69 = vld [vmem:[%s1 + $0xa0] sm:$0xf]
  %v70 = vld [vmem:[%s1 + $0xa4] sm:$0xf]
  %v71 = vld [vmem:[%s1 + $0xa8] sm:$0xf]
  %v72 = vld [vmem:[%s1 + $0xac] sm:$0xf]
  %v73 = vld [vmem:[%s1 + $0xb0] sm:$0xf]
  %v74 = vld [vmem:[%s1 + $0xb4] sm:$0xf]
  %v75 = vld [vmem:[%s1 + $0xb8] sm:$0xf]
  %v76 = vld [vmem:[%s1 + $0xbc] sm:$0xf]
  %v77 = vld [vmem:[%s1 + $0xc0] sm:$0xf]
  %v78 = vld [vmem:[%s1 + $0xc4] sm:$0xf]
  %v79 = vld [vmem:[%s1 + $0xc8] sm:$0xf]
  %v80 = vld [vmem:[%s1 + $0xcc] sm:$0xf]
  %v81 = vld [vmem:[%s1 + $0xd0] sm:$0xf]
  %v82 = vld [vmem:[%s1 + $0xd4] sm:$0xf]
  %v83 = vld [vmem:[%s1 + $0xd8] sm:$0xf]
  %v84 = vld [vmem:[%s1 + $0xdc] sm:$0xf]
  %v85 = vld [vmem:[%s1 + $0xe0] sm:$0xf]
  %v86 = vld [vmem:[%s1 + $0xe4] sm:$0xf]
  %v87 = vld [vmem:[%s1 + $0xe8] sm:$0xf]
  %v88 = vld [vmem:[%s1 + $0xec] sm:$0xf]
  %v89 = vld [vmem:[%s1 + $0xf0] sm:$0xf]
  %v90 = vld [vmem:[%s1 + $0xf4] sm:$0xf]
  %v91 = vld [vmem:[%s1 + $0xf8] sm:$0xf]
  %v92 = vld [vmem:[%s1 + $0xfc] sm:$0xf]
  %v93 = vld [vmem:[%s1 + $0x100] sm:$0xf]
  %v94 = vld [vmem:[%s1 + $0x104] sm:$0xf]
  %v95 = vld [vmem:[%s1 + $0x108] sm:$0xf]
  %v96 = vld [vmem:[%s1 + $0x10c] sm:$0xf]
  %v97 = vld [vmem:[%s1 + $0x110] sm:$0xf]
  %v98 = vld [vmem:[%s1 + $0x114] sm:$0xf]
  %v99 = vld [vmem:[%s1 + $0x118] sm:$0xf]
  %v100 = vld [vmem:[%s1 + $0x11c] sm:$0xf]
  %v101 = vld [vmem:[%s1 + $0x120] sm:$0xf]
  %v102 = vld [vmem:[%s1 + $0x124] sm:$0xf]
  %v103 = vld [vmem:[%s1 + $0x128] sm:$0xf]
  %v104 = vld [vmem:[%s1 + $0x12c] sm:$0xf]
  %v105 = vld [vmem:[%s1 + $0x130] sm:$0xf]
  %v106 = vld [vmem:[%s1 + $0x134] sm:$0xf]
  %v107 = vld [vmem:[%s1 + $0x138] sm:$0xf]
  %v108 = vld [vmem:[%s1 + $0x13c] sm:$0xf]
  %v109 = vld [vmem:[%s1 + $0x140] sm:$0xf]
  %v110 = vld [vmem:[%s1 + $0x144] sm:$0xf]
  %v111 = vld [vmem:[%s1 + $0x148] sm:$0xf]
  %v112 = vld [vmem:[%s1 + $0x14c] sm:$0xf]
  %v113 = vld [vmem:[%s1 + $0x150] sm:$0xf]
  %v114 = vld [vmem:[%s1 + $0x154] sm:$0xf]
  %v115 = vld [vmem:[%s1 + $0x158] sm:$0xf]
  %v116 = vld [vmem:[%s1 + $0x15c] sm:$0xf]
  %v117 = vld [vmem:[%s1 + $0x160] sm:$0xf]
  %v118 = vld [vmem:[%s1 + $0x164] sm:$0xf]
  %v119 = vld [vmem:[%s1 + $0x168] sm:$0xf]
  %v120 = vld [vmem:[%s1 + $0x16c] sm:$0xf]
  %v121 = vld [vmem:[%s1 + $0x170] sm:$0xf]
  %v122 = vld [vmem:[%s1 + $0x174] sm:$0xf]
  %v123 = vld [vmem:[%s1 + $0x178] sm:$0xf]
  %v124 = vld [vmem:[%s1 + $0x17c] sm:$0xf]
  %v125 = vld [vmem:[%s1 + $0x180] sm:$0xf]
  %v126 = vld [vmem:[%s1 + $0x184] sm:$0xf]
  %v127 = vld [vmem:[%s1 + $0x188] sm:$0xf]
  %v128 = vld [vmem:[%s1 + $0x18c] sm:$0xf]
  %v129 = vld [vmem:[%s1 + $0x190] sm:$0xf]
  %v130 = vld [vmem:[%s1 + $0x194] sm:$0xf]
  %v131 = vld [vmem:[%s1 + $0x198] sm:$0xf]
  %v132 = vld [vmem:[%s1 + $0x19c] sm:$0xf]
  %v133 = vld [vmem:[%s1 + $0x1a0] sm:$0xf]
  %v134 = vld [vmem:[%s1 + $0x1a4] sm:$0xf]
  %v135 = vld [vmem:[%s1 + $0x1a8] sm:$0xf]
  %v136 = vld [vmem:[%s1 + $0x1ac] sm:$0xf]
  %v137 = vld [vmem:[%s1 + $0x1b0] sm:$0xf]
  %v138 = vld [vmem:[%s1 + $0x1b4] sm:$0xf]
  %v139 = vld [vmem:[%s1 + $0x1b8] sm:$0xf]
  %v140 = vld [vmem:[%s1 + $0x1bc] sm:$0xf]
  %v141 = vld [vmem:[%s1 + $0x1c0] sm:$0xf]
  %v142 = vld [vmem:[%s1 + $0x1c4] sm:$0xf]
  %v143 = vld [vmem:[%s1 + $0x1c8] sm:$0xf]
  %v144 = vld [vmem:[%s1 + $0x1cc] sm:$0xf]
  %v145 = vld [vmem:[%s1 + $0x1d0] sm:$0xf]
  %v146 = vld [vmem:[%s1 + $0x1d4] sm:$0xf]
  %v147 = vld [vmem:[%s1 + $0x1d8] sm:$0xf]
  %v148 = vld [vmem:[%s1 + $0x1dc] sm:$0xf]
  %v149 = vld [vmem:[%s1 + $0x1e0] sm:$0xf]
  %v150 = vld [vmem:[%s1 + $0x1e4] sm:$0xf]
  %v151 = vld [vmem:[%s1 + $0x1e8] sm:$0xf]
  %v152 = vld [vmem:[%s1 + $0x1ec] sm:$0xf]
  %v153 = vld [vmem:[%s1 + $0x1f0] sm:$0xf]
  %v154 = vld [vmem:[%s1 + $0x1f4] sm:$0xf]
  %v155 = vld [vmem:[%s1 + $0x1f8] sm:$0xf]
  %v156 = vld [vmem:[%s1 + $0x1fc] sm:$0xf]
  %v157 = vld [vmem:[%s2] sm:$0x1]
  %v159 = vlaneseq
  %v160 = vshrl.u32 %v159, 7
  %v161 = vsub.s32 0, %v160
  %v162 = vrot.slane %v157, %v161
  %v172 = vunpack.c.l.b16 %v21
  %v173 = vunpack.c.h.b16 %v21
  %v174 = vunpack.c.l.b16 %v22
  %v175 = vunpack.c.h.b16 %v22
  %v176 = vunpack.c.l.b16 %v23
  %v177 = vunpack.c.h.b16 %v23
  %v178 = vunpack.c.l.b16 %v24
  %v179 = vunpack.c.h.b16 %v24
  %v180 = vunpack.c.l.b16 %v25
  %v181 = vunpack.c.h.b16 %v25
  %v182 = vunpack.c.l.b16 %v26
  %v183 = vunpack.c.h.b16 %v26
  %v184 = vunpack.c.l.b16 %v27
  %v185 = vunpack.c.h.b16 %v27
  %v186 = vunpack.c.l.b16 %v28
  %v187 = vunpack.c.h.b16 %v28
  %v188 = vpack.c.b16 %v180, %v172
  %v189 = vpack.c.b16 %v181, %v173
  %v190 = vpack.c.b16 %v182, %v174
  %v191 = vpack.c.b16 %v183, %v175
  %v192 = vpack.c.b16 %v184, %v176
  %v193 = vpack.c.b16 %v185, %v177
  %v194 = vpack.c.b16 %v186, %v178
  %v195 = vpack.c.b16 %v187, %v179
  %v332 = vunpack.c.l.b16 %v29
  %v333 = vunpack.c.l.b16 %v30
  %v334 = vunpack.c.l.b16 %v31
  %v335 = vunpack.c.l.b16 %v32
  %v336 = vunpack.c.l.b16 %v33
  %v337 = vunpack.c.l.b16 %v34
  %v338 = vunpack.c.l.b16 %v35
  %v339 = vunpack.c.l.b16 %v36
  %v340 = vunpack.c.l.b16 %v37
  %v341 = vunpack.c.l.b16 %v38
  %v342 = vunpack.c.l.b16 %v39
  %v343 = vunpack.c.l.b16 %v40
  %v344 = vunpack.c.l.b16 %v41
  %v345 = vunpack.c.l.b16 %v42
  %v346 = vunpack.c.l.b16 %v43
  %v347 = vunpack.c.l.b16 %v44
  %v348 = vunpack.c.l.b16 %v45
  %v349 = vunpack.c.l.b16 %v46
  %v350 = vunpack.c.l.b16 %v47
  %v351 = vunpack.c.l.b16 %v48
  %v352 = vunpack.c.l.b16 %v49
  %v353 = vunpack.c.l.b16 %v50
  %v354 = vunpack.c.l.b16 %v51
  %v355 = vunpack.c.l.b16 %v52
  %v356 = vunpack.c.l.b16 %v53
  %v357 = vunpack.c.l.b16 %v54
  %v358 = vunpack.c.l.b16 %v55
  %v359 = vunpack.c.l.b16 %v56
  %v360 = vunpack.c.l.b16 %v57
  %v361 = vunpack.c.l.b16 %v58
  %v362 = vunpack.c.l.b16 %v59
  %v363 = vunpack.c.l.b16 %v60
  %v364 = vunpack.c.l.b16 %v61
  %v365 = vunpack.c.l.b16 %v62
  %v366 = vunpack.c.l.b16 %v63
  %v367 = vunpack.c.l.b16 %v64
  %v368 = vunpack.c.l.b16 %v65
  %v369 = vunpack.c.l.b16 %v66
  %v370 = vunpack.c.l.b16 %v67
  %v371 = vunpack.c.l.b16 %v68
  %v372 = vunpack.c.l.b16 %v69
  %v373 = vunpack.c.l.b16 %v70
  %v374 = vunpack.c.l.b16 %v71
  %v375 = vunpack.c.l.b16 %v72
  %v376 = vunpack.c.l.b16 %v73
  %v377 = vunpack.c.l.b16 %v74
  %v378 = vunpack.c.l.b16 %v75
  %v379 = vunpack.c.l.b16 %v76
  %v380 = vunpack.c.l.b16 %v77
  %v381 = vunpack.c.l.b16 %v78
  %v382 = vunpack.c.l.b16 %v79
  %v383 = vunpack.c.l.b16 %v80
  %v384 = vunpack.c.l.b16 %v81
  %v385 = vunpack.c.l.b16 %v82
  %v386 = vunpack.c.l.b16 %v83
  %v387 = vunpack.c.l.b16 %v84
  %v388 = vunpack.c.l.b16 %v85
  %v389 = vunpack.c.l.b16 %v86
  %v390 = vunpack.c.l.b16 %v87
  %v391 = vunpack.c.l.b16 %v88
  %v392 = vunpack.c.l.b16 %v89
  %v393 = vunpack.c.l.b16 %v90
  %v394 = vunpack.c.l.b16 %v91
  %v395 = vunpack.c.l.b16 %v92
  %v396 = vunpack.c.l.b16 %v93
  %v397 = vunpack.c.l.b16 %v94
  %v398 = vunpack.c.l.b16 %v95
  %v399 = vunpack.c.l.b16 %v96
  %v400 = vunpack.c.l.b16 %v97
  %v401 = vunpack.c.l.b16 %v98
  %v402 = vunpack.c.l.b16 %v99
  %v403 = vunpack.c.l.b16 %v100
  %v404 = vunpack.c.l.b16 %v101
  %v405 = vunpack.c.l.b16 %v102
  %v406 = vunpack.c.l.b16 %v103
  %v407 = vunpack.c.l.b16 %v104
  %v408 = vunpack.c.l.b16 %v105
  %v409 = vunpack.c.l.b16 %v106
  %v410 = vunpack.c.l.b16 %v107
  %v411 = vunpack.c.l.b16 %v108
  %v412 = vunpack.c.l.b16 %v109
  %v413 = vunpack.c.l.b16 %v110
  %v414 = vunpack.c.l.b16 %v111
  %v415 = vunpack.c.l.b16 %v112
  %v416 = vunpack.c.l.b16 %v113
  %v417 = vunpack.c.l.b16 %v114
  %v418 = vunpack.c.l.b16 %v115
  %v419 = vunpack.c.l.b16 %v116
  %v420 = vunpack.c.l.b16 %v117
  %v421 = vunpack.c.l.b16 %v118
  %v422 = vunpack.c.l.b16 %v119
  %v423 = vunpack.c.l.b16 %v120
  %v424 = vunpack.c.l.b16 %v121
  %v425 = vunpack.c.l.b16 %v122
  %v426 = vunpack.c.l.b16 %v123
  %v427 = vunpack.c.l.b16 %v124
  %v428 = vunpack.c.l.b16 %v125
  %v429 = vunpack.c.l.b16 %v126
  %v430 = vunpack.c.l.b16 %v127
  %v431 = vunpack.c.l.b16 %v128
  %v432 = vunpack.c.l.b16 %v129
  %v433 = vunpack.c.l.b16 %v130
  %v434 = vunpack.c.l.b16 %v131
  %v435 = vunpack.c.l.b16 %v132
  %v436 = vunpack.c.l.b16 %v133
  %v437 = vunpack.c.l.b16 %v134
  %v438 = vunpack.c.l.b16 %v135
  %v439 = vunpack.c.l.b16 %v136
  %v440 = vunpack.c.l.b16 %v137
  %v441 = vunpack.c.l.b16 %v138
  %v442 = vunpack.c.l.b16 %v139
  %v443 = vunpack.c.l.b16 %v140
  %v444 = vunpack.c.l.b16 %v141
  %v445 = vunpack.c.l.b16 %v142
  %v446 = vunpack.c.l.b16 %v143
  %v447 = vunpack.c.l.b16 %v144
  %v448 = vunpack.c.l.b16 %v145
  %v449 = vunpack.c.l.b16 %v146
  %v450 = vunpack.c.l.b16 %v147
  %v451 = vunpack.c.l.b16 %v148
  %v452 = vunpack.c.l.b16 %v149
  %v453 = vunpack.c.l.b16 %v150
  %v454 = vunpack.c.l.b16 %v151
  %v455 = vunpack.c.l.b16 %v152
  %v456 = vunpack.c.l.b16 %v153
  %v457 = vunpack.c.l.b16 %v154
  %v458 = vunpack.c.l.b16 %v155
  %v459 = vunpack.c.l.b16 %v156
  %v460 = vpack.c.b16 %v333, %v332
  %v461 = vpack.c.b16 %v335, %v334
  %v462 = vpack.c.b16 %v337, %v336
  %v463 = vpack.c.b16 %v339, %v338
  %v464 = vpack.c.b16 %v341, %v340
  %v465 = vpack.c.b16 %v343, %v342
  %v466 = vpack.c.b16 %v345, %v344
  %v467 = vpack.c.b16 %v347, %v346
  %v468 = vpack.c.b16 %v349, %v348
  %v469 = vpack.c.b16 %v351, %v350
  %v470 = vpack.c.b16 %v353, %v352
  %v471 = vpack.c.b16 %v355, %v354
  %v472 = vpack.c.b16 %v357, %v356
  %v473 = vpack.c.b16 %v359, %v358
  %v474 = vpack.c.b16 %v361, %v360
  %v475 = vpack.c.b16 %v363, %v362
  %v476 = vpack.c.b16 %v365, %v364
  %v477 = vpack.c.b16 %v367, %v366
  %v478 = vpack.c.b16 %v369, %v368
  %v479 = vpack.c.b16 %v371, %v370
  %v480 = vpack.c.b16 %v373, %v372
  %v481 = vpack.c.b16 %v375, %v374
  %v482 = vpack.c.b16 %v377, %v376
  %v483 = vpack.c.b16 %v379, %v378
  %v484 = vpack.c.b16 %v381, %v380
  %v485 = vpack.c.b16 %v383, %v382
  %v486 = vpack.c.b16 %v385, %v384
  %v487 = vpack.c.b16 %v387, %v386
  %v488 = vpack.c.b16 %v389, %v388
  %v489 = vpack.c.b16 %v391, %v390
  %v490 = vpack.c.b16 %v393, %v392
  %v491 = vpack.c.b16 %v395, %v394
  %v492 = vpack.c.b16 %v397, %v396
  %v493 = vpack.c.b16 %v399, %v398
  %v494 = vpack.c.b16 %v401, %v400
  %v495 = vpack.c.b16 %v403, %v402
  %v496 = vpack.c.b16 %v405, %v404
  %v497 = vpack.c.b16 %v407, %v406
  %v498 = vpack.c.b16 %v409, %v408
  %v499 = vpack.c.b16 %v411, %v410
  %v500 = vpack.c.b16 %v413, %v412
  %v501 = vpack.c.b16 %v415, %v414
  %v502 = vpack.c.b16 %v417, %v416
  %v503 = vpack.c.b16 %v419, %v418
  %v504 = vpack.c.b16 %v421, %v420
  %v505 = vpack.c.b16 %v423, %v422
  %v506 = vpack.c.b16 %v425, %v424
  %v507 = vpack.c.b16 %v427, %v426
  %v508 = vpack.c.b16 %v429, %v428
  %v509 = vpack.c.b16 %v431, %v430
  %v510 = vpack.c.b16 %v433, %v432
  %v511 = vpack.c.b16 %v435, %v434
  %v512 = vpack.c.b16 %v437, %v436
  %v513 = vpack.c.b16 %v439, %v438
  %v514 = vpack.c.b16 %v441, %v440
  %v515 = vpack.c.b16 %v443, %v442
  %v516 = vpack.c.b16 %v445, %v444
  %v517 = vpack.c.b16 %v447, %v446
  %v518 = vpack.c.b16 %v449, %v448
  %v519 = vpack.c.b16 %v451, %v450
  %v520 = vpack.c.b16 %v453, %v452
  %v521 = vpack.c.b16 %v455, %v454
  %v522 = vpack.c.b16 %v457, %v456
  %v523 = vpack.c.b16 %v459, %v458
  %588 = vmatprep.subr.bf16.mxu0 0
  %589 = vmatpush1.bf16.msra.mxu0 %v467
  %590 = vmatprep.subr.bf16.mxu0 0
  %591 = vmatpush1.bf16.msra.mxu0 %v466
  %592 = vmatprep.subr.bf16.mxu0 0
  %593 = vmatpush1.bf16.msra.mxu0 %v465
  %594 = vmatprep.subr.bf16.mxu0 0
  %595 = vmatpush1.bf16.msra.mxu0 %v464
  %596 = vmatprep.subr.bf16.mxu0 0
  %597 = vmatpush1.bf16.msra.mxu0 %v463
  %598 = vmatprep.subr.bf16.mxu0 0
  %599 = vmatpush1.bf16.msra.mxu0 %v462
  %600 = vmatprep.subr.bf16.mxu0 0
  %601 = vmatpush1.bf16.msra.mxu0 %v461
  %602 = vmatprep.subr.bf16.mxu0 0
  %603 = vmatpush1.bf16.msra.mxu0 %v460
  %604 = vmatprep.subr.bf16.mxu0 0
  %605 = vmatpush2.bf16.msra.mxu0 %v475
  %606 = vmatprep.subr.bf16.mxu0 0
  %607 = vmatpush2.bf16.msra.mxu0 %v474
  %608 = vmatprep.subr.bf16.mxu0 0
  %609 = vmatpush2.bf16.msra.mxu0 %v473
  %610 = vmatprep.subr.bf16.mxu0 0
  %611 = vmatpush2.bf16.msra.mxu0 %v472
  %612 = vmatprep.subr.bf16.mxu0 0
  %613 = vmatpush2.bf16.msra.mxu0 %v471
  %614 = vmatprep.subr.bf16.mxu0 0
  %615 = vmatpush2.bf16.msra.mxu0 %v470
  %616 = vmatprep.subr.bf16.mxu0 0
  %617 = vmatpush2.bf16.msra.mxu0 %v469
  %618 = vmatprep.subr.bf16.mxu0 0
  %619 = vmatpush2.bf16.msra.mxu0 %v468
  %620 = vmatprep.mubr.bf16.mxu0 %v189
  %621 = vmatmul.mubr.bf16.gmra.mxu0 %v188
  %v622 = vpop.f32.mrf.mxu0
  %v623 = vadd.f32 %v162, %v622
  %v624 = vpop.f32.mrf.mxu0
  %v625 = vpop.f32.mrf.mxu0
  %v626 = vadd.f32 %v162, %v625
  %v627 = vpop.f32.mrf.mxu0
  %628 = vdwg.mxu0
  %629 = vmatprep.subr.bf16.mxu0 0
  %630 = vmatpush1.bf16.msra.mxu0 %v483
  %631 = vmatprep.subr.bf16.mxu0 0
  %632 = vmatpush1.bf16.msra.mxu0 %v482
  %633 = vmatprep.subr.bf16.mxu0 0
  %634 = vmatpush1.bf16.msra.mxu0 %v481
  %635 = vmatprep.subr.bf16.mxu0 0
  %636 = vmatpush1.bf16.msra.mxu0 %v480
  %637 = vmatprep.subr.bf16.mxu0 0
  %638 = vmatpush1.bf16.msra.mxu0 %v479
  %639 = vmatprep.subr.bf16.mxu0 0
  %640 = vmatpush1.bf16.msra.mxu0 %v478
  %641 = vmatprep.subr.bf16.mxu0 0
  %642 = vmatpush1.bf16.msra.mxu0 %v477
  %643 = vmatprep.subr.bf16.mxu0 0
  %644 = vmatpush1.bf16.msra.mxu0 %v476
  %645 = vmatprep.subr.bf16.mxu0 0
  %646 = vmatpush2.bf16.msra.mxu0 %v491
  %647 = vmatprep.subr.bf16.mxu0 0
  %648 = vmatpush2.bf16.msra.mxu0 %v490
  %649 = vmatprep.subr.bf16.mxu0 0
  %650 = vmatpush2.bf16.msra.mxu0 %v489
  %651 = vmatprep.subr.bf16.mxu0 0
  %652 = vmatpush2.bf16.msra.mxu0 %v488
  %653 = vmatprep.subr.bf16.mxu0 0
  %654 = vmatpush2.bf16.msra.mxu0 %v487
  %655 = vmatprep.subr.bf16.mxu0 0
  %656 = vmatpush2.bf16.msra.mxu0 %v486
  %657 = vmatprep.subr.bf16.mxu0 0
  %658 = vmatpush2.bf16.msra.mxu0 %v485
  %659 = vmatprep.subr.bf16.mxu0 0
  %660 = vmatpush2.bf16.msra.mxu0 %v484
  %661 = vmatprep.mubr.bf16.mxu0 %v191
  %662 = vmatmul.mubr.bf16.gmra.mxu0 %v190
  %v663 = vpop.f32.mrf.mxu0
  %v664 = vadd.f32 %v623, %v663
  %v665 = vpop.f32.mrf.mxu0
  %v666 = vpop.f32.mrf.mxu0
  %v667 = vadd.f32 %v626, %v666
  %v668 = vpop.f32.mrf.mxu0
  %669 = vdwg.mxu0
  %670 = vmatprep.subr.bf16.mxu0 0
  %671 = vmatpush1.bf16.msra.mxu0 %v499
  %672 = vmatprep.subr.bf16.mxu0 0
  %673 = vmatpush1.bf16.msra.mxu0 %v498
  %674 = vmatprep.subr.bf16.mxu0 0
  %675 = vmatpush1.bf16.msra.mxu0 %v497
  %676 = vmatprep.subr.bf16.mxu0 0
  %677 = vmatpush1.bf16.msra.mxu0 %v496
  %678 = vmatprep.subr.bf16.mxu0 0
  %679 = vmatpush1.bf16.msra.mxu0 %v495
  %680 = vmatprep.subr.bf16.mxu0 0
  %681 = vmatpush1.bf16.msra.mxu0 %v494
  %682 = vmatprep.subr.bf16.mxu0 0
  %683 = vmatpush1.bf16.msra.mxu0 %v493
  %684 = vmatprep.subr.bf16.mxu0 0
  %685 = vmatpush1.bf16.msra.mxu0 %v492
  %686 = vmatprep.subr.bf16.mxu0 0
  %687 = vmatpush2.bf16.msra.mxu0 %v507
  %688 = vmatprep.subr.bf16.mxu0 0
  %689 = vmatpush2.bf16.msra.mxu0 %v506
  %690 = vmatprep.subr.bf16.mxu0 0
  %691 = vmatpush2.bf16.msra.mxu0 %v505
  %692 = vmatprep.subr.bf16.mxu0 0
  %693 = vmatpush2.bf16.msra.mxu0 %v504
  %694 = vmatprep.subr.bf16.mxu0 0
  %695 = vmatpush2.bf16.msra.mxu0 %v503
  %696 = vmatprep.subr.bf16.mxu0 0
  %697 = vmatpush2.bf16.msra.mxu0 %v502
  %698 = vmatprep.subr.bf16.mxu0 0
  %699 = vmatpush2.bf16.msra.mxu0 %v501
  %700 = vmatprep.subr.bf16.mxu0 0
  %701 = vmatpush2.bf16.msra.mxu0 %v500
  %702 = vmatprep.mubr.bf16.mxu0 %v193
  %703 = vmatmul.mubr.bf16.gmra.mxu0 %v192
  %v704 = vpop.f32.mrf.mxu0
  %v705 = vadd.f32 %v664, %v704
  %v706 = vpop.f32.mrf.mxu0
  %v707 = vpop.f32.mrf.mxu0
  %v708 = vadd.f32 %v667, %v707
  %v709 = vpop.f32.mrf.mxu0
  %710 = vdwg.mxu0
  %711 = vmatprep.subr.bf16.mxu0 0
  %712 = vmatpush1.bf16.msra.mxu0 %v515
  %713 = vmatprep.subr.bf16.mxu0 0
  %714 = vmatpush1.bf16.msra.mxu0 %v514
  %715 = vmatprep.subr.bf16.mxu0 0
  %716 = vmatpush1.bf16.msra.mxu0 %v513
  %717 = vmatprep.subr.bf16.mxu0 0
  %718 = vmatpush1.bf16.msra.mxu0 %v512
  %719 = vmatprep.subr.bf16.mxu0 0
  %720 = vmatpush1.bf16.msra.mxu0 %v511
  %721 = vmatprep.subr.bf16.mxu0 0
  %722 = vmatpush1.bf16.msra.mxu0 %v510
  %723 = vmatprep.subr.bf16.mxu0 0
  %724 = vmatpush1.bf16.msra.mxu0 %v509
  %725 = vmatprep.subr.bf16.mxu0 0
  %726 = vmatpush1.bf16.msra.mxu0 %v508
  %727 = vmatprep.subr.bf16.mxu0 0
  %728 = vmatpush2.bf16.msra.mxu0 %v523
  %729 = vmatprep.subr.bf16.mxu0 0
  %730 = vmatpush2.bf16.msra.mxu0 %v522
  %731 = vmatprep.subr.bf16.mxu0 0
  %732 = vmatpush2.bf16.msra.mxu0 %v521
  %733 = vmatprep.subr.bf16.mxu0 0
  %734 = vmatpush2.bf16.msra.mxu0 %v520
  %735 = vmatprep.subr.bf16.mxu0 0
  %736 = vmatpush2.bf16.msra.mxu0 %v519
  %737 = vmatprep.subr.bf16.mxu0 0
  %738 = vmatpush2.bf16.msra.mxu0 %v518
  %739 = vmatprep.subr.bf16.mxu0 0
  %740 = vmatpush2.bf16.msra.mxu0 %v517
  %741 = vmatprep.subr.bf16.mxu0 0
  %742 = vmatpush2.bf16.msra.mxu0 %v516
  %743 = vmatprep.mubr.bf16.mxu0 %v195
  %744 = vmatmul.mubr.bf16.gmra.mxu0 %v194
  %v745 = vpop.f32.mrf.mxu0
  %v746 = vadd.f32 %v705, %v745
  %v747 = vpop.f32.mrf.mxu0
  %v748 = vpop.f32.mrf.mxu0
  %v749 = vadd.f32 %v708, %v748
  %v750 = vpop.f32.mrf.mxu0
  %751 = vdwg.mxu0
  %752 = vst [vmem:[%s5] sm:$0xff] %v746
  %753 = vst [vmem:[%s5 + $0x8] sm:$0xff] %v749
  // Predicated region
  $region22: #{_lambda_.18} parent=0 // pred_check
    _
  $region23: #{_lambda_.18} parent=0 // pred_check_branch
    %755 = sbr.rel (0) target = $region25
  $region24: #{_lambda_.18} parent=0 // pred_region
    _
  $region25: #{_lambda_.18} parent=0 // pred_fallthru
    _
  // Predicated region
  $region26: #{_lambda_.18} parent=0 // pred_check
    _
  $region27: #{_lambda_.18} parent=0 // pred_check_branch
    %757 = sbr.rel (0) target = $region29
  $region28: #{_lambda_.18} parent=0 // pred_region
    _
  $region29: #{_lambda_.18} parent=0 // pred_fallthru
    _

// kernel: tile.48
$region0: #{tile.48}
  %s0 = inlined_call_operand.vmem [shape: f32[4,64], index: 0, kind: input, shape index: {}]
  %s1 = inlined_call_operand.vmem [shape: f32[1,256], index: 1, kind: output, shape index: {}]
  $region1: #{tile.48} parent=0
    #allocation0 [shape = 'u8[8192]{0}', space=vmem, size = 0x2000, scoped, tag = 'scoped mem for output reshape']
    #allocation1 [shape = 'u8[4096]{0}', space=vmem, size = 0x1000, scoped, tag = 'scoped mem for input reshape']
    %s3 = sshll.u32 1, 4
    %s4 = ssub.s32 %s3, 1
    %v5 = vld [vmem:[%s0] sm:%s4]
    %6 = vst [vmem:[#allocation1] sm:%s4] %v5
    %s7 = smov 3
    %v8 = vld [vmem:[#allocation1] ss:$2 sm:%s7]
    %vm9 = vcmask 523264
    %10 = vst.msk [vmem:[#allocation0] ss:$8 sm:$0x3] %vm9, %v8
    %s11 = scalar_lea.vmem [#allocation1], 1
    %s12 = smov 3
    %v13 = vld [vmem:[%s11] ss:$2 sm:%s12]
    %14 = vrot.lane.b32.xlu0 %v13, 64
    %v15 = vpop.permute.xlu0 %14
    %vm16 = vcmask 1048064
    %17 = vst.msk [vmem:[#allocation0] ss:$8 sm:$0x3] %vm16, %v15
    %s19 = sshll.u32 1, 1
    %s20 = ssub.s32 %s19, 1
    %v22 = vld [vmem:[#allocation0] sm:%s20]
    %s23 = sshll.u32 1, 1
    %s24 = ssub.s32 %s23, 1
    %25 = vst [vmem:[%s1] sm:%s24] %v22
    %s26 = scalar_lea.vmem [#allocation0], 8
    %v27 = vld [vmem:[%s26] sm:%s20]
    %s28 = sshll.u32 1, 1
    %s29 = ssub.s32 %s28, 1
    %s30 = scalar_lea.vmem %s1, 1
    %31 = vst [vmem:[%s30] sm:%s29] %v27

// kernel: _lambda_.20
$region0: #{_lambda_.20}
  #allocation0 [shape = 'u32[]', space=smem, size = 0x4, offset = 0x4, fixed_abs, tag = 'smem constant byte address 0x4 - core index']
  #allocation1 [shape = 'u32[144,128]{1,0:T(1,128)}', space=vmem, size = 0x12000, scoped, tag = 'internal scratch']
  %s0 = inlined_call_operand.vmem [shape: f32[32,256], index: 0, kind: input, shape index: {}]
  %s1 = inlined_call_operand.vmem [shape: f32[1,256], index: 1, kind: input, shape index: {}]
  %s2 = inlined_call_operand.vmem [shape: f32[1,256], index: 2, kind: input, shape index: {}]
  %s3 = inlined_call_operand.vmem [shape: f32[32,256], index: 3, kind: output, shape index: {}]
  %s4 = sld [smem:[#allocation0]]
  $region22: #{_lambda_.20} parent=0
    _
  %s6 = ssub.s32 1, %s4
  %s7 = scalar_select 0, %s6, %s4
  // Predicated region
  $region2: #{_lambda_.20} parent=0 // pred_check
    _
  $region3: #{_lambda_.20} parent=0 // pred_check_branch
    %9 = sbr.rel (0) target = $region5
  $region4: #{_lambda_.20} parent=0 // pred_region
    _
  $region5: #{_lambda_.20} parent=0 // pred_fallthru
    _
  // Predicated region
  $region6: #{_lambda_.20} parent=0 // pred_check
    _
  $region7: #{_lambda_.20} parent=0 // pred_check_branch
    %11 = sbr.rel (0) target = $region9
  $region8: #{_lambda_.20} parent=0 // pred_region
    _
  $region9: #{_lambda_.20} parent=0 // pred_fallthru
    _
  // Predicated region
  $region10: #{_lambda_.20} parent=0 // pred_check
    _
  $region11: #{_lambda_.20} parent=0 // pred_check_branch
    %13 = sbr.rel (0) target = $region13
  $region12: #{_lambda_.20} parent=0 // pred_region
    _
  $region13: #{_lambda_.20} parent=0 // pred_fallthru
    _
  %v14 = vld [vmem:[%s0] sm:$0xff]
  %v15 = vld [vmem:[%s0 + $0x8] sm:$0xff]
  %v16 = vld [vmem:[%s0 + $0x10] sm:$0xff]
  %v17 = vld [vmem:[%s0 + $0x18] sm:$0xff]
  %v18 = vld [vmem:[%s0 + $0x20] sm:$0xff]
  %v19 = vld [vmem:[%s0 + $0x28] sm:$0xff]
  %v20 = vld [vmem:[%s0 + $0x30] sm:$0xff]
  %v21 = vld [vmem:[%s0 + $0x38] sm:$0xff]
  %v22 = vld [vmem:[%s1] sm:$0x3]
  %v24 = vlaneseq
  %v25 = vshrl.u32 %v24, 7
  %v26 = vsub.s32 0, %v25
  %v27 = vrot.slane %v22, %v26
  %v28 = vlaneseq
  %v29 = vshrl.u32 %v28, 7
  %v30 = vsub.s32 1, %v29
  %v31 = vrot.slane %v22, %v30
  %v34 = vmul.f32 %v14, %v27
  %v35 = vmul.f32 %v15, %v31
  %v36 = vmul.f32 %v16, %v27
  %v37 = vmul.f32 %v17, %v31
  %v38 = vmul.f32 %v18, %v27
  %v39 = vmul.f32 %v19, %v31
  %v40 = vmul.f32 %v20, %v27
  %v41 = vmul.f32 %v21, %v31
  %v42 = vld [vmem:[%s2] sm:$0x3]
  %v44 = vlaneseq
  %v45 = vshrl.u32 %v44, 7
  %v46 = vsub.s32 0, %v45
  %v47 = vrot.slane %v42, %v46
  %v48 = vlaneseq
  %v49 = vshrl.u32 %v48, 7
  %v50 = vsub.s32 1, %v49
  %v51 = vrot.slane %v42, %v50
  %v54 = vadd.f32 %v34, %v47
  %v55 = vadd.f32 %v35, %v51
  %v56 = vadd.f32 %v36, %v47
  %v57 = vadd.f32 %v37, %v51
  %v58 = vadd.f32 %v38, %v47
  %v59 = vadd.f32 %v39, %v51
  %v60 = vadd.f32 %v40, %v47
  %v61 = vadd.f32 %v41, %v51
  %62 = vst [vmem:[%s3] sm:$0xff] %v54
  %63 = vst [vmem:[%s3 + $0x8] sm:$0xff] %v55
  %64 = vst [vmem:[%s3 + $0x10] sm:$0xff] %v56
  %65 = vst [vmem:[%s3 + $0x18] sm:$0xff] %v57
  %66 = vst [vmem:[%s3 + $0x20] sm:$0xff] %v58
  %67 = vst [vmem:[%s3 + $0x28] sm:$0xff] %v59
  %68 = vst [vmem:[%s3 + $0x30] sm:$0xff] %v60
  %69 = vst [vmem:[%s3 + $0x38] sm:$0xff] %v61
  // Predicated region
  $region14: #{_lambda_.20} parent=0 // pred_check
    _
  $region15: #{_lambda_.20} parent=0 // pred_check_branch
    %71 = sbr.rel (0) target = $region17
  $region16: #{_lambda_.20} parent=0 // pred_region
    _
  $region17: #{_lambda_.20} parent=0 // pred_fallthru
    _
  // Predicated region
  $region18: #{_lambda_.20} parent=0 // pred_check
    _
  $region19: #{_lambda_.20} parent=0 // pred_check_branch
    %73 = sbr.rel (0) target = $region21
  $region20: #{_lambda_.20} parent=0 // pred_region
    _
  $region21: #{_lambda_.20} parent=0 // pred_fallthru
    _

// kernel: tile.57
$region0: #{tile.57}
  #allocation0 [shape = 's32[1]{0}', space=sflag, size = 0x4, scoped, tag = 'scoped memory for tile.57']
  %s0 = inlined_call_operand.vmem [shape: f32[32], index: 0, kind: input, shape index: {}]
  %s1 = inlined_call_operand.vmem [shape: f32[4,32], index: 1, kind: output, shape index: {}]
  // Predicated region
  $region2: #{tile.57} parent=0 // pred_check
    _
  $region3: #{tile.57} parent=0 // pred_check_branch
    %3 = sbr.rel (0) target = $region5
  $region4: #{tile.57} parent=0 // pred_region
    _
  $region5: #{tile.57} parent=0 // pred_fallthru
    _
  %v4 = vld [vmem:[%s0] ss:$0 sm:$0xff]
  %5 = vst [vmem:[%s1] sm:$0xf] %v4

// kernel: tile.58
$region0: #{tile.58}
  %s0 = inlined_call_operand.vmem [shape: f32[4,32], index: 0, kind: input, shape index: {}]
  %s1 = inlined_call_operand.vmem [shape: f32[1,128], index: 1, kind: output, shape index: {}]
  $region1: #{tile.58} parent=0
    #allocation0 [shape = 'u8[4096]{0}', space=vmem, size = 0x1000, scoped, tag = 'scoped mem for output reshape']
    #allocation1 [shape = 'u8[4096]{0}', space=vmem, size = 0x1000, scoped, tag = 'scoped mem for input reshape']
    %s3 = sshll.u32 1, 4
    %s4 = ssub.s32 %s3, 1
    %v5 = vld [vmem:[%s0] sm:%s4]
    %6 = vst [vmem:[#allocation1] sm:%s4] %v5
    %v7 = vld [vmem:[#allocation1] sm:$0x1]
    %vm8 = vcmask 261120
    %9 = vst.msk [vmem:[#allocation0] sm:$0x1] %vm8, %v7
    %s10 = scalar_lea.vmem [#allocation1], 3
    %v11 = vld [vmem:[%s10] sm:$0x1]
    %12 = vrot.lane.b32.xlu0 %v11, 96
    %v13 = vpop.permute.xlu0 %12
    %vm14 = vcmask 1048320
    %15 = vst.msk [vmem:[#allocation0] sm:$0x1] %vm14, %v13
    %s16 = scalar_lea.vmem [#allocation1], 2
    %v17 = vld [vmem:[%s16] sm:$0x1]
    %18 = vrot.lane.b32.xlu0 %v17, 64
    %v19 = vpop.permute.xlu0 %18
    %vm20 = vcmask 785920
    %21 = vst.msk [vmem:[#allocation0] sm:$0x1] %vm20, %v19
    %s22 = scalar_lea.vmem [#allocation1], 1
    %v23 = vld [vmem:[%s22] sm:$0x1]
    %24 = vrot.lane.b32.xlu0 %v23, 32
    %v25 = vpop.permute.xlu0 %24
    %vm26 = vcmask 523520
    %27 = vst.msk [vmem:[#allocation0] sm:$0x1] %vm26, %v25
    %s29 = sshll.u32 1, 1
    %s30 = ssub.s32 %s29, 1
    %v32 = vld [vmem:[#allocation0] sm:%s30]
    %s33 = sshll.u32 1, 1
    %s34 = ssub.s32 %s33, 1
    %35 = vst [vmem:[%s1] sm:%s34] %v32

// kernel: _lambda_.21
$region0: #{_lambda_.21}
  #allocation0 [shape = 'u32[]', space=smem, size = 0x4, offset = 0x4, fixed_abs, tag = 'smem constant byte address 0x4 - core index']
  #allocation1 [shape = 'u32[144,128]{1,0:T(1,128)}', space=vmem, size = 0x12000, scoped, tag = 'internal scratch']
  %s0 = inlined_call_operand.vmem [shape: bf16[64,512], index: 0, kind: input, shape index: {}]
  %s1 = inlined_call_operand.vmem [shape: bf16[512,128], index: 1, kind: input, shape index: {}]
  %s2 = inlined_call_operand.vmem [shape: f32[1,128], index: 2, kind: input, shape index: {}, may-alias: {2,3,4}]
  %s3 = inlined_call_operand.vmem [shape: f32[1,128], index: 3, kind: input, shape index: {}, may-alias: {2,3,4}]
  %s4 = inlined_call_operand.vmem [shape: f32[1,128], index: 4, kind: input, shape index: {}, may-alias: {2,3,4}]
  %s5 = inlined_call_operand.vmem [shape: f32[64,128], index: 5, kind: output, shape index: {}]
  %s6 = sld [smem:[#allocation0]]
  $region30: #{_lambda_.21} parent=0
    _
  %s8 = ssub.s32 1, %s6
  %s9 = scalar_select 0, %s8, %s6
  // Predicated region
  $region2: #{_lambda_.21} parent=0 // pred_check
    _
  $region3: #{_lambda_.21} parent=0 // pred_check_branch
    %11 = sbr.rel (0) target = $region5
  $region4: #{_lambda_.21} parent=0 // pred_region
    _
  $region5: #{_lambda_.21} parent=0 // pred_fallthru
    _
  // Predicated region
  $region6: #{_lambda_.21} parent=0 // pred_check
    _
  $region7: #{_lambda_.21} parent=0 // pred_check_branch
    %13 = sbr.rel (0) target = $region9
  $region8: #{_lambda_.21} parent=0 // pred_region
    _
  $region9: #{_lambda_.21} parent=0 // pred_fallthru
    _
  // Predicated region
  $region10: #{_lambda_.21} parent=0 // pred_check
    _
  $region11: #{_lambda_.21} parent=0 // pred_check_branch
    %15 = sbr.rel (0) target = $region13
  $region12: #{_lambda_.21} parent=0 // pred_region
    _
  $region13: #{_lambda_.21} parent=0 // pred_fallthru
    _
  // Predicated region
  $region14: #{_lambda_.21} parent=0 // pred_check
    _
  $region15: #{_lambda_.21} parent=0 // pred_check_branch
    %17 = sbr.rel (0) target = $region17
  $region16: #{_lambda_.21} parent=0 // pred_region
    _
  $region17: #{_lambda_.21} parent=0 // pred_fallthru
    _
  // Predicated region
  $region18: #{_lambda_.21} parent=0 // pred_check
    _
  $region19: #{_lambda_.21} parent=0 // pred_check_branch
    %19 = sbr.rel (0) target = $region21
  $region20: #{_lambda_.21} parent=0 // pred_region
    _
  $region21: #{_lambda_.21} parent=0 // pred_fallthru
    _
  %v21 = vld [vmem:[%s0] sm:$0xff]
  %v22 = vld [vmem:[%s0 + $0x8] sm:$0xff]
  %v23 = vld [vmem:[%s0 + $0x10] sm:$0xff]
  %v24 = vld [vmem:[%s0 + $0x18] sm:$0xff]
  %v25 = vld [vmem:[%s0 + $0x20] sm:$0xff]
  %v26 = vld [vmem:[%s0 + $0x28] sm:$0xff]
  %v27 = vld [vmem:[%s0 + $0x30] sm:$0xff]
  %v28 = vld [vmem:[%s0 + $0x38] sm:$0xff]
  %v29 = vld [vmem:[%s0 + $0x40] sm:$0xff]
  %v30 = vld [vmem:[%s0 + $0x48] sm:$0xff]
  %v31 = vld [vmem:[%s0 + $0x50] sm:$0xff]
  %v32 = vld [vmem:[%s0 + $0x58] sm:$0xff]
  %v33 = vld [vmem:[%s0 + $0x60] sm:$0xff]
  %v34 = vld [vmem:[%s0 + $0x68] sm:$0xff]
  %v35 = vld [vmem:[%s0 + $0x70] sm:$0xff]
  %v36 = vld [vmem:[%s0 + $0x78] sm:$0xff]
  %v37 = vld [vmem:[%s1] sm:$0xf]
  %v38 = vld [vmem:[%s1 + $0x4] sm:$0xf]
  %v39 = vld [vmem:[%s1 + $0x8] sm:$0xf]
  %v40 = vld [vmem:[%s1 + $0xc] sm:$0xf]
  %v41 = vld [vmem:[%s1 + $0x10] sm:$0xf]
  %v42 = vld [vmem:[%s1 + $0x14] sm:$0xf]
  %v43 = vld [vmem:[%s1 + $0x18] sm:$0xf]
  %v44 = vld [vmem:[%s1 + $0x1c] sm:$0xf]
  %v45 = vld [vmem:[%s1 + $0x20] sm:$0xf]
  %v46 = vld [vmem:[%s1 + $0x24] sm:$0xf]
  %v47 = vld [vmem:[%s1 + $0x28] sm:$0xf]
  %v48 = vld [vmem:[%s1 + $0x2c] sm:$0xf]
  %v49 = vld [vmem:[%s1 + $0x30] sm:$0xf]
  %v50 = vld [vmem:[%s1 + $0x34] sm:$0xf]
  %v51 = vld [vmem:[%s1 + $0x38] sm:$0xf]
  %v52 = vld [vmem:[%s1 + $0x3c] sm:$0xf]
  %v53 = vld [vmem:[%s1 + $0x40] sm:$0xf]
  %v54 = vld [vmem:[%s1 + $0x44] sm:$0xf]
  %v55 = vld [vmem:[%s1 + $0x48] sm:$0xf]
  %v56 = vld [vmem:[%s1 + $0x4c] sm:$0xf]
  %v57 = vld [vmem:[%s1 + $0x50] sm:$0xf]
  %v58 = vld [vmem:[%s1 + $0x54] sm:$0xf]
  %v59 = vld [vmem:[%s1 + $0x58] sm:$0xf]
  %v60 = vld [vmem:[%s1 + $0x5c] sm:$0xf]
  %v61 = vld [vmem:[%s1 + $0x60] sm:$0xf]
  %v62 = vld [vmem:[%s1 + $0x64] sm:$0xf]
  %v63 = vld [vmem:[%s1 + $0x68] sm:$0xf]
  %v64 = vld [vmem:[%s1 + $0x6c] sm:$0xf]
  %v65 = vld [vmem:[%s1 + $0x70] sm:$0xf]
  %v66 = vld [vmem:[%s1 + $0x74] sm:$0xf]
  %v67 = vld [vmem:[%s1 + $0x78] sm:$0xf]
  %v68 = vld [vmem:[%s1 + $0x7c] sm:$0xf]
  %v69 = vld [vmem:[%s1 + $0x80] sm:$0xf]
  %v70 = vld [vmem:[%s1 + $0x84] sm:$0xf]
  %v71 = vld [vmem:[%s1 + $0x88] sm:$0xf]
  %v72 = vld [vmem:[%s1 + $0x8c] sm:$0xf]
  %v73 = vld [vmem:[%s1 + $0x90] sm:$0xf]
  %v74 = vld [vmem:[%s1 + $0x94] sm:$0xf]
  %v75 = vld [vmem:[%s1 + $0x98] sm:$0xf]
  %v76 = vld [vmem:[%s1 + $0x9c] sm:$0xf]
  %v77 = vld [vmem:[%s1 + $0xa0] sm:$0xf]
  %v78 = vld [vmem:[%s1 + $0xa4] sm:$0xf]
  %v79 = vld [vmem:[%s1 + $0xa8] sm:$0xf]
  %v80 = vld [vmem:[%s1 + $0xac] sm:$0xf]
  %v81 = vld [vmem:[%s1 + $0xb0] sm:$0xf]
  %v82 = vld [vmem:[%s1 + $0xb4] sm:$0xf]
  %v83 = vld [vmem:[%s1 + $0xb8] sm:$0xf]
  %v84 = vld [vmem:[%s1 + $0xbc] sm:$0xf]
  %v85 = vld [vmem:[%s1 + $0xc0] sm:$0xf]
  %v86 = vld [vmem:[%s1 + $0xc4] sm:$0xf]
  %v87 = vld [vmem:[%s1 + $0xc8] sm:$0xf]
  %v88 = vld [vmem:[%s1 + $0xcc] sm:$0xf]
  %v89 = vld [vmem:[%s1 + $0xd0] sm:$0xf]
  %v90 = vld [vmem:[%s1 + $0xd4] sm:$0xf]
  %v91 = vld [vmem:[%s1 + $0xd8] sm:$0xf]
  %v92 = vld [vmem:[%s1 + $0xdc] sm:$0xf]
  %v93 = vld [vmem:[%s1 + $0xe0] sm:$0xf]
  %v94 = vld [vmem:[%s1 + $0xe4] sm:$0xf]
  %v95 = vld [vmem:[%s1 + $0xe8] sm:$0xf]
  %v96 = vld [vmem:[%s1 + $0xec] sm:$0xf]
  %v97 = vld [vmem:[%s1 + $0xf0] sm:$0xf]
  %v98 = vld [vmem:[%s1 + $0xf4] sm:$0xf]
  %v99 = vld [vmem:[%s1 + $0xf8] sm:$0xf]
  %v100 = vld [vmem:[%s1 + $0xfc] sm:$0xf]
  %v101 = vld [vmem:[%s2] sm:$0x1]
  %v103 = vlaneseq
  %v104 = vshrl.u32 %v103, 7
  %v105 = vsub.s32 0, %v104
  %v106 = vrot.slane %v101, %v105
  %v124 = vunpack.c.l.b16 %v21
  %v125 = vunpack.c.h.b16 %v21
  %v126 = vunpack.c.l.b16 %v22
  %v127 = vunpack.c.h.b16 %v22
  %v128 = vunpack.c.l.b16 %v23
  %v129 = vunpack.c.h.b16 %v23
  %v130 = vunpack.c.l.b16 %v24
  %v131 = vunpack.c.h.b16 %v24
  %v132 = vunpack.c.l.b16 %v25
  %v133 = vunpack.c.h.b16 %v25
  %v134 = vunpack.c.l.b16 %v26
  %v135 = vunpack.c.h.b16 %v26
  %v136 = vunpack.c.l.b16 %v27
  %v137 = vunpack.c.h.b16 %v27
  %v138 = vunpack.c.l.b16 %v28
  %v139 = vunpack.c.h.b16 %v28
  %v140 = vunpack.c.l.b16 %v29
  %v141 = vunpack.c.h.b16 %v29
  %v142 = vunpack.c.l.b16 %v30
  %v143 = vunpack.c.h.b16 %v30
  %v144 = vunpack.c.l.b16 %v31
  %v145 = vunpack.c.h.b16 %v31
  %v146 = vunpack.c.l.b16 %v32
  %v147 = vunpack.c.h.b16 %v32
  %v148 = vunpack.c.l.b16 %v33
  %v149 = vunpack.c.h.b16 %v33
  %v150 = vunpack.c.l.b16 %v34
  %v151 = vunpack.c.h.b16 %v34
  %v152 = vunpack.c.l.b16 %v35
  %v153 = vunpack.c.h.b16 %v35
  %v154 = vunpack.c.l.b16 %v36
  %v155 = vunpack.c.h.b16 %v36
  %v156 = vpack.c.b16 %v128, %v124
  %v157 = vpack.c.b16 %v129, %v125
  %v158 = vpack.c.b16 %v130, %v126
  %v159 = vpack.c.b16 %v131, %v127
  %v160 = vpack.c.b16 %v136, %v132
  %v161 = vpack.c.b16 %v137, %v133
  %v162 = vpack.c.b16 %v138, %v134
  %v163 = vpack.c.b16 %v139, %v135
  %v164 = vpack.c.b16 %v144, %v140
  %v165 = vpack.c.b16 %v145, %v141
  %v166 = vpack.c.b16 %v146, %v142
  %v167 = vpack.c.b16 %v147, %v143
  %v168 = vpack.c.b16 %v152, %v148
  %v169 = vpack.c.b16 %v153, %v149
  %v170 = vpack.c.b16 %v154, %v150
  %v171 = vpack.c.b16 %v155, %v151
  %v252 = vunpack.c.l.b16 %v37
  %v253 = vunpack.c.l.b16 %v38
  %v254 = vunpack.c.l.b16 %v39
  %v255 = vunpack.c.l.b16 %v40
  %v256 = vunpack.c.l.b16 %v41
  %v257 = vunpack.c.l.b16 %v42
  %v258 = vunpack.c.l.b16 %v43
  %v259 = vunpack.c.l.b16 %v44
  %v260 = vunpack.c.l.b16 %v45
  %v261 = vunpack.c.l.b16 %v46
  %v262 = vunpack.c.l.b16 %v47
  %v263 = vunpack.c.l.b16 %v48
  %v264 = vunpack.c.l.b16 %v49
  %v265 = vunpack.c.l.b16 %v50
  %v266 = vunpack.c.l.b16 %v51
  %v267 = vunpack.c.l.b16 %v52
  %v268 = vunpack.c.l.b16 %v53
  %v269 = vunpack.c.l.b16 %v54
  %v270 = vunpack.c.l.b16 %v55
  %v271 = vunpack.c.l.b16 %v56
  %v272 = vunpack.c.l.b16 %v57
  %v273 = vunpack.c.l.b16 %v58
  %v274 = vunpack.c.l.b16 %v59
  %v275 = vunpack.c.l.b16 %v60
  %v276 = vunpack.c.l.b16 %v61
  %v277 = vunpack.c.l.b16 %v62
  %v278 = vunpack.c.l.b16 %v63
  %v279 = vunpack.c.l.b16 %v64
  %v280 = vunpack.c.l.b16 %v65
  %v281 = vunpack.c.l.b16 %v66
  %v282 = vunpack.c.l.b16 %v67
  %v283 = vunpack.c.l.b16 %v68
  %v284 = vunpack.c.l.b16 %v69
  %v285 = vunpack.c.l.b16 %v70
  %v286 = vunpack.c.l.b16 %v71
  %v287 = vunpack.c.l.b16 %v72
  %v288 = vunpack.c.l.b16 %v73
  %v289 = vunpack.c.l.b16 %v74
  %v290 = vunpack.c.l.b16 %v75
  %v291 = vunpack.c.l.b16 %v76
  %v292 = vunpack.c.l.b16 %v77
  %v293 = vunpack.c.l.b16 %v78
  %v294 = vunpack.c.l.b16 %v79
  %v295 = vunpack.c.l.b16 %v80
  %v296 = vunpack.c.l.b16 %v81
  %v297 = vunpack.c.l.b16 %v82
  %v298 = vunpack.c.l.b16 %v83
  %v299 = vunpack.c.l.b16 %v84
  %v300 = vunpack.c.l.b16 %v85
  %v301 = vunpack.c.l.b16 %v86
  %v302 = vunpack.c.l.b16 %v87
  %v303 = vunpack.c.l.b16 %v88
  %v304 = vunpack.c.l.b16 %v89
  %v305 = vunpack.c.l.b16 %v90
  %v306 = vunpack.c.l.b16 %v91
  %v307 = vunpack.c.l.b16 %v92
  %v308 = vunpack.c.l.b16 %v93
  %v309 = vunpack.c.l.b16 %v94
  %v310 = vunpack.c.l.b16 %v95
  %v311 = vunpack.c.l.b16 %v96
  %v312 = vunpack.c.l.b16 %v97
  %v313 = vunpack.c.l.b16 %v98
  %v314 = vunpack.c.l.b16 %v99
  %v315 = vunpack.c.l.b16 %v100
  %v316 = vpack.c.b16 %v253, %v252
  %v317 = vpack.c.b16 %v255, %v254
  %v318 = vpack.c.b16 %v257, %v256
  %v319 = vpack.c.b16 %v259, %v258
  %v320 = vpack.c.b16 %v261, %v260
  %v321 = vpack.c.b16 %v263, %v262
  %v322 = vpack.c.b16 %v265, %v264
  %v323 = vpack.c.b16 %v267, %v266
  %v324 = vpack.c.b16 %v269, %v268
  %v325 = vpack.c.b16 %v271, %v270
  %v326 = vpack.c.b16 %v273, %v272
  %v327 = vpack.c.b16 %v275, %v274
  %v328 = vpack.c.b16 %v277, %v276
  %v329 = vpack.c.b16 %v279, %v278
  %v330 = vpack.c.b16 %v281, %v280
  %v331 = vpack.c.b16 %v283, %v282
  %v332 = vpack.c.b16 %v285, %v284
  %v333 = vpack.c.b16 %v287, %v286
  %v334 = vpack.c.b16 %v289, %v288
  %v335 = vpack.c.b16 %v291, %v290
  %v336 = vpack.c.b16 %v293, %v292
  %v337 = vpack.c.b16 %v295, %v294
  %v338 = vpack.c.b16 %v297, %v296
  %v339 = vpack.c.b16 %v299, %v298
  %v340 = vpack.c.b16 %v301, %v300
  %v341 = vpack.c.b16 %v303, %v302
  %v342 = vpack.c.b16 %v305, %v304
  %v343 = vpack.c.b16 %v307, %v306
  %v344 = vpack.c.b16 %v309, %v308
  %v345 = vpack.c.b16 %v311, %v310
  %v346 = vpack.c.b16 %v313, %v312
  %v347 = vpack.c.b16 %v315, %v314
  %380 = vmatprep.subr.bf16.mxu0 0
  %381 = vmatpush1.bf16.msra.mxu0 %v323
  %382 = vmatprep.subr.bf16.mxu0 0
  %383 = vmatpush1.bf16.msra.mxu0 %v322
  %384 = vmatprep.subr.bf16.mxu0 0
  %385 = vmatpush1.bf16.msra.mxu0 %v321
  %386 = vmatprep.subr.bf16.mxu0 0
  %387 = vmatpush1.bf16.msra.mxu0 %v320
  %388 = vmatprep.subr.bf16.mxu0 0
  %389 = vmatpush1.bf16.msra.mxu0 %v319
  %390 = vmatprep.subr.bf16.mxu0 0
  %391 = vmatpush1.bf16.msra.mxu0 %v318
  %392 = vmatprep.subr.bf16.mxu0 0
  %393 = vmatpush1.bf16.msra.mxu0 %v317
  %394 = vmatprep.subr.bf16.mxu0 0
  %395 = vmatpush1.bf16.msra.mxu0 %v316
  %396 = vmatprep.subr.bf16.mxu0 0
  %397 = vmatpush2.bf16.msra.mxu0 %v331
  %398 = vmatprep.subr.bf16.mxu0 0
  %399 = vmatpush2.bf16.msra.mxu0 %v330
  %400 = vmatprep.subr.bf16.mxu0 0
  %401 = vmatpush2.bf16.msra.mxu0 %v329
  %402 = vmatprep.subr.bf16.mxu0 0
  %403 = vmatpush2.bf16.msra.mxu0 %v328
  %404 = vmatprep.subr.bf16.mxu0 0
  %405 = vmatpush2.bf16.msra.mxu0 %v327
  %406 = vmatprep.subr.bf16.mxu0 0
  %407 = vmatpush2.bf16.msra.mxu0 %v326
  %408 = vmatprep.subr.bf16.mxu0 0
  %409 = vmatpush2.bf16.msra.mxu0 %v325
  %410 = vmatprep.subr.bf16.mxu0 0
  %411 = vmatpush2.bf16.msra.mxu0 %v324
  %412 = vmatprep.mubr.bf16.mxu0 %v157
  %413 = vmatmul.mubr.bf16.gmra.mxu0 %v156
  %v414 = vpop.f32.mrf.mxu0
  %v415 = vadd.f32 %v106, %v414
  %v416 = vpop.f32.mrf.mxu0
  %v417 = vpop.f32.mrf.mxu0
  %v418 = vadd.f32 %v106, %v417
  %v419 = vpop.f32.mrf.mxu0
  %420 = vmatprep.mubr.bf16.mxu0 %v161
  %421 = vmatmul.mubr.bf16.gmra.mxu0 %v160
  %v422 = vpop.f32.mrf.mxu0
  %v423 = vadd.f32 %v106, %v422
  %v424 = vpop.f32.mrf.mxu0
  %v425 = vpop.f32.mrf.mxu0
  %v426 = vadd.f32 %v106, %v425
  %v427 = vpop.f32.mrf.mxu0
  %428 = vmatprep.mubr.bf16.mxu0 %v165
  %429 = vmatmul.mubr.bf16.gmra.mxu0 %v164
  %v430 = vpop.f32.mrf.mxu0
  %v431 = vadd.f32 %v106, %v430
  %v432 = vpop.f32.mrf.mxu0
  %v433 = vpop.f32.mrf.mxu0
  %v434 = vadd.f32 %v106, %v433
  %v435 = vpop.f32.mrf.mxu0
  %436 = vmatprep.mubr.bf16.mxu0 %v169
  %437 = vmatmul.mubr.bf16.gmra.mxu0 %v168
  %v438 = vpop.f32.mrf.mxu0
  %v439 = vadd.f32 %v106, %v438
  %v440 = vpop.f32.mrf.mxu0
  %v441 = vpop.f32.mrf.mxu0
  %v442 = vadd.f32 %v106, %v441
  %v443 = vpop.f32.mrf.mxu0
  %444 = vdwg.mxu0
  %445 = vmatprep.subr.bf16.mxu0 0
  %446 = vmatpush1.bf16.msra.mxu0 %v339
  %447 = vmatprep.subr.bf16.mxu0 0
  %448 = vmatpush1.bf16.msra.mxu0 %v338
  %449 = vmatprep.subr.bf16.mxu0 0
  %450 = vmatpush1.bf16.msra.mxu0 %v337
  %451 = vmatprep.subr.bf16.mxu0 0
  %452 = vmatpush1.bf16.msra.mxu0 %v336
  %453 = vmatprep.subr.bf16.mxu0 0
  %454 = vmatpush1.bf16.msra.mxu0 %v335
  %455 = vmatprep.subr.bf16.mxu0 0
  %456 = vmatpush1.bf16.msra.mxu0 %v334
  %457 = vmatprep.subr.bf16.mxu0 0
  %458 = vmatpush1.bf16.msra.mxu0 %v333
  %459 = vmatprep.subr.bf16.mxu0 0
  %460 = vmatpush1.bf16.msra.mxu0 %v332
  %461 = vmatprep.subr.bf16.mxu0 0
  %462 = vmatpush2.bf16.msra.mxu0 %v347
  %463 = vmatprep.subr.bf16.mxu0 0
  %464 = vmatpush2.bf16.msra.mxu0 %v346
  %465 = vmatprep.subr.bf16.mxu0 0
  %466 = vmatpush2.bf16.msra.mxu0 %v345
  %467 = vmatprep.subr.bf16.mxu0 0
  %468 = vmatpush2.bf16.msra.mxu0 %v344
  %469 = vmatprep.subr.bf16.mxu0 0
  %470 = vmatpush2.bf16.msra.mxu0 %v343
  %471 = vmatprep.subr.bf16.mxu0 0
  %472 = vmatpush2.bf16.msra.mxu0 %v342
  %473 = vmatprep.subr.bf16.mxu0 0
  %474 = vmatpush2.bf16.msra.mxu0 %v341
  %475 = vmatprep.subr.bf16.mxu0 0
  %476 = vmatpush2.bf16.msra.mxu0 %v340
  %477 = vmatprep.mubr.bf16.mxu0 %v159
  %478 = vmatmul.mubr.bf16.gmra.mxu0 %v158
  %v479 = vpop.f32.mrf.mxu0
  %v480 = vadd.f32 %v415, %v479
  %v481 = vpop.f32.mrf.mxu0
  %v482 = vpop.f32.mrf.mxu0
  %v483 = vadd.f32 %v418, %v482
  %v484 = vpop.f32.mrf.mxu0
  %485 = vmatprep.mubr.bf16.mxu0 %v163
  %486 = vmatmul.mubr.bf16.gmra.mxu0 %v162
  %v487 = vpop.f32.mrf.mxu0
  %v488 = vadd.f32 %v423, %v487
  %v489 = vpop.f32.mrf.mxu0
  %v490 = vpop.f32.mrf.mxu0
  %v491 = vadd.f32 %v426, %v490
  %v492 = vpop.f32.mrf.mxu0
  %493 = vmatprep.mubr.bf16.mxu0 %v167
  %494 = vmatmul.mubr.bf16.gmra.mxu0 %v166
  %v495 = vpop.f32.mrf.mxu0
  %v496 = vadd.f32 %v431, %v495
  %v497 = vpop.f32.mrf.mxu0
  %v498 = vpop.f32.mrf.mxu0
  %v499 = vadd.f32 %v434, %v498
  %v500 = vpop.f32.mrf.mxu0
  %501 = vmatprep.mubr.bf16.mxu0 %v171
  %502 = vmatmul.mubr.bf16.gmra.mxu0 %v170
  %v503 = vpop.f32.mrf.mxu0
  %v504 = vadd.f32 %v439, %v503
  %v505 = vpop.f32.mrf.mxu0
  %v506 = vpop.f32.mrf.mxu0
  %v507 = vadd.f32 %v442, %v506
  %v508 = vpop.f32.mrf.mxu0
  %509 = vdwg.mxu0
  %510 = vst [vmem:[%s5] sm:$0xff] %v480
  %511 = vst [vmem:[%s5 + $0x8] sm:$0xff] %v483
  %512 = vst [vmem:[%s5 + $0x10] sm:$0xff] %v488
  %513 = vst [vmem:[%s5 + $0x18] sm:$0xff] %v491
  %514 = vst [vmem:[%s5 + $0x20] sm:$0xff] %v496
  %515 = vst [vmem:[%s5 + $0x28] sm:$0xff] %v499
  %516 = vst [vmem:[%s5 + $0x30] sm:$0xff] %v504
  %517 = vst [vmem:[%s5 + $0x38] sm:$0xff] %v507
  // Predicated region
  $region22: #{_lambda_.21} parent=0 // pred_check
    _
  $region23: #{_lambda_.21} parent=0 // pred_check_branch
    %519 = sbr.rel (0) target = $region25
  $region24: #{_lambda_.21} parent=0 // pred_region
    _
  $region25: #{_lambda_.21} parent=0 // pred_fallthru
    _
  // Predicated region
  $region26: #{_lambda_.21} parent=0 // pred_check
    _
  $region27: #{_lambda_.21} parent=0 // pred_check_branch
    %521 = sbr.rel (0) target = $region29
  $region28: #{_lambda_.21} parent=0 // pred_region
    _
  $region29: #{_lambda_.21} parent=0 // pred_fallthru
    _

// kernel: _lambda_.22
$region0: #{_lambda_.22}
  #allocation0 [shape = 'u32[]', space=smem, size = 0x4, offset = 0x4, fixed_abs, tag = 'smem constant byte address 0x4 - core index']
  #allocation1 [shape = 'u32[144,128]{1,0:T(1,128)}', space=vmem, size = 0x12000, scoped, tag = 'internal scratch']
  %s0 = inlined_call_operand.vmem [shape: f32[64,128], index: 0, kind: input, shape index: {}]
  %s1 = inlined_call_operand.vmem [shape: f32[1,128], index: 1, kind: input, shape index: {}]
  %s2 = inlined_call_operand.vmem [shape: f32[1,128], index: 2, kind: input, shape index: {}]
  %s3 = inlined_call_operand.vmem [shape: f32[64,128], index: 3, kind: output, shape index: {}]
  %s4 = sld [smem:[#allocation0]]
  $region22: #{_lambda_.22} parent=0
    _
  %s6 = ssub.s32 1, %s4
  %s7 = scalar_select 0, %s6, %s4
  // Predicated region
  $region2: #{_lambda_.22} parent=0 // pred_check
    _
  $region3: #{_lambda_.22} parent=0 // pred_check_branch
    %9 = sbr.rel (0) target = $region5
  $region4: #{_lambda_.22} parent=0 // pred_region
    _
  $region5: #{_lambda_.22} parent=0 // pred_fallthru
    _
  // Predicated region
  $region6: #{_lambda_.22} parent=0 // pred_check
    _
  $region7: #{_lambda_.22} parent=0 // pred_check_branch
    %11 = sbr.rel (0) target = $region9
  $region8: #{_lambda_.22} parent=0 // pred_region
    _
  $region9: #{_lambda_.22} parent=0 // pred_fallthru
    _
  // Predicated region
  $region10: #{_lambda_.22} parent=0 // pred_check
    _
  $region11: #{_lambda_.22} parent=0 // pred_check_branch
    %13 = sbr.rel (0) target = $region13
  $region12: #{_lambda_.22} parent=0 // pred_region
    _
  $region13: #{_lambda_.22} parent=0 // pred_fallthru
    _
  %v14 = vld [vmem:[%s0] sm:$0xff]
  %v15 = vld [vmem:[%s0 + $0x8] sm:$0xff]
  %v16 = vld [vmem:[%s0 + $0x10] sm:$0xff]
  %v17 = vld [vmem:[%s0 + $0x18] sm:$0xff]
  %v18 = vld [vmem:[%s0 + $0x20] sm:$0xff]
  %v19 = vld [vmem:[%s0 + $0x28] sm:$0xff]
  %v20 = vld [vmem:[%s0 + $0x30] sm:$0xff]
  %v21 = vld [vmem:[%s0 + $0x38] sm:$0xff]
  %v22 = vld [vmem:[%s1] sm:$0x1]
  %v24 = vlaneseq
  %v25 = vshrl.u32 %v24, 7
  %v26 = vsub.s32 0, %v25
  %v27 = vrot.slane %v22, %v26
  %v29 = vmul.f32 %v14, %v27
  %v30 = vmul.f32 %v15, %v27
  %v31 = vmul.f32 %v16, %v27
  %v32 = vmul.f32 %v17, %v27
  %v33 = vmul.f32 %v18, %v27
  %v34 = vmul.f32 %v19, %v27
  %v35 = vmul.f32 %v20, %v27
  %v36 = vmul.f32 %v21, %v27
  %v37 = vld [vmem:[%s2] sm:$0x1]
  %v39 = vlaneseq
  %v40 = vshrl.u32 %v39, 7
  %v41 = vsub.s32 0, %v40
  %v42 = vrot.slane %v37, %v41
  %v44 = vadd.f32 %v29, %v42
  %v45 = vadd.f32 %v30, %v42
  %v46 = vadd.f32 %v31, %v42
  %v47 = vadd.f32 %v32, %v42
  %v48 = vadd.f32 %v33, %v42
  %v49 = vadd.f32 %v34, %v42
  %v50 = vadd.f32 %v35, %v42
  %v51 = vadd.f32 %v36, %v42
  %52 = vst [vmem:[%s3] sm:$0xff] %v44
  %53 = vst [vmem:[%s3 + $0x8] sm:$0xff] %v45
  %54 = vst [vmem:[%s3 + $0x10] sm:$0xff] %v46
  %55 = vst [vmem:[%s3 + $0x18] sm:$0xff] %v47
  %56 = vst [vmem:[%s3 + $0x20] sm:$0xff] %v48
  %57 = vst [vmem:[%s3 + $0x28] sm:$0xff] %v49
  %58 = vst [vmem:[%s3 + $0x30] sm:$0xff] %v50
  %59 = vst [vmem:[%s3 + $0x38] sm:$0xff] %v51
  // Predicated region
  $region14: #{_lambda_.22} parent=0 // pred_check
    _
  $region15: #{_lambda_.22} parent=0 // pred_check_branch
    %61 = sbr.rel (0) target = $region17
  $region16: #{_lambda_.22} parent=0 // pred_region
    _
  $region17: #{_lambda_.22} parent=0 // pred_fallthru
    _
  // Predicated region
  $region18: #{_lambda_.22} parent=0 // pred_check
    _
  $region19: #{_lambda_.22} parent=0 // pred_check_branch
    %63 = sbr.rel (0) target = $region21
  $region20: #{_lambda_.22} parent=0 // pred_region
    _
  $region21: #{_lambda_.22} parent=0 // pred_fallthru
    _

// kernel: _lambda_.23
$region0: #{_lambda_.23}
  #allocation0 [shape = 'u32[]', space=smem, size = 0x4, offset = 0x4, fixed_abs, tag = 'smem constant byte address 0x4 - core index']
  #allocation1 [shape = 'u32[144,128]{1,0:T(1,128)}', space=vmem, size = 0x12000, scoped, tag = 'internal scratch']
  %s0 = inlined_call_operand.vmem [shape: bf16[176,256], index: 0, kind: input, shape index: {}]
  %s1 = inlined_call_operand.vmem [shape: bf16[256,128], index: 1, kind: input, shape index: {}]
  %s2 = inlined_call_operand.vmem [shape: f32[1,128], index: 2, kind: input, shape index: {}]
  %s3 = inlined_call_operand.vmem [shape: f32[1,128], index: 3, kind: input, shape index: {}, may-alias: {3,4}]
  %s4 = inlined_call_operand.vmem [shape: f32[1,128], index: 4, kind: input, shape index: {}, may-alias: {3,4}]
  %s5 = inlined_call_operand.vmem [shape: f32[176,128], index: 5, kind: output, shape index: {}]
  %s6 = sld [smem:[#allocation0]]
  $region30: #{_lambda_.23} parent=0
    _
  %s8 = ssub.s32 1, %s6
  %s9 = scalar_select 0, %s8, %s6
  // Predicated region
  $region2: #{_lambda_.23} parent=0 // pred_check
    _
  $region3: #{_lambda_.23} parent=0 // pred_check_branch
    %11 = sbr.rel (0) target = $region5
  $region4: #{_lambda_.23} parent=0 // pred_region
    _
  $region5: #{_lambda_.23} parent=0 // pred_fallthru
    _
  // Predicated region
  $region6: #{_lambda_.23} parent=0 // pred_check
    _
  $region7: #{_lambda_.23} parent=0 // pred_check_branch
    %13 = sbr.rel (0) target = $region9
  $region8: #{_lambda_.23} parent=0 // pred_region
    _
  $region9: #{_lambda_.23} parent=0 // pred_fallthru
    _
  // Predicated region
  $region10: #{_lambda_.23} parent=0 // pred_check
    _
  $region11: #{_lambda_.23} parent=0 // pred_check_branch
    %15 = sbr.rel (0) target = $region13
  $region12: #{_lambda_.23} parent=0 // pred_region
    _
  $region13: #{_lambda_.23} parent=0 // pred_fallthru
    _
  // Predicated region
  $region14: #{_lambda_.23} parent=0 // pred_check
    _
  $region15: #{_lambda_.23} parent=0 // pred_check_branch
    %17 = sbr.rel (0) target = $region17
  $region16: #{_lambda_.23} parent=0 // pred_region
    _
  $region17: #{_lambda_.23} parent=0 // pred_fallthru
    _
  // Predicated region
  $region18: #{_lambda_.23} parent=0 // pred_check
    _
  $region19: #{_lambda_.23} parent=0 // pred_check_branch
    %19 = sbr.rel (0) target = $region21
  $region20: #{_lambda_.23} parent=0 // pred_region
    _
  $region21: #{_lambda_.23} parent=0 // pred_fallthru
    _
  %v21 = vld [vmem:[%s0] sm:$0xff]
  %v22 = vld [vmem:[%s0 + $0x8] sm:$0xff]
  %v23 = vld [vmem:[%s0 + $0x10] sm:$0xff]
  %v24 = vld [vmem:[%s0 + $0x18] sm:$0xff]
  %v25 = vld [vmem:[%s0 + $0x20] sm:$0xff]
  %v26 = vld [vmem:[%s0 + $0x28] sm:$0xff]
  %v27 = vld [vmem:[%s0 + $0x30] sm:$0xff]
  %v28 = vld [vmem:[%s0 + $0x38] sm:$0xff]
  %v29 = vld [vmem:[%s0 + $0x40] sm:$0xff]
  %v30 = vld [vmem:[%s0 + $0x48] sm:$0xff]
  %v31 = vld [vmem:[%s0 + $0x50] sm:$0xff]
  %v32 = vld [vmem:[%s0 + $0x58] sm:$0xff]
  %v33 = vld [vmem:[%s0 + $0x60] sm:$0xff]
  %v34 = vld [vmem:[%s0 + $0x68] sm:$0xff]
  %v35 = vld [vmem:[%s0 + $0x70] sm:$0xff]
  %v36 = vld [vmem:[%s0 + $0x78] sm:$0xff]
  %v37 = vld [vmem:[%s0 + $0x80] sm:$0xff]
  %v38 = vld [vmem:[%s0 + $0x88] sm:$0xff]
  %v39 = vld [vmem:[%s0 + $0x90] sm:$0xff]
  %v40 = vld [vmem:[%s0 + $0x98] sm:$0xff]
  %v41 = vld [vmem:[%s0 + $0xa0] sm:$0xff]
  %v42 = vld [vmem:[%s0 + $0xa8] sm:$0xff]
  %v43 = vld [vmem:[%s1] sm:$0xf]
  %v44 = vld [vmem:[%s1 + $0x4] sm:$0xf]
  %v45 = vld [vmem:[%s1 + $0x8] sm:$0xf]
  %v46 = vld [vmem:[%s1 + $0xc] sm:$0xf]
  %v47 = vld [vmem:[%s1 + $0x10] sm:$0xf]
  %v48 = vld [vmem:[%s1 + $0x14] sm:$0xf]
  %v49 = vld [vmem:[%s1 + $0x18] sm:$0xf]
  %v50 = vld [vmem:[%s1 + $0x1c] sm:$0xf]
  %v51 = vld [vmem:[%s1 + $0x20] sm:$0xf]
  %v52 = vld [vmem:[%s1 + $0x24] sm:$0xf]
  %v53 = vld [vmem:[%s1 + $0x28] sm:$0xf]
  %v54 = vld [vmem:[%s1 + $0x2c] sm:$0xf]
  %v55 = vld [vmem:[%s1 + $0x30] sm:$0xf]
  %v56 = vld [vmem:[%s1 + $0x34] sm:$0xf]
  %v57 = vld [vmem:[%s1 + $0x38] sm:$0xf]
  %v58 = vld [vmem:[%s1 + $0x3c] sm:$0xf]
  %v59 = vld [vmem:[%s1 + $0x40] sm:$0xf]
  %v60 = vld [vmem:[%s1 + $0x44] sm:$0xf]
  %v61 = vld [vmem:[%s1 + $0x48] sm:$0xf]
  %v62 = vld [vmem:[%s1 + $0x4c] sm:$0xf]
  %v63 = vld [vmem:[%s1 + $0x50] sm:$0xf]
  %v64 = vld [vmem:[%s1 + $0x54] sm:$0xf]
  %v65 = vld [vmem:[%s1 + $0x58] sm:$0xf]
  %v66 = vld [vmem:[%s1 + $0x5c] sm:$0xf]
  %v67 = vld [vmem:[%s1 + $0x60] sm:$0xf]
  %v68 = vld [vmem:[%s1 + $0x64] sm:$0xf]
  %v69 = vld [vmem:[%s1 + $0x68] sm:$0xf]
  %v70 = vld [vmem:[%s1 + $0x6c] sm:$0xf]
  %v71 = vld [vmem:[%s1 + $0x70] sm:$0xf]
  %v72 = vld [vmem:[%s1 + $0x74] sm:$0xf]
  %v73 = vld [vmem:[%s1 + $0x78] sm:$0xf]
  %v74 = vld [vmem:[%s1 + $0x7c] sm:$0xf]
  %v75 = vld [vmem:[%s2] sm:$0x1]
  %v77 = vlaneseq
  %v78 = vshrl.u32 %v77, 7
  %v79 = vsub.s32 0, %v78
  %v80 = vrot.slane %v75, %v79
  %v104 = vunpack.c.l.b16 %v21
  %v105 = vunpack.c.h.b16 %v21
  %v106 = vunpack.c.l.b16 %v22
  %v107 = vunpack.c.h.b16 %v22
  %v108 = vunpack.c.l.b16 %v23
  %v109 = vunpack.c.h.b16 %v23
  %v110 = vunpack.c.l.b16 %v24
  %v111 = vunpack.c.h.b16 %v24
  %v112 = vunpack.c.l.b16 %v25
  %v113 = vunpack.c.h.b16 %v25
  %v114 = vunpack.c.l.b16 %v26
  %v115 = vunpack.c.h.b16 %v26
  %v116 = vunpack.c.l.b16 %v27
  %v117 = vunpack.c.h.b16 %v27
  %v118 = vunpack.c.l.b16 %v28
  %v119 = vunpack.c.h.b16 %v28
  %v120 = vunpack.c.l.b16 %v29
  %v121 = vunpack.c.h.b16 %v29
  %v122 = vunpack.c.l.b16 %v30
  %v123 = vunpack.c.h.b16 %v30
  %v124 = vunpack.c.l.b16 %v31
  %v125 = vunpack.c.h.b16 %v31
  %v126 = vunpack.c.l.b16 %v32
  %v127 = vunpack.c.h.b16 %v32
  %v128 = vunpack.c.l.b16 %v33
  %v129 = vunpack.c.h.b16 %v33
  %v130 = vunpack.c.l.b16 %v34
  %v131 = vunpack.c.h.b16 %v34
  %v132 = vunpack.c.l.b16 %v35
  %v133 = vunpack.c.h.b16 %v35
  %v134 = vunpack.c.l.b16 %v36
  %v135 = vunpack.c.h.b16 %v36
  %v136 = vunpack.c.l.b16 %v37
  %v137 = vunpack.c.h.b16 %v37
  %v138 = vunpack.c.l.b16 %v38
  %v139 = vunpack.c.h.b16 %v38
  %v140 = vunpack.c.l.b16 %v39
  %v141 = vunpack.c.h.b16 %v39
  %v142 = vunpack.c.l.b16 %v40
  %v143 = vunpack.c.h.b16 %v40
  %v144 = vunpack.c.l.b16 %v41
  %v145 = vunpack.c.h.b16 %v41
  %v146 = vunpack.c.l.b16 %v42
  %v147 = vunpack.c.h.b16 %v42
  %v148 = vpack.c.b16 %v106, %v104
  %v149 = vpack.c.b16 %v107, %v105
  %v150 = vpack.c.b16 %v110, %v108
  %v151 = vpack.c.b16 %v111, %v109
  %v152 = vpack.c.b16 %v114, %v112
  %v153 = vpack.c.b16 %v115, %v113
  %v154 = vpack.c.b16 %v118, %v116
  %v155 = vpack.c.b16 %v119, %v117
  %v156 = vpack.c.b16 %v122, %v120
  %v157 = vpack.c.b16 %v123, %v121
  %v158 = vpack.c.b16 %v126, %v124
  %v159 = vpack.c.b16 %v127, %v125
  %v160 = vpack.c.b16 %v130, %v128
  %v161 = vpack.c.b16 %v131, %v129
  %v162 = vpack.c.b16 %v134, %v132
  %v163 = vpack.c.b16 %v135, %v133
  %v164 = vpack.c.b16 %v138, %v136
  %v165 = vpack.c.b16 %v139, %v137
  %v166 = vpack.c.b16 %v142, %v140
  %v167 = vpack.c.b16 %v143, %v141
  %v168 = vpack.c.b16 %v146, %v144
  %v169 = vpack.c.b16 %v147, %v145
  %v224 = vunpack.c.l.b16 %v43
  %v225 = vunpack.c.l.b16 %v44
  %v226 = vunpack.c.l.b16 %v45
  %v227 = vunpack.c.l.b16 %v46
  %v228 = vunpack.c.l.b16 %v47
  %v229 = vunpack.c.l.b16 %v48
  %v230 = vunpack.c.l.b16 %v49
  %v231 = vunpack.c.l.b16 %v50
  %v232 = vunpack.c.l.b16 %v51
  %v233 = vunpack.c.l.b16 %v52
  %v234 = vunpack.c.l.b16 %v53
  %v235 = vunpack.c.l.b16 %v54
  %v236 = vunpack.c.l.b16 %v55
  %v237 = vunpack.c.l.b16 %v56
  %v238 = vunpack.c.l.b16 %v57
  %v239 = vunpack.c.l.b16 %v58
  %v240 = vunpack.c.l.b16 %v59
  %v241 = vunpack.c.l.b16 %v60
  %v242 = vunpack.c.l.b16 %v61
  %v243 = vunpack.c.l.b16 %v62
  %v244 = vunpack.c.l.b16 %v63
  %v245 = vunpack.c.l.b16 %v64
  %v246 = vunpack.c.l.b16 %v65
  %v247 = vunpack.c.l.b16 %v66
  %v248 = vunpack.c.l.b16 %v67
  %v249 = vunpack.c.l.b16 %v68
  %v250 = vunpack.c.l.b16 %v69
  %v251 = vunpack.c.l.b16 %v70
  %v252 = vunpack.c.l.b16 %v71
  %v253 = vunpack.c.l.b16 %v72
  %v254 = vunpack.c.l.b16 %v73
  %v255 = vunpack.c.l.b16 %v74
  %v256 = vpack.c.b16 %v225, %v224
  %v257 = vpack.c.b16 %v227, %v226
  %v258 = vpack.c.b16 %v229, %v228
  %v259 = vpack.c.b16 %v231, %v230
  %v260 = vpack.c.b16 %v233, %v232
  %v261 = vpack.c.b16 %v235, %v234
  %v262 = vpack.c.b16 %v237, %v236
  %v263 = vpack.c.b16 %v239, %v238
  %v264 = vpack.c.b16 %v241, %v240
  %v265 = vpack.c.b16 %v243, %v242
  %v266 = vpack.c.b16 %v245, %v244
  %v267 = vpack.c.b16 %v247, %v246
  %v268 = vpack.c.b16 %v249, %v248
  %v269 = vpack.c.b16 %v251, %v250
  %v270 = vpack.c.b16 %v253, %v252
  %v271 = vpack.c.b16 %v255, %v254
  %288 = vmatprep.subr.bf16.mxu0 0
  %289 = vmatpush1.bf16.msra.mxu0 %v263
  %290 = vmatprep.subr.bf16.mxu0 0
  %291 = vmatpush1.bf16.msra.mxu0 %v262
  %292 = vmatprep.subr.bf16.mxu0 0
  %293 = vmatpush1.bf16.msra.mxu0 %v261
  %294 = vmatprep.subr.bf16.mxu0 0
  %295 = vmatpush1.bf16.msra.mxu0 %v260
  %296 = vmatprep.subr.bf16.mxu0 0
  %297 = vmatpush1.bf16.msra.mxu0 %v259
  %298 = vmatprep.subr.bf16.mxu0 0
  %299 = vmatpush1.bf16.msra.mxu0 %v258
  %300 = vmatprep.subr.bf16.mxu0 0
  %301 = vmatpush1.bf16.msra.mxu0 %v257
  %302 = vmatprep.subr.bf16.mxu0 0
  %303 = vmatpush1.bf16.msra.mxu0 %v256
  %304 = vmatprep.subr.bf16.mxu0 0
  %305 = vmatpush2.bf16.msra.mxu0 %v271
  %306 = vmatprep.subr.bf16.mxu0 0
  %307 = vmatpush2.bf16.msra.mxu0 %v270
  %308 = vmatprep.subr.bf16.mxu0 0
  %309 = vmatpush2.bf16.msra.mxu0 %v269
  %310 = vmatprep.subr.bf16.mxu0 0
  %311 = vmatpush2.bf16.msra.mxu0 %v268
  %312 = vmatprep.subr.bf16.mxu0 0
  %313 = vmatpush2.bf16.msra.mxu0 %v267
  %314 = vmatprep.subr.bf16.mxu0 0
  %315 = vmatpush2.bf16.msra.mxu0 %v266
  %316 = vmatprep.subr.bf16.mxu0 0
  %317 = vmatpush2.bf16.msra.mxu0 %v265
  %318 = vmatprep.subr.bf16.mxu0 0
  %319 = vmatpush2.bf16.msra.mxu0 %v264
  %320 = vmatprep.mubr.bf16.mxu0 %v149
  %321 = vmatmul.mubr.bf16.gmra.mxu0 %v148
  %v322 = vpop.f32.mrf.mxu0
  %v323 = vadd.f32 %v80, %v322
  %v324 = vpop.f32.mrf.mxu0
  %v325 = vpop.f32.mrf.mxu0
  %v326 = vadd.f32 %v80, %v325
  %v327 = vpop.f32.mrf.mxu0
  %328 = vmatprep.mubr.bf16.mxu0 %v151
  %329 = vmatmul.mubr.bf16.gmra.mxu0 %v150
  %v330 = vpop.f32.mrf.mxu0
  %v331 = vadd.f32 %v80, %v330
  %v332 = vpop.f32.mrf.mxu0
  %v333 = vpop.f32.mrf.mxu0
  %v334 = vadd.f32 %v80, %v333
  %v335 = vpop.f32.mrf.mxu0
  %336 = vmatprep.mubr.bf16.mxu0 %v153
  %337 = vmatmul.mubr.bf16.gmra.mxu0 %v152
  %v338 = vpop.f32.mrf.mxu0
  %v339 = vadd.f32 %v80, %v338
  %v340 = vpop.f32.mrf.mxu0
  %v341 = vpop.f32.mrf.mxu0
  %v342 = vadd.f32 %v80, %v341
  %v343 = vpop.f32.mrf.mxu0
  %344 = vmatprep.mubr.bf16.mxu0 %v155
  %345 = vmatmul.mubr.bf16.gmra.mxu0 %v154
  %v346 = vpop.f32.mrf.mxu0
  %v347 = vadd.f32 %v80, %v346
  %v348 = vpop.f32.mrf.mxu0
  %v349 = vpop.f32.mrf.mxu0
  %v350 = vadd.f32 %v80, %v349
  %v351 = vpop.f32.mrf.mxu0
  %352 = vmatprep.mubr.bf16.mxu0 %v157
  %353 = vmatmul.mubr.bf16.gmra.mxu0 %v156
  %v354 = vpop.f32.mrf.mxu0
  %v355 = vadd.f32 %v80, %v354
  %v356 = vpop.f32.mrf.mxu0
  %v357 = vpop.f32.mrf.mxu0
  %v358 = vadd.f32 %v80, %v357
  %v359 = vpop.f32.mrf.mxu0
  %360 = vmatprep.mubr.bf16.mxu0 %v159
  %361 = vmatmul.mubr.bf16.gmra.mxu0 %v158
  %v362 = vpop.f32.mrf.mxu0
  %v363 = vadd.f32 %v80, %v362
  %v364 = vpop.f32.mrf.mxu0
  %v365 = vpop.f32.mrf.mxu0
  %v366 = vadd.f32 %v80, %v365
  %v367 = vpop.f32.mrf.mxu0
  %368 = vmatprep.mubr.bf16.mxu0 %v161
  %369 = vmatmul.mubr.bf16.gmra.mxu0 %v160
  %v370 = vpop.f32.mrf.mxu0
  %v371 = vadd.f32 %v80, %v370
  %v372 = vpop.f32.mrf.mxu0
  %v373 = vpop.f32.mrf.mxu0
  %v374 = vadd.f32 %v80, %v373
  %v375 = vpop.f32.mrf.mxu0
  %376 = vmatprep.mubr.bf16.mxu0 %v163
  %377 = vmatmul.mubr.bf16.gmra.mxu0 %v162
  %v378 = vpop.f32.mrf.mxu0
  %v379 = vadd.f32 %v80, %v378
  %v380 = vpop.f32.mrf.mxu0
  %v381 = vpop.f32.mrf.mxu0
  %v382 = vadd.f32 %v80, %v381
  %v383 = vpop.f32.mrf.mxu0
  %384 = vmatprep.mubr.bf16.mxu0 %v165
  %385 = vmatmul.mubr.bf16.gmra.mxu0 %v164
  %v386 = vpop.f32.mrf.mxu0
  %v387 = vadd.f32 %v80, %v386
  %v388 = vpop.f32.mrf.mxu0
  %v389 = vpop.f32.mrf.mxu0
  %v390 = vadd.f32 %v80, %v389
  %v391 = vpop.f32.mrf.mxu0
  %392 = vmatprep.mubr.bf16.mxu0 %v167
  %393 = vmatmul.mubr.bf16.gmra.mxu0 %v166
  %v394 = vpop.f32.mrf.mxu0
  %v395 = vadd.f32 %v80, %v394
  %v396 = vpop.f32.mrf.mxu0
  %v397 = vpop.f32.mrf.mxu0
  %v398 = vadd.f32 %v80, %v397
  %v399 = vpop.f32.mrf.mxu0
  %400 = vmatprep.mubr.bf16.mxu0 %v169
  %401 = vmatmul.mubr.bf16.gmra.mxu0 %v168
  %v402 = vpop.f32.mrf.mxu0
  %v403 = vadd.f32 %v80, %v402
  %v404 = vpop.f32.mrf.mxu0
  %v405 = vpop.f32.mrf.mxu0
  %v406 = vadd.f32 %v80, %v405
  %v407 = vpop.f32.mrf.mxu0
  %408 = vdwg.mxu0
  %409 = vst [vmem:[%s5] sm:$0xff] %v323
  %410 = vst [vmem:[%s5 + $0x8] sm:$0xff] %v326
  %411 = vst [vmem:[%s5 + $0x10] sm:$0xff] %v331
  %412 = vst [vmem:[%s5 + $0x18] sm:$0xff] %v334
  %413 = vst [vmem:[%s5 + $0x20] sm:$0xff] %v339
  %414 = vst [vmem:[%s5 + $0x28] sm:$0xff] %v342
  %415 = vst [vmem:[%s5 + $0x30] sm:$0xff] %v347
  %416 = vst [vmem:[%s5 + $0x38] sm:$0xff] %v350
  %417 = vst [vmem:[%s5 + $0x40] sm:$0xff] %v355
  %418 = vst [vmem:[%s5 + $0x48] sm:$0xff] %v358
  %419 = vst [vmem:[%s5 + $0x50] sm:$0xff] %v363
  %420 = vst [vmem:[%s5 + $0x58] sm:$0xff] %v366
  %421 = vst [vmem:[%s5 + $0x60] sm:$0xff] %v371
  %422 = vst [vmem:[%s5 + $0x68] sm:$0xff] %v374
  %423 = vst [vmem:[%s5 + $0x70] sm:$0xff] %v379
  %424 = vst [vmem:[%s5 + $0x78] sm:$0xff] %v382
  %425 = vst [vmem:[%s5 + $0x80] sm:$0xff] %v387
  %426 = vst [vmem:[%s5 + $0x88] sm:$0xff] %v390
  %427 = vst [vmem:[%s5 + $0x90] sm:$0xff] %v395
  %428 = vst [vmem:[%s5 + $0x98] sm:$0xff] %v398
  %429 = vst [vmem:[%s5 + $0xa0] sm:$0xff] %v403
  %430 = vst [vmem:[%s5 + $0xa8] sm:$0xff] %v406
  // Predicated region
  $region22: #{_lambda_.23} parent=0 // pred_check
    _
  $region23: #{_lambda_.23} parent=0 // pred_check_branch
    %432 = sbr.rel (0) target = $region25
  $region24: #{_lambda_.23} parent=0 // pred_region
    _
  $region25: #{_lambda_.23} parent=0 // pred_fallthru
    _
  // Predicated region
  $region26: #{_lambda_.23} parent=0 // pred_check
    _
  $region27: #{_lambda_.23} parent=0 // pred_check_branch
    %434 = sbr.rel (0) target = $region29
  $region28: #{_lambda_.23} parent=0 // pred_region
    _
  $region29: #{_lambda_.23} parent=0 // pred_fallthru
    _

// kernel: tile.67
$region0: #{tile.67}
  #allocation0 [shape = 's32[1]{0}', space=sflag, size = 0x4, scoped, tag = 'scoped memory for tile.67']
  %s0 = inlined_call_operand.vmem [shape: f32[16], index: 0, kind: input, shape index: {}]
  %s1 = inlined_call_operand.vmem [shape: f32[4,16], index: 1, kind: output, shape index: {}]
  // Predicated region
  $region2: #{tile.67} parent=0 // pred_check
    _
  $region3: #{tile.67} parent=0 // pred_check_branch
    %3 = sbr.rel (0) target = $region5
  $region4: #{tile.67} parent=0 // pred_region
    _
  $region5: #{tile.67} parent=0 // pred_fallthru
    _
  %v4 = vld [vmem:[%s0] ss:$0 sm:$0xff]
  %5 = vst [vmem:[%s1] sm:$0xf] %v4

// kernel: tile.68
$region0: #{tile.68}
  %s0 = inlined_call_operand.vmem [shape: f32[4,16], index: 0, kind: input, shape index: {}]
  %s1 = inlined_call_operand.vmem [shape: f32[1,64], index: 1, kind: output, shape index: {}]
  $region1: #{tile.68} parent=0
    #allocation0 [shape = 'u8[4096]{0}', space=vmem, size = 0x1000, scoped, tag = 'scoped mem for output reshape']
    #allocation1 [shape = 'u8[4096]{0}', space=vmem, size = 0x1000, scoped, tag = 'scoped mem for input reshape']
    %s3 = sshll.u32 1, 4
    %s4 = ssub.s32 %s3, 1
    %v5 = vld [vmem:[%s0] sm:%s4]
    %6 = vst [vmem:[#allocation1] sm:%s4] %v5
    %v7 = vld [vmem:[#allocation1] sm:$0x1]
    %vm8 = vcmask 130048
    %9 = vst.msk [vmem:[#allocation0] sm:$0x1] %vm8, %v7
    %s10 = scalar_lea.vmem [#allocation1], 3
    %v11 = vld [vmem:[%s10] sm:$0x1]
    %12 = vrot.lane.b32.xlu0 %v11, 48
    %v13 = vpop.permute.xlu0 %12
    %vm14 = vcmask 523648
    %15 = vst.msk [vmem:[#allocation0] sm:$0x1] %vm14, %v13
    %s16 = scalar_lea.vmem [#allocation1], 2
    %v17 = vld [vmem:[%s16] sm:$0x1]
    %18 = vrot.lane.b32.xlu0 %v17, 32
    %v19 = vpop.permute.xlu0 %18
    %vm20 = vcmask 392448
    %21 = vst.msk [vmem:[#allocation0] sm:$0x1] %vm20, %v19
    %s22 = scalar_lea.vmem [#allocation1], 1
    %v23 = vld [vmem:[%s22] sm:$0x1]
    %24 = vrot.lane.b32.xlu0 %v23, 16
    %v25 = vpop.permute.xlu0 %24
    %vm26 = vcmask 261248
    %27 = vst.msk [vmem:[#allocation0] sm:$0x1] %vm26, %v25
    %s29 = sshll.u32 1, 1
    %s30 = ssub.s32 %s29, 1
    %v32 = vld [vmem:[#allocation0] sm:%s30]
    %s33 = sshll.u32 1, 1
    %s34 = ssub.s32 %s33, 1
    %35 = vst [vmem:[%s1] sm:%s34] %v32

// kernel: _lambda_.24
$region0: #{_lambda_.24}
  #allocation0 [shape = 'u32[]', space=smem, size = 0x4, offset = 0x4, fixed_abs, tag = 'smem constant byte address 0x4 - core index']
  #allocation1 [shape = 'u32[144,128]{1,0:T(1,128)}', space=vmem, size = 0x12000, scoped, tag = 'internal scratch']
  %s0 = inlined_call_operand.vmem [shape: f32[176,128], index: 0, kind: input, shape index: {}]
  %s1 = inlined_call_operand.vmem [shape: f32[1,128], index: 1, kind: input, shape index: {}]
  %s2 = inlined_call_operand.vmem [shape: f32[1,128], index: 2, kind: input, shape index: {}]
  %s3 = inlined_call_operand.vmem [shape: f32[176,128], index: 3, kind: output, shape index: {}]
  %s4 = sld [smem:[#allocation0]]
  $region22: #{_lambda_.24} parent=0
    _
  %s6 = ssub.s32 1, %s4
  %s7 = scalar_select 0, %s6, %s4
  // Predicated region
  $region2: #{_lambda_.24} parent=0 // pred_check
    _
  $region3: #{_lambda_.24} parent=0 // pred_check_branch
    %9 = sbr.rel (0) target = $region5
  $region4: #{_lambda_.24} parent=0 // pred_region
    _
  $region5: #{_lambda_.24} parent=0 // pred_fallthru
    _
  // Predicated region
  $region6: #{_lambda_.24} parent=0 // pred_check
    _
  $region7: #{_lambda_.24} parent=0 // pred_check_branch
    %11 = sbr.rel (0) target = $region9
  $region8: #{_lambda_.24} parent=0 // pred_region
    _
  $region9: #{_lambda_.24} parent=0 // pred_fallthru
    _
  // Predicated region
  $region10: #{_lambda_.24} parent=0 // pred_check
    _
  $region11: #{_lambda_.24} parent=0 // pred_check_branch
    %13 = sbr.rel (0) target = $region13
  $region12: #{_lambda_.24} parent=0 // pred_region
    _
  $region13: #{_lambda_.24} parent=0 // pred_fallthru
    _
  %v14 = vld [vmem:[%s0] sm:$0xff]
  %v15 = vld [vmem:[%s0 + $0x8] sm:$0xff]
  %v16 = vld [vmem:[%s0 + $0x10] sm:$0xff]
  %v17 = vld [vmem:[%s0 + $0x18] sm:$0xff]
  %v18 = vld [vmem:[%s0 + $0x20] sm:$0xff]
  %v19 = vld [vmem:[%s0 + $0x28] sm:$0xff]
  %v20 = vld [vmem:[%s0 + $0x30] sm:$0xff]
  %v21 = vld [vmem:[%s0 + $0x38] sm:$0xff]
  %v22 = vld [vmem:[%s0 + $0x40] sm:$0xff]
  %v23 = vld [vmem:[%s0 + $0x48] sm:$0xff]
  %v24 = vld [vmem:[%s0 + $0x50] sm:$0xff]
  %v25 = vld [vmem:[%s0 + $0x58] sm:$0xff]
  %v26 = vld [vmem:[%s0 + $0x60] sm:$0xff]
  %v27 = vld [vmem:[%s0 + $0x68] sm:$0xff]
  %v28 = vld [vmem:[%s0 + $0x70] sm:$0xff]
  %v29 = vld [vmem:[%s0 + $0x78] sm:$0xff]
  %v30 = vld [vmem:[%s0 + $0x80] sm:$0xff]
  %v31 = vld [vmem:[%s0 + $0x88] sm:$0xff]
  %v32 = vld [vmem:[%s0 + $0x90] sm:$0xff]
  %v33 = vld [vmem:[%s0 + $0x98] sm:$0xff]
  %v34 = vld [vmem:[%s0 + $0xa0] sm:$0xff]
  %v35 = vld [vmem:[%s0 + $0xa8] sm:$0xff]
  %v36 = vld [vmem:[%s1] sm:$0x1]
  %v38 = vlaneseq
  %v39 = vshrl.u32 %v38, 7
  %v40 = vsub.s32 0, %v39
  %v41 = vrot.slane %v36, %v40
  %v43 = vmul.f32 %v14, %v41
  %v44 = vmul.f32 %v15, %v41
  %v45 = vmul.f32 %v16, %v41
  %v46 = vmul.f32 %v17, %v41
  %v47 = vmul.f32 %v18, %v41
  %v48 = vmul.f32 %v19, %v41
  %v49 = vmul.f32 %v20, %v41
  %v50 = vmul.f32 %v21, %v41
  %v51 = vmul.f32 %v22, %v41
  %v52 = vmul.f32 %v23, %v41
  %v53 = vmul.f32 %v24, %v41
  %v54 = vmul.f32 %v25, %v41
  %v55 = vmul.f32 %v26, %v41
  %v56 = vmul.f32 %v27, %v41
  %v57 = vmul.f32 %v28, %v41
  %v58 = vmul.f32 %v29, %v41
  %v59 = vmul.f32 %v30, %v41
  %v60 = vmul.f32 %v31, %v41
  %v61 = vmul.f32 %v32, %v41
  %v62 = vmul.f32 %v33, %v41
  %v63 = vmul.f32 %v34, %v41
  %v64 = vmul.f32 %v35, %v41
  %v65 = vld [vmem:[%s2] sm:$0x1]
  %v67 = vlaneseq
  %v68 = vshrl.u32 %v67, 7
  %v69 = vsub.s32 0, %v68
  %v70 = vrot.slane %v65, %v69
  %v72 = vadd.f32 %v43, %v70
  %v73 = vadd.f32 %v44, %v70
  %v74 = vadd.f32 %v45, %v70
  %v75 = vadd.f32 %v46, %v70
  %v76 = vadd.f32 %v47, %v70
  %v77 = vadd.f32 %v48, %v70
  %v78 = vadd.f32 %v49, %v70
  %v79 = vadd.f32 %v50, %v70
  %v80 = vadd.f32 %v51, %v70
  %v81 = vadd.f32 %v52, %v70
  %v82 = vadd.f32 %v53, %v70
  %v83 = vadd.f32 %v54, %v70
  %v84 = vadd.f32 %v55, %v70
  %v85 = vadd.f32 %v56, %v70
  %v86 = vadd.f32 %v57, %v70
  %v87 = vadd.f32 %v58, %v70
  %v88 = vadd.f32 %v59, %v70
  %v89 = vadd.f32 %v60, %v70
  %v90 = vadd.f32 %v61, %v70
  %v91 = vadd.f32 %v62, %v70
  %v92 = vadd.f32 %v63, %v70
  %v93 = vadd.f32 %v64, %v70
  %94 = vst [vmem:[%s3] sm:$0xff] %v72
  %95 = vst [vmem:[%s3 + $0x8] sm:$0xff] %v73
  %96 = vst [vmem:[%s3 + $0x10] sm:$0xff] %v74
  %97 = vst [vmem:[%s3 + $0x18] sm:$0xff] %v75
  %98 = vst [vmem:[%s3 + $0x20] sm:$0xff] %v76
  %99 = vst [vmem:[%s3 + $0x28] sm:$0xff] %v77
  %100 = vst [vmem:[%s3 + $0x30] sm:$0xff] %v78
  %101 = vst [vmem:[%s3 + $0x38] sm:$0xff] %v79
  %102 = vst [vmem:[%s3 + $0x40] sm:$0xff] %v80
  %103 = vst [vmem:[%s3 + $0x48] sm:$0xff] %v81
  %104 = vst [vmem:[%s3 + $0x50] sm:$0xff] %v82
  %105 = vst [vmem:[%s3 + $0x58] sm:$0xff] %v83
  %106 = vst [vmem:[%s3 + $0x60] sm:$0xff] %v84
  %107 = vst [vmem:[%s3 + $0x68] sm:$0xff] %v85
  %108 = vst [vmem:[%s3 + $0x70] sm:$0xff] %v86
  %109 = vst [vmem:[%s3 + $0x78] sm:$0xff] %v87
  %110 = vst [vmem:[%s3 + $0x80] sm:$0xff] %v88
  %111 = vst [vmem:[%s3 + $0x88] sm:$0xff] %v89
  %112 = vst [vmem:[%s3 + $0x90] sm:$0xff] %v90
  %113 = vst [vmem:[%s3 + $0x98] sm:$0xff] %v91
  %114 = vst [vmem:[%s3 + $0xa0] sm:$0xff] %v92
  %115 = vst [vmem:[%s3 + $0xa8] sm:$0xff] %v93
  // Predicated region
  $region14: #{_lambda_.24} parent=0 // pred_check
    _
  $region15: #{_lambda_.24} parent=0 // pred_check_branch
    %117 = sbr.rel (0) target = $region17
  $region16: #{_lambda_.24} parent=0 // pred_region
    _
  $region17: #{_lambda_.24} parent=0 // pred_fallthru
    _
  // Predicated region
  $region18: #{_lambda_.24} parent=0 // pred_check
    _
  $region19: #{_lambda_.24} parent=0 // pred_check_branch
    %119 = sbr.rel (0) target = $region21
  $region20: #{_lambda_.24} parent=0 // pred_region
    _
  $region21: #{_lambda_.24} parent=0 // pred_fallthru
    _

// kernel: _lambda_.25
$region0: #{_lambda_.25}
  #allocation0 [shape = 'u32[]', space=smem, size = 0x4, offset = 0x4, fixed_abs, tag = 'smem constant byte address 0x4 - core index']
  #allocation1 [shape = 'u32[144,128]{1,0:T(1,128)}', space=vmem, size = 0x12000, scoped, tag = 'internal scratch']
  %s0 = inlined_call_operand.vmem [shape: bf16[1024,128], index: 0, kind: input, shape index: {}]
  %s1 = inlined_call_operand.vmem [shape: bf16[128,128], index: 1, kind: input, shape index: {}]
  %s2 = inlined_call_operand.vmem [shape: f32[1,128], index: 2, kind: input, shape index: {}]
  %s3 = inlined_call_operand.vmem [shape: f32[1,128], index: 3, kind: input, shape index: {}, may-alias: {3,4}]
  %s4 = inlined_call_operand.vmem [shape: f32[1,128], index: 4, kind: input, shape index: {}, may-alias: {3,4}]
  %s5 = inlined_call_operand.vmem [shape: f32[1024,128], index: 5, kind: output, shape index: {}]
  %s6 = sld [smem:[#allocation0]]
  $region53: #{_lambda_.25} parent=0
    _
  %s8 = ssub.s32 1, %s6
  %s9 = scalar_select 0, %s8, %s6
  loop: start=0, step=1, limit=4
  $region2: #{_lambda_.25} parent=0 // loop_pre_header
    _
  $region3: #{_lambda_.25} parent=0 // loop_header
    %s11 = sphi 0, %s15
    %p12 = scmp.ge.s32.totalorder %s11, 4
    %s21 = sphi 0, %s23
    %s24 = sphi 0, %s21
    %s25 = sphi 0, %s24
    %s41 = sphi 0, %s25
    %s45 = sphi 0, %s45
    %s47 = sphi 0, %s45
    %s48 = sphi 0, %s47
    %s62 = sphi 0, %s48
    %s66 = sphi 0, %s66
    %s68 = sphi 0, %s66
    %s69 = sphi 0, %s68
    %s83 = sphi 0, %s69
    %s87 = sphi 0, %s87
    %s89 = sphi 0, %s87
    %s90 = sphi 0, %s89
    %s104 = sphi 0, %s90
    %s108 = sphi 0, %s108
    %s110 = sphi 0, %s108
    %s111 = sphi 0, %s110
    %s125 = sphi 0, %s111
    %s131 = sphi 0, %s133
    %s134 = sphi 0, %s131
    %s135 = sphi 0, %s134
    %s151 = sphi 0, %s135
  $region4: #{_lambda_.25} parent=0 // loop_header_branch
    %14 = sbr.rel (%p12) target = $region8
  $region5: #{_lambda_.25} parent=0 // loop_body
    %s16 = ssub.s32 %s11, 1
    %s17 = ssub.s32 %s11, 2
    %s18 = sadd.s32 %s11, 1
    %s19 = ssub.s32 %s11, %s18
    %p20 = scmp.eq.s32.totalorder %s19, 0
    %s22 = sadd.s32 %s21, 1
    %s23 = scalar_select %p20, %s21, %s22
    %p26 = pneg %p20
    %p27 = scmp.eq.s32.totalorder %s11, 1
    %p28 = por %p26, %p27
    %p29 = scmp.ne.s32.totalorder %s21, %s24
    %p30 = scmp.eq.s32.totalorder %s11, 0
    %p31 = por %p29, %p30
    %p32 = scmp.ne.s32.totalorder %s21, %s24
    %p33 = scmp.eq.s32.totalorder %s16, 1
    %p34 = por %p32, %p33
    %p35 = scmp.ne.s32.totalorder %s24, %s25
    %p36 = scmp.eq.s32.totalorder %s16, 0
    %p37 = por %p35, %p36
    %p38 = scmp.ne.s32.totalorder %s24, %s25
    %p39 = scmp.eq.s32.totalorder %s17, 1
    %p40 = por %p38, %p39
    %p42 = scmp.ne.s32.totalorder %s25, %s41
    %p43 = scmp.eq.s32.totalorder %s17, 0
    %p44 = por %p42, %p43
    %s46 = sadd.s32 %s45, 1
    %p49 = scmp.eq.s32.totalorder %s11, 1
    %p50 = scmp.ne.s32.totalorder %s45, %s47
    %p51 = scmp.eq.s32.totalorder %s11, 0
    %p52 = por %p50, %p51
    %p53 = scmp.ne.s32.totalorder %s45, %s47
    %p54 = scmp.eq.s32.totalorder %s16, 1
    %p55 = por %p53, %p54
    %p56 = scmp.ne.s32.totalorder %s47, %s48
    %p57 = scmp.eq.s32.totalorder %s16, 0
    %p58 = por %p56, %p57
    %p59 = scmp.ne.s32.totalorder %s47, %s48
    %p60 = scmp.eq.s32.totalorder %s17, 1
    %p61 = por %p59, %p60
    %p63 = scmp.ne.s32.totalorder %s48, %s62
    %p64 = scmp.eq.s32.totalorder %s17, 0
    %p65 = por %p63, %p64
    %s67 = sadd.s32 %s66, 1
    %p70 = scmp.eq.s32.totalorder %s11, 1
    %p71 = scmp.ne.s32.totalorder %s66, %s68
    %p72 = scmp.eq.s32.totalorder %s11, 0
    %p73 = por %p71, %p72
    %p74 = scmp.ne.s32.totalorder %s66, %s68
    %p75 = scmp.eq.s32.totalorder %s16, 1
    %p76 = por %p74, %p75
    %p77 = scmp.ne.s32.totalorder %s68, %s69
    %p78 = scmp.eq.s32.totalorder %s16, 0
    %p79 = por %p77, %p78
    %p80 = scmp.ne.s32.totalorder %s68, %s69
    %p81 = scmp.eq.s32.totalorder %s17, 1
    %p82 = por %p80, %p81
    %p84 = scmp.ne.s32.totalorder %s69, %s83
    %p85 = scmp.eq.s32.totalorder %s17, 0
    %p86 = por %p84, %p85
    %s88 = sadd.s32 %s87, 1
    %p91 = scmp.eq.s32.totalorder %s11, 1
    %p92 = scmp.ne.s32.totalorder %s87, %s89
    %p93 = scmp.eq.s32.totalorder %s11, 0
    %p94 = por %p92, %p93
    %p95 = scmp.ne.s32.totalorder %s87, %s89
    %p96 = scmp.eq.s32.totalorder %s16, 1
    %p97 = por %p95, %p96
    %p98 = scmp.ne.s32.totalorder %s89, %s90
    %p99 = scmp.eq.s32.totalorder %s16, 0
    %p100 = por %p98, %p99
    %p101 = scmp.ne.s32.totalorder %s89, %s90
    %p102 = scmp.eq.s32.totalorder %s17, 1
    %p103 = por %p101, %p102
    %p105 = scmp.ne.s32.totalorder %s90, %s104
    %p106 = scmp.eq.s32.totalorder %s17, 0
    %p107 = por %p105, %p106
    %s109 = sadd.s32 %s108, 1
    %p112 = scmp.eq.s32.totalorder %s11, 1
    %p113 = scmp.ne.s32.totalorder %s108, %s110
    %p114 = scmp.eq.s32.totalorder %s11, 0
    %p115 = por %p113, %p114
    %p116 = scmp.ne.s32.totalorder %s108, %s110
    %p117 = scmp.eq.s32.totalorder %s16, 1
    %p118 = por %p116, %p117
    %p119 = scmp.ne.s32.totalorder %s110, %s111
    %p120 = scmp.eq.s32.totalorder %s16, 0
    %p121 = por %p119, %p120
    %p122 = scmp.ne.s32.totalorder %s110, %s111
    %p123 = scmp.eq.s32.totalorder %s17, 1
    %p124 = por %p122, %p123
    %p126 = scmp.ne.s32.totalorder %s111, %s125
    %p127 = scmp.eq.s32.totalorder %s17, 0
    %p128 = por %p126, %p127
    %s129 = ssub.s32 %s11, %s18
    %p130 = scmp.eq.s32.totalorder %s129, 0
    %s132 = sadd.s32 %s131, 1
    %s133 = scalar_select %p130, %s131, %s132
    %p136 = pneg %p130
    %p137 = scmp.eq.s32.totalorder %s11, 1
    %p138 = por %p136, %p137
    %p139 = scmp.ne.s32.totalorder %s131, %s134
    %p140 = scmp.eq.s32.totalorder %s11, 0
    %p141 = por %p139, %p140
    %p142 = scmp.ne.s32.totalorder %s131, %s134
    %p143 = scmp.eq.s32.totalorder %s16, 1
    %p144 = por %p142, %p143
    %p145 = scmp.ne.s32.totalorder %s134, %s135
    %p146 = scmp.eq.s32.totalorder %s16, 0
    %p147 = por %p145, %p146
    %p148 = scmp.ne.s32.totalorder %s134, %s135
    %p149 = scmp.eq.s32.totalorder %s17, 1
    %p150 = por %p148, %p149
    %p152 = scmp.ne.s32.totalorder %s135, %s151
    %p153 = scmp.eq.s32.totalorder %s17, 0
    %p154 = por %p152, %p153
    %p155 = scmp.le.s32.totalorder 1, %s11
    %p156 = scmp.lt.s32.totalorder %s11, 3
    %p157 = pnand %p155, %p156
    %p158 = pneg %p157
    // Predicated region
    $region9: #{_lambda_.25} parent=5 // pred_check
      _
    $region10: #{_lambda_.25} parent=5 // pred_check_branch
      %160 = sbr.rel (%p157) target = $region12
    $region11: #{_lambda_.25} parent=5 // pred_region
      %s161 = ssub.s32 %s11, 1
      // Predicated region
      $region13: #{_lambda_.25} parent=11 // pred_check
        %p162 = pneg %p58
      $region14: #{_lambda_.25} parent=11 // pred_check_branch
        %164 = sbr.rel (%p162) target = $region16
      $region15: #{_lambda_.25} parent=11 // pred_region
        _
      $region16: #{_lambda_.25} parent=11 // pred_fallthru
        _
      // Predicated region
      $region17: #{_lambda_.25} parent=11 // pred_check
        %p165 = pneg %p79
      $region18: #{_lambda_.25} parent=11 // pred_check_branch
        %167 = sbr.rel (%p165) target = $region20
      $region19: #{_lambda_.25} parent=11 // pred_region
        _
      $region20: #{_lambda_.25} parent=11 // pred_fallthru
        _
      // Predicated region
      $region21: #{_lambda_.25} parent=11 // pred_check
        %p168 = pneg %p100
      $region22: #{_lambda_.25} parent=11 // pred_check_branch
        %170 = sbr.rel (%p168) target = $region24
      $region23: #{_lambda_.25} parent=11 // pred_region
        _
      $region24: #{_lambda_.25} parent=11 // pred_fallthru
        _
      // Predicated region
      $region25: #{_lambda_.25} parent=11 // pred_check
        %p171 = pneg %p121
      $region26: #{_lambda_.25} parent=11 // pred_check_branch
        %173 = sbr.rel (%p171) target = $region28
      $region27: #{_lambda_.25} parent=11 // pred_region
        _
      $region28: #{_lambda_.25} parent=11 // pred_fallthru
        _
    $region12: #{_lambda_.25} parent=5 // pred_fallthru
      _
    %p174 = scmp.lt.s32.totalorder %s11, 2
    // Predicated region
    $region29: #{_lambda_.25} parent=5 // pred_check
      %p175 = pneg %p174
    $region30: #{_lambda_.25} parent=5 // pred_check_branch
      %177 = sbr.rel (%p175) target = $region32
    $region31: #{_lambda_.25} parent=5 // pred_region
      // Predicated region
      $region33: #{_lambda_.25} parent=31 // pred_check
        %p178 = pneg %p31
      $region34: #{_lambda_.25} parent=31 // pred_check_branch
        %180 = sbr.rel (%p178) target = $region36
      $region35: #{_lambda_.25} parent=31 // pred_region
        %s181 = smul.u32 64, %s11
        %p182 = scmp.lt.s32.totalorder %s181, 127
        %s183 = scalar_select %p182, %s181, 127
        %s184 = smul.addr %s183, 4
        %s185 = scalar_lea.vmem %s0, %s184
        %s186 = smul.u32 64, %s11
      $region36: #{_lambda_.25} parent=31 // pred_fallthru
        _
    $region32: #{_lambda_.25} parent=5 // pred_fallthru
      _
    %p187 = scmp.le.s32.totalorder 1, %s11
    %p188 = scmp.lt.s32.totalorder %s11, 3
    %p189 = pnand %p187, %p188
    %p190 = pneg %p189
    // Predicated region
    $region37: #{_lambda_.25} parent=5 // pred_check
      _
    $region38: #{_lambda_.25} parent=5 // pred_check_branch
      %192 = sbr.rel (%p189) target = $region40
    $region39: #{_lambda_.25} parent=5 // pred_region
      %s193 = ssub.s32 %s11, 1
      %s194 = smul.u32 64, %s16
      %p195 = scmp.lt.s32.totalorder %s194, 127
      %s196 = scalar_select %p195, %s194, 127
      %s197 = smul.addr %s196, 4
      %s198 = scalar_lea.vmem %s0, %s197
      %p199 = pneg %p37
      %p200 = pneg %p34
      %p201 = pneg %p58
      %p202 = pneg %p55
      %p203 = pneg %p79
      %p204 = pneg %p76
      %p205 = pneg %p100
      %p206 = pneg %p97
      %p207 = pneg %p121
      %p208 = pneg %p118
      %p209 = pneg %p147
      %p210 = pneg %p144
      %s211 = smul.u32 64, %s16
      %p212 = scmp.lt.s32.totalorder %s211, 127
      %s213 = scalar_select %p212, %s211, 127
      %s214 = smul.addr %s213, 8
      %s215 = scalar_lea.vmem %s5, %s214
      %s216 = smul.u32 64, %s16
      %p217 = scmp.lt.s32.totalorder %s216, 127
      %s218 = scalar_select %p217, %s216, 127
      %s219 = smul.addr %s218, 4
      %s220 = scalar_lea.vmem %s0, %s219
      %s221 = smul.u32 64, %s16
      %s222 = smul.u32 64, %s16
      %p223 = scmp.lt.s32.totalorder %s222, 127
      %s224 = scalar_select %p223, %s222, 127
      %s225 = smul.addr %s224, 8
      %s226 = scalar_lea.vmem %s5, %s225
      %s227 = smul.u32 64, %s16
      %v229 = vld [vmem:[%s220] sm:$0xf]
      %v230 = vld [vmem:[%s220 + $0x4] sm:$0xf]
      %v231 = vld [vmem:[%s220 + $0x8] sm:$0xf]
      %v232 = vld [vmem:[%s220 + $0xc] sm:$0xf]
      %v233 = vld [vmem:[%s220 + $0x10] sm:$0xf]
      %v234 = vld [vmem:[%s220 + $0x14] sm:$0xf]
      %v235 = vld [vmem:[%s220 + $0x18] sm:$0xf]
      %v236 = vld [vmem:[%s220 + $0x1c] sm:$0xf]
      %v237 = vld [vmem:[%s220 + $0x20] sm:$0xf]
      %v238 = vld [vmem:[%s220 + $0x24] sm:$0xf]
      %v239 = vld [vmem:[%s220 + $0x28] sm:$0xf]
      %v240 = vld [vmem:[%s220 + $0x2c] sm:$0xf]
      %v241 = vld [vmem:[%s220 + $0x30] sm:$0xf]
      %v242 = vld [vmem:[%s220 + $0x34] sm:$0xf]
      %v243 = vld [vmem:[%s220 + $0x38] sm:$0xf]
      %v244 = vld [vmem:[%s220 + $0x3c] sm:$0xf]
      %v245 = vld [vmem:[%s220 + $0x40] sm:$0xf]
      %v246 = vld [vmem:[%s220 + $0x44] sm:$0xf]
      %v247 = vld [vmem:[%s220 + $0x48] sm:$0xf]
      %v248 = vld [vmem:[%s220 + $0x4c] sm:$0xf]
      %v249 = vld [vmem:[%s220 + $0x50] sm:$0xf]
      %v250 = vld [vmem:[%s220 + $0x54] sm:$0xf]
      %v251 = vld [vmem:[%s220 + $0x58] sm:$0xf]
      %v252 = vld [vmem:[%s220 + $0x5c] sm:$0xf]
      %v253 = vld [vmem:[%s220 + $0x60] sm:$0xf]
      %v254 = vld [vmem:[%s220 + $0x64] sm:$0xf]
      %v255 = vld [vmem:[%s220 + $0x68] sm:$0xf]
      %v256 = vld [vmem:[%s220 + $0x6c] sm:$0xf]
      %v257 = vld [vmem:[%s220 + $0x70] sm:$0xf]
      %v258 = vld [vmem:[%s220 + $0x74] sm:$0xf]
      %v259 = vld [vmem:[%s220 + $0x78] sm:$0xf]
      %v260 = vld [vmem:[%s220 + $0x7c] sm:$0xf]
      %v261 = vld [vmem:[%s220 + $0x80] sm:$0xf]
      %v262 = vld [vmem:[%s220 + $0x84] sm:$0xf]
      %v263 = vld [vmem:[%s220 + $0x88] sm:$0xf]
      %v264 = vld [vmem:[%s220 + $0x8c] sm:$0xf]
      %v265 = vld [vmem:[%s220 + $0x90] sm:$0xf]
      %v266 = vld [vmem:[%s220 + $0x94] sm:$0xf]
      %v267 = vld [vmem:[%s220 + $0x98] sm:$0xf]
      %v268 = vld [vmem:[%s220 + $0x9c] sm:$0xf]
      %v269 = vld [vmem:[%s220 + $0xa0] sm:$0xf]
      %v270 = vld [vmem:[%s220 + $0xa4] sm:$0xf]
      %v271 = vld [vmem:[%s220 + $0xa8] sm:$0xf]
      %v272 = vld [vmem:[%s220 + $0xac] sm:$0xf]
      %v273 = vld [vmem:[%s220 + $0xb0] sm:$0xf]
      %v274 = vld [vmem:[%s220 + $0xb4] sm:$0xf]
      %v275 = vld [vmem:[%s220 + $0xb8] sm:$0xf]
      %v276 = vld [vmem:[%s220 + $0xbc] sm:$0xf]
      %v277 = vld [vmem:[%s220 + $0xc0] sm:$0xf]
      %v278 = vld [vmem:[%s220 + $0xc4] sm:$0xf]
      %v279 = vld [vmem:[%s220 + $0xc8] sm:$0xf]
      %v280 = vld [vmem:[%s220 + $0xcc] sm:$0xf]
      %v281 = vld [vmem:[%s220 + $0xd0] sm:$0xf]
      %v282 = vld [vmem:[%s220 + $0xd4] sm:$0xf]
      %v283 = vld [vmem:[%s220 + $0xd8] sm:$0xf]
      %v284 = vld [vmem:[%s220 + $0xdc] sm:$0xf]
      %v285 = vld [vmem:[%s220 + $0xe0] sm:$0xf]
      %v286 = vld [vmem:[%s220 + $0xe4] sm:$0xf]
      %v287 = vld [vmem:[%s220 + $0xe8] sm:$0xf]
      %v288 = vld [vmem:[%s220 + $0xec] sm:$0xf]
      %v289 = vld [vmem:[%s220 + $0xf0] sm:$0xf]
      %v290 = vld [vmem:[%s220 + $0xf4] sm:$0xf]
      %v291 = vld [vmem:[%s220 + $0xf8] sm:$0xf]
      %v292 = vld [vmem:[%s220 + $0xfc] sm:$0xf]
      %v293 = vld [vmem:[%s1] sm:$0xf]
      %v294 = vld [vmem:[%s1 + $0x4] sm:$0xf]
      %v295 = vld [vmem:[%s1 + $0x8] sm:$0xf]
      %v296 = vld [vmem:[%s1 + $0xc] sm:$0xf]
      %v297 = vld [vmem:[%s1 + $0x10] sm:$0xf]
      %v298 = vld [vmem:[%s1 + $0x14] sm:$0xf]
      %v299 = vld [vmem:[%s1 + $0x18] sm:$0xf]
      %v300 = vld [vmem:[%s1 + $0x1c] sm:$0xf]
      %v301 = vld [vmem:[%s1 + $0x20] sm:$0xf]
      %v302 = vld [vmem:[%s1 + $0x24] sm:$0xf]
      %v303 = vld [vmem:[%s1 + $0x28] sm:$0xf]
      %v304 = vld [vmem:[%s1 + $0x2c] sm:$0xf]
      %v305 = vld [vmem:[%s1 + $0x30] sm:$0xf]
      %v306 = vld [vmem:[%s1 + $0x34] sm:$0xf]
      %v307 = vld [vmem:[%s1 + $0x38] sm:$0xf]
      %v308 = vld [vmem:[%s1 + $0x3c] sm:$0xf]
      %v309 = vld [vmem:[%s2] sm:$0x1]
      %v311 = vlaneseq
      %v312 = vshrl.u32 %v311, 7
      %v313 = vsub.s32 0, %v312
      %v314 = vrot.slane %v309, %v313
      %v380 = vunpack.c.l.b16 %v229
      %v381 = vunpack.c.l.b16 %v230
      %v382 = vunpack.c.l.b16 %v231
      %v383 = vunpack.c.l.b16 %v232
      %v384 = vunpack.c.l.b16 %v233
      %v385 = vunpack.c.l.b16 %v234
      %v386 = vunpack.c.l.b16 %v235
      %v387 = vunpack.c.l.b16 %v236
      %v388 = vunpack.c.l.b16 %v237
      %v389 = vunpack.c.l.b16 %v238
      %v390 = vunpack.c.l.b16 %v239
      %v391 = vunpack.c.l.b16 %v240
      %v392 = vunpack.c.l.b16 %v241
      %v393 = vunpack.c.l.b16 %v242
      %v394 = vunpack.c.l.b16 %v243
      %v395 = vunpack.c.l.b16 %v244
      %v396 = vunpack.c.l.b16 %v245
      %v397 = vunpack.c.l.b16 %v246
      %v398 = vunpack.c.l.b16 %v247
      %v399 = vunpack.c.l.b16 %v248
      %v400 = vunpack.c.l.b16 %v249
      %v401 = vunpack.c.l.b16 %v250
      %v402 = vunpack.c.l.b16 %v251
      %v403 = vunpack.c.l.b16 %v252
      %v404 = vunpack.c.l.b16 %v253
      %v405 = vunpack.c.l.b16 %v254
      %v406 = vunpack.c.l.b16 %v255
      %v407 = vunpack.c.l.b16 %v256
      %v408 = vunpack.c.l.b16 %v257
      %v409 = vunpack.c.l.b16 %v258
      %v410 = vunpack.c.l.b16 %v259
      %v411 = vunpack.c.l.b16 %v260
      %v412 = vunpack.c.l.b16 %v261
      %v413 = vunpack.c.l.b16 %v262
      %v414 = vunpack.c.l.b16 %v263
      %v415 = vunpack.c.l.b16 %v264
      %v416 = vunpack.c.l.b16 %v265
      %v417 = vunpack.c.l.b16 %v266
      %v418 = vunpack.c.l.b16 %v267
      %v419 = vunpack.c.l.b16 %v268
      %v420 = vunpack.c.l.b16 %v269
      %v421 = vunpack.c.l.b16 %v270
      %v422 = vunpack.c.l.b16 %v271
      %v423 = vunpack.c.l.b16 %v272
      %v424 = vunpack.c.l.b16 %v273
      %v425 = vunpack.c.l.b16 %v274
      %v426 = vunpack.c.l.b16 %v275
      %v427 = vunpack.c.l.b16 %v276
      %v428 = vunpack.c.l.b16 %v277
      %v429 = vunpack.c.l.b16 %v278
      %v430 = vunpack.c.l.b16 %v279
      %v431 = vunpack.c.l.b16 %v280
      %v432 = vunpack.c.l.b16 %v281
      %v433 = vunpack.c.l.b16 %v282
      %v434 = vunpack.c.l.b16 %v283
      %v435 = vunpack.c.l.b16 %v284
      %v436 = vunpack.c.l.b16 %v285
      %v437 = vunpack.c.l.b16 %v286
      %v438 = vunpack.c.l.b16 %v287
      %v439 = vunpack.c.l.b16 %v288
      %v440 = vunpack.c.l.b16 %v289
      %v441 = vunpack.c.l.b16 %v290
      %v442 = vunpack.c.l.b16 %v291
      %v443 = vunpack.c.l.b16 %v292
      %v444 = vpack.c.b16 %v381, %v380
      %v445 = vpack.c.b16 %v383, %v382
      %v446 = vpack.c.b16 %v385, %v384
      %v447 = vpack.c.b16 %v387, %v386
      %v448 = vpack.c.b16 %v389, %v388
      %v449 = vpack.c.b16 %v391, %v390
      %v450 = vpack.c.b16 %v393, %v392
      %v451 = vpack.c.b16 %v395, %v394
      %v452 = vpack.c.b16 %v397, %v396
      %v453 = vpack.c.b16 %v399, %v398
      %v454 = vpack.c.b16 %v401, %v400
      %v455 = vpack.c.b16 %v403, %v402
      %v456 = vpack.c.b16 %v405, %v404
      %v457 = vpack.c.b16 %v407, %v406
      %v458 = vpack.c.b16 %v409, %v408
      %v459 = vpack.c.b16 %v411, %v410
      %v460 = vpack.c.b16 %v413, %v412
      %v461 = vpack.c.b16 %v415, %v414
      %v462 = vpack.c.b16 %v417, %v416
      %v463 = vpack.c.b16 %v419, %v418
      %v464 = vpack.c.b16 %v421, %v420
      %v465 = vpack.c.b16 %v423, %v422
      %v466 = vpack.c.b16 %v425, %v424
      %v467 = vpack.c.b16 %v427, %v426
      %v468 = vpack.c.b16 %v429, %v428
      %v469 = vpack.c.b16 %v431, %v430
      %v470 = vpack.c.b16 %v433, %v432
      %v471 = vpack.c.b16 %v435, %v434
      %v472 = vpack.c.b16 %v437, %v436
      %v473 = vpack.c.b16 %v439, %v438
      %v474 = vpack.c.b16 %v441, %v440
      %v475 = vpack.c.b16 %v443, %v442
      %v524 = vunpack.c.l.b16 %v293
      %v525 = vunpack.c.l.b16 %v294
      %v526 = vunpack.c.l.b16 %v295
      %v527 = vunpack.c.l.b16 %v296
      %v528 = vunpack.c.l.b16 %v297
      %v529 = vunpack.c.l.b16 %v298
      %v530 = vunpack.c.l.b16 %v299
      %v531 = vunpack.c.l.b16 %v300
      %v532 = vunpack.c.l.b16 %v301
      %v533 = vunpack.c.l.b16 %v302
      %v534 = vunpack.c.l.b16 %v303
      %v535 = vunpack.c.l.b16 %v304
      %v536 = vunpack.c.l.b16 %v305
      %v537 = vunpack.c.l.b16 %v306
      %v538 = vunpack.c.l.b16 %v307
      %v539 = vunpack.c.l.b16 %v308
      %v540 = vpack.c.b16 %v525, %v524
      %v541 = vpack.c.b16 %v527, %v526
      %v542 = vpack.c.b16 %v529, %v528
      %v543 = vpack.c.b16 %v531, %v530
      %v544 = vpack.c.b16 %v533, %v532
      %v545 = vpack.c.b16 %v535, %v534
      %v546 = vpack.c.b16 %v537, %v536
      %v547 = vpack.c.b16 %v539, %v538
      %556 = vmatprep.subr.bf16.mxu0 0
      %557 = vmatpush1.bf16.msra.mxu0 %v547
      %558 = vmatprep.subr.bf16.mxu0 0
      %559 = vmatpush1.bf16.msra.mxu0 %v546
      %560 = vmatprep.subr.bf16.mxu0 0
      %561 = vmatpush1.bf16.msra.mxu0 %v545
      %562 = vmatprep.subr.bf16.mxu0 0
      %563 = vmatpush1.bf16.msra.mxu0 %v544
      %564 = vmatprep.subr.bf16.mxu0 0
      %565 = vmatpush1.bf16.msra.mxu0 %v543
      %566 = vmatprep.subr.bf16.mxu0 0
      %567 = vmatpush1.bf16.msra.mxu0 %v542
      %568 = vmatprep.subr.bf16.mxu0 0
      %569 = vmatpush1.bf16.msra.mxu0 %v541
      %570 = vmatprep.subr.bf16.mxu0 0
      %571 = vmatpush1.bf16.msra.mxu0 %v540
      %572 = vmatprep.subr.bf16.mxu0 0
      %573 = vmatpush2.bf16.msra.mxu0 0
      %574 = vmatprep.subr.bf16.mxu0 0
      %575 = vmatpush2.bf16.msra.mxu0 0
      %576 = vmatprep.subr.bf16.mxu0 0
      %577 = vmatpush2.bf16.msra.mxu0 0
      %578 = vmatprep.subr.bf16.mxu0 0
      %579 = vmatpush2.bf16.msra.mxu0 0
      %580 = vmatprep.subr.bf16.mxu0 0
      %581 = vmatpush2.bf16.msra.mxu0 0
      %582 = vmatprep.subr.bf16.mxu0 0
      %583 = vmatpush2.bf16.msra.mxu0 0
      %584 = vmatprep.subr.bf16.mxu0 0
      %585 = vmatpush2.bf16.msra.mxu0 0
      %586 = vmatprep.subr.bf16.mxu0 0
      %587 = vmatpush2.bf16.msra.mxu0 0
      %588 = vmatprep.mubr.bf16.mxu0 0
      %589 = vmatmul.mubr.bf16.gmra.mxu0 %v444
      %v590 = vpop.f32.mrf.mxu0
      %v591 = vadd.f32 %v314, %v590
      %v592 = vpop.f32.mrf.mxu0
      %v593 = vpop.f32.mrf.mxu0
      %v594 = vadd.f32 %v314, %v593
      %v595 = vpop.f32.mrf.mxu0
      %596 = vmatprep.mubr.bf16.mxu0 0
      %597 = vmatmul.mubr.bf16.gmra.mxu0 %v445
      %v598 = vpop.f32.mrf.mxu0
      %v599 = vadd.f32 %v314, %v598
      %v600 = vpop.f32.mrf.mxu0
      %v601 = vpop.f32.mrf.mxu0
      %v602 = vadd.f32 %v314, %v601
      %v603 = vpop.f32.mrf.mxu0
      %604 = vmatprep.mubr.bf16.mxu0 0
      %605 = vmatmul.mubr.bf16.gmra.mxu0 %v446
      %v606 = vpop.f32.mrf.mxu0
      %v607 = vadd.f32 %v314, %v606
      %v608 = vpop.f32.mrf.mxu0
      %v609 = vpop.f32.mrf.mxu0
      %v610 = vadd.f32 %v314, %v609
      %v611 = vpop.f32.mrf.mxu0
      %612 = vmatprep.mubr.bf16.mxu0 0
      %613 = vmatmul.mubr.bf16.gmra.mxu0 %v447
      %v614 = vpop.f32.mrf.mxu0
      %v615 = vadd.f32 %v314, %v614
      %v616 = vpop.f32.mrf.mxu0
      %v617 = vpop.f32.mrf.mxu0
      %v618 = vadd.f32 %v314, %v617
      %v619 = vpop.f32.mrf.mxu0
      %620 = vmatprep.mubr.bf16.mxu0 0
      %621 = vmatmul.mubr.bf16.gmra.mxu0 %v448
      %v622 = vpop.f32.mrf.mxu0
      %v623 = vadd.f32 %v314, %v622
      %v624 = vpop.f32.mrf.mxu0
      %v625 = vpop.f32.mrf.mxu0
      %v626 = vadd.f32 %v314, %v625
      %v627 = vpop.f32.mrf.mxu0
      %628 = vmatprep.mubr.bf16.mxu0 0
      %629 = vmatmul.mubr.bf16.gmra.mxu0 %v449
      %v630 = vpop.f32.mrf.mxu0
      %v631 = vadd.f32 %v314, %v630
      %v632 = vpop.f32.mrf.mxu0
      %v633 = vpop.f32.mrf.mxu0
      %v634 = vadd.f32 %v314, %v633
      %v635 = vpop.f32.mrf.mxu0
      %636 = vmatprep.mubr.bf16.mxu0 0
      %637 = vmatmul.mubr.bf16.gmra.mxu0 %v450
      %v638 = vpop.f32.mrf.mxu0
      %v639 = vadd.f32 %v314, %v638
      %v640 = vpop.f32.mrf.mxu0
      %v641 = vpop.f32.mrf.mxu0
      %v642 = vadd.f32 %v314, %v641
      %v643 = vpop.f32.mrf.mxu0
      %644 = vmatprep.mubr.bf16.mxu0 0
      %645 = vmatmul.mubr.bf16.gmra.mxu0 %v451
      %v646 = vpop.f32.mrf.mxu0
      %v647 = vadd.f32 %v314, %v646
      %v648 = vpop.f32.mrf.mxu0
      %v649 = vpop.f32.mrf.mxu0
      %v650 = vadd.f32 %v314, %v649
      %v651 = vpop.f32.mrf.mxu0
      %652 = vmatprep.mubr.bf16.mxu0 0
      %653 = vmatmul.mubr.bf16.gmra.mxu0 %v452
      %v654 = vpop.f32.mrf.mxu0
      %v655 = vadd.f32 %v314, %v654
      %v656 = vpop.f32.mrf.mxu0
      %v657 = vpop.f32.mrf.mxu0
      %v658 = vadd.f32 %v314, %v657
      %v659 = vpop.f32.mrf.mxu0
      %660 = vmatprep.mubr.bf16.mxu0 0
      %661 = vmatmul.mubr.bf16.gmra.mxu0 %v453
      %v662 = vpop.f32.mrf.mxu0
      %v663 = vadd.f32 %v314, %v662
      %v664 = vpop.f32.mrf.mxu0
      %v665 = vpop.f32.mrf.mxu0
      %v666 = vadd.f32 %v314, %v665
      %v667 = vpop.f32.mrf.mxu0
      %668 = vmatprep.mubr.bf16.mxu0 0
      %669 = vmatmul.mubr.bf16.gmra.mxu0 %v454
      %v670 = vpop.f32.mrf.mxu0
      %v671 = vadd.f32 %v314, %v670
      %v672 = vpop.f32.mrf.mxu0
      %v673 = vpop.f32.mrf.mxu0
      %v674 = vadd.f32 %v314, %v673
      %v675 = vpop.f32.mrf.mxu0
      %676 = vmatprep.mubr.bf16.mxu0 0
      %677 = vmatmul.mubr.bf16.gmra.mxu0 %v455
      %v678 = vpop.f32.mrf.mxu0
      %v679 = vadd.f32 %v314, %v678
      %v680 = vpop.f32.mrf.mxu0
      %v681 = vpop.f32.mrf.mxu0
      %v682 = vadd.f32 %v314, %v681
      %v683 = vpop.f32.mrf.mxu0
      %684 = vmatprep.mubr.bf16.mxu0 0
      %685 = vmatmul.mubr.bf16.gmra.mxu0 %v456
      %v686 = vpop.f32.mrf.mxu0
      %v687 = vadd.f32 %v314, %v686
      %v688 = vpop.f32.mrf.mxu0
      %v689 = vpop.f32.mrf.mxu0
      %v690 = vadd.f32 %v314, %v689
      %v691 = vpop.f32.mrf.mxu0
      %692 = vmatprep.mubr.bf16.mxu0 0
      %693 = vmatmul.mubr.bf16.gmra.mxu0 %v457
      %v694 = vpop.f32.mrf.mxu0
      %v695 = vadd.f32 %v314, %v694
      %v696 = vpop.f32.mrf.mxu0
      %v697 = vpop.f32.mrf.mxu0
      %v698 = vadd.f32 %v314, %v697
      %v699 = vpop.f32.mrf.mxu0
      %700 = vmatprep.mubr.bf16.mxu0 0
      %701 = vmatmul.mubr.bf16.gmra.mxu0 %v458
      %v702 = vpop.f32.mrf.mxu0
      %v703 = vadd.f32 %v314, %v702
      %v704 = vpop.f32.mrf.mxu0
      %v705 = vpop.f32.mrf.mxu0
      %v706 = vadd.f32 %v314, %v705
      %v707 = vpop.f32.mrf.mxu0
      %708 = vmatprep.mubr.bf16.mxu0 0
      %709 = vmatmul.mubr.bf16.gmra.mxu0 %v459
      %v710 = vpop.f32.mrf.mxu0
      %v711 = vadd.f32 %v314, %v710
      %v712 = vpop.f32.mrf.mxu0
      %v713 = vpop.f32.mrf.mxu0
      %v714 = vadd.f32 %v314, %v713
      %v715 = vpop.f32.mrf.mxu0
      %716 = vmatprep.mubr.bf16.mxu0 0
      %717 = vmatmul.mubr.bf16.gmra.mxu0 %v460
      %v718 = vpop.f32.mrf.mxu0
      %v719 = vadd.f32 %v314, %v718
      %v720 = vpop.f32.mrf.mxu0
      %v721 = vpop.f32.mrf.mxu0
      %v722 = vadd.f32 %v314, %v721
      %v723 = vpop.f32.mrf.mxu0
      %724 = vmatprep.mubr.bf16.mxu0 0
      %725 = vmatmul.mubr.bf16.gmra.mxu0 %v461
      %v726 = vpop.f32.mrf.mxu0
      %v727 = vadd.f32 %v314, %v726
      %v728 = vpop.f32.mrf.mxu0
      %v729 = vpop.f32.mrf.mxu0
      %v730 = vadd.f32 %v314, %v729
      %v731 = vpop.f32.mrf.mxu0
      %732 = vmatprep.mubr.bf16.mxu0 0
      %733 = vmatmul.mubr.bf16.gmra.mxu0 %v462
      %v734 = vpop.f32.mrf.mxu0
      %v735 = vadd.f32 %v314, %v734
      %v736 = vpop.f32.mrf.mxu0
      %v737 = vpop.f32.mrf.mxu0
      %v738 = vadd.f32 %v314, %v737
      %v739 = vpop.f32.mrf.mxu0
      %740 = vmatprep.mubr.bf16.mxu0 0
      %741 = vmatmul.mubr.bf16.gmra.mxu0 %v463
      %v742 = vpop.f32.mrf.mxu0
      %v743 = vadd.f32 %v314, %v742
      %v744 = vpop.f32.mrf.mxu0
      %v745 = vpop.f32.mrf.mxu0
      %v746 = vadd.f32 %v314, %v745
      %v747 = vpop.f32.mrf.mxu0
      %748 = vmatprep.mubr.bf16.mxu0 0
      %749 = vmatmul.mubr.bf16.gmra.mxu0 %v464
      %v750 = vpop.f32.mrf.mxu0
      %v751 = vadd.f32 %v314, %v750
      %v752 = vpop.f32.mrf.mxu0
      %v753 = vpop.f32.mrf.mxu0
      %v754 = vadd.f32 %v314, %v753
      %v755 = vpop.f32.mrf.mxu0
      %756 = vmatprep.mubr.bf16.mxu0 0
      %757 = vmatmul.mubr.bf16.gmra.mxu0 %v465
      %v758 = vpop.f32.mrf.mxu0
      %v759 = vadd.f32 %v314, %v758
      %v760 = vpop.f32.mrf.mxu0
      %v761 = vpop.f32.mrf.mxu0
      %v762 = vadd.f32 %v314, %v761
      %v763 = vpop.f32.mrf.mxu0
      %764 = vmatprep.mubr.bf16.mxu0 0
      %765 = vmatmul.mubr.bf16.gmra.mxu0 %v466
      %v766 = vpop.f32.mrf.mxu0
      %v767 = vadd.f32 %v314, %v766
      %v768 = vpop.f32.mrf.mxu0
      %v769 = vpop.f32.mrf.mxu0
      %v770 = vadd.f32 %v314, %v769
      %v771 = vpop.f32.mrf.mxu0
      %772 = vmatprep.mubr.bf16.mxu0 0
      %773 = vmatmul.mubr.bf16.gmra.mxu0 %v467
      %v774 = vpop.f32.mrf.mxu0
      %v775 = vadd.f32 %v314, %v774
      %v776 = vpop.f32.mrf.mxu0
      %v777 = vpop.f32.mrf.mxu0
      %v778 = vadd.f32 %v314, %v777
      %v779 = vpop.f32.mrf.mxu0
      %780 = vmatprep.mubr.bf16.mxu0 0
      %781 = vmatmul.mubr.bf16.gmra.mxu0 %v468
      %v782 = vpop.f32.mrf.mxu0
      %v783 = vadd.f32 %v314, %v782
      %v784 = vpop.f32.mrf.mxu0
      %v785 = vpop.f32.mrf.mxu0
      %v786 = vadd.f32 %v314, %v785
      %v787 = vpop.f32.mrf.mxu0
      %788 = vmatprep.mubr.bf16.mxu0 0
      %789 = vmatmul.mubr.bf16.gmra.mxu0 %v469
      %v790 = vpop.f32.mrf.mxu0
      %v791 = vadd.f32 %v314, %v790
      %v792 = vpop.f32.mrf.mxu0
      %v793 = vpop.f32.mrf.mxu0
      %v794 = vadd.f32 %v314, %v793
      %v795 = vpop.f32.mrf.mxu0
      %796 = vmatprep.mubr.bf16.mxu0 0
      %797 = vmatmul.mubr.bf16.gmra.mxu0 %v470
      %v798 = vpop.f32.mrf.mxu0
      %v799 = vadd.f32 %v314, %v798
      %v800 = vpop.f32.mrf.mxu0
      %v801 = vpop.f32.mrf.mxu0
      %v802 = vadd.f32 %v314, %v801
      %v803 = vpop.f32.mrf.mxu0
      %804 = vmatprep.mubr.bf16.mxu0 0
      %805 = vmatmul.mubr.bf16.gmra.mxu0 %v471
      %v806 = vpop.f32.mrf.mxu0
      %v807 = vadd.f32 %v314, %v806
      %v808 = vpop.f32.mrf.mxu0
      %v809 = vpop.f32.mrf.mxu0
      %v810 = vadd.f32 %v314, %v809
      %v811 = vpop.f32.mrf.mxu0
      %812 = vmatprep.mubr.bf16.mxu0 0
      %813 = vmatmul.mubr.bf16.gmra.mxu0 %v472
      %v814 = vpop.f32.mrf.mxu0
      %v815 = vadd.f32 %v314, %v814
      %v816 = vpop.f32.mrf.mxu0
      %v817 = vpop.f32.mrf.mxu0
      %v818 = vadd.f32 %v314, %v817
      %v819 = vpop.f32.mrf.mxu0
      %820 = vmatprep.mubr.bf16.mxu0 0
      %821 = vmatmul.mubr.bf16.gmra.mxu0 %v473
      %v822 = vpop.f32.mrf.mxu0
      %v823 = vadd.f32 %v314, %v822
      %v824 = vpop.f32.mrf.mxu0
      %v825 = vpop.f32.mrf.mxu0
      %v826 = vadd.f32 %v314, %v825
      %v827 = vpop.f32.mrf.mxu0
      %828 = vmatprep.mubr.bf16.mxu0 0
      %829 = vmatmul.mubr.bf16.gmra.mxu0 %v474
      %v830 = vpop.f32.mrf.mxu0
      %v831 = vadd.f32 %v314, %v830
      %v832 = vpop.f32.mrf.mxu0
      %v833 = vpop.f32.mrf.mxu0
      %v834 = vadd.f32 %v314, %v833
      %v835 = vpop.f32.mrf.mxu0
      %836 = vmatprep.mubr.bf16.mxu0 0
      %837 = vmatmul.mubr.bf16.gmra.mxu0 %v475
      %v838 = vpop.f32.mrf.mxu0
      %v839 = vadd.f32 %v314, %v838
      %v840 = vpop.f32.mrf.mxu0
      %v841 = vpop.f32.mrf.mxu0
      %v842 = vadd.f32 %v314, %v841
      %v843 = vpop.f32.mrf.mxu0
      %844 = vdwg.mxu0
      %845 = vst [vmem:[%s226] sm:$0xff] %v591
      %846 = vst [vmem:[%s226 + $0x8] sm:$0xff] %v594
      %847 = vst [vmem:[%s226 + $0x10] sm:$0xff] %v599
      %848 = vst [vmem:[%s226 + $0x18] sm:$0xff] %v602
      %849 = vst [vmem:[%s226 + $0x20] sm:$0xff] %v607
      %850 = vst [vmem:[%s226 + $0x28] sm:$0xff] %v610
      %851 = vst [vmem:[%s226 + $0x30] sm:$0xff] %v615
      %852 = vst [vmem:[%s226 + $0x38] sm:$0xff] %v618
      %853 = vst [vmem:[%s226 + $0x40] sm:$0xff] %v623
      %854 = vst [vmem:[%s226 + $0x48] sm:$0xff] %v626
      %855 = vst [vmem:[%s226 + $0x50] sm:$0xff] %v631
      %856 = vst [vmem:[%s226 + $0x58] sm:$0xff] %v634
      %857 = vst [vmem:[%s226 + $0x60] sm:$0xff] %v639
      %858 = vst [vmem:[%s226 + $0x68] sm:$0xff] %v642
      %859 = vst [vmem:[%s226 + $0x70] sm:$0xff] %v647
      %860 = vst [vmem:[%s226 + $0x78] sm:$0xff] %v650
      %861 = vst [vmem:[%s226 + $0x80] sm:$0xff] %v655
      %862 = vst [vmem:[%s226 + $0x88] sm:$0xff] %v658
      %863 = vst [vmem:[%s226 + $0x90] sm:$0xff] %v663
      %864 = vst [vmem:[%s226 + $0x98] sm:$0xff] %v666
      %865 = vst [vmem:[%s226 + $0xa0] sm:$0xff] %v671
      %866 = vst [vmem:[%s226 + $0xa8] sm:$0xff] %v674
      %867 = vst [vmem:[%s226 + $0xb0] sm:$0xff] %v679
      %868 = vst [vmem:[%s226 + $0xb8] sm:$0xff] %v682
      %869 = vst [vmem:[%s226 + $0xc0] sm:$0xff] %v687
      %870 = vst [vmem:[%s226 + $0xc8] sm:$0xff] %v690
      %871 = vst [vmem:[%s226 + $0xd0] sm:$0xff] %v695
      %872 = vst [vmem:[%s226 + $0xd8] sm:$0xff] %v698
      %873 = vst [vmem:[%s226 + $0xe0] sm:$0xff] %v703
      %874 = vst [vmem:[%s226 + $0xe8] sm:$0xff] %v706
      %875 = vst [vmem:[%s226 + $0xf0] sm:$0xff] %v711
      %876 = vst [vmem:[%s226 + $0xf8] sm:$0xff] %v714
      %877 = vst [vmem:[%s226 + $0x100] sm:$0xff] %v719
      %878 = vst [vmem:[%s226 + $0x108] sm:$0xff] %v722
      %879 = vst [vmem:[%s226 + $0x110] sm:$0xff] %v727
      %880 = vst [vmem:[%s226 + $0x118] sm:$0xff] %v730
      %881 = vst [vmem:[%s226 + $0x120] sm:$0xff] %v735
      %882 = vst [vmem:[%s226 + $0x128] sm:$0xff] %v738
      %883 = vst [vmem:[%s226 + $0x130] sm:$0xff] %v743
      %884 = vst [vmem:[%s226 + $0x138] sm:$0xff] %v746
      %885 = vst [vmem:[%s226 + $0x140] sm:$0xff] %v751
      %886 = vst [vmem:[%s226 + $0x148] sm:$0xff] %v754
      %887 = vst [vmem:[%s226 + $0x150] sm:$0xff] %v759
      %888 = vst [vmem:[%s226 + $0x158] sm:$0xff] %v762
      %889 = vst [vmem:[%s226 + $0x160] sm:$0xff] %v767
      %890 = vst [vmem:[%s226 + $0x168] sm:$0xff] %v770
      %891 = vst [vmem:[%s226 + $0x170] sm:$0xff] %v775
      %892 = vst [vmem:[%s226 + $0x178] sm:$0xff] %v778
      %893 = vst [vmem:[%s226 + $0x180] sm:$0xff] %v783
      %894 = vst [vmem:[%s226 + $0x188] sm:$0xff] %v786
      %895 = vst [vmem:[%s226 + $0x190] sm:$0xff] %v791
      %896 = vst [vmem:[%s226 + $0x198] sm:$0xff] %v794
      %897 = vst [vmem:[%s226 + $0x1a0] sm:$0xff] %v799
      %898 = vst [vmem:[%s226 + $0x1a8] sm:$0xff] %v802
      %899 = vst [vmem:[%s226 + $0x1b0] sm:$0xff] %v807
      %900 = vst [vmem:[%s226 + $0x1b8] sm:$0xff] %v810
      %901 = vst [vmem:[%s226 + $0x1c0] sm:$0xff] %v815
      %902 = vst [vmem:[%s226 + $0x1c8] sm:$0xff] %v818
      %903 = vst [vmem:[%s226 + $0x1d0] sm:$0xff] %v823
      %904 = vst [vmem:[%s226 + $0x1d8] sm:$0xff] %v826
      %905 = vst [vmem:[%s226 + $0x1e0] sm:$0xff] %v831
      %906 = vst [vmem:[%s226 + $0x1e8] sm:$0xff] %v834
      %907 = vst [vmem:[%s226 + $0x1f0] sm:$0xff] %v839
      %908 = vst [vmem:[%s226 + $0x1f8] sm:$0xff] %v842
      %s909 = smul.u32 64, %s16
      %p910 = scmp.lt.s32.totalorder %s909, 127
      %s911 = scalar_select %p910, %s909, 127
      %s912 = smul.addr %s911, 8
      %s913 = scalar_lea.vmem %s5, %s912
      // Predicated region
      $region41: #{_lambda_.25} parent=39 // pred_check
        %p914 = pneg %p144
      $region42: #{_lambda_.25} parent=39 // pred_check_branch
        %916 = sbr.rel (%p914) target = $region44
      $region43: #{_lambda_.25} parent=39 // pred_region
        %s917 = smul.u32 64, %s16
      $region44: #{_lambda_.25} parent=39 // pred_fallthru
        _
    $region40: #{_lambda_.25} parent=5 // pred_fallthru
      _
    %p918 = scmp.le.s32.totalorder 2, %s11
    // Predicated region
    $region45: #{_lambda_.25} parent=5 // pred_check
      %p919 = pneg %p918
    $region46: #{_lambda_.25} parent=5 // pred_check_branch
      %921 = sbr.rel (%p919) target = $region48
    $region47: #{_lambda_.25} parent=5 // pred_region
      %s922 = ssub.s32 %s11, 2
      // Predicated region
      $region49: #{_lambda_.25} parent=47 // pred_check
        %p923 = pneg %p150
      $region50: #{_lambda_.25} parent=47 // pred_check_branch
        %925 = sbr.rel (%p923) target = $region52
      $region51: #{_lambda_.25} parent=47 // pred_region
        %s926 = smul.u32 64, %s17
        %p927 = scmp.lt.s32.totalorder %s926, 127
        %s928 = scalar_select %p927, %s926, 127
        %s929 = smul.addr %s928, 8
        %s930 = scalar_lea.vmem %s5, %s929
      $region52: #{_lambda_.25} parent=47 // pred_fallthru
        _
    $region48: #{_lambda_.25} parent=5 // pred_fallthru
      _
  $region6: #{_lambda_.25} parent=0 // loop_footer
    %s15 = sadd.s32 1, %s11
  $region7: #{_lambda_.25} parent=0 // loop_footer_branch
    %10 = sbr.rel target = $region3
  $region8: #{_lambda_.25} parent=0 // loop_exit
    _

// kernel: tile.77
$region0: #{tile.77}
  #allocation0 [shape = 's32[1]{0}', space=sflag, size = 0x4, scoped, tag = 'scoped memory for tile.77']
  %s0 = inlined_call_operand.vmem [shape: f32[8], index: 0, kind: input, shape index: {}]
  %s1 = inlined_call_operand.vmem [shape: f32[4,8], index: 1, kind: output, shape index: {}]
  // Predicated region
  $region2: #{tile.77} parent=0 // pred_check
    _
  $region3: #{tile.77} parent=0 // pred_check_branch
    %3 = sbr.rel (0) target = $region5
  $region4: #{tile.77} parent=0 // pred_region
    _
  $region5: #{tile.77} parent=0 // pred_fallthru
    _
  %v4 = vld [vmem:[%s0] ss:$0 sm:$0xff]
  %5 = vst [vmem:[%s1] sm:$0xf] %v4

// kernel: tile.78
$region0: #{tile.78}
  %s0 = inlined_call_operand.vmem [shape: f32[4,8], index: 0, kind: input, shape index: {}]
  %s1 = inlined_call_operand.vmem [shape: f32[1,32], index: 1, kind: output, shape index: {}]
  $region1: #{tile.78} parent=0
    #allocation0 [shape = 'u8[4096]{0}', space=vmem, size = 0x1000, scoped, tag = 'scoped mem for output reshape']
    #allocation1 [shape = 'u8[4096]{0}', space=vmem, size = 0x1000, scoped, tag = 'scoped mem for input reshape']
    %s3 = sshll.u32 1, 4
    %s4 = ssub.s32 %s3, 1
    %v5 = vld [vmem:[%s0] sm:%s4]
    %6 = vst [vmem:[#allocation1] sm:%s4] %v5
    %v7 = vld [vmem:[#allocation1] sm:$0x1]
    %vm8 = vcmask 64512
    %9 = vst.msk [vmem:[#allocation0] sm:$0x1] %vm8, %v7
    %s10 = scalar_lea.vmem [#allocation1], 3
    %v11 = vld [vmem:[%s10] sm:$0x1]
    %12 = vrot.lane.b32.xlu0 %v11, 24
    %v13 = vpop.permute.xlu0 %12
    %vm14 = vcmask 261312
    %15 = vst.msk [vmem:[#allocation0] sm:$0x1] %vm14, %v13
    %s16 = scalar_lea.vmem [#allocation1], 2
    %v17 = vld [vmem:[%s16] sm:$0x1]
    %18 = vrot.lane.b32.xlu0 %v17, 16
    %v19 = vpop.permute.xlu0 %18
    %vm20 = vcmask 195712
    %21 = vst.msk [vmem:[#allocation0] sm:$0x1] %vm20, %v19
    %s22 = scalar_lea.vmem [#allocation1], 1
    %v23 = vld [vmem:[%s22] sm:$0x1]
    %24 = vrot.lane.b32.xlu0 %v23, 8
    %v25 = vpop.permute.xlu0 %24
    %vm26 = vcmask 130112
    %27 = vst.msk [vmem:[#allocation0] sm:$0x1] %vm26, %v25
    %s29 = sshll.u32 1, 1
    %s30 = ssub.s32 %s29, 1
    %v32 = vld [vmem:[#allocation0] sm:%s30]
    %s33 = sshll.u32 1, 1
    %s34 = ssub.s32 %s33, 1
    %35 = vst [vmem:[%s1] sm:%s34] %v32

// kernel: _lambda_.26
$region0: #{_lambda_.26}
  #allocation0 [shape = 'u32[]', space=smem, size = 0x4, offset = 0x4, fixed_abs, tag = 'smem constant byte address 0x4 - core index']
  #allocation1 [shape = 'u32[144,128]{1,0:T(1,128)}', space=vmem, size = 0x12000, scoped, tag = 'internal scratch']
  %s0 = inlined_call_operand.vmem [shape: f32[1024,128], index: 0, kind: input, shape index: {}]
  %s1 = inlined_call_operand.vmem [shape: f32[1,128], index: 1, kind: input, shape index: {}]
  %s2 = inlined_call_operand.vmem [shape: f32[1,128], index: 2, kind: input, shape index: {}]
  %s3 = inlined_call_operand.vmem [shape: f32[1024,128], index: 3, kind: output, shape index: {}]
  %s4 = sld [smem:[#allocation0]]
  $region45: #{_lambda_.26} parent=0
    _
  %s6 = ssub.s32 1, %s4
  %s7 = scalar_select 0, %s6, %s4
  loop: start=0, step=1, limit=4
  $region2: #{_lambda_.26} parent=0 // loop_pre_header
    _
  $region3: #{_lambda_.26} parent=0 // loop_header
    %s9 = sphi 0, %s13
    %p10 = scmp.ge.s32.totalorder %s9, 4
    %s19 = sphi 0, %s21
    %s22 = sphi 0, %s19
    %s23 = sphi 0, %s22
    %s39 = sphi 0, %s23
    %s43 = sphi 0, %s43
    %s45 = sphi 0, %s43
    %s46 = sphi 0, %s45
    %s60 = sphi 0, %s46
    %s64 = sphi 0, %s64
    %s66 = sphi 0, %s64
    %s67 = sphi 0, %s66
    %s81 = sphi 0, %s67
    %s87 = sphi 0, %s89
    %s90 = sphi 0, %s87
    %s91 = sphi 0, %s90
    %s107 = sphi 0, %s91
  $region4: #{_lambda_.26} parent=0 // loop_header_branch
    %12 = sbr.rel (%p10) target = $region8
  $region5: #{_lambda_.26} parent=0 // loop_body
    %s14 = ssub.s32 %s9, 1
    %s15 = ssub.s32 %s9, 2
    %s16 = sadd.s32 %s9, 1
    %s17 = ssub.s32 %s9, %s16
    %p18 = scmp.eq.s32.totalorder %s17, 0
    %s20 = sadd.s32 %s19, 1
    %s21 = scalar_select %p18, %s19, %s20
    %p24 = pneg %p18
    %p25 = scmp.eq.s32.totalorder %s9, 1
    %p26 = por %p24, %p25
    %p27 = scmp.ne.s32.totalorder %s19, %s22
    %p28 = scmp.eq.s32.totalorder %s9, 0
    %p29 = por %p27, %p28
    %p30 = scmp.ne.s32.totalorder %s19, %s22
    %p31 = scmp.eq.s32.totalorder %s14, 1
    %p32 = por %p30, %p31
    %p33 = scmp.ne.s32.totalorder %s22, %s23
    %p34 = scmp.eq.s32.totalorder %s14, 0
    %p35 = por %p33, %p34
    %p36 = scmp.ne.s32.totalorder %s22, %s23
    %p37 = scmp.eq.s32.totalorder %s15, 1
    %p38 = por %p36, %p37
    %p40 = scmp.ne.s32.totalorder %s23, %s39
    %p41 = scmp.eq.s32.totalorder %s15, 0
    %p42 = por %p40, %p41
    %s44 = sadd.s32 %s43, 1
    %p47 = scmp.eq.s32.totalorder %s9, 1
    %p48 = scmp.ne.s32.totalorder %s43, %s45
    %p49 = scmp.eq.s32.totalorder %s9, 0
    %p50 = por %p48, %p49
    %p51 = scmp.ne.s32.totalorder %s43, %s45
    %p52 = scmp.eq.s32.totalorder %s14, 1
    %p53 = por %p51, %p52
    %p54 = scmp.ne.s32.totalorder %s45, %s46
    %p55 = scmp.eq.s32.totalorder %s14, 0
    %p56 = por %p54, %p55
    %p57 = scmp.ne.s32.totalorder %s45, %s46
    %p58 = scmp.eq.s32.totalorder %s15, 1
    %p59 = por %p57, %p58
    %p61 = scmp.ne.s32.totalorder %s46, %s60
    %p62 = scmp.eq.s32.totalorder %s15, 0
    %p63 = por %p61, %p62
    %s65 = sadd.s32 %s64, 1
    %p68 = scmp.eq.s32.totalorder %s9, 1
    %p69 = scmp.ne.s32.totalorder %s64, %s66
    %p70 = scmp.eq.s32.totalorder %s9, 0
    %p71 = por %p69, %p70
    %p72 = scmp.ne.s32.totalorder %s64, %s66
    %p73 = scmp.eq.s32.totalorder %s14, 1
    %p74 = por %p72, %p73
    %p75 = scmp.ne.s32.totalorder %s66, %s67
    %p76 = scmp.eq.s32.totalorder %s14, 0
    %p77 = por %p75, %p76
    %p78 = scmp.ne.s32.totalorder %s66, %s67
    %p79 = scmp.eq.s32.totalorder %s15, 1
    %p80 = por %p78, %p79
    %p82 = scmp.ne.s32.totalorder %s67, %s81
    %p83 = scmp.eq.s32.totalorder %s15, 0
    %p84 = por %p82, %p83
    %s85 = ssub.s32 %s9, %s16
    %p86 = scmp.eq.s32.totalorder %s85, 0
    %s88 = sadd.s32 %s87, 1
    %s89 = scalar_select %p86, %s87, %s88
    %p92 = pneg %p86
    %p93 = scmp.eq.s32.totalorder %s9, 1
    %p94 = por %p92, %p93
    %p95 = scmp.ne.s32.totalorder %s87, %s90
    %p96 = scmp.eq.s32.totalorder %s9, 0
    %p97 = por %p95, %p96
    %p98 = scmp.ne.s32.totalorder %s87, %s90
    %p99 = scmp.eq.s32.totalorder %s14, 1
    %p100 = por %p98, %p99
    %p101 = scmp.ne.s32.totalorder %s90, %s91
    %p102 = scmp.eq.s32.totalorder %s14, 0
    %p103 = por %p101, %p102
    %p104 = scmp.ne.s32.totalorder %s90, %s91
    %p105 = scmp.eq.s32.totalorder %s15, 1
    %p106 = por %p104, %p105
    %p108 = scmp.ne.s32.totalorder %s91, %s107
    %p109 = scmp.eq.s32.totalorder %s15, 0
    %p110 = por %p108, %p109
    %p111 = scmp.le.s32.totalorder 1, %s9
    %p112 = scmp.lt.s32.totalorder %s9, 3
    %p113 = pnand %p111, %p112
    %p114 = pneg %p113
    // Predicated region
    $region9: #{_lambda_.26} parent=5 // pred_check
      _
    $region10: #{_lambda_.26} parent=5 // pred_check_branch
      %116 = sbr.rel (%p113) target = $region12
    $region11: #{_lambda_.26} parent=5 // pred_region
      %s117 = ssub.s32 %s9, 1
      // Predicated region
      $region13: #{_lambda_.26} parent=11 // pred_check
        %p118 = pneg %p56
      $region14: #{_lambda_.26} parent=11 // pred_check_branch
        %120 = sbr.rel (%p118) target = $region16
      $region15: #{_lambda_.26} parent=11 // pred_region
        _
      $region16: #{_lambda_.26} parent=11 // pred_fallthru
        _
      // Predicated region
      $region17: #{_lambda_.26} parent=11 // pred_check
        %p121 = pneg %p77
      $region18: #{_lambda_.26} parent=11 // pred_check_branch
        %123 = sbr.rel (%p121) target = $region20
      $region19: #{_lambda_.26} parent=11 // pred_region
        _
      $region20: #{_lambda_.26} parent=11 // pred_fallthru
        _
    $region12: #{_lambda_.26} parent=5 // pred_fallthru
      _
    %p124 = scmp.lt.s32.totalorder %s9, 2
    // Predicated region
    $region21: #{_lambda_.26} parent=5 // pred_check
      %p125 = pneg %p124
    $region22: #{_lambda_.26} parent=5 // pred_check_branch
      %127 = sbr.rel (%p125) target = $region24
    $region23: #{_lambda_.26} parent=5 // pred_region
      // Predicated region
      $region25: #{_lambda_.26} parent=23 // pred_check
        %p128 = pneg %p29
      $region26: #{_lambda_.26} parent=23 // pred_check_branch
        %130 = sbr.rel (%p128) target = $region28
      $region27: #{_lambda_.26} parent=23 // pred_region
        %s131 = smul.u32 64, %s9
        %p132 = scmp.lt.s32.totalorder %s131, 127
        %s133 = scalar_select %p132, %s131, 127
        %s134 = smul.addr %s133, 8
        %s135 = scalar_lea.vmem %s0, %s134
        %s136 = smul.u32 64, %s9
      $region28: #{_lambda_.26} parent=23 // pred_fallthru
        _
    $region24: #{_lambda_.26} parent=5 // pred_fallthru
      _
    %p137 = scmp.le.s32.totalorder 1, %s9
    %p138 = scmp.lt.s32.totalorder %s9, 3
    %p139 = pnand %p137, %p138
    %p140 = pneg %p139
    // Predicated region
    $region29: #{_lambda_.26} parent=5 // pred_check
      _
    $region30: #{_lambda_.26} parent=5 // pred_check_branch
      %142 = sbr.rel (%p139) target = $region32
    $region31: #{_lambda_.26} parent=5 // pred_region
      %s143 = ssub.s32 %s9, 1
      %s144 = smul.u32 64, %s14
      %p145 = scmp.lt.s32.totalorder %s144, 127
      %s146 = scalar_select %p145, %s144, 127
      %s147 = smul.addr %s146, 8
      %s148 = scalar_lea.vmem %s0, %s147
      %p149 = pneg %p35
      %p150 = pneg %p32
      %p151 = pneg %p56
      %p152 = pneg %p53
      %p153 = pneg %p77
      %p154 = pneg %p74
      %p155 = pneg %p103
      %p156 = pneg %p100
      %s157 = smul.u32 64, %s14
      %p158 = scmp.lt.s32.totalorder %s157, 127
      %s159 = scalar_select %p158, %s157, 127
      %s160 = smul.addr %s159, 8
      %s161 = scalar_lea.vmem %s3, %s160
      %s162 = smul.u32 64, %s14
      %p163 = scmp.lt.s32.totalorder %s162, 127
      %s164 = scalar_select %p163, %s162, 127
      %s165 = smul.addr %s164, 8
      %s166 = scalar_lea.vmem %s0, %s165
      %s167 = smul.u32 64, %s14
      %s168 = smul.u32 64, %s14
      %p169 = scmp.lt.s32.totalorder %s168, 127
      %s170 = scalar_select %p169, %s168, 127
      %s171 = smul.addr %s170, 8
      %s172 = scalar_lea.vmem %s3, %s171
      %s173 = smul.u32 64, %s14
      %v174 = vld [vmem:[%s166] sm:$0xff]
      %v175 = vld [vmem:[%s166 + $0x8] sm:$0xff]
      %v176 = vld [vmem:[%s166 + $0x10] sm:$0xff]
      %v177 = vld [vmem:[%s166 + $0x18] sm:$0xff]
      %v178 = vld [vmem:[%s166 + $0x20] sm:$0xff]
      %v179 = vld [vmem:[%s166 + $0x28] sm:$0xff]
      %v180 = vld [vmem:[%s166 + $0x30] sm:$0xff]
      %v181 = vld [vmem:[%s166 + $0x38] sm:$0xff]
      %v182 = vld [vmem:[%s166 + $0x40] sm:$0xff]
      %v183 = vld [vmem:[%s166 + $0x48] sm:$0xff]
      %v184 = vld [vmem:[%s166 + $0x50] sm:$0xff]
      %v185 = vld [vmem:[%s166 + $0x58] sm:$0xff]
      %v186 = vld [vmem:[%s166 + $0x60] sm:$0xff]
      %v187 = vld [vmem:[%s166 + $0x68] sm:$0xff]
      %v188 = vld [vmem:[%s166 + $0x70] sm:$0xff]
      %v189 = vld [vmem:[%s166 + $0x78] sm:$0xff]
      %v190 = vld [vmem:[%s166 + $0x80] sm:$0xff]
      %v191 = vld [vmem:[%s166 + $0x88] sm:$0xff]
      %v192 = vld [vmem:[%s166 + $0x90] sm:$0xff]
      %v193 = vld [vmem:[%s166 + $0x98] sm:$0xff]
      %v194 = vld [vmem:[%s166 + $0xa0] sm:$0xff]
      %v195 = vld [vmem:[%s166 + $0xa8] sm:$0xff]
      %v196 = vld [vmem:[%s166 + $0xb0] sm:$0xff]
      %v197 = vld [vmem:[%s166 + $0xb8] sm:$0xff]
      %v198 = vld [vmem:[%s166 + $0xc0] sm:$0xff]
      %v199 = vld [vmem:[%s166 + $0xc8] sm:$0xff]
      %v200 = vld [vmem:[%s166 + $0xd0] sm:$0xff]
      %v201 = vld [vmem:[%s166 + $0xd8] sm:$0xff]
      %v202 = vld [vmem:[%s166 + $0xe0] sm:$0xff]
      %v203 = vld [vmem:[%s166 + $0xe8] sm:$0xff]
      %v204 = vld [vmem:[%s166 + $0xf0] sm:$0xff]
      %v205 = vld [vmem:[%s166 + $0xf8] sm:$0xff]
      %v206 = vld [vmem:[%s166 + $0x100] sm:$0xff]
      %v207 = vld [vmem:[%s166 + $0x108] sm:$0xff]
      %v208 = vld [vmem:[%s166 + $0x110] sm:$0xff]
      %v209 = vld [vmem:[%s166 + $0x118] sm:$0xff]
      %v210 = vld [vmem:[%s166 + $0x120] sm:$0xff]
      %v211 = vld [vmem:[%s166 + $0x128] sm:$0xff]
      %v212 = vld [vmem:[%s166 + $0x130] sm:$0xff]
      %v213 = vld [vmem:[%s166 + $0x138] sm:$0xff]
      %v214 = vld [vmem:[%s166 + $0x140] sm:$0xff]
      %v215 = vld [vmem:[%s166 + $0x148] sm:$0xff]
      %v216 = vld [vmem:[%s166 + $0x150] sm:$0xff]
      %v217 = vld [vmem:[%s166 + $0x158] sm:$0xff]
      %v218 = vld [vmem:[%s166 + $0x160] sm:$0xff]
      %v219 = vld [vmem:[%s166 + $0x168] sm:$0xff]
      %v220 = vld [vmem:[%s166 + $0x170] sm:$0xff]
      %v221 = vld [vmem:[%s166 + $0x178] sm:$0xff]
      %v222 = vld [vmem:[%s166 + $0x180] sm:$0xff]
      %v223 = vld [vmem:[%s166 + $0x188] sm:$0xff]
      %v224 = vld [vmem:[%s166 + $0x190] sm:$0xff]
      %v225 = vld [vmem:[%s166 + $0x198] sm:$0xff]
      %v226 = vld [vmem:[%s166 + $0x1a0] sm:$0xff]
      %v227 = vld [vmem:[%s166 + $0x1a8] sm:$0xff]
      %v228 = vld [vmem:[%s166 + $0x1b0] sm:$0xff]
      %v229 = vld [vmem:[%s166 + $0x1b8] sm:$0xff]
      %v230 = vld [vmem:[%s166 + $0x1c0] sm:$0xff]
      %v231 = vld [vmem:[%s166 + $0x1c8] sm:$0xff]
      %v232 = vld [vmem:[%s166 + $0x1d0] sm:$0xff]
      %v233 = vld [vmem:[%s166 + $0x1d8] sm:$0xff]
      %v234 = vld [vmem:[%s166 + $0x1e0] sm:$0xff]
      %v235 = vld [vmem:[%s166 + $0x1e8] sm:$0xff]
      %v236 = vld [vmem:[%s166 + $0x1f0] sm:$0xff]
      %v237 = vld [vmem:[%s166 + $0x1f8] sm:$0xff]
      %v238 = vld [vmem:[%s1] sm:$0x1]
      %v240 = vlaneseq
      %v241 = vshrl.u32 %v240, 7
      %v242 = vsub.s32 0, %v241
      %v243 = vrot.slane %v238, %v242
      %v245 = vmul.f32 %v174, %v243
      %v246 = vmul.f32 %v175, %v243
      %v247 = vmul.f32 %v176, %v243
      %v248 = vmul.f32 %v177, %v243
      %v249 = vmul.f32 %v178, %v243
      %v250 = vmul.f32 %v179, %v243
      %v251 = vmul.f32 %v180, %v243
      %v252 = vmul.f32 %v181, %v243
      %v253 = vmul.f32 %v182, %v243
      %v254 = vmul.f32 %v183, %v243
      %v255 = vmul.f32 %v184, %v243
      %v256 = vmul.f32 %v185, %v243
      %v257 = vmul.f32 %v186, %v243
      %v258 = vmul.f32 %v187, %v243
      %v259 = vmul.f32 %v188, %v243
      %v260 = vmul.f32 %v189, %v243
      %v261 = vmul.f32 %v190, %v243
      %v262 = vmul.f32 %v191, %v243
      %v263 = vmul.f32 %v192, %v243
      %v264 = vmul.f32 %v193, %v243
      %v265 = vmul.f32 %v194, %v243
      %v266 = vmul.f32 %v195, %v243
      %v267 = vmul.f32 %v196, %v243
      %v268 = vmul.f32 %v197, %v243
      %v269 = vmul.f32 %v198, %v243
      %v270 = vmul.f32 %v199, %v243
      %v271 = vmul.f32 %v200, %v243
      %v272 = vmul.f32 %v201, %v243
      %v273 = vmul.f32 %v202, %v243
      %v274 = vmul.f32 %v203, %v243
      %v275 = vmul.f32 %v204, %v243
      %v276 = vmul.f32 %v205, %v243
      %v277 = vmul.f32 %v206, %v243
      %v278 = vmul.f32 %v207, %v243
      %v279 = vmul.f32 %v208, %v243
      %v280 = vmul.f32 %v209, %v243
      %v281 = vmul.f32 %v210, %v243
      %v282 = vmul.f32 %v211, %v243
      %v283 = vmul.f32 %v212, %v243
      %v284 = vmul.f32 %v213, %v243
      %v285 = vmul.f32 %v214, %v243
      %v286 = vmul.f32 %v215, %v243
      %v287 = vmul.f32 %v216, %v243
      %v288 = vmul.f32 %v217, %v243
      %v289 = vmul.f32 %v218, %v243
      %v290 = vmul.f32 %v219, %v243
      %v291 = vmul.f32 %v220, %v243
      %v292 = vmul.f32 %v221, %v243
      %v293 = vmul.f32 %v222, %v243
      %v294 = vmul.f32 %v223, %v243
      %v295 = vmul.f32 %v224, %v243
      %v296 = vmul.f32 %v225, %v243
      %v297 = vmul.f32 %v226, %v243
      %v298 = vmul.f32 %v227, %v243
      %v299 = vmul.f32 %v228, %v243
      %v300 = vmul.f32 %v229, %v243
      %v301 = vmul.f32 %v230, %v243
      %v302 = vmul.f32 %v231, %v243
      %v303 = vmul.f32 %v232, %v243
      %v304 = vmul.f32 %v233, %v243
      %v305 = vmul.f32 %v234, %v243
      %v306 = vmul.f32 %v235, %v243
      %v307 = vmul.f32 %v236, %v243
      %v308 = vmul.f32 %v237, %v243
      %v309 = vld [vmem:[%s2] sm:$0x1]
      %v311 = vlaneseq
      %v312 = vshrl.u32 %v311, 7
      %v313 = vsub.s32 0, %v312
      %v314 = vrot.slane %v309, %v313
      %v316 = vadd.f32 %v245, %v314
      %v317 = vadd.f32 %v246, %v314
      %v318 = vadd.f32 %v247, %v314
      %v319 = vadd.f32 %v248, %v314
      %v320 = vadd.f32 %v249, %v314
      %v321 = vadd.f32 %v250, %v314
      %v322 = vadd.f32 %v251, %v314
      %v323 = vadd.f32 %v252, %v314
      %v324 = vadd.f32 %v253, %v314
      %v325 = vadd.f32 %v254, %v314
      %v326 = vadd.f32 %v255, %v314
      %v327 = vadd.f32 %v256, %v314
      %v328 = vadd.f32 %v257, %v314
      %v329 = vadd.f32 %v258, %v314
      %v330 = vadd.f32 %v259, %v314
      %v331 = vadd.f32 %v260, %v314
      %v332 = vadd.f32 %v261, %v314
      %v333 = vadd.f32 %v262, %v314
      %v334 = vadd.f32 %v263, %v314
      %v335 = vadd.f32 %v264, %v314
      %v336 = vadd.f32 %v265, %v314
      %v337 = vadd.f32 %v266, %v314
      %v338 = vadd.f32 %v267, %v314
      %v339 = vadd.f32 %v268, %v314
      %v340 = vadd.f32 %v269, %v314
      %v341 = vadd.f32 %v270, %v314
      %v342 = vadd.f32 %v271, %v314
      %v343 = vadd.f32 %v272, %v314
      %v344 = vadd.f32 %v273, %v314
      %v345 = vadd.f32 %v274, %v314
      %v346 = vadd.f32 %v275, %v314
      %v347 = vadd.f32 %v276, %v314
      %v348 = vadd.f32 %v277, %v314
      %v349 = vadd.f32 %v278, %v314
      %v350 = vadd.f32 %v279, %v314
      %v351 = vadd.f32 %v280, %v314
      %v352 = vadd.f32 %v281, %v314
      %v353 = vadd.f32 %v282, %v314
      %v354 = vadd.f32 %v283, %v314
      %v355 = vadd.f32 %v284, %v314
      %v356 = vadd.f32 %v285, %v314
      %v357 = vadd.f32 %v286, %v314
      %v358 = vadd.f32 %v287, %v314
      %v359 = vadd.f32 %v288, %v314
      %v360 = vadd.f32 %v289, %v314
      %v361 = vadd.f32 %v290, %v314
      %v362 = vadd.f32 %v291, %v314
      %v363 = vadd.f32 %v292, %v314
      %v364 = vadd.f32 %v293, %v314
      %v365 = vadd.f32 %v294, %v314
      %v366 = vadd.f32 %v295, %v314
      %v367 = vadd.f32 %v296, %v314
      %v368 = vadd.f32 %v297, %v314
      %v369 = vadd.f32 %v298, %v314
      %v370 = vadd.f32 %v299, %v314
      %v371 = vadd.f32 %v300, %v314
      %v372 = vadd.f32 %v301, %v314
      %v373 = vadd.f32 %v302, %v314
      %v374 = vadd.f32 %v303, %v314
      %v375 = vadd.f32 %v304, %v314
      %v376 = vadd.f32 %v305, %v314
      %v377 = vadd.f32 %v306, %v314
      %v378 = vadd.f32 %v307, %v314
      %v379 = vadd.f32 %v308, %v314
      %380 = vst [vmem:[%s172] sm:$0xff] %v316
      %381 = vst [vmem:[%s172 + $0x8] sm:$0xff] %v317
      %382 = vst [vmem:[%s172 + $0x10] sm:$0xff] %v318
      %383 = vst [vmem:[%s172 + $0x18] sm:$0xff] %v319
      %384 = vst [vmem:[%s172 + $0x20] sm:$0xff] %v320
      %385 = vst [vmem:[%s172 + $0x28] sm:$0xff] %v321
      %386 = vst [vmem:[%s172 + $0x30] sm:$0xff] %v322
      %387 = vst [vmem:[%s172 + $0x38] sm:$0xff] %v323
      %388 = vst [vmem:[%s172 + $0x40] sm:$0xff] %v324
      %389 = vst [vmem:[%s172 + $0x48] sm:$0xff] %v325
      %390 = vst [vmem:[%s172 + $0x50] sm:$0xff] %v326
      %391 = vst [vmem:[%s172 + $0x58] sm:$0xff] %v327
      %392 = vst [vmem:[%s172 + $0x60] sm:$0xff] %v328
      %393 = vst [vmem:[%s172 + $0x68] sm:$0xff] %v329
      %394 = vst [vmem:[%s172 + $0x70] sm:$0xff] %v330
      %395 = vst [vmem:[%s172 + $0x78] sm:$0xff] %v331
      %396 = vst [vmem:[%s172 + $0x80] sm:$0xff] %v332
      %397 = vst [vmem:[%s172 + $0x88] sm:$0xff] %v333
      %398 = vst [vmem:[%s172 + $0x90] sm:$0xff] %v334
      %399 = vst [vmem:[%s172 + $0x98] sm:$0xff] %v335
      %400 = vst [vmem:[%s172 + $0xa0] sm:$0xff] %v336
      %401 = vst [vmem:[%s172 + $0xa8] sm:$0xff] %v337
      %402 = vst [vmem:[%s172 + $0xb0] sm:$0xff] %v338
      %403 = vst [vmem:[%s172 + $0xb8] sm:$0xff] %v339
      %404 = vst [vmem:[%s172 + $0xc0] sm:$0xff] %v340
      %405 = vst [vmem:[%s172 + $0xc8] sm:$0xff] %v341
      %406 = vst [vmem:[%s172 + $0xd0] sm:$0xff] %v342
      %407 = vst [vmem:[%s172 + $0xd8] sm:$0xff] %v343
      %408 = vst [vmem:[%s172 + $0xe0] sm:$0xff] %v344
      %409 = vst [vmem:[%s172 + $0xe8] sm:$0xff] %v345
      %410 = vst [vmem:[%s172 + $0xf0] sm:$0xff] %v346
      %411 = vst [vmem:[%s172 + $0xf8] sm:$0xff] %v347
      %412 = vst [vmem:[%s172 + $0x100] sm:$0xff] %v348
      %413 = vst [vmem:[%s172 + $0x108] sm:$0xff] %v349
      %414 = vst [vmem:[%s172 + $0x110] sm:$0xff] %v350
      %415 = vst [vmem:[%s172 + $0x118] sm:$0xff] %v351
      %416 = vst [vmem:[%s172 + $0x120] sm:$0xff] %v352
      %417 = vst [vmem:[%s172 + $0x128] sm:$0xff] %v353
      %418 = vst [vmem:[%s172 + $0x130] sm:$0xff] %v354
      %419 = vst [vmem:[%s172 + $0x138] sm:$0xff] %v355
      %420 = vst [vmem:[%s172 + $0x140] sm:$0xff] %v356
      %421 = vst [vmem:[%s172 + $0x148] sm:$0xff] %v357
      %422 = vst [vmem:[%s172 + $0x150] sm:$0xff] %v358
      %423 = vst [vmem:[%s172 + $0x158] sm:$0xff] %v359
      %424 = vst [vmem:[%s172 + $0x160] sm:$0xff] %v360
      %425 = vst [vmem:[%s172 + $0x168] sm:$0xff] %v361
      %426 = vst [vmem:[%s172 + $0x170] sm:$0xff] %v362
      %427 = vst [vmem:[%s172 + $0x178] sm:$0xff] %v363
      %428 = vst [vmem:[%s172 + $0x180] sm:$0xff] %v364
      %429 = vst [vmem:[%s172 + $0x188] sm:$0xff] %v365
      %430 = vst [vmem:[%s172 + $0x190] sm:$0xff] %v366
      %431 = vst [vmem:[%s172 + $0x198] sm:$0xff] %v367
      %432 = vst [vmem:[%s172 + $0x1a0] sm:$0xff] %v368
      %433 = vst [vmem:[%s172 + $0x1a8] sm:$0xff] %v369
      %434 = vst [vmem:[%s172 + $0x1b0] sm:$0xff] %v370
      %435 = vst [vmem:[%s172 + $0x1b8] sm:$0xff] %v371
      %436 = vst [vmem:[%s172 + $0x1c0] sm:$0xff] %v372
      %437 = vst [vmem:[%s172 + $0x1c8] sm:$0xff] %v373
      %438 = vst [vmem:[%s172 + $0x1d0] sm:$0xff] %v374
      %439 = vst [vmem:[%s172 + $0x1d8] sm:$0xff] %v375
      %440 = vst [vmem:[%s172 + $0x1e0] sm:$0xff] %v376
      %441 = vst [vmem:[%s172 + $0x1e8] sm:$0xff] %v377
      %442 = vst [vmem:[%s172 + $0x1f0] sm:$0xff] %v378
      %443 = vst [vmem:[%s172 + $0x1f8] sm:$0xff] %v379
      %s444 = smul.u32 64, %s14
      %p445 = scmp.lt.s32.totalorder %s444, 127
      %s446 = scalar_select %p445, %s444, 127
      %s447 = smul.addr %s446, 8
      %s448 = scalar_lea.vmem %s3, %s447
      // Predicated region
      $region33: #{_lambda_.26} parent=31 // pred_check
        %p449 = pneg %p100
      $region34: #{_lambda_.26} parent=31 // pred_check_branch
        %451 = sbr.rel (%p449) target = $region36
      $region35: #{_lambda_.26} parent=31 // pred_region
        %s452 = smul.u32 64, %s14
      $region36: #{_lambda_.26} parent=31 // pred_fallthru
        _
    $region32: #{_lambda_.26} parent=5 // pred_fallthru
      _
    %p453 = scmp.le.s32.totalorder 2, %s9
    // Predicated region
    $region37: #{_lambda_.26} parent=5 // pred_check
      %p454 = pneg %p453
    $region38: #{_lambda_.26} parent=5 // pred_check_branch
      %456 = sbr.rel (%p454) target = $region40
    $region39: #{_lambda_.26} parent=5 // pred_region
      %s457 = ssub.s32 %s9, 2
      // Predicated region
      $region41: #{_lambda_.26} parent=39 // pred_check
        %p458 = pneg %p106
      $region42: #{_lambda_.26} parent=39 // pred_check_branch
        %460 = sbr.rel (%p458) target = $region44
      $region43: #{_lambda_.26} parent=39 // pred_region
        %s461 = smul.u32 64, %s15
        %p462 = scmp.lt.s32.totalorder %s461, 127
        %s463 = scalar_select %p462, %s461, 127
        %s464 = smul.addr %s463, 8
        %s465 = scalar_lea.vmem %s3, %s464
      $region44: #{_lambda_.26} parent=39 // pred_fallthru
        _
    $region40: #{_lambda_.26} parent=5 // pred_fallthru
      _
  $region6: #{_lambda_.26} parent=0 // loop_footer
    %s13 = sadd.s32 1, %s9
  $region7: #{_lambda_.26} parent=0 // loop_footer_branch
    %8 = sbr.rel target = $region3
  $region8: #{_lambda_.26} parent=0 // loop_exit
    _

// kernel: tile.86
$region0: #{tile.86}
  #allocation0 [shape = 's32[1]{0}', space=sflag, size = 0x4, scoped, tag = 'scoped memory for tile.86']
  %s0 = inlined_call_operand.vmem [shape: f32[3], index: 0, kind: input, shape index: {}]
  %s1 = inlined_call_operand.vmem [shape: f32[4,3], index: 1, kind: output, shape index: {}]
  // Predicated region
  $region2: #{tile.86} parent=0 // pred_check
    _
  $region3: #{tile.86} parent=0 // pred_check_branch
    %3 = sbr.rel (0) target = $region5
  $region4: #{tile.86} parent=0 // pred_region
    _
  $region5: #{tile.86} parent=0 // pred_fallthru
    _
  %v4 = vld [vmem:[%s0] ss:$0 sm:$0xff]
  %5 = vst [vmem:[%s1] sm:$0xf] %v4

// kernel: tile.87
$region0: #{tile.87}
  %s0 = inlined_call_operand.vmem [shape: f32[4,3], index: 0, kind: input, shape index: {}]
  %s1 = inlined_call_operand.vmem [shape: f32[1,12], index: 1, kind: output, shape index: {}]
  $region1: #{tile.87} parent=0
    #allocation0 [shape = 'u8[4096]{0}', space=vmem, size = 0x1000, scoped, tag = 'scoped mem for output reshape']
    #allocation1 [shape = 'u8[4096]{0}', space=vmem, size = 0x1000, scoped, tag = 'scoped mem for input reshape']
    %s3 = sshll.u32 1, 4
    %s4 = ssub.s32 %s3, 1
    %v5 = vld [vmem:[%s0] sm:%s4]
    %6 = vst [vmem:[#allocation1] sm:%s4] %v5
    %v7 = vld [vmem:[#allocation1] sm:$0x1]
    %vm8 = vcmask 23552
    %9 = vst.msk [vmem:[#allocation0] sm:$0x1] %vm8, %v7
    %s10 = scalar_lea.vmem [#allocation1], 3
    %v11 = vld [vmem:[%s10] sm:$0x1]
    %12 = vrot.lane.b32.xlu0 %v11, 9
    %v13 = vpop.permute.xlu0 %12
    %vm14 = vcmask 97352
    %15 = vst.msk [vmem:[#allocation0] sm:$0x1] %vm14, %v13
    %s16 = scalar_lea.vmem [#allocation1], 2
    %v17 = vld [vmem:[%s16] sm:$0x1]
    %18 = vrot.lane.b32.xlu0 %v17, 6
    %v19 = vpop.permute.xlu0 %18
    %vm20 = vcmask 72752
    %21 = vst.msk [vmem:[#allocation0] sm:$0x1] %vm20, %v19
    %s22 = scalar_lea.vmem [#allocation1], 1
    %v23 = vld [vmem:[%s22] sm:$0x1]
    %24 = vrot.lane.b32.xlu0 %v23, 3
    %v25 = vpop.permute.xlu0 %24
    %vm26 = vcmask 48152
    %27 = vst.msk [vmem:[#allocation0] sm:$0x1] %vm26, %v25
    %s29 = sshll.u32 1, 1
    %s30 = ssub.s32 %s29, 1
    %v32 = vld [vmem:[#allocation0] sm:%s30]
    %s33 = sshll.u32 1, 1
    %s34 = ssub.s32 %s33, 1
    %35 = vst [vmem:[%s1] sm:%s34] %v32

// kernel: _lambda_.27
$region0: #{_lambda_.27}
  #allocation0 [shape = 'u32[]', space=smem, size = 0x4, offset = 0x4, fixed_abs, tag = 'smem constant byte address 0x4 - core index']
  #allocation1 [shape = 'u32[144,128]{1,0:T(1,128)}', space=vmem, size = 0x12000, scoped, tag = 'internal scratch']
  %s0 = inlined_call_operand.vmem [shape: bf16[2560,64], index: 0, kind: input, shape index: {}]
  %s1 = inlined_call_operand.vmem [shape: bf16[64,128], index: 1, kind: input, shape index: {}]
  %s2 = inlined_call_operand.vmem [shape: f32[1,128], index: 2, kind: input, shape index: {}]
  %s3 = inlined_call_operand.vmem [shape: f32[1,128], index: 3, kind: input, shape index: {}, may-alias: {3,4}]
  %s4 = inlined_call_operand.vmem [shape: f32[1,128], index: 4, kind: input, shape index: {}, may-alias: {3,4}]
  %s5 = inlined_call_operand.vmem [shape: f32[2560,128], index: 5, kind: output, shape index: {}]
  %s6 = sld [smem:[#allocation0]]
  $region53: #{_lambda_.27} parent=0
    _
  %s8 = ssub.s32 1, %s6
  %s9 = scalar_select 0, %s8, %s6
  loop: start=0, step=1, limit=7
  $region2: #{_lambda_.27} parent=0 // loop_pre_header
    _
  $region3: #{_lambda_.27} parent=0 // loop_header
    %s11 = sphi 0, %s15
    %p12 = scmp.ge.s32.totalorder %s11, 7
    %s21 = sphi 0, %s23
    %s24 = sphi 0, %s21
    %s25 = sphi 0, %s24
    %s41 = sphi 0, %s25
    %s45 = sphi 0, %s45
    %s47 = sphi 0, %s45
    %s48 = sphi 0, %s47
    %s62 = sphi 0, %s48
    %s66 = sphi 0, %s66
    %s68 = sphi 0, %s66
    %s69 = sphi 0, %s68
    %s83 = sphi 0, %s69
    %s87 = sphi 0, %s87
    %s89 = sphi 0, %s87
    %s90 = sphi 0, %s89
    %s104 = sphi 0, %s90
    %s108 = sphi 0, %s108
    %s110 = sphi 0, %s108
    %s111 = sphi 0, %s110
    %s125 = sphi 0, %s111
    %s131 = sphi 0, %s133
    %s134 = sphi 0, %s131
    %s135 = sphi 0, %s134
    %s151 = sphi 0, %s135
  $region4: #{_lambda_.27} parent=0 // loop_header_branch
    %14 = sbr.rel (%p12) target = $region8
  $region5: #{_lambda_.27} parent=0 // loop_body
    %s16 = ssub.s32 %s11, 1
    %s17 = ssub.s32 %s11, 2
    %s18 = sadd.s32 %s11, 1
    %s19 = ssub.s32 %s11, %s18
    %p20 = scmp.eq.s32.totalorder %s19, 0
    %s22 = sadd.s32 %s21, 1
    %s23 = scalar_select %p20, %s21, %s22
    %p26 = pneg %p20
    %p27 = scmp.eq.s32.totalorder %s11, 4
    %p28 = por %p26, %p27
    %p29 = scmp.ne.s32.totalorder %s21, %s24
    %p30 = scmp.eq.s32.totalorder %s11, 0
    %p31 = por %p29, %p30
    %p32 = scmp.ne.s32.totalorder %s21, %s24
    %p33 = scmp.eq.s32.totalorder %s16, 4
    %p34 = por %p32, %p33
    %p35 = scmp.ne.s32.totalorder %s24, %s25
    %p36 = scmp.eq.s32.totalorder %s16, 0
    %p37 = por %p35, %p36
    %p38 = scmp.ne.s32.totalorder %s24, %s25
    %p39 = scmp.eq.s32.totalorder %s17, 4
    %p40 = por %p38, %p39
    %p42 = scmp.ne.s32.totalorder %s25, %s41
    %p43 = scmp.eq.s32.totalorder %s17, 0
    %p44 = por %p42, %p43
    %s46 = sadd.s32 %s45, 1
    %p49 = scmp.eq.s32.totalorder %s11, 4
    %p50 = scmp.ne.s32.totalorder %s45, %s47
    %p51 = scmp.eq.s32.totalorder %s11, 0
    %p52 = por %p50, %p51
    %p53 = scmp.ne.s32.totalorder %s45, %s47
    %p54 = scmp.eq.s32.totalorder %s16, 4
    %p55 = por %p53, %p54
    %p56 = scmp.ne.s32.totalorder %s47, %s48
    %p57 = scmp.eq.s32.totalorder %s16, 0
    %p58 = por %p56, %p57
    %p59 = scmp.ne.s32.totalorder %s47, %s48
    %p60 = scmp.eq.s32.totalorder %s17, 4
    %p61 = por %p59, %p60
    %p63 = scmp.ne.s32.totalorder %s48, %s62
    %p64 = scmp.eq.s32.totalorder %s17, 0
    %p65 = por %p63, %p64
    %s67 = sadd.s32 %s66, 1
    %p70 = scmp.eq.s32.totalorder %s11, 4
    %p71 = scmp.ne.s32.totalorder %s66, %s68
    %p72 = scmp.eq.s32.totalorder %s11, 0
    %p73 = por %p71, %p72
    %p74 = scmp.ne.s32.totalorder %s66, %s68
    %p75 = scmp.eq.s32.totalorder %s16, 4
    %p76 = por %p74, %p75
    %p77 = scmp.ne.s32.totalorder %s68, %s69
    %p78 = scmp.eq.s32.totalorder %s16, 0
    %p79 = por %p77, %p78
    %p80 = scmp.ne.s32.totalorder %s68, %s69
    %p81 = scmp.eq.s32.totalorder %s17, 4
    %p82 = por %p80, %p81
    %p84 = scmp.ne.s32.totalorder %s69, %s83
    %p85 = scmp.eq.s32.totalorder %s17, 0
    %p86 = por %p84, %p85
    %s88 = sadd.s32 %s87, 1
    %p91 = scmp.eq.s32.totalorder %s11, 4
    %p92 = scmp.ne.s32.totalorder %s87, %s89
    %p93 = scmp.eq.s32.totalorder %s11, 0
    %p94 = por %p92, %p93
    %p95 = scmp.ne.s32.totalorder %s87, %s89
    %p96 = scmp.eq.s32.totalorder %s16, 4
    %p97 = por %p95, %p96
    %p98 = scmp.ne.s32.totalorder %s89, %s90
    %p99 = scmp.eq.s32.totalorder %s16, 0
    %p100 = por %p98, %p99
    %p101 = scmp.ne.s32.totalorder %s89, %s90
    %p102 = scmp.eq.s32.totalorder %s17, 4
    %p103 = por %p101, %p102
    %p105 = scmp.ne.s32.totalorder %s90, %s104
    %p106 = scmp.eq.s32.totalorder %s17, 0
    %p107 = por %p105, %p106
    %s109 = sadd.s32 %s108, 1
    %p112 = scmp.eq.s32.totalorder %s11, 4
    %p113 = scmp.ne.s32.totalorder %s108, %s110
    %p114 = scmp.eq.s32.totalorder %s11, 0
    %p115 = por %p113, %p114
    %p116 = scmp.ne.s32.totalorder %s108, %s110
    %p117 = scmp.eq.s32.totalorder %s16, 4
    %p118 = por %p116, %p117
    %p119 = scmp.ne.s32.totalorder %s110, %s111
    %p120 = scmp.eq.s32.totalorder %s16, 0
    %p121 = por %p119, %p120
    %p122 = scmp.ne.s32.totalorder %s110, %s111
    %p123 = scmp.eq.s32.totalorder %s17, 4
    %p124 = por %p122, %p123
    %p126 = scmp.ne.s32.totalorder %s111, %s125
    %p127 = scmp.eq.s32.totalorder %s17, 0
    %p128 = por %p126, %p127
    %s129 = ssub.s32 %s11, %s18
    %p130 = scmp.eq.s32.totalorder %s129, 0
    %s132 = sadd.s32 %s131, 1
    %s133 = scalar_select %p130, %s131, %s132
    %p136 = pneg %p130
    %p137 = scmp.eq.s32.totalorder %s11, 4
    %p138 = por %p136, %p137
    %p139 = scmp.ne.s32.totalorder %s131, %s134
    %p140 = scmp.eq.s32.totalorder %s11, 0
    %p141 = por %p139, %p140
    %p142 = scmp.ne.s32.totalorder %s131, %s134
    %p143 = scmp.eq.s32.totalorder %s16, 4
    %p144 = por %p142, %p143
    %p145 = scmp.ne.s32.totalorder %s134, %s135
    %p146 = scmp.eq.s32.totalorder %s16, 0
    %p147 = por %p145, %p146
    %p148 = scmp.ne.s32.totalorder %s134, %s135
    %p149 = scmp.eq.s32.totalorder %s17, 4
    %p150 = por %p148, %p149
    %p152 = scmp.ne.s32.totalorder %s135, %s151
    %p153 = scmp.eq.s32.totalorder %s17, 0
    %p154 = por %p152, %p153
    %p155 = scmp.le.s32.totalorder 1, %s11
    %p156 = scmp.lt.s32.totalorder %s11, 6
    %p157 = pnand %p155, %p156
    %p158 = pneg %p157
    // Predicated region
    $region9: #{_lambda_.27} parent=5 // pred_check
      _
    $region10: #{_lambda_.27} parent=5 // pred_check_branch
      %160 = sbr.rel (%p157) target = $region12
    $region11: #{_lambda_.27} parent=5 // pred_region
      %s161 = ssub.s32 %s11, 1
      // Predicated region
      $region13: #{_lambda_.27} parent=11 // pred_check
        %p162 = pneg %p58
      $region14: #{_lambda_.27} parent=11 // pred_check_branch
        %164 = sbr.rel (%p162) target = $region16
      $region15: #{_lambda_.27} parent=11 // pred_region
        _
      $region16: #{_lambda_.27} parent=11 // pred_fallthru
        _
      // Predicated region
      $region17: #{_lambda_.27} parent=11 // pred_check
        %p165 = pneg %p79
      $region18: #{_lambda_.27} parent=11 // pred_check_branch
        %167 = sbr.rel (%p165) target = $region20
      $region19: #{_lambda_.27} parent=11 // pred_region
        _
      $region20: #{_lambda_.27} parent=11 // pred_fallthru
        _
      // Predicated region
      $region21: #{_lambda_.27} parent=11 // pred_check
        %p168 = pneg %p100
      $region22: #{_lambda_.27} parent=11 // pred_check_branch
        %170 = sbr.rel (%p168) target = $region24
      $region23: #{_lambda_.27} parent=11 // pred_region
        _
      $region24: #{_lambda_.27} parent=11 // pred_fallthru
        _
      // Predicated region
      $region25: #{_lambda_.27} parent=11 // pred_check
        %p171 = pneg %p121
      $region26: #{_lambda_.27} parent=11 // pred_check_branch
        %173 = sbr.rel (%p171) target = $region28
      $region27: #{_lambda_.27} parent=11 // pred_region
        _
      $region28: #{_lambda_.27} parent=11 // pred_fallthru
        _
    $region12: #{_lambda_.27} parent=5 // pred_fallthru
      _
    %p174 = scmp.lt.s32.totalorder %s11, 5
    // Predicated region
    $region29: #{_lambda_.27} parent=5 // pred_check
      %p175 = pneg %p174
    $region30: #{_lambda_.27} parent=5 // pred_check_branch
      %177 = sbr.rel (%p175) target = $region32
    $region31: #{_lambda_.27} parent=5 // pred_region
      // Predicated region
      $region33: #{_lambda_.27} parent=31 // pred_check
        %p178 = pneg %p31
      $region34: #{_lambda_.27} parent=31 // pred_check_branch
        %180 = sbr.rel (%p178) target = $region36
      $region35: #{_lambda_.27} parent=31 // pred_region
        %s181 = smul.u32 64, %s11
        %p182 = scmp.lt.s32.totalorder %s181, 319
        %s183 = scalar_select %p182, %s181, 319
        %s184 = smul.addr %s183, 4
        %s185 = scalar_lea.vmem %s0, %s184
        %s186 = smul.u32 64, %s11
      $region36: #{_lambda_.27} parent=31 // pred_fallthru
        _
    $region32: #{_lambda_.27} parent=5 // pred_fallthru
      _
    %p187 = scmp.le.s32.totalorder 1, %s11
    %p188 = scmp.lt.s32.totalorder %s11, 6
    %p189 = pnand %p187, %p188
    %p190 = pneg %p189
    // Predicated region
    $region37: #{_lambda_.27} parent=5 // pred_check
      _
    $region38: #{_lambda_.27} parent=5 // pred_check_branch
      %192 = sbr.rel (%p189) target = $region40
    $region39: #{_lambda_.27} parent=5 // pred_region
      %s193 = ssub.s32 %s11, 1
      %s194 = smul.u32 64, %s16
      %p195 = scmp.lt.s32.totalorder %s194, 319
      %s196 = scalar_select %p195, %s194, 319
      %s197 = smul.addr %s196, 4
      %s198 = scalar_lea.vmem %s0, %s197
      %p199 = pneg %p37
      %p200 = pneg %p34
      %p201 = pneg %p58
      %p202 = pneg %p55
      %p203 = pneg %p79
      %p204 = pneg %p76
      %p205 = pneg %p100
      %p206 = pneg %p97
      %p207 = pneg %p121
      %p208 = pneg %p118
      %p209 = pneg %p147
      %p210 = pneg %p144
      %s211 = smul.u32 64, %s16
      %p212 = scmp.lt.s32.totalorder %s211, 319
      %s213 = scalar_select %p212, %s211, 319
      %s214 = smul.addr %s213, 8
      %s215 = scalar_lea.vmem %s5, %s214
      %s216 = smul.u32 64, %s16
      %p217 = scmp.lt.s32.totalorder %s216, 319
      %s218 = scalar_select %p217, %s216, 319
      %s219 = smul.addr %s218, 4
      %s220 = scalar_lea.vmem %s0, %s219
      %s221 = smul.u32 64, %s16
      %s222 = smul.u32 64, %s16
      %p223 = scmp.lt.s32.totalorder %s222, 319
      %s224 = scalar_select %p223, %s222, 319
      %s225 = smul.addr %s224, 8
      %s226 = scalar_lea.vmem %s5, %s225
      %s227 = smul.u32 64, %s16
      %v229 = vld [vmem:[%s220] sm:$0xf]
      %v230 = vld [vmem:[%s220 + $0x4] sm:$0xf]
      %v231 = vld [vmem:[%s220 + $0x8] sm:$0xf]
      %v232 = vld [vmem:[%s220 + $0xc] sm:$0xf]
      %v233 = vld [vmem:[%s220 + $0x10] sm:$0xf]
      %v234 = vld [vmem:[%s220 + $0x14] sm:$0xf]
      %v235 = vld [vmem:[%s220 + $0x18] sm:$0xf]
      %v236 = vld [vmem:[%s220 + $0x1c] sm:$0xf]
      %v237 = vld [vmem:[%s220 + $0x20] sm:$0xf]
      %v238 = vld [vmem:[%s220 + $0x24] sm:$0xf]
      %v239 = vld [vmem:[%s220 + $0x28] sm:$0xf]
      %v240 = vld [vmem:[%s220 + $0x2c] sm:$0xf]
      %v241 = vld [vmem:[%s220 + $0x30] sm:$0xf]
      %v242 = vld [vmem:[%s220 + $0x34] sm:$0xf]
      %v243 = vld [vmem:[%s220 + $0x38] sm:$0xf]
      %v244 = vld [vmem:[%s220 + $0x3c] sm:$0xf]
      %v245 = vld [vmem:[%s220 + $0x40] sm:$0xf]
      %v246 = vld [vmem:[%s220 + $0x44] sm:$0xf]
      %v247 = vld [vmem:[%s220 + $0x48] sm:$0xf]
      %v248 = vld [vmem:[%s220 + $0x4c] sm:$0xf]
      %v249 = vld [vmem:[%s220 + $0x50] sm:$0xf]
      %v250 = vld [vmem:[%s220 + $0x54] sm:$0xf]
      %v251 = vld [vmem:[%s220 + $0x58] sm:$0xf]
      %v252 = vld [vmem:[%s220 + $0x5c] sm:$0xf]
      %v253 = vld [vmem:[%s220 + $0x60] sm:$0xf]
      %v254 = vld [vmem:[%s220 + $0x64] sm:$0xf]
      %v255 = vld [vmem:[%s220 + $0x68] sm:$0xf]
      %v256 = vld [vmem:[%s220 + $0x6c] sm:$0xf]
      %v257 = vld [vmem:[%s220 + $0x70] sm:$0xf]
      %v258 = vld [vmem:[%s220 + $0x74] sm:$0xf]
      %v259 = vld [vmem:[%s220 + $0x78] sm:$0xf]
      %v260 = vld [vmem:[%s220 + $0x7c] sm:$0xf]
      %v261 = vld [vmem:[%s220 + $0x80] sm:$0xf]
      %v262 = vld [vmem:[%s220 + $0x84] sm:$0xf]
      %v263 = vld [vmem:[%s220 + $0x88] sm:$0xf]
      %v264 = vld [vmem:[%s220 + $0x8c] sm:$0xf]
      %v265 = vld [vmem:[%s220 + $0x90] sm:$0xf]
      %v266 = vld [vmem:[%s220 + $0x94] sm:$0xf]
      %v267 = vld [vmem:[%s220 + $0x98] sm:$0xf]
      %v268 = vld [vmem:[%s220 + $0x9c] sm:$0xf]
      %v269 = vld [vmem:[%s220 + $0xa0] sm:$0xf]
      %v270 = vld [vmem:[%s220 + $0xa4] sm:$0xf]
      %v271 = vld [vmem:[%s220 + $0xa8] sm:$0xf]
      %v272 = vld [vmem:[%s220 + $0xac] sm:$0xf]
      %v273 = vld [vmem:[%s220 + $0xb0] sm:$0xf]
      %v274 = vld [vmem:[%s220 + $0xb4] sm:$0xf]
      %v275 = vld [vmem:[%s220 + $0xb8] sm:$0xf]
      %v276 = vld [vmem:[%s220 + $0xbc] sm:$0xf]
      %v277 = vld [vmem:[%s220 + $0xc0] sm:$0xf]
      %v278 = vld [vmem:[%s220 + $0xc4] sm:$0xf]
      %v279 = vld [vmem:[%s220 + $0xc8] sm:$0xf]
      %v280 = vld [vmem:[%s220 + $0xcc] sm:$0xf]
      %v281 = vld [vmem:[%s220 + $0xd0] sm:$0xf]
      %v282 = vld [vmem:[%s220 + $0xd4] sm:$0xf]
      %v283 = vld [vmem:[%s220 + $0xd8] sm:$0xf]
      %v284 = vld [vmem:[%s220 + $0xdc] sm:$0xf]
      %v285 = vld [vmem:[%s220 + $0xe0] sm:$0xf]
      %v286 = vld [vmem:[%s220 + $0xe4] sm:$0xf]
      %v287 = vld [vmem:[%s220 + $0xe8] sm:$0xf]
      %v288 = vld [vmem:[%s220 + $0xec] sm:$0xf]
      %v289 = vld [vmem:[%s220 + $0xf0] sm:$0xf]
      %v290 = vld [vmem:[%s220 + $0xf4] sm:$0xf]
      %v291 = vld [vmem:[%s220 + $0xf8] sm:$0xf]
      %v292 = vld [vmem:[%s220 + $0xfc] sm:$0xf]
      %v293 = vld [vmem:[%s1] sm:$0xf]
      %v294 = vld [vmem:[%s1 + $0x4] sm:$0xf]
      %v295 = vld [vmem:[%s1 + $0x8] sm:$0xf]
      %v296 = vld [vmem:[%s1 + $0xc] sm:$0xf]
      %v297 = vld [vmem:[%s1 + $0x10] sm:$0xf]
      %v298 = vld [vmem:[%s1 + $0x14] sm:$0xf]
      %v299 = vld [vmem:[%s1 + $0x18] sm:$0xf]
      %v300 = vld [vmem:[%s1 + $0x1c] sm:$0xf]
      %v301 = vld [vmem:[%s2] sm:$0x1]
      %v303 = vlaneseq
      %v304 = vshrl.u32 %v303, 7
      %v305 = vsub.s32 0, %v304
      %v306 = vrot.slane %v301, %v305
      %v372 = vunpack.c.l.b16 %v229
      %v373 = vunpack.c.l.b16 %v230
      %v374 = vunpack.c.l.b16 %v231
      %v375 = vunpack.c.l.b16 %v232
      %v376 = vunpack.c.l.b16 %v233
      %v377 = vunpack.c.l.b16 %v234
      %v378 = vunpack.c.l.b16 %v235
      %v379 = vunpack.c.l.b16 %v236
      %v380 = vunpack.c.l.b16 %v237
      %v381 = vunpack.c.l.b16 %v238
      %v382 = vunpack.c.l.b16 %v239
      %v383 = vunpack.c.l.b16 %v240
      %v384 = vunpack.c.l.b16 %v241
      %v385 = vunpack.c.l.b16 %v242
      %v386 = vunpack.c.l.b16 %v243
      %v387 = vunpack.c.l.b16 %v244
      %v388 = vunpack.c.l.b16 %v245
      %v389 = vunpack.c.l.b16 %v246
      %v390 = vunpack.c.l.b16 %v247
      %v391 = vunpack.c.l.b16 %v248
      %v392 = vunpack.c.l.b16 %v249
      %v393 = vunpack.c.l.b16 %v250
      %v394 = vunpack.c.l.b16 %v251
      %v395 = vunpack.c.l.b16 %v252
      %v396 = vunpack.c.l.b16 %v253
      %v397 = vunpack.c.l.b16 %v254
      %v398 = vunpack.c.l.b16 %v255
      %v399 = vunpack.c.l.b16 %v256
      %v400 = vunpack.c.l.b16 %v257
      %v401 = vunpack.c.l.b16 %v258
      %v402 = vunpack.c.l.b16 %v259
      %v403 = vunpack.c.l.b16 %v260
      %v404 = vunpack.c.l.b16 %v261
      %v405 = vunpack.c.l.b16 %v262
      %v406 = vunpack.c.l.b16 %v263
      %v407 = vunpack.c.l.b16 %v264
      %v408 = vunpack.c.l.b16 %v265
      %v409 = vunpack.c.l.b16 %v266
      %v410 = vunpack.c.l.b16 %v267
      %v411 = vunpack.c.l.b16 %v268
      %v412 = vunpack.c.l.b16 %v269
      %v413 = vunpack.c.l.b16 %v270
      %v414 = vunpack.c.l.b16 %v271
      %v415 = vunpack.c.l.b16 %v272
      %v416 = vunpack.c.l.b16 %v273
      %v417 = vunpack.c.l.b16 %v274
      %v418 = vunpack.c.l.b16 %v275
      %v419 = vunpack.c.l.b16 %v276
      %v420 = vunpack.c.l.b16 %v277
      %v421 = vunpack.c.l.b16 %v278
      %v422 = vunpack.c.l.b16 %v279
      %v423 = vunpack.c.l.b16 %v280
      %v424 = vunpack.c.l.b16 %v281
      %v425 = vunpack.c.l.b16 %v282
      %v426 = vunpack.c.l.b16 %v283
      %v427 = vunpack.c.l.b16 %v284
      %v428 = vunpack.c.l.b16 %v285
      %v429 = vunpack.c.l.b16 %v286
      %v430 = vunpack.c.l.b16 %v287
      %v431 = vunpack.c.l.b16 %v288
      %v432 = vunpack.c.l.b16 %v289
      %v433 = vunpack.c.l.b16 %v290
      %v434 = vunpack.c.l.b16 %v291
      %v435 = vunpack.c.l.b16 %v292
      %v436 = vpack.c.b16 %v373, %v372
      %v437 = vpack.c.b16 %v375, %v374
      %v438 = vpack.c.b16 %v377, %v376
      %v439 = vpack.c.b16 %v379, %v378
      %v440 = vpack.c.b16 %v381, %v380
      %v441 = vpack.c.b16 %v383, %v382
      %v442 = vpack.c.b16 %v385, %v384
      %v443 = vpack.c.b16 %v387, %v386
      %v444 = vpack.c.b16 %v389, %v388
      %v445 = vpack.c.b16 %v391, %v390
      %v446 = vpack.c.b16 %v393, %v392
      %v447 = vpack.c.b16 %v395, %v394
      %v448 = vpack.c.b16 %v397, %v396
      %v449 = vpack.c.b16 %v399, %v398
      %v450 = vpack.c.b16 %v401, %v400
      %v451 = vpack.c.b16 %v403, %v402
      %v452 = vpack.c.b16 %v405, %v404
      %v453 = vpack.c.b16 %v407, %v406
      %v454 = vpack.c.b16 %v409, %v408
      %v455 = vpack.c.b16 %v411, %v410
      %v456 = vpack.c.b16 %v413, %v412
      %v457 = vpack.c.b16 %v415, %v414
      %v458 = vpack.c.b16 %v417, %v416
      %v459 = vpack.c.b16 %v419, %v418
      %v460 = vpack.c.b16 %v421, %v420
      %v461 = vpack.c.b16 %v423, %v422
      %v462 = vpack.c.b16 %v425, %v424
      %v463 = vpack.c.b16 %v427, %v426
      %v464 = vpack.c.b16 %v429, %v428
      %v465 = vpack.c.b16 %v431, %v430
      %v466 = vpack.c.b16 %v433, %v432
      %v467 = vpack.c.b16 %v435, %v434
      %v476 = vunpack.c.l.b16 %v293
      %v477 = vunpack.c.l.b16 %v294
      %v478 = vunpack.c.l.b16 %v295
      %v479 = vunpack.c.l.b16 %v296
      %v480 = vunpack.c.l.b16 %v297
      %v481 = vunpack.c.l.b16 %v298
      %v482 = vunpack.c.l.b16 %v299
      %v483 = vunpack.c.l.b16 %v300
      %v484 = vpack.c.b16 %v477, %v476
      %v485 = vpack.c.b16 %v479, %v478
      %v486 = vpack.c.b16 %v481, %v480
      %v487 = vpack.c.b16 %v483, %v482
      %vm492 = vcmask 523264
      %v494 = vsel %vm492, %v436, 0
      %v497 = vsel %vm492, %v437, 0
      %v500 = vsel %vm492, %v438, 0
      %v503 = vsel %vm492, %v439, 0
      %v506 = vsel %vm492, %v440, 0
      %v509 = vsel %vm492, %v441, 0
      %v512 = vsel %vm492, %v442, 0
      %v515 = vsel %vm492, %v443, 0
      %v518 = vsel %vm492, %v444, 0
      %v521 = vsel %vm492, %v445, 0
      %v524 = vsel %vm492, %v446, 0
      %v527 = vsel %vm492, %v447, 0
      %v530 = vsel %vm492, %v448, 0
      %v533 = vsel %vm492, %v449, 0
      %v536 = vsel %vm492, %v450, 0
      %v539 = vsel %vm492, %v451, 0
      %v542 = vsel %vm492, %v452, 0
      %v545 = vsel %vm492, %v453, 0
      %v548 = vsel %vm492, %v454, 0
      %v551 = vsel %vm492, %v455, 0
      %v554 = vsel %vm492, %v456, 0
      %v557 = vsel %vm492, %v457, 0
      %v560 = vsel %vm492, %v458, 0
      %v563 = vsel %vm492, %v459, 0
      %v566 = vsel %vm492, %v460, 0
      %v569 = vsel %vm492, %v461, 0
      %v572 = vsel %vm492, %v462, 0
      %v575 = vsel %vm492, %v463, 0
      %v578 = vsel %vm492, %v464, 0
      %v581 = vsel %vm492, %v465, 0
      %v584 = vsel %vm492, %v466, 0
      %v587 = vsel %vm492, %v467, 0
      %589 = vmatprep.subr.bf16.mxu0 0
      %590 = vmatpush1.bf16.msra.mxu0 0
      %591 = vmatprep.subr.bf16.mxu0 0
      %592 = vmatpush1.bf16.msra.mxu0 0
      %593 = vmatprep.subr.bf16.mxu0 0
      %594 = vmatpush1.bf16.msra.mxu0 0
      %595 = vmatprep.subr.bf16.mxu0 0
      %596 = vmatpush1.bf16.msra.mxu0 0
      %597 = vmatprep.subr.bf16.mxu0 0
      %598 = vmatpush1.bf16.msra.mxu0 %v487
      %599 = vmatprep.subr.bf16.mxu0 0
      %600 = vmatpush1.bf16.msra.mxu0 %v486
      %601 = vmatprep.subr.bf16.mxu0 0
      %602 = vmatpush1.bf16.msra.mxu0 %v485
      %603 = vmatprep.subr.bf16.mxu0 0
      %604 = vmatpush1.bf16.msra.mxu0 %v484
      %605 = vmatprep.subr.bf16.mxu0 0
      %606 = vmatpush2.bf16.msra.mxu0 0
      %607 = vmatprep.subr.bf16.mxu0 0
      %608 = vmatpush2.bf16.msra.mxu0 0
      %609 = vmatprep.subr.bf16.mxu0 0
      %610 = vmatpush2.bf16.msra.mxu0 0
      %611 = vmatprep.subr.bf16.mxu0 0
      %612 = vmatpush2.bf16.msra.mxu0 0
      %613 = vmatprep.subr.bf16.mxu0 0
      %614 = vmatpush2.bf16.msra.mxu0 0
      %615 = vmatprep.subr.bf16.mxu0 0
      %616 = vmatpush2.bf16.msra.mxu0 0
      %617 = vmatprep.subr.bf16.mxu0 0
      %618 = vmatpush2.bf16.msra.mxu0 0
      %619 = vmatprep.subr.bf16.mxu0 0
      %620 = vmatpush2.bf16.msra.mxu0 0
      %621 = vmatprep.mubr.bf16.mxu0 0
      %622 = vmatmul.mubr.bf16.gmra.mxu0 %v494
      %v623 = vpop.f32.mrf.mxu0
      %v624 = vadd.f32 %v306, %v623
      %v625 = vpop.f32.mrf.mxu0
      %v626 = vpop.f32.mrf.mxu0
      %v627 = vadd.f32 %v306, %v626
      %v628 = vpop.f32.mrf.mxu0
      %629 = vmatprep.mubr.bf16.mxu0 0
      %630 = vmatmul.mubr.bf16.gmra.mxu0 %v497
      %v631 = vpop.f32.mrf.mxu0
      %v632 = vadd.f32 %v306, %v631
      %v633 = vpop.f32.mrf.mxu0
      %v634 = vpop.f32.mrf.mxu0
      %v635 = vadd.f32 %v306, %v634
      %v636 = vpop.f32.mrf.mxu0
      %637 = vmatprep.mubr.bf16.mxu0 0
      %638 = vmatmul.mubr.bf16.gmra.mxu0 %v500
      %v639 = vpop.f32.mrf.mxu0
      %v640 = vadd.f32 %v306, %v639
      %v641 = vpop.f32.mrf.mxu0
      %v642 = vpop.f32.mrf.mxu0
      %v643 = vadd.f32 %v306, %v642
      %v644 = vpop.f32.mrf.mxu0
      %645 = vmatprep.mubr.bf16.mxu0 0
      %646 = vmatmul.mubr.bf16.gmra.mxu0 %v503
      %v647 = vpop.f32.mrf.mxu0
      %v648 = vadd.f32 %v306, %v647
      %v649 = vpop.f32.mrf.mxu0
      %v650 = vpop.f32.mrf.mxu0
      %v651 = vadd.f32 %v306, %v650
      %v652 = vpop.f32.mrf.mxu0
      %653 = vmatprep.mubr.bf16.mxu0 0
      %654 = vmatmul.mubr.bf16.gmra.mxu0 %v506
      %v655 = vpop.f32.mrf.mxu0
      %v656 = vadd.f32 %v306, %v655
      %v657 = vpop.f32.mrf.mxu0
      %v658 = vpop.f32.mrf.mxu0
      %v659 = vadd.f32 %v306, %v658
      %v660 = vpop.f32.mrf.mxu0
      %661 = vmatprep.mubr.bf16.mxu0 0
      %662 = vmatmul.mubr.bf16.gmra.mxu0 %v509
      %v663 = vpop.f32.mrf.mxu0
      %v664 = vadd.f32 %v306, %v663
      %v665 = vpop.f32.mrf.mxu0
      %v666 = vpop.f32.mrf.mxu0
      %v667 = vadd.f32 %v306, %v666
      %v668 = vpop.f32.mrf.mxu0
      %669 = vmatprep.mubr.bf16.mxu0 0
      %670 = vmatmul.mubr.bf16.gmra.mxu0 %v512
      %v671 = vpop.f32.mrf.mxu0
      %v672 = vadd.f32 %v306, %v671
      %v673 = vpop.f32.mrf.mxu0
      %v674 = vpop.f32.mrf.mxu0
      %v675 = vadd.f32 %v306, %v674
      %v676 = vpop.f32.mrf.mxu0
      %677 = vmatprep.mubr.bf16.mxu0 0
      %678 = vmatmul.mubr.bf16.gmra.mxu0 %v515
      %v679 = vpop.f32.mrf.mxu0
      %v680 = vadd.f32 %v306, %v679
      %v681 = vpop.f32.mrf.mxu0
      %v682 = vpop.f32.mrf.mxu0
      %v683 = vadd.f32 %v306, %v682
      %v684 = vpop.f32.mrf.mxu0
      %685 = vmatprep.mubr.bf16.mxu0 0
      %686 = vmatmul.mubr.bf16.gmra.mxu0 %v518
      %v687 = vpop.f32.mrf.mxu0
      %v688 = vadd.f32 %v306, %v687
      %v689 = vpop.f32.mrf.mxu0
      %v690 = vpop.f32.mrf.mxu0
      %v691 = vadd.f32 %v306, %v690
      %v692 = vpop.f32.mrf.mxu0
      %693 = vmatprep.mubr.bf16.mxu0 0
      %694 = vmatmul.mubr.bf16.gmra.mxu0 %v521
      %v695 = vpop.f32.mrf.mxu0
      %v696 = vadd.f32 %v306, %v695
      %v697 = vpop.f32.mrf.mxu0
      %v698 = vpop.f32.mrf.mxu0
      %v699 = vadd.f32 %v306, %v698
      %v700 = vpop.f32.mrf.mxu0
      %701 = vmatprep.mubr.bf16.mxu0 0
      %702 = vmatmul.mubr.bf16.gmra.mxu0 %v524
      %v703 = vpop.f32.mrf.mxu0
      %v704 = vadd.f32 %v306, %v703
      %v705 = vpop.f32.mrf.mxu0
      %v706 = vpop.f32.mrf.mxu0
      %v707 = vadd.f32 %v306, %v706
      %v708 = vpop.f32.mrf.mxu0
      %709 = vmatprep.mubr.bf16.mxu0 0
      %710 = vmatmul.mubr.bf16.gmra.mxu0 %v527
      %v711 = vpop.f32.mrf.mxu0
      %v712 = vadd.f32 %v306, %v711
      %v713 = vpop.f32.mrf.mxu0
      %v714 = vpop.f32.mrf.mxu0
      %v715 = vadd.f32 %v306, %v714
      %v716 = vpop.f32.mrf.mxu0
      %717 = vmatprep.mubr.bf16.mxu0 0
      %718 = vmatmul.mubr.bf16.gmra.mxu0 %v530
      %v719 = vpop.f32.mrf.mxu0
      %v720 = vadd.f32 %v306, %v719
      %v721 = vpop.f32.mrf.mxu0
      %v722 = vpop.f32.mrf.mxu0
      %v723 = vadd.f32 %v306, %v722
      %v724 = vpop.f32.mrf.mxu0
      %725 = vmatprep.mubr.bf16.mxu0 0
      %726 = vmatmul.mubr.bf16.gmra.mxu0 %v533
      %v727 = vpop.f32.mrf.mxu0
      %v728 = vadd.f32 %v306, %v727
      %v729 = vpop.f32.mrf.mxu0
      %v730 = vpop.f32.mrf.mxu0
      %v731 = vadd.f32 %v306, %v730
      %v732 = vpop.f32.mrf.mxu0
      %733 = vmatprep.mubr.bf16.mxu0 0
      %734 = vmatmul.mubr.bf16.gmra.mxu0 %v536
      %v735 = vpop.f32.mrf.mxu0
      %v736 = vadd.f32 %v306, %v735
      %v737 = vpop.f32.mrf.mxu0
      %v738 = vpop.f32.mrf.mxu0
      %v739 = vadd.f32 %v306, %v738
      %v740 = vpop.f32.mrf.mxu0
      %741 = vmatprep.mubr.bf16.mxu0 0
      %742 = vmatmul.mubr.bf16.gmra.mxu0 %v539
      %v743 = vpop.f32.mrf.mxu0
      %v744 = vadd.f32 %v306, %v743
      %v745 = vpop.f32.mrf.mxu0
      %v746 = vpop.f32.mrf.mxu0
      %v747 = vadd.f32 %v306, %v746
      %v748 = vpop.f32.mrf.mxu0
      %749 = vmatprep.mubr.bf16.mxu0 0
      %750 = vmatmul.mubr.bf16.gmra.mxu0 %v542
      %v751 = vpop.f32.mrf.mxu0
      %v752 = vadd.f32 %v306, %v751
      %v753 = vpop.f32.mrf.mxu0
      %v754 = vpop.f32.mrf.mxu0
      %v755 = vadd.f32 %v306, %v754
      %v756 = vpop.f32.mrf.mxu0
      %757 = vmatprep.mubr.bf16.mxu0 0
      %758 = vmatmul.mubr.bf16.gmra.mxu0 %v545
      %v759 = vpop.f32.mrf.mxu0
      %v760 = vadd.f32 %v306, %v759
      %v761 = vpop.f32.mrf.mxu0
      %v762 = vpop.f32.mrf.mxu0
      %v763 = vadd.f32 %v306, %v762
      %v764 = vpop.f32.mrf.mxu0
      %765 = vmatprep.mubr.bf16.mxu0 0
      %766 = vmatmul.mubr.bf16.gmra.mxu0 %v548
      %v767 = vpop.f32.mrf.mxu0
      %v768 = vadd.f32 %v306, %v767
      %v769 = vpop.f32.mrf.mxu0
      %v770 = vpop.f32.mrf.mxu0
      %v771 = vadd.f32 %v306, %v770
      %v772 = vpop.f32.mrf.mxu0
      %773 = vmatprep.mubr.bf16.mxu0 0
      %774 = vmatmul.mubr.bf16.gmra.mxu0 %v551
      %v775 = vpop.f32.mrf.mxu0
      %v776 = vadd.f32 %v306, %v775
      %v777 = vpop.f32.mrf.mxu0
      %v778 = vpop.f32.mrf.mxu0
      %v779 = vadd.f32 %v306, %v778
      %v780 = vpop.f32.mrf.mxu0
      %781 = vmatprep.mubr.bf16.mxu0 0
      %782 = vmatmul.mubr.bf16.gmra.mxu0 %v554
      %v783 = vpop.f32.mrf.mxu0
      %v784 = vadd.f32 %v306, %v783
      %v785 = vpop.f32.mrf.mxu0
      %v786 = vpop.f32.mrf.mxu0
      %v787 = vadd.f32 %v306, %v786
      %v788 = vpop.f32.mrf.mxu0
      %789 = vmatprep.mubr.bf16.mxu0 0
      %790 = vmatmul.mubr.bf16.gmra.mxu0 %v557
      %v791 = vpop.f32.mrf.mxu0
      %v792 = vadd.f32 %v306, %v791
      %v793 = vpop.f32.mrf.mxu0
      %v794 = vpop.f32.mrf.mxu0
      %v795 = vadd.f32 %v306, %v794
      %v796 = vpop.f32.mrf.mxu0
      %797 = vmatprep.mubr.bf16.mxu0 0
      %798 = vmatmul.mubr.bf16.gmra.mxu0 %v560
      %v799 = vpop.f32.mrf.mxu0
      %v800 = vadd.f32 %v306, %v799
      %v801 = vpop.f32.mrf.mxu0
      %v802 = vpop.f32.mrf.mxu0
      %v803 = vadd.f32 %v306, %v802
      %v804 = vpop.f32.mrf.mxu0
      %805 = vmatprep.mubr.bf16.mxu0 0
      %806 = vmatmul.mubr.bf16.gmra.mxu0 %v563
      %v807 = vpop.f32.mrf.mxu0
      %v808 = vadd.f32 %v306, %v807
      %v809 = vpop.f32.mrf.mxu0
      %v810 = vpop.f32.mrf.mxu0
      %v811 = vadd.f32 %v306, %v810
      %v812 = vpop.f32.mrf.mxu0
      %813 = vmatprep.mubr.bf16.mxu0 0
      %814 = vmatmul.mubr.bf16.gmra.mxu0 %v566
      %v815 = vpop.f32.mrf.mxu0
      %v816 = vadd.f32 %v306, %v815
      %v817 = vpop.f32.mrf.mxu0
      %v818 = vpop.f32.mrf.mxu0
      %v819 = vadd.f32 %v306, %v818
      %v820 = vpop.f32.mrf.mxu0
      %821 = vmatprep.mubr.bf16.mxu0 0
      %822 = vmatmul.mubr.bf16.gmra.mxu0 %v569
      %v823 = vpop.f32.mrf.mxu0
      %v824 = vadd.f32 %v306, %v823
      %v825 = vpop.f32.mrf.mxu0
      %v826 = vpop.f32.mrf.mxu0
      %v827 = vadd.f32 %v306, %v826
      %v828 = vpop.f32.mrf.mxu0
      %829 = vmatprep.mubr.bf16.mxu0 0
      %830 = vmatmul.mubr.bf16.gmra.mxu0 %v572
      %v831 = vpop.f32.mrf.mxu0
      %v832 = vadd.f32 %v306, %v831
      %v833 = vpop.f32.mrf.mxu0
      %v834 = vpop.f32.mrf.mxu0
      %v835 = vadd.f32 %v306, %v834
      %v836 = vpop.f32.mrf.mxu0
      %837 = vmatprep.mubr.bf16.mxu0 0
      %838 = vmatmul.mubr.bf16.gmra.mxu0 %v575
      %v839 = vpop.f32.mrf.mxu0
      %v840 = vadd.f32 %v306, %v839
      %v841 = vpop.f32.mrf.mxu0
      %v842 = vpop.f32.mrf.mxu0
      %v843 = vadd.f32 %v306, %v842
      %v844 = vpop.f32.mrf.mxu0
      %845 = vmatprep.mubr.bf16.mxu0 0
      %846 = vmatmul.mubr.bf16.gmra.mxu0 %v578
      %v847 = vpop.f32.mrf.mxu0
      %v848 = vadd.f32 %v306, %v847
      %v849 = vpop.f32.mrf.mxu0
      %v850 = vpop.f32.mrf.mxu0
      %v851 = vadd.f32 %v306, %v850
      %v852 = vpop.f32.mrf.mxu0
      %853 = vmatprep.mubr.bf16.mxu0 0
      %854 = vmatmul.mubr.bf16.gmra.mxu0 %v581
      %v855 = vpop.f32.mrf.mxu0
      %v856 = vadd.f32 %v306, %v855
      %v857 = vpop.f32.mrf.mxu0
      %v858 = vpop.f32.mrf.mxu0
      %v859 = vadd.f32 %v306, %v858
      %v860 = vpop.f32.mrf.mxu0
      %861 = vmatprep.mubr.bf16.mxu0 0
      %862 = vmatmul.mubr.bf16.gmra.mxu0 %v584
      %v863 = vpop.f32.mrf.mxu0
      %v864 = vadd.f32 %v306, %v863
      %v865 = vpop.f32.mrf.mxu0
      %v866 = vpop.f32.mrf.mxu0
      %v867 = vadd.f32 %v306, %v866
      %v868 = vpop.f32.mrf.mxu0
      %869 = vmatprep.mubr.bf16.mxu0 0
      %870 = vmatmul.mubr.bf16.gmra.mxu0 %v587
      %v871 = vpop.f32.mrf.mxu0
      %v872 = vadd.f32 %v306, %v871
      %v873 = vpop.f32.mrf.mxu0
      %v874 = vpop.f32.mrf.mxu0
      %v875 = vadd.f32 %v306, %v874
      %v876 = vpop.f32.mrf.mxu0
      %877 = vdwg.mxu0
      %v878 = vtanh.pop %v624
      %v879 = vtanh.pop %v627
      %v880 = vtanh.pop %v632
      %v881 = vtanh.pop %v635
      %v882 = vtanh.pop %v640
      %v883 = vtanh.pop %v643
      %v884 = vtanh.pop %v648
      %v885 = vtanh.pop %v651
      %v886 = vtanh.pop %v656
      %v887 = vtanh.pop %v659
      %v888 = vtanh.pop %v664
      %v889 = vtanh.pop %v667
      %v890 = vtanh.pop %v672
      %v891 = vtanh.pop %v675
      %v892 = vtanh.pop %v680
      %v893 = vtanh.pop %v683
      %v894 = vtanh.pop %v688
      %v895 = vtanh.pop %v691
      %v896 = vtanh.pop %v696
      %v897 = vtanh.pop %v699
      %v898 = vtanh.pop %v704
      %v899 = vtanh.pop %v707
      %v900 = vtanh.pop %v712
      %v901 = vtanh.pop %v715
      %v902 = vtanh.pop %v720
      %v903 = vtanh.pop %v723
      %v904 = vtanh.pop %v728
      %v905 = vtanh.pop %v731
      %v906 = vtanh.pop %v736
      %v907 = vtanh.pop %v739
      %v908 = vtanh.pop %v744
      %v909 = vtanh.pop %v747
      %v910 = vtanh.pop %v752
      %v911 = vtanh.pop %v755
      %v912 = vtanh.pop %v760
      %v913 = vtanh.pop %v763
      %v914 = vtanh.pop %v768
      %v915 = vtanh.pop %v771
      %v916 = vtanh.pop %v776
      %v917 = vtanh.pop %v779
      %v918 = vtanh.pop %v784
      %v919 = vtanh.pop %v787
      %v920 = vtanh.pop %v792
      %v921 = vtanh.pop %v795
      %v922 = vtanh.pop %v800
      %v923 = vtanh.pop %v803
      %v924 = vtanh.pop %v808
      %v925 = vtanh.pop %v811
      %v926 = vtanh.pop %v816
      %v927 = vtanh.pop %v819
      %v928 = vtanh.pop %v824
      %v929 = vtanh.pop %v827
      %v930 = vtanh.pop %v832
      %v931 = vtanh.pop %v835
      %v932 = vtanh.pop %v840
      %v933 = vtanh.pop %v843
      %v934 = vtanh.pop %v848
      %v935 = vtanh.pop %v851
      %v936 = vtanh.pop %v856
      %v937 = vtanh.pop %v859
      %v938 = vtanh.pop %v864
      %v939 = vtanh.pop %v867
      %v940 = vtanh.pop %v872
      %v941 = vtanh.pop %v875
      %942 = vst [vmem:[%s226] sm:$0xff] %v878
      %943 = vst [vmem:[%s226 + $0x8] sm:$0xff] %v879
      %944 = vst [vmem:[%s226 + $0x10] sm:$0xff] %v880
      %945 = vst [vmem:[%s226 + $0x18] sm:$0xff] %v881
      %946 = vst [vmem:[%s226 + $0x20] sm:$0xff] %v882
      %947 = vst [vmem:[%s226 + $0x28] sm:$0xff] %v883
      %948 = vst [vmem:[%s226 + $0x30] sm:$0xff] %v884
      %949 = vst [vmem:[%s226 + $0x38] sm:$0xff] %v885
      %950 = vst [vmem:[%s226 + $0x40] sm:$0xff] %v886
      %951 = vst [vmem:[%s226 + $0x48] sm:$0xff] %v887
      %952 = vst [vmem:[%s226 + $0x50] sm:$0xff] %v888
      %953 = vst [vmem:[%s226 + $0x58] sm:$0xff] %v889
      %954 = vst [vmem:[%s226 + $0x60] sm:$0xff] %v890
      %955 = vst [vmem:[%s226 + $0x68] sm:$0xff] %v891
      %956 = vst [vmem:[%s226 + $0x70] sm:$0xff] %v892
      %957 = vst [vmem:[%s226 + $0x78] sm:$0xff] %v893
      %958 = vst [vmem:[%s226 + $0x80] sm:$0xff] %v894
      %959 = vst [vmem:[%s226 + $0x88] sm:$0xff] %v895
      %960 = vst [vmem:[%s226 + $0x90] sm:$0xff] %v896
      %961 = vst [vmem:[%s226 + $0x98] sm:$0xff] %v897
      %962 = vst [vmem:[%s226 + $0xa0] sm:$0xff] %v898
      %963 = vst [vmem:[%s226 + $0xa8] sm:$0xff] %v899
      %964 = vst [vmem:[%s226 + $0xb0] sm:$0xff] %v900
      %965 = vst [vmem:[%s226 + $0xb8] sm:$0xff] %v901
      %966 = vst [vmem:[%s226 + $0xc0] sm:$0xff] %v902
      %967 = vst [vmem:[%s226 + $0xc8] sm:$0xff] %v903
      %968 = vst [vmem:[%s226 + $0xd0] sm:$0xff] %v904
      %969 = vst [vmem:[%s226 + $0xd8] sm:$0xff] %v905
      %970 = vst [vmem:[%s226 + $0xe0] sm:$0xff] %v906
      %971 = vst [vmem:[%s226 + $0xe8] sm:$0xff] %v907
      %972 = vst [vmem:[%s226 + $0xf0] sm:$0xff] %v908
      %973 = vst [vmem:[%s226 + $0xf8] sm:$0xff] %v909
      %974 = vst [vmem:[%s226 + $0x100] sm:$0xff] %v910
      %975 = vst [vmem:[%s226 + $0x108] sm:$0xff] %v911
      %976 = vst [vmem:[%s226 + $0x110] sm:$0xff] %v912
      %977 = vst [vmem:[%s226 + $0x118] sm:$0xff] %v913
      %978 = vst [vmem:[%s226 + $0x120] sm:$0xff] %v914
      %979 = vst [vmem:[%s226 + $0x128] sm:$0xff] %v915
      %980 = vst [vmem:[%s226 + $0x130] sm:$0xff] %v916
      %981 = vst [vmem:[%s226 + $0x138] sm:$0xff] %v917
      %982 = vst [vmem:[%s226 + $0x140] sm:$0xff] %v918
      %983 = vst [vmem:[%s226 + $0x148] sm:$0xff] %v919
      %984 = vst [vmem:[%s226 + $0x150] sm:$0xff] %v920
      %985 = vst [vmem:[%s226 + $0x158] sm:$0xff] %v921
      %986 = vst [vmem:[%s226 + $0x160] sm:$0xff] %v922
      %987 = vst [vmem:[%s226 + $0x168] sm:$0xff] %v923
      %988 = vst [vmem:[%s226 + $0x170] sm:$0xff] %v924
      %989 = vst [vmem:[%s226 + $0x178] sm:$0xff] %v925
      %990 = vst [vmem:[%s226 + $0x180] sm:$0xff] %v926
      %991 = vst [vmem:[%s226 + $0x188] sm:$0xff] %v927
      %992 = vst [vmem:[%s226 + $0x190] sm:$0xff] %v928
      %993 = vst [vmem:[%s226 + $0x198] sm:$0xff] %v929
      %994 = vst [vmem:[%s226 + $0x1a0] sm:$0xff] %v930
      %995 = vst [vmem:[%s226 + $0x1a8] sm:$0xff] %v931
      %996 = vst [vmem:[%s226 + $0x1b0] sm:$0xff] %v932
      %997 = vst [vmem:[%s226 + $0x1b8] sm:$0xff] %v933
      %998 = vst [vmem:[%s226 + $0x1c0] sm:$0xff] %v934
      %999 = vst [vmem:[%s226 + $0x1c8] sm:$0xff] %v935
      %1000 = vst [vmem:[%s226 + $0x1d0] sm:$0xff] %v936
      %1001 = vst [vmem:[%s226 + $0x1d8] sm:$0xff] %v937
      %1002 = vst [vmem:[%s226 + $0x1e0] sm:$0xff] %v938
      %1003 = vst [vmem:[%s226 + $0x1e8] sm:$0xff] %v939
      %1004 = vst [vmem:[%s226 + $0x1f0] sm:$0xff] %v940
      %1005 = vst [vmem:[%s226 + $0x1f8] sm:$0xff] %v941
      %s1006 = smul.u32 64, %s16
      %p1007 = scmp.lt.s32.totalorder %s1006, 319
      %s1008 = scalar_select %p1007, %s1006, 319
      %s1009 = smul.addr %s1008, 8
      %s1010 = scalar_lea.vmem %s5, %s1009
      // Predicated region
      $region41: #{_lambda_.27} parent=39 // pred_check
        %p1011 = pneg %p144
      $region42: #{_lambda_.27} parent=39 // pred_check_branch
        %1013 = sbr.rel (%p1011) target = $region44
      $region43: #{_lambda_.27} parent=39 // pred_region
        %s1014 = smul.u32 64, %s16
      $region44: #{_lambda_.27} parent=39 // pred_fallthru
        _
    $region40: #{_lambda_.27} parent=5 // pred_fallthru
      _
    %p1015 = scmp.le.s32.totalorder 2, %s11
    // Predicated region
    $region45: #{_lambda_.27} parent=5 // pred_check
      %p1016 = pneg %p1015
    $region46: #{_lambda_.27} parent=5 // pred_check_branch
      %1018 = sbr.rel (%p1016) target = $region48
    $region47: #{_lambda_.27} parent=5 // pred_region
      %s1019 = ssub.s32 %s11, 2
      // Predicated region
      $region49: #{_lambda_.27} parent=47 // pred_check
        %p1020 = pneg %p150
      $region50: #{_lambda_.27} parent=47 // pred_check_branch
        %1022 = sbr.rel (%p1020) target = $region52
      $region51: #{_lambda_.27} parent=47 // pred_region
        %s1023 = smul.u32 64, %s17
        %p1024 = scmp.lt.s32.totalorder %s1023, 319
        %s1025 = scalar_select %p1024, %s1023, 319
        %s1026 = smul.addr %s1025, 8
        %s1027 = scalar_lea.vmem %s5, %s1026
      $region52: #{_lambda_.27} parent=47 // pred_fallthru
        _
    $region48: #{_lambda_.27} parent=5 // pred_fallthru
      _
  $region6: #{_lambda_.27} parent=0 // loop_footer
    %s15 = sadd.s32 1, %s11
  $region7: #{_lambda_.27} parent=0 // loop_footer_branch
    %10 = sbr.rel target = $region3
  $region8: #{_lambda_.27} parent=0 // loop_exit
    _

</llo_original>
